<compile_context>
chip_gen: v6e
topology: v6e:2x2x1
jax: 0.10.0
libtpu: 0.0.40
codegen_flags: <defaults>
</compile_context>

<pallas_src>
import math
from functools import partial

import jax
import jax.numpy as jnp
from jax import lax
from jax.experimental import pallas as pl
from jax.experimental.pallas import tpu as pltpu

D_MODEL = 512
N_HEADS = 8
D_K = 64
D_V = 64
LN_EPS = 1e-5  # nn.LayerNorm default


def _round_up(x, m):
    return (x + m - 1) // m * m


# ----------------------------------------------------------------------------
# Pallas kernels
# ----------------------------------------------------------------------------

def _mm_bias_kernel(a_ref, w_ref, b_ref, o_ref):
    # (tm, K) @ (K, tn) + bias ; bf16 operands, f32 accumulation.
    a = a_ref[...].astype(w_ref.dtype)
    acc = jnp.dot(a, w_ref[...], preferred_element_type=jnp.float32)
    o_ref[...] = (acc + b_ref[...]).astype(o_ref.dtype)


def linear_bias(a, w, b):
    """out = a @ w + b ; a: (M, K) f32, w: (K, N) bf16, b: (N,) f32 -> (M, N) f32."""
    M, K = a.shape
    K2, N = w.shape
    assert K == K2
    tm = min(128, _round_up(M, 8))
    Mpad = _round_up(M, tm)
    if Mpad != M:
        a = jnp.pad(a, ((0, Mpad - M), (0, 0)))
    tn = 512 if (N % 512 == 0) else N
    assert N % tn == 0
    b2 = b.reshape(1, N).astype(jnp.float32)
    out = pl.pallas_call(
        _mm_bias_kernel,
        out_shape=jax.ShapeDtypeStruct((Mpad, N), jnp.float32),
        grid=(Mpad // tm, N // tn),
        in_specs=[
            pl.BlockSpec((tm, K), lambda i, j: (i, 0)),
            pl.BlockSpec((K, tn), lambda i, j: (0, j)),
            pl.BlockSpec((1, tn), lambda i, j: (0, j)),
        ],
        out_specs=pl.BlockSpec((tm, tn), lambda i, j: (i, j)),
        compiler_params=pltpu.CompilerParams(
            dimension_semantics=("parallel", "parallel")),
    )(a, w, b2)
    return out[:M] if Mpad != M else out


def _attn_kernel(q_ref, k_ref, v_ref, ctx_ref, attn_ref, *, scale):
    # One batch element, all heads: q/k/v blocks are (1, H, S, D).
    q = q_ref[0].astype(jnp.float32)          # (H, S, Dk)
    k = k_ref[0].astype(jnp.float32)          # (H, S, Dk)
    v = v_ref[0].astype(jnp.float32)          # (H, S, Dv)
    s = jnp.einsum('hqd,hkd->hqk', q, k,
                   preferred_element_type=jnp.float32) * scale
    m = jnp.max(s, axis=-1, keepdims=True)
    p = jnp.exp(s - m)
    denom = jnp.sum(p, axis=-1, keepdims=True)
    attn = p / denom
    ctx = jnp.einsum('hqk,hkd->hqd', attn, v,
                     preferred_element_type=jnp.float32)
    attn_ref[0] = attn.astype(attn_ref.dtype)
    ctx_ref[0] = ctx.astype(ctx_ref.dtype)


def attention(q, k, v):
    """q,k,v: (B, H, S, D) f32 -> (context (B,H,S,Dv), attn (B,H,S,S))."""
    B, H, S, Dk = q.shape
    Dv = v.shape[-1]
    scale = 1.0 / math.sqrt(Dk)
    ctx, attn = pl.pallas_call(
        partial(_attn_kernel, scale=scale),
        out_shape=(jax.ShapeDtypeStruct((B, H, S, Dv), jnp.float32),
                   jax.ShapeDtypeStruct((B, H, S, S), jnp.float32)),
        grid=(B,),
        in_specs=[
            pl.BlockSpec((1, H, S, Dk), lambda b: (b, 0, 0, 0)),
            pl.BlockSpec((1, H, S, Dk), lambda b: (b, 0, 0, 0)),
            pl.BlockSpec((1, H, S, Dv), lambda b: (b, 0, 0, 0)),
        ],
        out_specs=(pl.BlockSpec((1, H, S, Dv), lambda b: (b, 0, 0, 0)),
                   pl.BlockSpec((1, H, S, S), lambda b: (b, 0, 0, 0))),
        compiler_params=pltpu.CompilerParams(
            dimension_semantics=("parallel",)),
    )(q, k, v)
    return ctx, attn


def _fc_res_ln_kernel(a_ref, w_ref, b_ref, res_ref, g_ref, bt_ref, o_ref, *, eps):
    # out = LayerNorm(a @ w + b + residual) * gamma + beta
    a = a_ref[...].astype(w_ref.dtype)
    y = jnp.dot(a, w_ref[...], preferred_element_type=jnp.float32)
    y = y + b_ref[...] + res_ref[...].astype(jnp.float32)
    mu = jnp.mean(y, axis=-1, keepdims=True)
    xc = y - mu
    var = jnp.mean(xc * xc, axis=-1, keepdims=True)
    yn = xc * lax.rsqrt(var + eps)
    o_ref[...] = (yn * g_ref[...] + bt_ref[...]).astype(o_ref.dtype)


def fc_residual_layernorm(a, w, b, res, gamma, beta, *, eps=LN_EPS):
    """LayerNorm((a @ w + b) + res); a:(M,K) f32, w:(K,N) bf16, res:(M,N) f32."""
    M, K = a.shape
    K2, N = w.shape
    assert K == K2 and res.shape == (M, N)
    tm = min(128, _round_up(M, 8))
    Mpad = _round_up(M, tm)
    if Mpad != M:
        a = jnp.pad(a, ((0, Mpad - M), (0, 0)))
        res = jnp.pad(res, ((0, Mpad - M), (0, 0)))
    out = pl.pallas_call(
        partial(_fc_res_ln_kernel, eps=eps),
        out_shape=jax.ShapeDtypeStruct((Mpad, N), jnp.float32),
        grid=(Mpad // tm,),
        in_specs=[
            pl.BlockSpec((tm, K), lambda i: (i, 0)),
            pl.BlockSpec((K, N), lambda i: (0, 0)),
            pl.BlockSpec((1, N), lambda i: (0, 0)),
            pl.BlockSpec((tm, N), lambda i: (i, 0)),
            pl.BlockSpec((1, N), lambda i: (0, 0)),
            pl.BlockSpec((1, N), lambda i: (0, 0)),
        ],
        out_specs=pl.BlockSpec((tm, N), lambda i: (i, 0)),
        compiler_params=pltpu.CompilerParams(
            dimension_semantics=("parallel",)),
    )(a, w, b.reshape(1, N).astype(jnp.float32), res,
      gamma.reshape(1, N).astype(jnp.float32),
      beta.reshape(1, N).astype(jnp.float32))
    return out[:M] if Mpad != M else out


# ----------------------------------------------------------------------------
# Parameter init (matches nn.Linear / nn.LayerNorm defaults, weights -> bf16)
# ----------------------------------------------------------------------------

def _linear_init(key, fan_in, shape_w, shape_b):
    kw, kb = jax.random.split(key)
    lim = 1.0 / math.sqrt(fan_in)
    w = jax.random.uniform(kw, shape_w, minval=-lim, maxval=lim)
    b = jax.random.uniform(kb, shape_b, minval=-lim, maxval=lim)
    return w, b


def init_encoder_params(key, input_dim, n_layers, d_model=D_MODEL,
                        n_heads=N_HEADS, d_k=D_K, d_v=D_V):
    assert d_k == d_v
    params = {}
    key, km = jax.random.split(key)
    mw, mb = _linear_init(km, input_dim, (input_dim, d_model), (d_model,))
    params['mel_w'] = mw.astype(jnp.bfloat16)
    params['mel_b'] = mb.astype(jnp.float32)
    layers = []
    for _ in range(n_layers):
        key, kq, kk_, kv, kf = jax.random.split(key, 5)
        wq, bq = _linear_init(kq, d_model, (d_model, n_heads * d_k), (n_heads * d_k,))
        wk, bk = _linear_init(kk_, d_model, (d_model, n_heads * d_k), (n_heads * d_k,))
        wv, bv = _linear_init(kv, d_model, (d_model, n_heads * d_v), (n_heads * d_v,))
        wf, bf = _linear_init(kf, n_heads * d_v, (n_heads * d_v, d_model), (d_model,))
        layers.append(dict(
            wqkv=jnp.concatenate([wq, wk, wv], axis=1).astype(jnp.bfloat16),
            bqkv=jnp.concatenate([bq, bk, bv], axis=0).astype(jnp.float32),
            wfc=wf.astype(jnp.bfloat16),
            bfc=bf.astype(jnp.float32),
            ln_g=jnp.ones((d_model,), jnp.float32),
            ln_b=jnp.zeros((d_model,), jnp.float32),
        ))
    params['layers'] = layers
    return params


# ----------------------------------------------------------------------------
# Forward pass (== Encoder.forward)
# ----------------------------------------------------------------------------

def encoder_forward(x, params, n_heads=N_HEADS, d_k=D_K, d_v=D_V):
    """x: (B, S, ...) -> (enc_outputs (B, S, d_model), [attn (B, H, S, S)] per layer)."""
    B, S = x.shape[0], x.shape[1]
    x = x.reshape(B, S, -1).astype(jnp.float32)
    h = linear_bias(x.reshape(B * S, -1), params['mel_w'], params['mel_b'])
    d_model = h.shape[-1]
    attns = []
    for lp in params['layers']:
        residual = h
        qkv = linear_bias(h, lp['wqkv'], lp['bqkv'])              # (B*S, 3*H*dk)
        qkv = qkv.reshape(B, S, 3, n_heads, d_k).transpose(2, 0, 3, 1, 4)
        q, k, v = qkv[0], qkv[1], qkv[2]                          # (B, H, S, dk)
        ctx, attn = attention(q, k, v)
        attns.append(attn)
        ctx = ctx.transpose(0, 2, 1, 3).reshape(B * S, n_heads * d_v)
        h = fc_residual_layernorm(ctx, lp['wfc'], lp['bfc'],
                                  residual, lp['ln_g'], lp['ln_b'])
    return h.reshape(B, S, d_model), attns


# ----------------------------------------------------------------------------
# Pure-JAX reference (same bf16 weights / f32 accumulation) for validation
# ----------------------------------------------------------------------------

def _ref_linear(a, w, b):
    return jnp.dot(a.astype(jnp.bfloat16), w,
                   preferred_element_type=jnp.float32) + b


def encoder_forward_ref(x, params, n_heads=N_HEADS, d_k=D_K, d_v=D_V):
    B, S = x.shape[0], x.shape[1]
    x = x.reshape(B, S, -1).astype(jnp.float32)
    h = _ref_linear(x.reshape(B * S, -1), params['mel_w'], params['mel_b'])
    attns = []
    for lp in params['layers']:
        residual = h
        qkv = _ref_linear(h, lp['wqkv'], lp['bqkv'])
        qkv = qkv.reshape(B, S, 3, n_heads, d_k).transpose(2, 0, 3, 1, 4)
        q, k, v = qkv[0], qkv[1], qkv[2]
        s = jnp.einsum('bhqd,bhkd->bhqk', q, k,
                       preferred_element_type=jnp.float32) / math.sqrt(d_k)
        attn = jax.nn.softmax(s, axis=-1)
        attns.append(attn)
        ctx = jnp.einsum('bhqk,bhkd->bhqd', attn, v,
                         preferred_element_type=jnp.float32)
        ctx = ctx.transpose(0, 2, 1, 3).reshape(B * S, n_heads * d_v)
        y = _ref_linear(ctx, lp['wfc'], lp['bfc']) + residual
        mu = jnp.mean(y, axis=-1, keepdims=True)
        var = jnp.mean((y - mu) ** 2, axis=-1, keepdims=True)
        h = (y - mu) / jnp.sqrt(var + LN_EPS) * lp['ln_g'] + lp['ln_b']
    return h.reshape(B, S, -1), attns


if __name__ == "__main__":
    key = jax.random.PRNGKey(0)
    kx, kp = jax.random.split(key)
    B, S, input_dim, n_layers = 2, 8, 32, 2
    x = jax.random.normal(kx, (B, S, input_dim), dtype=jnp.float32)
    params = init_encoder_params(kp, input_dim=input_dim, n_layers=n_layers)

    fwd = jax.jit(encoder_forward)
    out, attns = fwd(x, params)
    out = jax.block_until_ready(out)

    assert out.shape == (B, S, D_MODEL)
    assert len(attns) == n_layers
    assert attns[0].shape == (B, N_HEADS, S, S)
    assert bool(jnp.all(jnp.isfinite(out)))
    assert bool(jnp.all(jnp.isfinite(attns[0])))
    # softmax rows sum to 1
    assert bool(jnp.all(jnp.abs(jnp.sum(attns[0], axis=-1) - 1.0) < 1e-3))

    # compare against pure-JAX reference (same bf16 weights)
    ref_out, ref_attns = encoder_forward_ref(x, params)
    assert bool(jnp.max(jnp.abs(out - ref_out)) < 2e-2)
    assert bool(jnp.max(jnp.abs(attns[-1] - ref_attns[-1])) < 2e-2)

    print("KERNEL_OK")
</pallas_src>

<mosaic_0001>
module attributes {stable_mosaic.version = 11 : i64} {
  func.func @_mm_bias_kernel(%arg0: i32, %arg1: i32, %arg2: memref<16x32xf32, #tpu.memory_space<vmem>>, %arg3: memref<32x512xbf16, #tpu.memory_space<vmem>>, %arg4: memref<1x512xf32, #tpu.memory_space<vmem>>, %arg5: memref<16x512xf32, #tpu.memory_space<vmem>>) attributes {dimension_semantics = [#tpu.dimension_semantics<parallel>, #tpu.dimension_semantics<parallel>], iteration_bounds = array<i64: 1, 1>, scalar_prefetch = 0 : i64, scratch_operands = 0 : i64, tpu.core_type = #tpu.core_type<tc>, window_params = [{transform_indices = @transform_0, window_bounds = array<i64: 16, 32>}, {transform_indices = @transform_1, window_bounds = array<i64: 32, 512>}, {transform_indices = @transform_2, window_bounds = array<i64: 1, 512>}, {transform_indices = @transform_3, window_bounds = array<i64: 16, 512>}]} {
    %c0 = arith.constant 0 : index
    %c0_0 = arith.constant 0 : index
    %0 = vector.load %arg2[%c0, %c0_0] : memref<16x32xf32, #tpu.memory_space<vmem>>, vector<16x32xf32>
    %1 = arith.truncf %0 : vector<16x32xf32> to vector<16x32xbf16>
    %c0_1 = arith.constant 0 : index
    %c0_2 = arith.constant 0 : index
    %2 = vector.load %arg3[%c0_1, %c0_2] : memref<32x512xbf16, #tpu.memory_space<vmem>>, vector<32x512xbf16>
    %cst = arith.constant dense<0.000000e+00> : vector<16x512xf32>
    %3 = tpu.matmul %1, %2, %cst {dimension_numbers = #tpu.dot_dimension_numbers<[1], [0], [0], [1], [0, 0, 1, 1], [], []>} : vector<16x32xbf16>, vector<32x512xbf16>, vector<16x512xf32> -> vector<16x512xf32>
    %c0_3 = arith.constant 0 : index
    %c0_4 = arith.constant 0 : index
    %4 = vector.load %arg4[%c0_3, %c0_4] : memref<1x512xf32, #tpu.memory_space<vmem>>, vector<1x512xf32>
    %5 = vector.broadcast %4 : vector<1x512xf32> to vector<16x512xf32>
    %6 = arith.addf %3, %5 : vector<16x512xf32>
    %c0_5 = arith.constant 0 : index
    %c0_6 = arith.constant 0 : index
    %7 = vector.load %arg5[%c0_5, %c0_6] : memref<16x512xf32, #tpu.memory_space<vmem>>, vector<16x512xf32>
    tpu.vector_store %arg5[%c0_5, %c0_6], %6 {strides = array<i32>} : memref<16x512xf32, #tpu.memory_space<vmem>>, vector<16x512xf32>,
    return
  }
  func.func @transform_0(%arg0: i32, %arg1: i32) -> (i32, i32) {
    %c0_i32 = arith.constant 0 : i32
    %c0_i32_0 = arith.constant 0 : i32
    return %arg0, %c0_i32 : i32, i32
  }
  func.func @transform_1(%arg0: i32, %arg1: i32) -> (i32, i32) {
    %c0_i32 = arith.constant 0 : i32
    %c0_i32_0 = arith.constant 0 : i32
    return %c0_i32, %arg1 : i32, i32
  }
  func.func @transform_2(%arg0: i32, %arg1: i32) -> (i32, i32) {
    %c0_i32 = arith.constant 0 : i32
    %c0_i32_0 = arith.constant 0 : i32
    return %c0_i32, %arg1 : i32, i32
  }
  func.func @transform_3(%arg0: i32, %arg1: i32) -> (i32, i32) {
    %c0_i32 = arith.constant 0 : i32
    return %arg0, %arg1 : i32, i32
  }
}

module attributes {stable_mosaic.version = 11 : i64} {
  func.func @_mm_bias_kernel(%arg0: i32, %arg1: i32, %arg2: memref<16x512xf32, #tpu.memory_space<vmem>>, %arg3: memref<512x512xbf16, #tpu.memory_space<vmem>>, %arg4: memref<1x512xf32, #tpu.memory_space<vmem>>, %arg5: memref<16x512xf32, #tpu.memory_space<vmem>>) attributes {dimension_semantics = [#tpu.dimension_semantics<parallel>, #tpu.dimension_semantics<parallel>], iteration_bounds = array<i64: 1, 3>, scalar_prefetch = 0 : i64, scratch_operands = 0 : i64, tpu.core_type = #tpu.core_type<tc>, window_params = [{transform_indices = @transform_0, window_bounds = array<i64: 16, 512>}, {transform_indices = @transform_1, window_bounds = array<i64: 512, 512>}, {transform_indices = @transform_2, window_bounds = array<i64: 1, 512>}, {transform_indices = @transform_3, window_bounds = array<i64: 16, 512>}]} {
    %c0 = arith.constant 0 : index
    %c0_0 = arith.constant 0 : index
    %0 = vector.load %arg2[%c0, %c0_0] : memref<16x512xf32, #tpu.memory_space<vmem>>, vector<16x512xf32>
    %1 = arith.truncf %0 : vector<16x512xf32> to vector<16x512xbf16>
    %c0_1 = arith.constant 0 : index
    %c0_2 = arith.constant 0 : index
    %2 = vector.load %arg3[%c0_1, %c0_2] : memref<512x512xbf16, #tpu.memory_space<vmem>>, vector<512x512xbf16>
    %cst = arith.constant dense<0.000000e+00> : vector<16x512xf32>
    %3 = tpu.matmul %1, %2, %cst {dimension_numbers = #tpu.dot_dimension_numbers<[1], [0], [0], [1], [0, 0, 1, 1], [], []>} : vector<16x512xbf16>, vector<512x512xbf16>, vector<16x512xf32> -> vector<16x512xf32>
    %c0_3 = arith.constant 0 : index
    %c0_4 = arith.constant 0 : index
    %4 = vector.load %arg4[%c0_3, %c0_4] : memref<1x512xf32, #tpu.memory_space<vmem>>, vector<1x512xf32>
    %5 = vector.broadcast %4 : vector<1x512xf32> to vector<16x512xf32>
    %6 = arith.addf %3, %5 : vector<16x512xf32>
    %c0_5 = arith.constant 0 : index
    %c0_6 = arith.constant 0 : index
    %7 = vector.load %arg5[%c0_5, %c0_6] : memref<16x512xf32, #tpu.memory_space<vmem>>, vector<16x512xf32>
    tpu.vector_store %arg5[%c0_5, %c0_6], %6 {strides = array<i32>} : memref<16x512xf32, #tpu.memory_space<vmem>>, vector<16x512xf32>,
    return
  }
  func.func @transform_0(%arg0: i32, %arg1: i32) -> (i32, i32) {
    %c0_i32 = arith.constant 0 : i32
    %c0_i32_0 = arith.constant 0 : i32
    return %arg0, %c0_i32 : i32, i32
  }
  func.func @transform_1(%arg0: i32, %arg1: i32) -> (i32, i32) {
    %c0_i32 = arith.constant 0 : i32
    %c0_i32_0 = arith.constant 0 : i32
    return %c0_i32, %arg1 : i32, i32
  }
  func.func @transform_2(%arg0: i32, %arg1: i32) -> (i32, i32) {
    %c0_i32 = arith.constant 0 : i32
    %c0_i32_0 = arith.constant 0 : i32
    return %c0_i32, %arg1 : i32, i32
  }
  func.func @transform_3(%arg0: i32, %arg1: i32) -> (i32, i32) {
    %c0_i32 = arith.constant 0 : i32
    return %arg0, %arg1 : i32, i32
  }
}

module attributes {stable_mosaic.version = 11 : i64} {
  func.func @_attn_kernel(%arg0: i32, %arg1: memref<1x8x8x64xf32, #tpu.memory_space<vmem>>, %arg2: memref<1x8x8x64xf32, #tpu.memory_space<vmem>>, %arg3: memref<1x8x8x64xf32, #tpu.memory_space<vmem>>, %arg4: memref<1x8x8x64xf32, #tpu.memory_space<vmem>>, %arg5: memref<1x8x8x8xf32, #tpu.memory_space<vmem>>) attributes {dimension_semantics = [#tpu.dimension_semantics<parallel>], iteration_bounds = array<i64: 2>, scalar_prefetch = 0 : i64, scratch_operands = 0 : i64, tpu.core_type = #tpu.core_type<tc>, window_params = [{transform_indices = @transform_0, window_bounds = array<i64: 1, 8, 8, 64>}, {transform_indices = @transform_1, window_bounds = array<i64: 1, 8, 8, 64>}, {transform_indices = @transform_2, window_bounds = array<i64: 1, 8, 8, 64>}, {transform_indices = @transform_3, window_bounds = array<i64: 1, 8, 8, 64>}, {transform_indices = @transform_4, window_bounds = array<i64: 1, 8, 8, 8>}]} {
    %c0 = arith.constant 0 : index
    %c0_0 = arith.constant 0 : index
    %c0_1 = arith.constant 0 : index
    %c0_2 = arith.constant 0 : index
    %0 = vector.load %arg1[%c0, %c0_0, %c0_1, %c0_2] : memref<1x8x8x64xf32, #tpu.memory_space<vmem>>, vector<1x8x8x64xf32>
    %1 = vector.shape_cast %0 : vector<1x8x8x64xf32> to vector<8x8x64xf32>
    %c0_3 = arith.constant 0 : index
    %c0_4 = arith.constant 0 : index
    %c0_5 = arith.constant 0 : index
    %c0_6 = arith.constant 0 : index
    %2 = vector.load %arg2[%c0_3, %c0_4, %c0_5, %c0_6] : memref<1x8x8x64xf32, #tpu.memory_space<vmem>>, vector<1x8x8x64xf32>
    %3 = vector.shape_cast %2 : vector<1x8x8x64xf32> to vector<8x8x64xf32>
    %c0_7 = arith.constant 0 : index
    %c0_8 = arith.constant 0 : index
    %c0_9 = arith.constant 0 : index
    %c0_10 = arith.constant 0 : index
    %4 = vector.load %arg3[%c0_7, %c0_8, %c0_9, %c0_10] : memref<1x8x8x64xf32, #tpu.memory_space<vmem>>, vector<1x8x8x64xf32>
    %5 = vector.shape_cast %4 : vector<1x8x8x64xf32> to vector<8x8x64xf32>
    "tpu.trace_start"() <{level = 10 : i32, message = "hqd,hkd->hqk"}> : () -> ()
    %cst = arith.constant dense<0.000000e+00> : vector<8x8x8xf32>
    %6 = tpu.matmul %1, %3, %cst {dimension_numbers = #tpu.dot_dimension_numbers<[2], [2], [1], [1], [0, 0, 0, 1, 1, 1], [0], [0]>} : vector<8x8x64xf32>, vector<8x8x64xf32>, vector<8x8x8xf32> -> vector<8x8x8xf32>
    "tpu.trace_stop"() : () -> ()
    %cst_11 = arith.constant 1.250000e-01 : f32
    %7 = vector.broadcast %cst_11 : f32 to vector<8x8x8xf32>
    %8 = arith.mulf %6, %7 : vector<8x8x8xf32>
    %cst_12 = arith.constant dense<0xFF800000> : vector<8x8xf32>
    %9 = vector.multi_reduction <maximumf>, %8, %cst_12 [2] : vector<8x8x8xf32> to vector<8x8xf32>
    %10 = vector.shape_cast %9 : vector<8x8xf32> to vector<8x8x1xf32>
    %11 = vector.broadcast %10 : vector<8x8x1xf32> to vector<8x8x8xf32>
    %12 = arith.subf %8, %11 : vector<8x8x8xf32>
    %13 = math.exp %12 : vector<8x8x8xf32>
    %cst_13 = arith.constant dense<0.000000e+00> : vector<8x8xf32>
    %14 = vector.multi_reduction <add>, %13, %cst_13 [2] : vector<8x8x8xf32> to vector<8x8xf32>
    %15 = vector.shape_cast %14 : vector<8x8xf32> to vector<8x8x1xf32>
    %16 = vector.broadcast %15 : vector<8x8x1xf32> to vector<8x8x8xf32>
    %17 = arith.divf %13, %16 : vector<8x8x8xf32>
    "tpu.trace_start"() <{level = 10 : i32, message = "hqk,hkd->hqd"}> : () -> ()
    %cst_14 = arith.constant dense<0.000000e+00> : vector<8x8x64xf32>
    %18 = tpu.matmul %17, %5, %cst_14 {dimension_numbers = #tpu.dot_dimension_numbers<[2], [1], [1], [2], [0, 0, 0, 1, 1, 2], [0], [0]>} : vector<8x8x8xf32>, vector<8x8x64xf32>, vector<8x8x64xf32> -> vector<8x8x64xf32>
    "tpu.trace_stop"() : () -> ()
    %c0_15 = arith.constant 0 : index
    %c0_16 = arith.constant 0 : index
    %c0_17 = arith.constant 0 : index
    %c0_18 = arith.constant 0 : index
    %19 = vector.load %arg5[%c0_15, %c0_16, %c0_17, %c0_18] : memref<1x8x8x8xf32, #tpu.memory_space<vmem>>, vector<1x8x8x8xf32>
    %20 = vector.shape_cast %19 : vector<1x8x8x8xf32> to vector<8x8x8xf32>
    %21 = vector.shape_cast %17 : vector<8x8x8xf32> to vector<1x8x8x8xf32>
    tpu.vector_store %arg5[%c0_15, %c0_16, %c0_17, %c0_18], %21 {strides = array<i32>} : memref<1x8x8x8xf32, #tpu.memory_space<vmem>>, vector<1x8x8x8xf32>,
    %c0_19 = arith.constant 0 : index
    %c0_20 = arith.constant 0 : index
    %c0_21 = arith.constant 0 : index
    %c0_22 = arith.constant 0 : index
    %22 = vector.load %arg4[%c0_19, %c0_20, %c0_21, %c0_22] : memref<1x8x8x64xf32, #tpu.memory_space<vmem>>, vector<1x8x8x64xf32>
    %23 = vector.shape_cast %22 : vector<1x8x8x64xf32> to vector<8x8x64xf32>
    %24 = vector.shape_cast %18 : vector<8x8x64xf32> to vector<1x8x8x64xf32>
    tpu.vector_store %arg4[%c0_19, %c0_20, %c0_21, %c0_22], %24 {strides = array<i32>} : memref<1x8x8x64xf32, #tpu.memory_space<vmem>>, vector<1x8x8x64xf32>,
    return
  }
  func.func @transform_0(%arg0: i32) -> (i32, i32, i32, i32) {
    %c0_i32 = arith.constant 0 : i32
    %c0_i32_0 = arith.constant 0 : i32
    %c0_i32_1 = arith.constant 0 : i32
    %c0_i32_2 = arith.constant 0 : i32
    return %arg0, %c0_i32, %c0_i32_0, %c0_i32_1 : i32, i32, i32, i32
  }
  func.func @transform_1(%arg0: i32) -> (i32, i32, i32, i32) {
    %c0_i32 = arith.constant 0 : i32
    %c0_i32_0 = arith.constant 0 : i32
    %c0_i32_1 = arith.constant 0 : i32
    %c0_i32_2 = arith.constant 0 : i32
    return %arg0, %c0_i32, %c0_i32_0, %c0_i32_1 : i32, i32, i32, i32
  }
  func.func @transform_2(%arg0: i32) -> (i32, i32, i32, i32) {
    %c0_i32 = arith.constant 0 : i32
    %c0_i32_0 = arith.constant 0 : i32
    %c0_i32_1 = arith.constant 0 : i32
    %c0_i32_2 = arith.constant 0 : i32
    return %arg0, %c0_i32, %c0_i32_0, %c0_i32_1 : i32, i32, i32, i32
  }
  func.func @transform_3(%arg0: i32) -> (i32, i32, i32, i32) {
    %c0_i32 = arith.constant 0 : i32
    %c0_i32_0 = arith.constant 0 : i32
    %c0_i32_1 = arith.constant 0 : i32
    %c0_i32_2 = arith.constant 0 : i32
    return %arg0, %c0_i32, %c0_i32_0, %c0_i32_1 : i32, i32, i32, i32
  }
  func.func @transform_4(%arg0: i32) -> (i32, i32, i32, i32) {
    %c0_i32 = arith.constant 0 : i32
    %c0_i32_0 = arith.constant 0 : i32
    %c0_i32_1 = arith.constant 0 : i32
    %c0_i32_2 = arith.constant 0 : i32
    return %arg0, %c0_i32, %c0_i32_0, %c0_i32_1 : i32, i32, i32, i32
  }
}

module attributes {stable_mosaic.version = 11 : i64} {
  func.func @_fc_res_ln_kernel(%arg0: i32, %arg1: memref<16x512xf32, #tpu.memory_space<vmem>>, %arg2: memref<512x512xbf16, #tpu.memory_space<vmem>>, %arg3: memref<1x512xf32, #tpu.memory_space<vmem>>, %arg4: memref<16x512xf32, #tpu.memory_space<vmem>>, %arg5: memref<1x512xf32, #tpu.memory_space<vmem>>, %arg6: memref<1x512xf32, #tpu.memory_space<vmem>>, %arg7: memref<16x512xf32, #tpu.memory_space<vmem>>) attributes {dimension_semantics = [#tpu.dimension_semantics<parallel>], iteration_bounds = array<i64: 1>, scalar_prefetch = 0 : i64, scratch_operands = 0 : i64, tpu.core_type = #tpu.core_type<tc>, window_params = [{transform_indices = @transform_0, window_bounds = array<i64: 16, 512>}, {pipeline_mode = #tpu.pipeline_mode<synchronous>, transform_indices = @transform_1, window_bounds = array<i64: 512, 512>}, {pipeline_mode = #tpu.pipeline_mode<synchronous>, transform_indices = @transform_2, window_bounds = array<i64: 1, 512>}, {transform_indices = @transform_3, window_bounds = array<i64: 16, 512>}, {pipeline_mode = #tpu.pipeline_mode<synchronous>, transform_indices = @transform_4, window_bounds = array<i64: 1, 512>}, {pipeline_mode = #tpu.pipeline_mode<synchronous>, transform_indices = @transform_5, window_bounds = array<i64: 1, 512>}, {transform_indices = @transform_6, window_bounds = array<i64: 16, 512>}]} {
    %c0 = arith.constant 0 : index
    %c0_0 = arith.constant 0 : index
    %0 = vector.load %arg1[%c0, %c0_0] : memref<16x512xf32, #tpu.memory_space<vmem>>, vector<16x512xf32>
    %1 = arith.truncf %0 : vector<16x512xf32> to vector<16x512xbf16>
    %c0_1 = arith.constant 0 : index
    %c0_2 = arith.constant 0 : index
    %2 = vector.load %arg2[%c0_1, %c0_2] : memref<512x512xbf16, #tpu.memory_space<vmem>>, vector<512x512xbf16>
    %cst = arith.constant dense<0.000000e+00> : vector<16x512xf32>
    %3 = tpu.matmul %1, %2, %cst {dimension_numbers = #tpu.dot_dimension_numbers<[1], [0], [0], [1], [0, 0, 1, 1], [], []>} : vector<16x512xbf16>, vector<512x512xbf16>, vector<16x512xf32> -> vector<16x512xf32>
    %c0_3 = arith.constant 0 : index
    %c0_4 = arith.constant 0 : index
    %4 = vector.load %arg3[%c0_3, %c0_4] : memref<1x512xf32, #tpu.memory_space<vmem>>, vector<1x512xf32>
    %5 = vector.broadcast %4 : vector<1x512xf32> to vector<16x512xf32>
    %6 = arith.addf %3, %5 : vector<16x512xf32>
    %c0_5 = arith.constant 0 : index
    %c0_6 = arith.constant 0 : index
    %7 = vector.load %arg4[%c0_5, %c0_6] : memref<16x512xf32, #tpu.memory_space<vmem>>, vector<16x512xf32>
    %8 = arith.addf %6, %7 : vector<16x512xf32>
    %cst_7 = arith.constant dense<0.000000e+00> : vector<16xf32>
    %9 = vector.multi_reduction <add>, %8, %cst_7 [1] : vector<16x512xf32> to vector<16xf32>
    %10 = vector.shape_cast %9 : vector<16xf32> to vector<16x1xf32>
    %cst_8 = arith.constant 5.120000e+02 : f32
    %11 = vector.broadcast %cst_8 : f32 to vector<16x1xf32>
    %12 = arith.divf %10, %11 : vector<16x1xf32>
    %13 = vector.broadcast %12 : vector<16x1xf32> to vector<16x512xf32>
    %14 = arith.subf %8, %13 : vector<16x512xf32>
    %15 = arith.mulf %14, %14 : vector<16x512xf32>
    %cst_9 = arith.constant dense<0.000000e+00> : vector<16xf32>
    %16 = vector.multi_reduction <add>, %15, %cst_9 [1] : vector<16x512xf32> to vector<16xf32>
    %17 = vector.shape_cast %16 : vector<16xf32> to vector<16x1xf32>
    %cst_10 = arith.constant 5.120000e+02 : f32
    %18 = vector.broadcast %cst_10 : f32 to vector<16x1xf32>
    %19 = arith.divf %17, %18 : vector<16x1xf32>
    %cst_11 = arith.constant 9.99999974E-6 : f32
    %20 = vector.broadcast %cst_11 : f32 to vector<16x1xf32>
    %21 = arith.addf %19, %20 : vector<16x1xf32>
    %22 = math.rsqrt %21 : vector<16x1xf32>
    %23 = vector.broadcast %22 : vector<16x1xf32> to vector<16x512xf32>
    %24 = arith.mulf %14, %23 : vector<16x512xf32>
    %c0_12 = arith.constant 0 : index
    %c0_13 = arith.constant 0 : index
    %25 = vector.load %arg5[%c0_12, %c0_13] : memref<1x512xf32, #tpu.memory_space<vmem>>, vector<1x512xf32>
    %26 = vector.broadcast %25 : vector<1x512xf32> to vector<16x512xf32>
    %27 = arith.mulf %24, %26 : vector<16x512xf32>
    %c0_14 = arith.constant 0 : index
    %c0_15 = arith.constant 0 : index
    %28 = vector.load %arg6[%c0_14, %c0_15] : memref<1x512xf32, #tpu.memory_space<vmem>>, vector<1x512xf32>
    %29 = vector.broadcast %28 : vector<1x512xf32> to vector<16x512xf32>
    %30 = arith.addf %27, %29 : vector<16x512xf32>
    %c0_16 = arith.constant 0 : index
    %c0_17 = arith.constant 0 : index
    %31 = vector.load %arg7[%c0_16, %c0_17] : memref<16x512xf32, #tpu.memory_space<vmem>>, vector<16x512xf32>
    tpu.vector_store %arg7[%c0_16, %c0_17], %30 {strides = array<i32>} : memref<16x512xf32, #tpu.memory_space<vmem>>, vector<16x512xf32>,
    return
  }
  func.func @transform_0(%arg0: i32) -> (i32, i32) {
    %c0_i32 = arith.constant 0 : i32
    %c0_i32_0 = arith.constant 0 : i32
    return %arg0, %c0_i32 : i32, i32
  }
  func.func @transform_1(%arg0: i32) -> (i32, i32) {
    %c0_i32 = arith.constant 0 : i32
    %c0_i32_0 = arith.constant 0 : i32
    %c0_i32_1 = arith.constant 0 : i32
    return %c0_i32, %c0_i32_0 : i32, i32
  }
  func.func @transform_2(%arg0: i32) -> (i32, i32) {
    %c0_i32 = arith.constant 0 : i32
    %c0_i32_0 = arith.constant 0 : i32
    %c0_i32_1 = arith.constant 0 : i32
    return %c0_i32, %c0_i32_0 : i32, i32
  }
  func.func @transform_3(%arg0: i32) -> (i32, i32) {
    %c0_i32 = arith.constant 0 : i32
    %c0_i32_0 = arith.constant 0 : i32
    return %arg0, %c0_i32 : i32, i32
  }
  func.func @transform_4(%arg0: i32) -> (i32, i32) {
    %c0_i32 = arith.constant 0 : i32
    %c0_i32_0 = arith.constant 0 : i32
    %c0_i32_1 = arith.constant 0 : i32
    return %c0_i32, %c0_i32_0 : i32, i32
  }
  func.func @transform_5(%arg0: i32) -> (i32, i32) {
    %c0_i32 = arith.constant 0 : i32
    %c0_i32_0 = arith.constant 0 : i32
    %c0_i32_1 = arith.constant 0 : i32
    return %c0_i32, %c0_i32_0 : i32, i32
  }
  func.func @transform_6(%arg0: i32) -> (i32, i32) {
    %c0_i32 = arith.constant 0 : i32
    %c0_i32_0 = arith.constant 0 : i32
    return %arg0, %c0_i32 : i32, i32
  }
}

module attributes {stable_mosaic.version = 11 : i64} {
  func.func @_mm_bias_kernel(%arg0: i32, %arg1: i32, %arg2: memref<16x512xf32, #tpu.memory_space<vmem>>, %arg3: memref<512x512xbf16, #tpu.memory_space<vmem>>, %arg4: memref<1x512xf32, #tpu.memory_space<vmem>>, %arg5: memref<16x512xf32, #tpu.memory_space<vmem>>) attributes {dimension_semantics = [#tpu.dimension_semantics<parallel>, #tpu.dimension_semantics<parallel>], iteration_bounds = array<i64: 1, 3>, scalar_prefetch = 0 : i64, scratch_operands = 0 : i64, tpu.core_type = #tpu.core_type<tc>, window_params = [{transform_indices = @transform_0, window_bounds = array<i64: 16, 512>}, {transform_indices = @transform_1, window_bounds = array<i64: 512, 512>}, {transform_indices = @transform_2, window_bounds = array<i64: 1, 512>}, {transform_indices = @transform_3, window_bounds = array<i64: 16, 512>}]} {
    %c0 = arith.constant 0 : index
    %c0_0 = arith.constant 0 : index
    %0 = vector.load %arg2[%c0, %c0_0] : memref<16x512xf32, #tpu.memory_space<vmem>>, vector<16x512xf32>
    %1 = arith.truncf %0 : vector<16x512xf32> to vector<16x512xbf16>
    %c0_1 = arith.constant 0 : index
    %c0_2 = arith.constant 0 : index
    %2 = vector.load %arg3[%c0_1, %c0_2] : memref<512x512xbf16, #tpu.memory_space<vmem>>, vector<512x512xbf16>
    %cst = arith.constant dense<0.000000e+00> : vector<16x512xf32>
    %3 = tpu.matmul %1, %2, %cst {dimension_numbers = #tpu.dot_dimension_numbers<[1], [0], [0], [1], [0, 0, 1, 1], [], []>} : vector<16x512xbf16>, vector<512x512xbf16>, vector<16x512xf32> -> vector<16x512xf32>
    %c0_3 = arith.constant 0 : index
    %c0_4 = arith.constant 0 : index
    %4 = vector.load %arg4[%c0_3, %c0_4] : memref<1x512xf32, #tpu.memory_space<vmem>>, vector<1x512xf32>
    %5 = vector.broadcast %4 : vector<1x512xf32> to vector<16x512xf32>
    %6 = arith.addf %3, %5 : vector<16x512xf32>
    %c0_5 = arith.constant 0 : index
    %c0_6 = arith.constant 0 : index
    %7 = vector.load %arg5[%c0_5, %c0_6] : memref<16x512xf32, #tpu.memory_space<vmem>>, vector<16x512xf32>
    tpu.vector_store %arg5[%c0_5, %c0_6], %6 {strides = array<i32>} : memref<16x512xf32, #tpu.memory_space<vmem>>, vector<16x512xf32>,
    return
  }
  func.func @transform_0(%arg0: i32, %arg1: i32) -> (i32, i32) {
    %c0_i32 = arith.constant 0 : i32
    %c0_i32_0 = arith.constant 0 : i32
    return %arg0, %c0_i32 : i32, i32
  }
  func.func @transform_1(%arg0: i32, %arg1: i32) -> (i32, i32) {
    %c0_i32 = arith.constant 0 : i32
    %c0_i32_0 = arith.constant 0 : i32
    return %c0_i32, %arg1 : i32, i32
  }
  func.func @transform_2(%arg0: i32, %arg1: i32) -> (i32, i32) {
    %c0_i32 = arith.constant 0 : i32
    %c0_i32_0 = arith.constant 0 : i32
    return %c0_i32, %arg1 : i32, i32
  }
  func.func @transform_3(%arg0: i32, %arg1: i32) -> (i32, i32) {
    %c0_i32 = arith.constant 0 : i32
    return %arg0, %arg1 : i32, i32
  }
}

module attributes {stable_mosaic.version = 11 : i64} {
  func.func @_fc_res_ln_kernel(%arg0: i32, %arg1: memref<16x512xf32, #tpu.memory_space<vmem>>, %arg2: memref<512x512xbf16, #tpu.memory_space<vmem>>, %arg3: memref<1x512xf32, #tpu.memory_space<vmem>>, %arg4: memref<16x512xf32, #tpu.memory_space<vmem>>, %arg5: memref<1x512xf32, #tpu.memory_space<vmem>>, %arg6: memref<1x512xf32, #tpu.memory_space<vmem>>, %arg7: memref<16x512xf32, #tpu.memory_space<vmem>>) attributes {dimension_semantics = [#tpu.dimension_semantics<parallel>], iteration_bounds = array<i64: 1>, scalar_prefetch = 0 : i64, scratch_operands = 0 : i64, tpu.core_type = #tpu.core_type<tc>, window_params = [{transform_indices = @transform_0, window_bounds = array<i64: 16, 512>}, {pipeline_mode = #tpu.pipeline_mode<synchronous>, transform_indices = @transform_1, window_bounds = array<i64: 512, 512>}, {pipeline_mode = #tpu.pipeline_mode<synchronous>, transform_indices = @transform_2, window_bounds = array<i64: 1, 512>}, {transform_indices = @transform_3, window_bounds = array<i64: 16, 512>}, {pipeline_mode = #tpu.pipeline_mode<synchronous>, transform_indices = @transform_4, window_bounds = array<i64: 1, 512>}, {pipeline_mode = #tpu.pipeline_mode<synchronous>, transform_indices = @transform_5, window_bounds = array<i64: 1, 512>}, {transform_indices = @transform_6, window_bounds = array<i64: 16, 512>}]} {
    %c0 = arith.constant 0 : index
    %c0_0 = arith.constant 0 : index
    %0 = vector.load %arg1[%c0, %c0_0] : memref<16x512xf32, #tpu.memory_space<vmem>>, vector<16x512xf32>
    %1 = arith.truncf %0 : vector<16x512xf32> to vector<16x512xbf16>
    %c0_1 = arith.constant 0 : index
    %c0_2 = arith.constant 0 : index
    %2 = vector.load %arg2[%c0_1, %c0_2] : memref<512x512xbf16, #tpu.memory_space<vmem>>, vector<512x512xbf16>
    %cst = arith.constant dense<0.000000e+00> : vector<16x512xf32>
    %3 = tpu.matmul %1, %2, %cst {dimension_numbers = #tpu.dot_dimension_numbers<[1], [0], [0], [1], [0, 0, 1, 1], [], []>} : vector<16x512xbf16>, vector<512x512xbf16>, vector<16x512xf32> -> vector<16x512xf32>
    %c0_3 = arith.constant 0 : index
    %c0_4 = arith.constant 0 : index
    %4 = vector.load %arg3[%c0_3, %c0_4] : memref<1x512xf32, #tpu.memory_space<vmem>>, vector<1x512xf32>
    %5 = vector.broadcast %4 : vector<1x512xf32> to vector<16x512xf32>
    %6 = arith.addf %3, %5 : vector<16x512xf32>
    %c0_5 = arith.constant 0 : index
    %c0_6 = arith.constant 0 : index
    %7 = vector.load %arg4[%c0_5, %c0_6] : memref<16x512xf32, #tpu.memory_space<vmem>>, vector<16x512xf32>
    %8 = arith.addf %6, %7 : vector<16x512xf32>
    %cst_7 = arith.constant dense<0.000000e+00> : vector<16xf32>
    %9 = vector.multi_reduction <add>, %8, %cst_7 [1] : vector<16x512xf32> to vector<16xf32>
    %10 = vector.shape_cast %9 : vector<16xf32> to vector<16x1xf32>
    %cst_8 = arith.constant 5.120000e+02 : f32
    %11 = vector.broadcast %cst_8 : f32 to vector<16x1xf32>
    %12 = arith.divf %10, %11 : vector<16x1xf32>
    %13 = vector.broadcast %12 : vector<16x1xf32> to vector<16x512xf32>
    %14 = arith.subf %8, %13 : vector<16x512xf32>
    %15 = arith.mulf %14, %14 : vector<16x512xf32>
    %cst_9 = arith.constant dense<0.000000e+00> : vector<16xf32>
    %16 = vector.multi_reduction <add>, %15, %cst_9 [1] : vector<16x512xf32> to vector<16xf32>
    %17 = vector.shape_cast %16 : vector<16xf32> to vector<16x1xf32>
    %cst_10 = arith.constant 5.120000e+02 : f32
    %18 = vector.broadcast %cst_10 : f32 to vector<16x1xf32>
    %19 = arith.divf %17, %18 : vector<16x1xf32>
    %cst_11 = arith.constant 9.99999974E-6 : f32
    %20 = vector.broadcast %cst_11 : f32 to vector<16x1xf32>
    %21 = arith.addf %19, %20 : vector<16x1xf32>
    %22 = math.rsqrt %21 : vector<16x1xf32>
    %23 = vector.broadcast %22 : vector<16x1xf32> to vector<16x512xf32>
    %24 = arith.mulf %14, %23 : vector<16x512xf32>
    %c0_12 = arith.constant 0 : index
    %c0_13 = arith.constant 0 : index
    %25 = vector.load %arg5[%c0_12, %c0_13] : memref<1x512xf32, #tpu.memory_space<vmem>>, vector<1x512xf32>
    %26 = vector.broadcast %25 : vector<1x512xf32> to vector<16x512xf32>
    %27 = arith.mulf %24, %26 : vector<16x512xf32>
    %c0_14 = arith.constant 0 : index
    %c0_15 = arith.constant 0 : index
    %28 = vector.load %arg6[%c0_14, %c0_15] : memref<1x512xf32, #tpu.memory_space<vmem>>, vector<1x512xf32>
    %29 = vector.broadcast %28 : vector<1x512xf32> to vector<16x512xf32>
    %30 = arith.addf %27, %29 : vector<16x512xf32>
    %c0_16 = arith.constant 0 : index
    %c0_17 = arith.constant 0 : index
    %31 = vector.load %arg7[%c0_16, %c0_17] : memref<16x512xf32, #tpu.memory_space<vmem>>, vector<16x512xf32>
    tpu.vector_store %arg7[%c0_16, %c0_17], %30 {strides = array<i32>} : memref<16x512xf32, #tpu.memory_space<vmem>>, vector<16x512xf32>,
    return
  }
  func.func @transform_0(%arg0: i32) -> (i32, i32) {
    %c0_i32 = arith.constant 0 : i32
    %c0_i32_0 = arith.constant 0 : i32
    return %arg0, %c0_i32 : i32, i32
  }
  func.func @transform_1(%arg0: i32) -> (i32, i32) {
    %c0_i32 = arith.constant 0 : i32
    %c0_i32_0 = arith.constant 0 : i32
    %c0_i32_1 = arith.constant 0 : i32
    return %c0_i32, %c0_i32_0 : i32, i32
  }
  func.func @transform_2(%arg0: i32) -> (i32, i32) {
    %c0_i32 = arith.constant 0 : i32
    %c0_i32_0 = arith.constant 0 : i32
    %c0_i32_1 = arith.constant 0 : i32
    return %c0_i32, %c0_i32_0 : i32, i32
  }
  func.func @transform_3(%arg0: i32) -> (i32, i32) {
    %c0_i32 = arith.constant 0 : i32
    %c0_i32_0 = arith.constant 0 : i32
    return %arg0, %c0_i32 : i32, i32
  }
  func.func @transform_4(%arg0: i32) -> (i32, i32) {
    %c0_i32 = arith.constant 0 : i32
    %c0_i32_0 = arith.constant 0 : i32
    %c0_i32_1 = arith.constant 0 : i32
    return %c0_i32, %c0_i32_0 : i32, i32
  }
  func.func @transform_5(%arg0: i32) -> (i32, i32) {
    %c0_i32 = arith.constant 0 : i32
    %c0_i32_0 = arith.constant 0 : i32
    %c0_i32_1 = arith.constant 0 : i32
    return %c0_i32, %c0_i32_0 : i32, i32
  }
  func.func @transform_6(%arg0: i32) -> (i32, i32) {
    %c0_i32 = arith.constant 0 : i32
    %c0_i32_0 = arith.constant 0 : i32
    return %arg0, %c0_i32 : i32, i32
  }
}

</mosaic_0001>

<llo_original>
// kernel: encoder_forward.7
$region0: #{encoder_forward.7}
  #allocation0 [shape = 'u32[]', space=smem, size = 0x4, offset = 0x4, fixed_abs, tag = 'smem constant byte address 0x4 - core index']
  #allocation1 [shape = 'u32[144,128]{1,0:T(1,128)}', space=vmem, size = 0x12000, scoped, tag = 'internal scratch']
  %s0 = inlined_call_operand.hbm [shape: f32[16,32], index: 0, kind: input, shape index: {}]
  %s1 = inlined_call_operand.hbm [shape: bf16[32,512], index: 1, kind: input, shape index: {}]
  %s2 = inlined_call_operand.hbm [shape: f32[1,512], index: 2, kind: input, shape index: {}]
  %s3 = inlined_call_operand.vmem [shape: f32[16,512], index: 3, kind: output, shape index: {}]
  %s4 = sld [smem:[#allocation0]]
  $region34: #{encoder_forward.7} parent=0
    _
  %s6 = ssub.s32 1, %s4
  %s7 = scalar_select 0, %s6, %s4
  $region1: #{encoder_forward.7} parent=0
    #allocation2 [shape = 'u8[8192]{0}', space=vmem, size = 0x2000, scoped, tag = 'input window, operand 0, single buffered']
    #allocation3 [shape = 's32[1]{0}', space=sflag, size = 0x4, scoped, tag = 'scoped memory for encoder_forward.7']
    #allocation4 [shape = 'u8[32768]{0}', space=vmem, size = 0x8000, scoped, tag = 'input window, operand 1, single buffered']
    #allocation5 [shape = 's32[1]{0}', space=sflag, size = 0x4, scoped, tag = 'scoped memory for encoder_forward.7']
    #allocation6 [shape = 'u8[2048]{0}', space=vmem, size = 0x800, scoped, tag = 'input window, operand 2, single buffered']
    %8 = vsyncpa [#allocation3], 0
    %9 = vsyncpa [#allocation5], 0
    // Predicated region
    $region2: #{encoder_forward.7} parent=1 // pred_check
      _
    $region3: #{encoder_forward.7} parent=1 // pred_check_branch
      %11 = sbr.rel (0) target = $region5
    $region4: #{encoder_forward.7} parent=1 // pred_region
      %s13 = ssub.s32 256, 256
      %14 = vsyncadd [#allocation3], %s13
      %s15 = sshll.u32 [#allocation2], 4
      %s16 = int_to_ptr.vmem [resolvable:$true] %s15
      %21 = dma.hbm_to_vmem [thread:$0]  %s0, 256, %s16, [#allocation3], 128, 128, 8
    $region5: #{encoder_forward.7} parent=1 // pred_fallthru
      _
    // Predicated region
    $region6: #{encoder_forward.7} parent=1 // pred_check
      _
    $region7: #{encoder_forward.7} parent=1 // pred_check_branch
      %23 = sbr.rel (0) target = $region9
    $region8: #{encoder_forward.7} parent=1 // pred_region
      %s25 = ssub.s32 1024, 1024
      %26 = vsyncadd [#allocation5], %s25
      %s27 = sshll.u32 [#allocation4], 4
      %s28 = int_to_ptr.vmem [resolvable:$true] %s27
      %33 = dma.hbm_to_vmem [thread:$0]  %s1, 1024, %s28, [#allocation5], 256, 256, 16
    $region9: #{encoder_forward.7} parent=1 // pred_fallthru
      _
    // Predicated region
    $region10: #{encoder_forward.7} parent=1 // pred_check
      _
    $region11: #{encoder_forward.7} parent=1 // pred_check_branch
      %35 = sbr.rel (0) target = $region13
    $region12: #{encoder_forward.7} parent=1 // pred_region
      %s37 = ssub.s32 64, 64
      %38 = vsyncadd [#allocation5], %s37
      %s40 = sshll.u32 [#allocation6], 4
      %s41 = int_to_ptr.vmem [resolvable:$true] %s40
      %43 = dma.hbm_to_vmem [thread:$0]  %s2, 64, %s41, [#allocation5]
    $region13: #{encoder_forward.7} parent=1 // pred_fallthru
      _
    // Predicated region
    $region14: #{encoder_forward.7} parent=1 // pred_check
      _
    $region15: #{encoder_forward.7} parent=1 // pred_check_branch
      %45 = sbr.rel (0) target = $region17
    $region16: #{encoder_forward.7} parent=1 // pred_region
      %46 = dma.done [#allocation3], 256
    $region17: #{encoder_forward.7} parent=1 // pred_fallthru
      _
    // Predicated region
    $region18: #{encoder_forward.7} parent=1 // pred_check
      _
    $region19: #{encoder_forward.7} parent=1 // pred_check_branch
      %48 = sbr.rel (0) target = $region21
    $region20: #{encoder_forward.7} parent=1 // pred_region
      %49 = dma.done [#allocation5], 1024
    $region21: #{encoder_forward.7} parent=1 // pred_fallthru
      _
    // Predicated region
    $region22: #{encoder_forward.7} parent=1 // pred_check
      _
    $region23: #{encoder_forward.7} parent=1 // pred_check_branch
      %51 = sbr.rel (0) target = $region25
    $region24: #{encoder_forward.7} parent=1 // pred_region
      %52 = dma.done [#allocation5], 64
    $region25: #{encoder_forward.7} parent=1 // pred_fallthru
      _
    %v54 = vld [vmem:[#allocation2] sm:$0xff]
    %v55 = vld [vmem:[#allocation2 + $0x8] sm:$0xff]
    %v56 = vpack.c.bf16 %v55, %v54
    %v57 = vld [vmem:[#allocation4] sm:$0xff]
    %v58 = vld [vmem:[#allocation4 + $0x8] sm:$0xff]
    %v59 = vld [vmem:[#allocation4 + $0x10] sm:$0xff]
    %v60 = vld [vmem:[#allocation4 + $0x18] sm:$0xff]
    %v61 = vld [vmem:[#allocation4 + $0x20] sm:$0xff]
    %v62 = vld [vmem:[#allocation4 + $0x28] sm:$0xff]
    %v63 = vld [vmem:[#allocation4 + $0x30] sm:$0xff]
    %v64 = vld [vmem:[#allocation4 + $0x38] sm:$0xff]
    %v65 = vld [vmem:[#allocation6] sm:$0xf]
    %v67 = vlaneseq
    %v68 = vshrl.u32 %v67, 7
    %v69 = vsub.s32 0, %v68
    %v70 = vrot.slane %v65, %v69
    %v71 = vlaneseq
    %v72 = vshrl.u32 %v71, 7
    %v73 = vsub.s32 1, %v72
    %v74 = vrot.slane %v65, %v73
    %v75 = vlaneseq
    %v76 = vshrl.u32 %v75, 7
    %v77 = vsub.s32 2, %v76
    %v78 = vrot.slane %v65, %v77
    %v79 = vlaneseq
    %v80 = vshrl.u32 %v79, 7
    %v81 = vsub.s32 3, %v80
    %v82 = vrot.slane %v65, %v81
    %v95 = vunpack.c.l.b16 %v57
    %v96 = vunpack.c.h.b16 %v57
    %v97 = vunpack.c.l.b16 %v58
    %v98 = vunpack.c.h.b16 %v58
    %v99 = vunpack.c.l.b16 %v59
    %v100 = vunpack.c.h.b16 %v59
    %v101 = vunpack.c.l.b16 %v60
    %v102 = vunpack.c.h.b16 %v60
    %v103 = vunpack.c.l.b16 %v61
    %v104 = vunpack.c.h.b16 %v61
    %v105 = vunpack.c.l.b16 %v62
    %v106 = vunpack.c.h.b16 %v62
    %v107 = vunpack.c.l.b16 %v63
    %v108 = vunpack.c.h.b16 %v63
    %v109 = vunpack.c.l.b16 %v64
    %v110 = vunpack.c.h.b16 %v64
    %v111 = vpack.c.b16 %v99, %v95
    %v112 = vpack.c.b16 %v100, %v96
    %v113 = vpack.c.b16 %v101, %v97
    %v114 = vpack.c.b16 %v102, %v98
    %v115 = vpack.c.b16 %v107, %v103
    %v116 = vpack.c.b16 %v108, %v104
    %v117 = vpack.c.b16 %v109, %v105
    %v118 = vpack.c.b16 %v110, %v106
    %vm127 = vcmask 261120
    %v129 = vsel %vm127, %v56, 0
    %131 = vmatprep.subr.bf16.mxu0 0
    %132 = vmatpush1.bf16.msra.mxu0 0
    %133 = vmatprep.subr.bf16.mxu0 0
    %134 = vmatpush1.bf16.msra.mxu0 0
    %135 = vmatprep.subr.bf16.mxu0 0
    %136 = vmatpush1.bf16.msra.mxu0 0
    %137 = vmatprep.subr.bf16.mxu0 0
    %138 = vmatpush1.bf16.msra.mxu0 0
    %139 = vmatprep.subr.bf16.mxu0 0
    %140 = vmatpush1.bf16.msra.mxu0 0
    %141 = vmatprep.subr.bf16.mxu0 0
    %142 = vmatpush1.bf16.msra.mxu0 0
    %143 = vmatprep.subr.bf16.mxu0 %v116
    %144 = vmatpush1.bf16.msra.mxu0 %v115
    %145 = vmatprep.subr.bf16.mxu0 %v112
    %146 = vmatpush1.bf16.msra.mxu0 %v111
    %147 = vmatprep.subr.bf16.mxu0 0
    %148 = vmatpush2.bf16.msra.mxu0 0
    %149 = vmatprep.subr.bf16.mxu0 0
    %150 = vmatpush2.bf16.msra.mxu0 0
    %151 = vmatprep.subr.bf16.mxu0 0
    %152 = vmatpush2.bf16.msra.mxu0 0
    %153 = vmatprep.subr.bf16.mxu0 0
    %154 = vmatpush2.bf16.msra.mxu0 0
    %155 = vmatprep.subr.bf16.mxu0 0
    %156 = vmatpush2.bf16.msra.mxu0 0
    %157 = vmatprep.subr.bf16.mxu0 0
    %158 = vmatpush2.bf16.msra.mxu0 0
    %159 = vmatprep.subr.bf16.mxu0 0
    %160 = vmatpush2.bf16.msra.mxu0 0
    %161 = vmatprep.subr.bf16.mxu0 0
    %162 = vmatpush2.bf16.msra.mxu0 0
    %163 = vmatprep.mubr.bf16.mxu0 0
    %164 = vmatmul.mubr.bf16.gmra.mxu0 %v129
    %v165 = vpop.f32.mrf.mxu0
    %v166 = vadd.f32 %v70, %v165
    %v167 = vpop.f32.mrf.mxu0
    %v168 = vadd.f32 %v74, %v167
    %v169 = vpop.f32.mrf.mxu0
    %v170 = vadd.f32 %v70, %v169
    %v171 = vpop.f32.mrf.mxu0
    %v172 = vadd.f32 %v74, %v171
    %173 = vdwg.mxu0
    %174 = vmatprep.subr.bf16.mxu0 0
    %175 = vmatpush1.bf16.msra.mxu0 0
    %176 = vmatprep.subr.bf16.mxu0 0
    %177 = vmatpush1.bf16.msra.mxu0 0
    %178 = vmatprep.subr.bf16.mxu0 0
    %179 = vmatpush1.bf16.msra.mxu0 0
    %180 = vmatprep.subr.bf16.mxu0 0
    %181 = vmatpush1.bf16.msra.mxu0 0
    %182 = vmatprep.subr.bf16.mxu0 0
    %183 = vmatpush1.bf16.msra.mxu0 0
    %184 = vmatprep.subr.bf16.mxu0 0
    %185 = vmatpush1.bf16.msra.mxu0 0
    %186 = vmatprep.subr.bf16.mxu0 %v118
    %187 = vmatpush1.bf16.msra.mxu0 %v117
    %188 = vmatprep.subr.bf16.mxu0 %v114
    %189 = vmatpush1.bf16.msra.mxu0 %v113
    %190 = vmatprep.subr.bf16.mxu0 0
    %191 = vmatpush2.bf16.msra.mxu0 0
    %192 = vmatprep.subr.bf16.mxu0 0
    %193 = vmatpush2.bf16.msra.mxu0 0
    %194 = vmatprep.subr.bf16.mxu0 0
    %195 = vmatpush2.bf16.msra.mxu0 0
    %196 = vmatprep.subr.bf16.mxu0 0
    %197 = vmatpush2.bf16.msra.mxu0 0
    %198 = vmatprep.subr.bf16.mxu0 0
    %199 = vmatpush2.bf16.msra.mxu0 0
    %200 = vmatprep.subr.bf16.mxu0 0
    %201 = vmatpush2.bf16.msra.mxu0 0
    %202 = vmatprep.subr.bf16.mxu0 0
    %203 = vmatpush2.bf16.msra.mxu0 0
    %204 = vmatprep.subr.bf16.mxu0 0
    %205 = vmatpush2.bf16.msra.mxu0 0
    %206 = vmatprep.mubr.bf16.mxu0 0
    %207 = vmatmul.mubr.bf16.gmra.mxu0 %v129
    %v208 = vpop.f32.mrf.mxu0
    %v209 = vadd.f32 %v78, %v208
    %v210 = vpop.f32.mrf.mxu0
    %v211 = vadd.f32 %v82, %v210
    %v212 = vpop.f32.mrf.mxu0
    %v213 = vadd.f32 %v78, %v212
    %v214 = vpop.f32.mrf.mxu0
    %v215 = vadd.f32 %v82, %v214
    %216 = vdwg.mxu0
    %217 = vst [vmem:[%s3] sm:$0xff] %v166
    %218 = vst [vmem:[%s3 + $0x8] sm:$0xff] %v168
    %219 = vst [vmem:[%s3 + $0x10] sm:$0xff] %v209
    %220 = vst [vmem:[%s3 + $0x18] sm:$0xff] %v211
    %221 = vst [vmem:[%s3 + $0x20] sm:$0xff] %v170
    %222 = vst [vmem:[%s3 + $0x28] sm:$0xff] %v172
    %223 = vst [vmem:[%s3 + $0x30] sm:$0xff] %v213
    %224 = vst [vmem:[%s3 + $0x38] sm:$0xff] %v215
    // Predicated region
    $region26: #{encoder_forward.7} parent=1 // pred_check
      _
    $region27: #{encoder_forward.7} parent=1 // pred_check_branch
      %226 = sbr.rel (0) target = $region29
    $region28: #{encoder_forward.7} parent=1 // pred_region
      _
    $region29: #{encoder_forward.7} parent=1 // pred_fallthru
      _
    // Predicated region
    $region30: #{encoder_forward.7} parent=1 // pred_check
      _
    $region31: #{encoder_forward.7} parent=1 // pred_check_branch
      %228 = sbr.rel (0) target = $region33
    $region32: #{encoder_forward.7} parent=1 // pred_region
      _
    $region33: #{encoder_forward.7} parent=1 // pred_fallthru
      _
    %229 = vsyncpa [#allocation3], 1
    %230 = vsyncpa [#allocation5], 1

// kernel: encoder_forward.8
$region0: #{encoder_forward.8}
  #allocation0 [shape = 'u32[]', space=smem, size = 0x4, offset = 0x4, fixed_abs, tag = 'smem constant byte address 0x4 - core index']
  #allocation1 [shape = 'u32[144,128]{1,0:T(1,128)}', space=vmem, size = 0x12000, scoped, tag = 'internal scratch']
  %s0 = inlined_call_operand.vmem [shape: f32[16,512], index: 0, kind: input, shape index: {}]
  %s1 = inlined_call_operand.hbm [shape: bf16[512,1536], index: 1, kind: input, shape index: {}]
  %s2 = inlined_call_operand.vmem [shape: f32[1,1536], index: 2, kind: input, shape index: {}]
  %s3 = inlined_call_operand.vmem [shape: f32[16,1536], index: 3, kind: output, shape index: {}]
  %s4 = sld [smem:[#allocation0]]
  $region68: #{encoder_forward.8} parent=0
    _
  %s6 = ssub.s32 1, %s4
  %s7 = scalar_select 0, %s6, %s4
  $region1: #{encoder_forward.8} parent=0
    #allocation2 [shape = 'u8[1048576]{0}', space=vmem, size = 0x100000, scoped, tag = 'input window, operand 1']
    #allocation3 [shape = 's32[2]{0}', space=sflag, size = 0x8, scoped, tag = 'scoped memory for encoder_forward.8']
    #allocation4 [shape = 'u8[65536]{0}', space=vmem, size = 0x10000, scoped, tag = 'output window, operand 0']
    %8 = vsyncpa [#allocation3], 0
    %s9 = scalar_lea.sflag [#allocation3], 1
    %10 = vsyncpa %s9, 0
    loop: start=0, step=1, limit=5
    $region2: #{encoder_forward.8} parent=1 // loop_pre_header
      _
    $region3: #{encoder_forward.8} parent=1 // loop_header
      %s12 = sphi 0, %s16
      %p13 = scmp.ge.s32.totalorder %s12, 5
      %s19 = sphi 0, %s31
      %s20 = sphi 0, %s27
      %s21 = sphi 0, %s19
      %s22 = sphi 0, %s20
      %s23 = sphi 0, %s21
      %s24 = sphi 0, %s22
      %s34 = sphi 0, %s36
      %s37 = sphi 0, %s34
      %s38 = sphi 0, %s37
      %s54 = sphi 0, %s38
      %s60 = sphi 0, %s62
      %s63 = sphi 0, %s60
      %s64 = sphi 0, %s63
      %s80 = sphi 0, %s64
      %s86 = sphi 0, %s88
      %s89 = sphi 0, %s86
      %s90 = sphi 0, %s89
      %s106 = sphi 0, %s90
      %s114 = sphi 0, %s116
      %s117 = sphi 0, %s114
      %s118 = sphi 0, %s117
      %s134 = sphi 0, %s118
    $region4: #{encoder_forward.8} parent=1 // loop_header_branch
      %15 = sbr.rel (%p13) target = $region8
    $region5: #{encoder_forward.8} parent=1 // loop_body
      %s17 = ssub.s32 %s12, 1
      %s18 = ssub.s32 %s12, 2
      %s25 = sadd.s32 1, %s20
      %p26 = scmp.ge.s32.totalorder %s25, 3
      %s27 = scalar_select %p26, 0, %s25
      %s28 = sadd.s32 1, %s19
      %s29 = scalar_select %p26, %s28, %s19
      %p30 = scmp.ge.s32.totalorder %s29, 1
      %s31 = scalar_select %p30, 0, %s29
      %s32 = ssub.s32 %s19, %s31
      %p33 = scmp.eq.s32.totalorder %s32, 0
      %s35 = sadd.s32 %s34, 1
      %s36 = scalar_select %p33, %s34, %s35
      %p39 = pneg %p33
      %p40 = scmp.eq.s32.totalorder %s12, 2
      %p41 = por %p39, %p40
      %p42 = scmp.ne.s32.totalorder %s34, %s37
      %p43 = scmp.eq.s32.totalorder %s12, 0
      %p44 = por %p42, %p43
      %p45 = scmp.ne.s32.totalorder %s34, %s37
      %p46 = scmp.eq.s32.totalorder %s17, 2
      %p47 = por %p45, %p46
      %p48 = scmp.ne.s32.totalorder %s37, %s38
      %p49 = scmp.eq.s32.totalorder %s17, 0
      %p50 = por %p48, %p49
      %p51 = scmp.ne.s32.totalorder %s37, %s38
      %p52 = scmp.eq.s32.totalorder %s18, 2
      %p53 = por %p51, %p52
      %p55 = scmp.ne.s32.totalorder %s38, %s54
      %p56 = scmp.eq.s32.totalorder %s18, 0
      %p57 = por %p55, %p56
      %s58 = ssub.s32 %s20, %s27
      %p59 = scmp.eq.s32.totalorder %s58, 0
      %s61 = sadd.s32 %s60, 1
      %s62 = scalar_select %p59, %s60, %s61
      %p65 = pneg %p59
      %p66 = scmp.eq.s32.totalorder %s12, 2
      %p67 = por %p65, %p66
      %p68 = scmp.ne.s32.totalorder %s60, %s63
      %p69 = scmp.eq.s32.totalorder %s12, 0
      %p70 = por %p68, %p69
      %p71 = scmp.ne.s32.totalorder %s60, %s63
      %p72 = scmp.eq.s32.totalorder %s17, 2
      %p73 = por %p71, %p72
      %p74 = scmp.ne.s32.totalorder %s63, %s64
      %p75 = scmp.eq.s32.totalorder %s17, 0
      %p76 = por %p74, %p75
      %p77 = scmp.ne.s32.totalorder %s63, %s64
      %p78 = scmp.eq.s32.totalorder %s18, 2
      %p79 = por %p77, %p78
      %p81 = scmp.ne.s32.totalorder %s64, %s80
      %p82 = scmp.eq.s32.totalorder %s18, 0
      %p83 = por %p81, %p82
      %s84 = ssub.s32 %s20, %s27
      %p85 = scmp.eq.s32.totalorder %s84, 0
      %s87 = sadd.s32 %s86, 1
      %s88 = scalar_select %p85, %s86, %s87
      %p91 = pneg %p85
      %p92 = scmp.eq.s32.totalorder %s12, 2
      %p93 = por %p91, %p92
      %p94 = scmp.ne.s32.totalorder %s86, %s89
      %p95 = scmp.eq.s32.totalorder %s12, 0
      %p96 = por %p94, %p95
      %p97 = scmp.ne.s32.totalorder %s86, %s89
      %p98 = scmp.eq.s32.totalorder %s17, 2
      %p99 = por %p97, %p98
      %p100 = scmp.ne.s32.totalorder %s89, %s90
      %p101 = scmp.eq.s32.totalorder %s17, 0
      %p102 = por %p100, %p101
      %p103 = scmp.ne.s32.totalorder %s89, %s90
      %p104 = scmp.eq.s32.totalorder %s18, 2
      %p105 = por %p103, %p104
      %p107 = scmp.ne.s32.totalorder %s90, %s106
      %p108 = scmp.eq.s32.totalorder %s18, 0
      %p109 = por %p107, %p108
      %s110 = ssub.s32 %s19, %s31
      %s111 = ssub.s32 %s20, %s27
      %s112 = sor.u32 %s110, %s111
      %p113 = scmp.eq.s32.totalorder %s112, 0
      %s115 = sadd.s32 %s114, 1
      %s116 = scalar_select %p113, %s114, %s115
      %p119 = pneg %p113
      %p120 = scmp.eq.s32.totalorder %s12, 2
      %p121 = por %p119, %p120
      %p122 = scmp.ne.s32.totalorder %s114, %s117
      %p123 = scmp.eq.s32.totalorder %s12, 0
      %p124 = por %p122, %p123
      %p125 = scmp.ne.s32.totalorder %s114, %s117
      %p126 = scmp.eq.s32.totalorder %s17, 2
      %p127 = por %p125, %p126
      %p128 = scmp.ne.s32.totalorder %s117, %s118
      %p129 = scmp.eq.s32.totalorder %s17, 0
      %p130 = por %p128, %p129
      %p131 = scmp.ne.s32.totalorder %s117, %s118
      %p132 = scmp.eq.s32.totalorder %s18, 2
      %p133 = por %p131, %p132
      %p135 = scmp.ne.s32.totalorder %s118, %s134
      %p136 = scmp.eq.s32.totalorder %s18, 0
      %p137 = por %p135, %p136
      %p138 = scmp.le.s32.totalorder 1, %s12
      %p139 = scmp.lt.s32.totalorder %s12, 4
      %p140 = pnand %p138, %p139
      %p141 = pneg %p140
      // Predicated region
      $region9: #{encoder_forward.8} parent=5 // pred_check
        _
      $region10: #{encoder_forward.8} parent=5 // pred_check_branch
        %143 = sbr.rel (%p140) target = $region12
      $region11: #{encoder_forward.8} parent=5 // pred_region
        %s144 = ssub.s32 %s12, 1
        // Predicated region
        $region13: #{encoder_forward.8} parent=11 // pred_check
          %p145 = pneg %p50
        $region14: #{encoder_forward.8} parent=11 // pred_check_branch
          %147 = sbr.rel (%p145) target = $region16
        $region15: #{encoder_forward.8} parent=11 // pred_region
          %s148 = smul.u32 2, %s21
          %p149 = scmp.lt.s32.totalorder %s148, 1
          %s150 = scalar_select %p149, %s148, 1
          %s151 = smul.addr %s150, 4
          %s152 = smul.addr %s151, 8
          %s153 = scalar_lea.vmem %s0, %s152
          %s154 = smul.u32 2, %s21
        $region16: #{encoder_forward.8} parent=11 // pred_fallthru
          _
      $region12: #{encoder_forward.8} parent=5 // pred_fallthru
        _
      %p155 = scmp.lt.s32.totalorder %s12, 3
      // Predicated region
      $region17: #{encoder_forward.8} parent=5 // pred_check
        %p156 = pneg %p155
      $region18: #{encoder_forward.8} parent=5 // pred_check_branch
        %158 = sbr.rel (%p156) target = $region20
      $region19: #{encoder_forward.8} parent=5 // pred_region
        // Predicated region
        $region21: #{encoder_forward.8} parent=19 // pred_check
          %p159 = pneg %p70
        $region22: #{encoder_forward.8} parent=19 // pred_check_branch
          %161 = sbr.rel (%p159) target = $region24
        $region23: #{encoder_forward.8} parent=19 // pred_region
          %s162 = sand.u32 %s60, 1
          %s163 = scalar_lea.sflag [#allocation3], %s162
          %s164 = sand.u32 %s60, 1
          %s165 = smul.addr %s164, 1024
          %s166 = scalar_lea.vmem [#allocation2], %s165
          %s167 = smul.u32 4, %s20
          %s169 = ssub.s32 16384, 16384
          %170 = vsyncadd %s163, %s169
          %s171 = smul.addr %s167, 64
          %s172 = scalar_lea.hbm %s1, %s171
          %s173 = sshll.u32 %s166, 4
          %s174 = int_to_ptr.vmem [resolvable:$true] %s173
          %179 = dma.hbm_to_vmem [thread:$0]  %s172, 16384, %s174, %s163, 768, 256, 16
        $region24: #{encoder_forward.8} parent=19 // pred_fallthru
          _
        // Predicated region
        $region25: #{encoder_forward.8} parent=19 // pred_check
          %p180 = pneg %p96
        $region26: #{encoder_forward.8} parent=19 // pred_check_branch
          %182 = sbr.rel (%p180) target = $region28
        $region27: #{encoder_forward.8} parent=19 // pred_region
          %s183 = smul.u32 4, %s20
          %p184 = scmp.lt.s32.totalorder %s183, 11
          %s185 = scalar_select %p184, %s183, 11
          %s186 = scalar_lea.vmem %s2, %s185
          %s187 = smul.u32 4, %s20
        $region28: #{encoder_forward.8} parent=19 // pred_fallthru
          _
      $region20: #{encoder_forward.8} parent=5 // pred_fallthru
        _
      %p188 = scmp.le.s32.totalorder 1, %s12
      %p189 = scmp.lt.s32.totalorder %s12, 4
      %p190 = pnand %p188, %p189
      %p191 = pneg %p190
      // Predicated region
      $region29: #{encoder_forward.8} parent=5 // pred_check
        _
      $region30: #{encoder_forward.8} parent=5 // pred_check_branch
        %193 = sbr.rel (%p190) target = $region32
      $region31: #{encoder_forward.8} parent=5 // pred_region
        %s194 = ssub.s32 %s12, 1
        %s195 = sand.u32 %s63, 1
        %s196 = scalar_lea.sflag [#allocation3], %s195
        %s197 = sand.u32 %s63, 1
        %s198 = smul.addr %s197, 1024
        %s199 = scalar_lea.vmem [#allocation2], %s198
        // Predicated region
        $region33: #{encoder_forward.8} parent=31 // pred_check
          %p200 = pneg %p76
        $region34: #{encoder_forward.8} parent=31 // pred_check_branch
          %202 = sbr.rel (%p200) target = $region36
        $region35: #{encoder_forward.8} parent=31 // pred_region
          %203 = dma.done %s196, 16384
        $region36: #{encoder_forward.8} parent=31 // pred_fallthru
          _
        %s204 = smul.u32 2, %s21
        %p205 = scmp.lt.s32.totalorder %s204, 1
        %s206 = scalar_select %p205, %s204, 1
        %s207 = smul.addr %s206, 4
        %s208 = smul.addr %s207, 8
        %s209 = scalar_lea.vmem %s0, %s208
        %p210 = pneg %p50
        %p211 = pneg %p47
        %s212 = sand.u32 %s63, 1
        %s213 = scalar_lea.sflag [#allocation3], %s212
        %s214 = sand.u32 %s63, 1
        %s215 = smul.addr %s214, 1024
        %s216 = scalar_lea.vmem [#allocation2], %s215
        %p217 = pneg %p76
        %p218 = pneg %p73
        %s219 = smul.u32 4, %s22
        %p220 = scmp.lt.s32.totalorder %s219, 11
        %s221 = scalar_select %p220, %s219, 11
        %s222 = scalar_lea.vmem %s2, %s221
        %p223 = pneg %p102
        %p224 = pneg %p99
        %p225 = pneg %p130
        %p226 = pneg %p127
        %s227 = sand.u32 %s117, 1
        %s228 = sand.u32 %s117, 1
        %s229 = smul.addr %s228, 64
        %s230 = scalar_lea.vmem [#allocation4], %s229
        %s231 = smul.u32 2, %s21
        %p232 = scmp.lt.s32.totalorder %s231, 1
        %s233 = scalar_select %p232, %s231, 1
        %s234 = smul.addr %s233, 4
        %s235 = smul.addr %s234, 8
        %s236 = scalar_lea.vmem %s0, %s235
        %s237 = smul.u32 2, %s21
        %s238 = smul.u32 4, %s22
        %s239 = smul.u32 4, %s22
        %p240 = scmp.lt.s32.totalorder %s239, 11
        %s241 = scalar_select %p240, %s239, 11
        %s242 = scalar_lea.vmem %s2, %s241
        %s243 = smul.u32 4, %s22
        %s244 = smul.u32 2, %s21
        %s245 = smul.u32 4, %s22
        %v246 = vld [vmem:[%s236] sm:$0xff]
        %v247 = vld [vmem:[%s236 + $0x8] sm:$0xff]
        %v248 = vld [vmem:[%s236 + $0x10] sm:$0xff]
        %v249 = vld [vmem:[%s236 + $0x18] sm:$0xff]
        %v250 = vld [vmem:[%s236 + $0x20] sm:$0xff]
        %v251 = vld [vmem:[%s236 + $0x28] sm:$0xff]
        %v252 = vld [vmem:[%s236 + $0x30] sm:$0xff]
        %v253 = vld [vmem:[%s236 + $0x38] sm:$0xff]
        %v254 = vpack.c.bf16 %v250, %v246
        %v255 = vpack.c.bf16 %v251, %v247
        %v256 = vpack.c.bf16 %v252, %v248
        %v257 = vpack.c.bf16 %v253, %v249
        %v258 = vld [vmem:[%s199] sm:$0xff]
        %v259 = vld [vmem:[%s199 + $0x8] sm:$0xff]
        %v260 = vld [vmem:[%s199 + $0x10] sm:$0xff]
        %v261 = vld [vmem:[%s199 + $0x18] sm:$0xff]
        %v262 = vld [vmem:[%s199 + $0x20] sm:$0xff]
        %v263 = vld [vmem:[%s199 + $0x28] sm:$0xff]
        %v264 = vld [vmem:[%s199 + $0x30] sm:$0xff]
        %v265 = vld [vmem:[%s199 + $0x38] sm:$0xff]
        %v266 = vld [vmem:[%s199 + $0x40] sm:$0xff]
        %v267 = vld [vmem:[%s199 + $0x48] sm:$0xff]
        %v268 = vld [vmem:[%s199 + $0x50] sm:$0xff]
        %v269 = vld [vmem:[%s199 + $0x58] sm:$0xff]
        %v270 = vld [vmem:[%s199 + $0x60] sm:$0xff]
        %v271 = vld [vmem:[%s199 + $0x68] sm:$0xff]
        %v272 = vld [vmem:[%s199 + $0x70] sm:$0xff]
        %v273 = vld [vmem:[%s199 + $0x78] sm:$0xff]
        %v274 = vld [vmem:[%s199 + $0x80] sm:$0xff]
        %v275 = vld [vmem:[%s199 + $0x88] sm:$0xff]
        %v276 = vld [vmem:[%s199 + $0x90] sm:$0xff]
        %v277 = vld [vmem:[%s199 + $0x98] sm:$0xff]
        %v278 = vld [vmem:[%s199 + $0xa0] sm:$0xff]
        %v279 = vld [vmem:[%s199 + $0xa8] sm:$0xff]
        %v280 = vld [vmem:[%s199 + $0xb0] sm:$0xff]
        %v281 = vld [vmem:[%s199 + $0xb8] sm:$0xff]
        %v282 = vld [vmem:[%s199 + $0xc0] sm:$0xff]
        %v283 = vld [vmem:[%s199 + $0xc8] sm:$0xff]
        %v284 = vld [vmem:[%s199 + $0xd0] sm:$0xff]
        %v285 = vld [vmem:[%s199 + $0xd8] sm:$0xff]
        %v286 = vld [vmem:[%s199 + $0xe0] sm:$0xff]
        %v287 = vld [vmem:[%s199 + $0xe8] sm:$0xff]
        %v288 = vld [vmem:[%s199 + $0xf0] sm:$0xff]
        %v289 = vld [vmem:[%s199 + $0xf8] sm:$0xff]
        %v290 = vld [vmem:[%s199 + $0x100] sm:$0xff]
        %v291 = vld [vmem:[%s199 + $0x108] sm:$0xff]
        %v292 = vld [vmem:[%s199 + $0x110] sm:$0xff]
        %v293 = vld [vmem:[%s199 + $0x118] sm:$0xff]
        %v294 = vld [vmem:[%s199 + $0x120] sm:$0xff]
        %v295 = vld [vmem:[%s199 + $0x128] sm:$0xff]
        %v296 = vld [vmem:[%s199 + $0x130] sm:$0xff]
        %v297 = vld [vmem:[%s199 + $0x138] sm:$0xff]
        %v298 = vld [vmem:[%s199 + $0x140] sm:$0xff]
        %v299 = vld [vmem:[%s199 + $0x148] sm:$0xff]
        %v300 = vld [vmem:[%s199 + $0x150] sm:$0xff]
        %v301 = vld [vmem:[%s199 + $0x158] sm:$0xff]
        %v302 = vld [vmem:[%s199 + $0x160] sm:$0xff]
        %v303 = vld [vmem:[%s199 + $0x168] sm:$0xff]
        %v304 = vld [vmem:[%s199 + $0x170] sm:$0xff]
        %v305 = vld [vmem:[%s199 + $0x178] sm:$0xff]
        %v306 = vld [vmem:[%s199 + $0x180] sm:$0xff]
        %v307 = vld [vmem:[%s199 + $0x188] sm:$0xff]
        %v308 = vld [vmem:[%s199 + $0x190] sm:$0xff]
        %v309 = vld [vmem:[%s199 + $0x198] sm:$0xff]
        %v310 = vld [vmem:[%s199 + $0x1a0] sm:$0xff]
        %v311 = vld [vmem:[%s199 + $0x1a8] sm:$0xff]
        %v312 = vld [vmem:[%s199 + $0x1b0] sm:$0xff]
        %v313 = vld [vmem:[%s199 + $0x1b8] sm:$0xff]
        %v314 = vld [vmem:[%s199 + $0x1c0] sm:$0xff]
        %v315 = vld [vmem:[%s199 + $0x1c8] sm:$0xff]
        %v316 = vld [vmem:[%s199 + $0x1d0] sm:$0xff]
        %v317 = vld [vmem:[%s199 + $0x1d8] sm:$0xff]
        %v318 = vld [vmem:[%s199 + $0x1e0] sm:$0xff]
        %v319 = vld [vmem:[%s199 + $0x1e8] sm:$0xff]
        %v320 = vld [vmem:[%s199 + $0x1f0] sm:$0xff]
        %v321 = vld [vmem:[%s199 + $0x1f8] sm:$0xff]
        %v322 = vld [vmem:[%s199 + $0x200] sm:$0xff]
        %v323 = vld [vmem:[%s199 + $0x208] sm:$0xff]
        %v324 = vld [vmem:[%s199 + $0x210] sm:$0xff]
        %v325 = vld [vmem:[%s199 + $0x218] sm:$0xff]
        %v326 = vld [vmem:[%s199 + $0x220] sm:$0xff]
        %v327 = vld [vmem:[%s199 + $0x228] sm:$0xff]
        %v328 = vld [vmem:[%s199 + $0x230] sm:$0xff]
        %v329 = vld [vmem:[%s199 + $0x238] sm:$0xff]
        %v330 = vld [vmem:[%s199 + $0x240] sm:$0xff]
        %v331 = vld [vmem:[%s199 + $0x248] sm:$0xff]
        %v332 = vld [vmem:[%s199 + $0x250] sm:$0xff]
        %v333 = vld [vmem:[%s199 + $0x258] sm:$0xff]
        %v334 = vld [vmem:[%s199 + $0x260] sm:$0xff]
        %v335 = vld [vmem:[%s199 + $0x268] sm:$0xff]
        %v336 = vld [vmem:[%s199 + $0x270] sm:$0xff]
        %v337 = vld [vmem:[%s199 + $0x278] sm:$0xff]
        %v338 = vld [vmem:[%s199 + $0x280] sm:$0xff]
        %v339 = vld [vmem:[%s199 + $0x288] sm:$0xff]
        %v340 = vld [vmem:[%s199 + $0x290] sm:$0xff]
        %v341 = vld [vmem:[%s199 + $0x298] sm:$0xff]
        %v342 = vld [vmem:[%s199 + $0x2a0] sm:$0xff]
        %v343 = vld [vmem:[%s199 + $0x2a8] sm:$0xff]
        %v344 = vld [vmem:[%s199 + $0x2b0] sm:$0xff]
        %v345 = vld [vmem:[%s199 + $0x2b8] sm:$0xff]
        %v346 = vld [vmem:[%s199 + $0x2c0] sm:$0xff]
        %v347 = vld [vmem:[%s199 + $0x2c8] sm:$0xff]
        %v348 = vld [vmem:[%s199 + $0x2d0] sm:$0xff]
        %v349 = vld [vmem:[%s199 + $0x2d8] sm:$0xff]
        %v350 = vld [vmem:[%s199 + $0x2e0] sm:$0xff]
        %v351 = vld [vmem:[%s199 + $0x2e8] sm:$0xff]
        %v352 = vld [vmem:[%s199 + $0x2f0] sm:$0xff]
        %v353 = vld [vmem:[%s199 + $0x2f8] sm:$0xff]
        %v354 = vld [vmem:[%s199 + $0x300] sm:$0xff]
        %v355 = vld [vmem:[%s199 + $0x308] sm:$0xff]
        %v356 = vld [vmem:[%s199 + $0x310] sm:$0xff]
        %v357 = vld [vmem:[%s199 + $0x318] sm:$0xff]
        %v358 = vld [vmem:[%s199 + $0x320] sm:$0xff]
        %v359 = vld [vmem:[%s199 + $0x328] sm:$0xff]
        %v360 = vld [vmem:[%s199 + $0x330] sm:$0xff]
        %v361 = vld [vmem:[%s199 + $0x338] sm:$0xff]
        %v362 = vld [vmem:[%s199 + $0x340] sm:$0xff]
        %v363 = vld [vmem:[%s199 + $0x348] sm:$0xff]
        %v364 = vld [vmem:[%s199 + $0x350] sm:$0xff]
        %v365 = vld [vmem:[%s199 + $0x358] sm:$0xff]
        %v366 = vld [vmem:[%s199 + $0x360] sm:$0xff]
        %v367 = vld [vmem:[%s199 + $0x368] sm:$0xff]
        %v368 = vld [vmem:[%s199 + $0x370] sm:$0xff]
        %v369 = vld [vmem:[%s199 + $0x378] sm:$0xff]
        %v370 = vld [vmem:[%s199 + $0x380] sm:$0xff]
        %v371 = vld [vmem:[%s199 + $0x388] sm:$0xff]
        %v372 = vld [vmem:[%s199 + $0x390] sm:$0xff]
        %v373 = vld [vmem:[%s199 + $0x398] sm:$0xff]
        %v374 = vld [vmem:[%s199 + $0x3a0] sm:$0xff]
        %v375 = vld [vmem:[%s199 + $0x3a8] sm:$0xff]
        %v376 = vld [vmem:[%s199 + $0x3b0] sm:$0xff]
        %v377 = vld [vmem:[%s199 + $0x3b8] sm:$0xff]
        %v378 = vld [vmem:[%s199 + $0x3c0] sm:$0xff]
        %v379 = vld [vmem:[%s199 + $0x3c8] sm:$0xff]
        %v380 = vld [vmem:[%s199 + $0x3d0] sm:$0xff]
        %v381 = vld [vmem:[%s199 + $0x3d8] sm:$0xff]
        %v382 = vld [vmem:[%s199 + $0x3e0] sm:$0xff]
        %v383 = vld [vmem:[%s199 + $0x3e8] sm:$0xff]
        %v384 = vld [vmem:[%s199 + $0x3f0] sm:$0xff]
        %v385 = vld [vmem:[%s199 + $0x3f8] sm:$0xff]
        %v386 = vld [vmem:[%s242] sm:$0xf]
        %v388 = vlaneseq
        %v389 = vshrl.u32 %v388, 7
        %v390 = vsub.s32 0, %v389
        %v391 = vrot.slane %v386, %v390
        %v392 = vlaneseq
        %v393 = vshrl.u32 %v392, 7
        %v394 = vsub.s32 1, %v393
        %v395 = vrot.slane %v386, %v394
        %v396 = vlaneseq
        %v397 = vshrl.u32 %v396, 7
        %v398 = vsub.s32 2, %v397
        %v399 = vrot.slane %v386, %v398
        %v400 = vlaneseq
        %v401 = vshrl.u32 %v400, 7
        %v402 = vsub.s32 3, %v401
        %v403 = vrot.slane %v386, %v402
        %v536 = vunpack.c.l.b16 %v258
        %v537 = vunpack.c.h.b16 %v258
        %v538 = vunpack.c.l.b16 %v259
        %v539 = vunpack.c.h.b16 %v259
        %v540 = vunpack.c.l.b16 %v260
        %v541 = vunpack.c.h.b16 %v260
        %v542 = vunpack.c.l.b16 %v261
        %v543 = vunpack.c.h.b16 %v261
        %v544 = vunpack.c.l.b16 %v262
        %v545 = vunpack.c.h.b16 %v262
        %v546 = vunpack.c.l.b16 %v263
        %v547 = vunpack.c.h.b16 %v263
        %v548 = vunpack.c.l.b16 %v264
        %v549 = vunpack.c.h.b16 %v264
        %v550 = vunpack.c.l.b16 %v265
        %v551 = vunpack.c.h.b16 %v265
        %v552 = vunpack.c.l.b16 %v266
        %v553 = vunpack.c.h.b16 %v266
        %v554 = vunpack.c.l.b16 %v267
        %v555 = vunpack.c.h.b16 %v267
        %v556 = vunpack.c.l.b16 %v268
        %v557 = vunpack.c.h.b16 %v268
        %v558 = vunpack.c.l.b16 %v269
        %v559 = vunpack.c.h.b16 %v269
        %v560 = vunpack.c.l.b16 %v270
        %v561 = vunpack.c.h.b16 %v270
        %v562 = vunpack.c.l.b16 %v271
        %v563 = vunpack.c.h.b16 %v271
        %v564 = vunpack.c.l.b16 %v272
        %v565 = vunpack.c.h.b16 %v272
        %v566 = vunpack.c.l.b16 %v273
        %v567 = vunpack.c.h.b16 %v273
        %v568 = vunpack.c.l.b16 %v274
        %v569 = vunpack.c.h.b16 %v274
        %v570 = vunpack.c.l.b16 %v275
        %v571 = vunpack.c.h.b16 %v275
        %v572 = vunpack.c.l.b16 %v276
        %v573 = vunpack.c.h.b16 %v276
        %v574 = vunpack.c.l.b16 %v277
        %v575 = vunpack.c.h.b16 %v277
        %v576 = vunpack.c.l.b16 %v278
        %v577 = vunpack.c.h.b16 %v278
        %v578 = vunpack.c.l.b16 %v279
        %v579 = vunpack.c.h.b16 %v279
        %v580 = vunpack.c.l.b16 %v280
        %v581 = vunpack.c.h.b16 %v280
        %v582 = vunpack.c.l.b16 %v281
        %v583 = vunpack.c.h.b16 %v281
        %v584 = vunpack.c.l.b16 %v282
        %v585 = vunpack.c.h.b16 %v282
        %v586 = vunpack.c.l.b16 %v283
        %v587 = vunpack.c.h.b16 %v283
        %v588 = vunpack.c.l.b16 %v284
        %v589 = vunpack.c.h.b16 %v284
        %v590 = vunpack.c.l.b16 %v285
        %v591 = vunpack.c.h.b16 %v285
        %v592 = vunpack.c.l.b16 %v286
        %v593 = vunpack.c.h.b16 %v286
        %v594 = vunpack.c.l.b16 %v287
        %v595 = vunpack.c.h.b16 %v287
        %v596 = vunpack.c.l.b16 %v288
        %v597 = vunpack.c.h.b16 %v288
        %v598 = vunpack.c.l.b16 %v289
        %v599 = vunpack.c.h.b16 %v289
        %v600 = vunpack.c.l.b16 %v290
        %v601 = vunpack.c.h.b16 %v290
        %v602 = vunpack.c.l.b16 %v291
        %v603 = vunpack.c.h.b16 %v291
        %v604 = vunpack.c.l.b16 %v292
        %v605 = vunpack.c.h.b16 %v292
        %v606 = vunpack.c.l.b16 %v293
        %v607 = vunpack.c.h.b16 %v293
        %v608 = vunpack.c.l.b16 %v294
        %v609 = vunpack.c.h.b16 %v294
        %v610 = vunpack.c.l.b16 %v295
        %v611 = vunpack.c.h.b16 %v295
        %v612 = vunpack.c.l.b16 %v296
        %v613 = vunpack.c.h.b16 %v296
        %v614 = vunpack.c.l.b16 %v297
        %v615 = vunpack.c.h.b16 %v297
        %v616 = vunpack.c.l.b16 %v298
        %v617 = vunpack.c.h.b16 %v298
        %v618 = vunpack.c.l.b16 %v299
        %v619 = vunpack.c.h.b16 %v299
        %v620 = vunpack.c.l.b16 %v300
        %v621 = vunpack.c.h.b16 %v300
        %v622 = vunpack.c.l.b16 %v301
        %v623 = vunpack.c.h.b16 %v301
        %v624 = vunpack.c.l.b16 %v302
        %v625 = vunpack.c.h.b16 %v302
        %v626 = vunpack.c.l.b16 %v303
        %v627 = vunpack.c.h.b16 %v303
        %v628 = vunpack.c.l.b16 %v304
        %v629 = vunpack.c.h.b16 %v304
        %v630 = vunpack.c.l.b16 %v305
        %v631 = vunpack.c.h.b16 %v305
        %v632 = vunpack.c.l.b16 %v306
        %v633 = vunpack.c.h.b16 %v306
        %v634 = vunpack.c.l.b16 %v307
        %v635 = vunpack.c.h.b16 %v307
        %v636 = vunpack.c.l.b16 %v308
        %v637 = vunpack.c.h.b16 %v308
        %v638 = vunpack.c.l.b16 %v309
        %v639 = vunpack.c.h.b16 %v309
        %v640 = vunpack.c.l.b16 %v310
        %v641 = vunpack.c.h.b16 %v310
        %v642 = vunpack.c.l.b16 %v311
        %v643 = vunpack.c.h.b16 %v311
        %v644 = vunpack.c.l.b16 %v312
        %v645 = vunpack.c.h.b16 %v312
        %v646 = vunpack.c.l.b16 %v313
        %v647 = vunpack.c.h.b16 %v313
        %v648 = vunpack.c.l.b16 %v314
        %v649 = vunpack.c.h.b16 %v314
        %v650 = vunpack.c.l.b16 %v315
        %v651 = vunpack.c.h.b16 %v315
        %v652 = vunpack.c.l.b16 %v316
        %v653 = vunpack.c.h.b16 %v316
        %v654 = vunpack.c.l.b16 %v317
        %v655 = vunpack.c.h.b16 %v317
        %v656 = vunpack.c.l.b16 %v318
        %v657 = vunpack.c.h.b16 %v318
        %v658 = vunpack.c.l.b16 %v319
        %v659 = vunpack.c.h.b16 %v319
        %v660 = vunpack.c.l.b16 %v320
        %v661 = vunpack.c.h.b16 %v320
        %v662 = vunpack.c.l.b16 %v321
        %v663 = vunpack.c.h.b16 %v321
        %v664 = vunpack.c.l.b16 %v322
        %v665 = vunpack.c.h.b16 %v322
        %v666 = vunpack.c.l.b16 %v323
        %v667 = vunpack.c.h.b16 %v323
        %v668 = vunpack.c.l.b16 %v324
        %v669 = vunpack.c.h.b16 %v324
        %v670 = vunpack.c.l.b16 %v325
        %v671 = vunpack.c.h.b16 %v325
        %v672 = vunpack.c.l.b16 %v326
        %v673 = vunpack.c.h.b16 %v326
        %v674 = vunpack.c.l.b16 %v327
        %v675 = vunpack.c.h.b16 %v327
        %v676 = vunpack.c.l.b16 %v328
        %v677 = vunpack.c.h.b16 %v328
        %v678 = vunpack.c.l.b16 %v329
        %v679 = vunpack.c.h.b16 %v329
        %v680 = vunpack.c.l.b16 %v330
        %v681 = vunpack.c.h.b16 %v330
        %v682 = vunpack.c.l.b16 %v331
        %v683 = vunpack.c.h.b16 %v331
        %v684 = vunpack.c.l.b16 %v332
        %v685 = vunpack.c.h.b16 %v332
        %v686 = vunpack.c.l.b16 %v333
        %v687 = vunpack.c.h.b16 %v333
        %v688 = vunpack.c.l.b16 %v334
        %v689 = vunpack.c.h.b16 %v334
        %v690 = vunpack.c.l.b16 %v335
        %v691 = vunpack.c.h.b16 %v335
        %v692 = vunpack.c.l.b16 %v336
        %v693 = vunpack.c.h.b16 %v336
        %v694 = vunpack.c.l.b16 %v337
        %v695 = vunpack.c.h.b16 %v337
        %v696 = vunpack.c.l.b16 %v338
        %v697 = vunpack.c.h.b16 %v338
        %v698 = vunpack.c.l.b16 %v339
        %v699 = vunpack.c.h.b16 %v339
        %v700 = vunpack.c.l.b16 %v340
        %v701 = vunpack.c.h.b16 %v340
        %v702 = vunpack.c.l.b16 %v341
        %v703 = vunpack.c.h.b16 %v341
        %v704 = vunpack.c.l.b16 %v342
        %v705 = vunpack.c.h.b16 %v342
        %v706 = vunpack.c.l.b16 %v343
        %v707 = vunpack.c.h.b16 %v343
        %v708 = vunpack.c.l.b16 %v344
        %v709 = vunpack.c.h.b16 %v344
        %v710 = vunpack.c.l.b16 %v345
        %v711 = vunpack.c.h.b16 %v345
        %v712 = vunpack.c.l.b16 %v346
        %v713 = vunpack.c.h.b16 %v346
        %v714 = vunpack.c.l.b16 %v347
        %v715 = vunpack.c.h.b16 %v347
        %v716 = vunpack.c.l.b16 %v348
        %v717 = vunpack.c.h.b16 %v348
        %v718 = vunpack.c.l.b16 %v349
        %v719 = vunpack.c.h.b16 %v349
        %v720 = vunpack.c.l.b16 %v350
        %v721 = vunpack.c.h.b16 %v350
        %v722 = vunpack.c.l.b16 %v351
        %v723 = vunpack.c.h.b16 %v351
        %v724 = vunpack.c.l.b16 %v352
        %v725 = vunpack.c.h.b16 %v352
        %v726 = vunpack.c.l.b16 %v353
        %v727 = vunpack.c.h.b16 %v353
        %v728 = vunpack.c.l.b16 %v354
        %v729 = vunpack.c.h.b16 %v354
        %v730 = vunpack.c.l.b16 %v355
        %v731 = vunpack.c.h.b16 %v355
        %v732 = vunpack.c.l.b16 %v356
        %v733 = vunpack.c.h.b16 %v356
        %v734 = vunpack.c.l.b16 %v357
        %v735 = vunpack.c.h.b16 %v357
        %v736 = vunpack.c.l.b16 %v358
        %v737 = vunpack.c.h.b16 %v358
        %v738 = vunpack.c.l.b16 %v359
        %v739 = vunpack.c.h.b16 %v359
        %v740 = vunpack.c.l.b16 %v360
        %v741 = vunpack.c.h.b16 %v360
        %v742 = vunpack.c.l.b16 %v361
        %v743 = vunpack.c.h.b16 %v361
        %v744 = vunpack.c.l.b16 %v362
        %v745 = vunpack.c.h.b16 %v362
        %v746 = vunpack.c.l.b16 %v363
        %v747 = vunpack.c.h.b16 %v363
        %v748 = vunpack.c.l.b16 %v364
        %v749 = vunpack.c.h.b16 %v364
        %v750 = vunpack.c.l.b16 %v365
        %v751 = vunpack.c.h.b16 %v365
        %v752 = vunpack.c.l.b16 %v366
        %v753 = vunpack.c.h.b16 %v366
        %v754 = vunpack.c.l.b16 %v367
        %v755 = vunpack.c.h.b16 %v367
        %v756 = vunpack.c.l.b16 %v368
        %v757 = vunpack.c.h.b16 %v368
        %v758 = vunpack.c.l.b16 %v369
        %v759 = vunpack.c.h.b16 %v369
        %v760 = vunpack.c.l.b16 %v370
        %v761 = vunpack.c.h.b16 %v370
        %v762 = vunpack.c.l.b16 %v371
        %v763 = vunpack.c.h.b16 %v371
        %v764 = vunpack.c.l.b16 %v372
        %v765 = vunpack.c.h.b16 %v372
        %v766 = vunpack.c.l.b16 %v373
        %v767 = vunpack.c.h.b16 %v373
        %v768 = vunpack.c.l.b16 %v374
        %v769 = vunpack.c.h.b16 %v374
        %v770 = vunpack.c.l.b16 %v375
        %v771 = vunpack.c.h.b16 %v375
        %v772 = vunpack.c.l.b16 %v376
        %v773 = vunpack.c.h.b16 %v376
        %v774 = vunpack.c.l.b16 %v377
        %v775 = vunpack.c.h.b16 %v377
        %v776 = vunpack.c.l.b16 %v378
        %v777 = vunpack.c.h.b16 %v378
        %v778 = vunpack.c.l.b16 %v379
        %v779 = vunpack.c.h.b16 %v379
        %v780 = vunpack.c.l.b16 %v380
        %v781 = vunpack.c.h.b16 %v380
        %v782 = vunpack.c.l.b16 %v381
        %v783 = vunpack.c.h.b16 %v381
        %v784 = vunpack.c.l.b16 %v382
        %v785 = vunpack.c.h.b16 %v382
        %v786 = vunpack.c.l.b16 %v383
        %v787 = vunpack.c.h.b16 %v383
        %v788 = vunpack.c.l.b16 %v384
        %v789 = vunpack.c.h.b16 %v384
        %v790 = vunpack.c.l.b16 %v385
        %v791 = vunpack.c.h.b16 %v385
        %v792 = vpack.c.b16 %v540, %v536
        %v793 = vpack.c.b16 %v541, %v537
        %v794 = vpack.c.b16 %v542, %v538
        %v795 = vpack.c.b16 %v543, %v539
        %v796 = vpack.c.b16 %v548, %v544
        %v797 = vpack.c.b16 %v549, %v545
        %v798 = vpack.c.b16 %v550, %v546
        %v799 = vpack.c.b16 %v551, %v547
        %v800 = vpack.c.b16 %v556, %v552
        %v801 = vpack.c.b16 %v557, %v553
        %v802 = vpack.c.b16 %v558, %v554
        %v803 = vpack.c.b16 %v559, %v555
        %v804 = vpack.c.b16 %v564, %v560
        %v805 = vpack.c.b16 %v565, %v561
        %v806 = vpack.c.b16 %v566, %v562
        %v807 = vpack.c.b16 %v567, %v563
        %v808 = vpack.c.b16 %v572, %v568
        %v809 = vpack.c.b16 %v573, %v569
        %v810 = vpack.c.b16 %v574, %v570
        %v811 = vpack.c.b16 %v575, %v571
        %v812 = vpack.c.b16 %v580, %v576
        %v813 = vpack.c.b16 %v581, %v577
        %v814 = vpack.c.b16 %v582, %v578
        %v815 = vpack.c.b16 %v583, %v579
        %v816 = vpack.c.b16 %v588, %v584
        %v817 = vpack.c.b16 %v589, %v585
        %v818 = vpack.c.b16 %v590, %v586
        %v819 = vpack.c.b16 %v591, %v587
        %v820 = vpack.c.b16 %v596, %v592
        %v821 = vpack.c.b16 %v597, %v593
        %v822 = vpack.c.b16 %v598, %v594
        %v823 = vpack.c.b16 %v599, %v595
        %v824 = vpack.c.b16 %v604, %v600
        %v825 = vpack.c.b16 %v605, %v601
        %v826 = vpack.c.b16 %v606, %v602
        %v827 = vpack.c.b16 %v607, %v603
        %v828 = vpack.c.b16 %v612, %v608
        %v829 = vpack.c.b16 %v613, %v609
        %v830 = vpack.c.b16 %v614, %v610
        %v831 = vpack.c.b16 %v615, %v611
        %v832 = vpack.c.b16 %v620, %v616
        %v833 = vpack.c.b16 %v621, %v617
        %v834 = vpack.c.b16 %v622, %v618
        %v835 = vpack.c.b16 %v623, %v619
        %v836 = vpack.c.b16 %v628, %v624
        %v837 = vpack.c.b16 %v629, %v625
        %v838 = vpack.c.b16 %v630, %v626
        %v839 = vpack.c.b16 %v631, %v627
        %v840 = vpack.c.b16 %v636, %v632
        %v841 = vpack.c.b16 %v637, %v633
        %v842 = vpack.c.b16 %v638, %v634
        %v843 = vpack.c.b16 %v639, %v635
        %v844 = vpack.c.b16 %v644, %v640
        %v845 = vpack.c.b16 %v645, %v641
        %v846 = vpack.c.b16 %v646, %v642
        %v847 = vpack.c.b16 %v647, %v643
        %v848 = vpack.c.b16 %v652, %v648
        %v849 = vpack.c.b16 %v653, %v649
        %v850 = vpack.c.b16 %v654, %v650
        %v851 = vpack.c.b16 %v655, %v651
        %v852 = vpack.c.b16 %v660, %v656
        %v853 = vpack.c.b16 %v661, %v657
        %v854 = vpack.c.b16 %v662, %v658
        %v855 = vpack.c.b16 %v663, %v659
        %v856 = vpack.c.b16 %v668, %v664
        %v857 = vpack.c.b16 %v669, %v665
        %v858 = vpack.c.b16 %v670, %v666
        %v859 = vpack.c.b16 %v671, %v667
        %v860 = vpack.c.b16 %v676, %v672
        %v861 = vpack.c.b16 %v677, %v673
        %v862 = vpack.c.b16 %v678, %v674
        %v863 = vpack.c.b16 %v679, %v675
        %v864 = vpack.c.b16 %v684, %v680
        %v865 = vpack.c.b16 %v685, %v681
        %v866 = vpack.c.b16 %v686, %v682
        %v867 = vpack.c.b16 %v687, %v683
        %v868 = vpack.c.b16 %v692, %v688
        %v869 = vpack.c.b16 %v693, %v689
        %v870 = vpack.c.b16 %v694, %v690
        %v871 = vpack.c.b16 %v695, %v691
        %v872 = vpack.c.b16 %v700, %v696
        %v873 = vpack.c.b16 %v701, %v697
        %v874 = vpack.c.b16 %v702, %v698
        %v875 = vpack.c.b16 %v703, %v699
        %v876 = vpack.c.b16 %v708, %v704
        %v877 = vpack.c.b16 %v709, %v705
        %v878 = vpack.c.b16 %v710, %v706
        %v879 = vpack.c.b16 %v711, %v707
        %v880 = vpack.c.b16 %v716, %v712
        %v881 = vpack.c.b16 %v717, %v713
        %v882 = vpack.c.b16 %v718, %v714
        %v883 = vpack.c.b16 %v719, %v715
        %v884 = vpack.c.b16 %v724, %v720
        %v885 = vpack.c.b16 %v725, %v721
        %v886 = vpack.c.b16 %v726, %v722
        %v887 = vpack.c.b16 %v727, %v723
        %v888 = vpack.c.b16 %v732, %v728
        %v889 = vpack.c.b16 %v733, %v729
        %v890 = vpack.c.b16 %v734, %v730
        %v891 = vpack.c.b16 %v735, %v731
        %v892 = vpack.c.b16 %v740, %v736
        %v893 = vpack.c.b16 %v741, %v737
        %v894 = vpack.c.b16 %v742, %v738
        %v895 = vpack.c.b16 %v743, %v739
        %v896 = vpack.c.b16 %v748, %v744
        %v897 = vpack.c.b16 %v749, %v745
        %v898 = vpack.c.b16 %v750, %v746
        %v899 = vpack.c.b16 %v751, %v747
        %v900 = vpack.c.b16 %v756, %v752
        %v901 = vpack.c.b16 %v757, %v753
        %v902 = vpack.c.b16 %v758, %v754
        %v903 = vpack.c.b16 %v759, %v755
        %v904 = vpack.c.b16 %v764, %v760
        %v905 = vpack.c.b16 %v765, %v761
        %v906 = vpack.c.b16 %v766, %v762
        %v907 = vpack.c.b16 %v767, %v763
        %v908 = vpack.c.b16 %v772, %v768
        %v909 = vpack.c.b16 %v773, %v769
        %v910 = vpack.c.b16 %v774, %v770
        %v911 = vpack.c.b16 %v775, %v771
        %v912 = vpack.c.b16 %v780, %v776
        %v913 = vpack.c.b16 %v781, %v777
        %v914 = vpack.c.b16 %v782, %v778
        %v915 = vpack.c.b16 %v783, %v779
        %v916 = vpack.c.b16 %v788, %v784
        %v917 = vpack.c.b16 %v789, %v785
        %v918 = vpack.c.b16 %v790, %v786
        %v919 = vpack.c.b16 %v791, %v787
        %1048 = vmatprep.subr.bf16.mxu0 %v821
        %1049 = vmatpush1.bf16.msra.mxu0 %v820
        %1050 = vmatprep.subr.bf16.mxu0 %v817
        %1051 = vmatpush1.bf16.msra.mxu0 %v816
        %1052 = vmatprep.subr.bf16.mxu0 %v813
        %1053 = vmatpush1.bf16.msra.mxu0 %v812
        %1054 = vmatprep.subr.bf16.mxu0 %v809
        %1055 = vmatpush1.bf16.msra.mxu0 %v808
        %1056 = vmatprep.subr.bf16.mxu0 %v805
        %1057 = vmatpush1.bf16.msra.mxu0 %v804
        %1058 = vmatprep.subr.bf16.mxu0 %v801
        %1059 = vmatpush1.bf16.msra.mxu0 %v800
        %1060 = vmatprep.subr.bf16.mxu0 %v797
        %1061 = vmatpush1.bf16.msra.mxu0 %v796
        %1062 = vmatprep.subr.bf16.mxu0 %v793
        %1063 = vmatpush1.bf16.msra.mxu0 %v792
        %1064 = vmatprep.subr.bf16.mxu0 %v853
        %1065 = vmatpush2.bf16.msra.mxu0 %v852
        %1066 = vmatprep.subr.bf16.mxu0 %v849
        %1067 = vmatpush2.bf16.msra.mxu0 %v848
        %1068 = vmatprep.subr.bf16.mxu0 %v845
        %1069 = vmatpush2.bf16.msra.mxu0 %v844
        %1070 = vmatprep.subr.bf16.mxu0 %v841
        %1071 = vmatpush2.bf16.msra.mxu0 %v840
        %1072 = vmatprep.subr.bf16.mxu0 %v837
        %1073 = vmatpush2.bf16.msra.mxu0 %v836
        %1074 = vmatprep.subr.bf16.mxu0 %v833
        %1075 = vmatpush2.bf16.msra.mxu0 %v832
        %1076 = vmatprep.subr.bf16.mxu0 %v829
        %1077 = vmatpush2.bf16.msra.mxu0 %v828
        %1078 = vmatprep.subr.bf16.mxu0 %v825
        %1079 = vmatpush2.bf16.msra.mxu0 %v824
        %1080 = vmatprep.mubr.bf16.mxu0 %v255
        %1081 = vmatmul.mubr.bf16.gmra.mxu0 %v254
        %v1082 = vpop.f32.mrf.mxu0
        %v1083 = vadd.f32 %v391, %v1082
        %v1084 = vpop.f32.mrf.mxu0
        %v1085 = vadd.f32 %v395, %v1084
        %v1086 = vpop.f32.mrf.mxu0
        %v1087 = vadd.f32 %v391, %v1086
        %v1088 = vpop.f32.mrf.mxu0
        %v1089 = vadd.f32 %v395, %v1088
        %1090 = vdwg.mxu0
        %1091 = vmatprep.subr.bf16.mxu0 %v885
        %1092 = vmatpush1.bf16.msra.mxu0 %v884
        %1093 = vmatprep.subr.bf16.mxu0 %v881
        %1094 = vmatpush1.bf16.msra.mxu0 %v880
        %1095 = vmatprep.subr.bf16.mxu0 %v877
        %1096 = vmatpush1.bf16.msra.mxu0 %v876
        %1097 = vmatprep.subr.bf16.mxu0 %v873
        %1098 = vmatpush1.bf16.msra.mxu0 %v872
        %1099 = vmatprep.subr.bf16.mxu0 %v869
        %1100 = vmatpush1.bf16.msra.mxu0 %v868
        %1101 = vmatprep.subr.bf16.mxu0 %v865
        %1102 = vmatpush1.bf16.msra.mxu0 %v864
        %1103 = vmatprep.subr.bf16.mxu0 %v861
        %1104 = vmatpush1.bf16.msra.mxu0 %v860
        %1105 = vmatprep.subr.bf16.mxu0 %v857
        %1106 = vmatpush1.bf16.msra.mxu0 %v856
        %1107 = vmatprep.subr.bf16.mxu0 %v917
        %1108 = vmatpush2.bf16.msra.mxu0 %v916
        %1109 = vmatprep.subr.bf16.mxu0 %v913
        %1110 = vmatpush2.bf16.msra.mxu0 %v912
        %1111 = vmatprep.subr.bf16.mxu0 %v909
        %1112 = vmatpush2.bf16.msra.mxu0 %v908
        %1113 = vmatprep.subr.bf16.mxu0 %v905
        %1114 = vmatpush2.bf16.msra.mxu0 %v904
        %1115 = vmatprep.subr.bf16.mxu0 %v901
        %1116 = vmatpush2.bf16.msra.mxu0 %v900
        %1117 = vmatprep.subr.bf16.mxu0 %v897
        %1118 = vmatpush2.bf16.msra.mxu0 %v896
        %1119 = vmatprep.subr.bf16.mxu0 %v893
        %1120 = vmatpush2.bf16.msra.mxu0 %v892
        %1121 = vmatprep.subr.bf16.mxu0 %v889
        %1122 = vmatpush2.bf16.msra.mxu0 %v888
        %1123 = vmatprep.mubr.bf16.mxu0 %v257
        %1124 = vmatmul.mubr.bf16.gmra.mxu0 %v256
        %v1125 = vpop.f32.mrf.mxu0
        %v1126 = vadd.f32 %v1083, %v1125
        %v1127 = vpop.f32.mrf.mxu0
        %v1128 = vadd.f32 %v1085, %v1127
        %v1129 = vpop.f32.mrf.mxu0
        %v1130 = vadd.f32 %v1087, %v1129
        %v1131 = vpop.f32.mrf.mxu0
        %v1132 = vadd.f32 %v1089, %v1131
        %1133 = vdwg.mxu0
        %1134 = vmatprep.subr.bf16.mxu0 %v823
        %1135 = vmatpush1.bf16.msra.mxu0 %v822
        %1136 = vmatprep.subr.bf16.mxu0 %v819
        %1137 = vmatpush1.bf16.msra.mxu0 %v818
        %1138 = vmatprep.subr.bf16.mxu0 %v815
        %1139 = vmatpush1.bf16.msra.mxu0 %v814
        %1140 = vmatprep.subr.bf16.mxu0 %v811
        %1141 = vmatpush1.bf16.msra.mxu0 %v810
        %1142 = vmatprep.subr.bf16.mxu0 %v807
        %1143 = vmatpush1.bf16.msra.mxu0 %v806
        %1144 = vmatprep.subr.bf16.mxu0 %v803
        %1145 = vmatpush1.bf16.msra.mxu0 %v802
        %1146 = vmatprep.subr.bf16.mxu0 %v799
        %1147 = vmatpush1.bf16.msra.mxu0 %v798
        %1148 = vmatprep.subr.bf16.mxu0 %v795
        %1149 = vmatpush1.bf16.msra.mxu0 %v794
        %1150 = vmatprep.subr.bf16.mxu0 %v855
        %1151 = vmatpush2.bf16.msra.mxu0 %v854
        %1152 = vmatprep.subr.bf16.mxu0 %v851
        %1153 = vmatpush2.bf16.msra.mxu0 %v850
        %1154 = vmatprep.subr.bf16.mxu0 %v847
        %1155 = vmatpush2.bf16.msra.mxu0 %v846
        %1156 = vmatprep.subr.bf16.mxu0 %v843
        %1157 = vmatpush2.bf16.msra.mxu0 %v842
        %1158 = vmatprep.subr.bf16.mxu0 %v839
        %1159 = vmatpush2.bf16.msra.mxu0 %v838
        %1160 = vmatprep.subr.bf16.mxu0 %v835
        %1161 = vmatpush2.bf16.msra.mxu0 %v834
        %1162 = vmatprep.subr.bf16.mxu0 %v831
        %1163 = vmatpush2.bf16.msra.mxu0 %v830
        %1164 = vmatprep.subr.bf16.mxu0 %v827
        %1165 = vmatpush2.bf16.msra.mxu0 %v826
        %1166 = vmatprep.mubr.bf16.mxu0 %v255
        %1167 = vmatmul.mubr.bf16.gmra.mxu0 %v254
        %v1168 = vpop.f32.mrf.mxu0
        %v1169 = vadd.f32 %v399, %v1168
        %v1170 = vpop.f32.mrf.mxu0
        %v1171 = vadd.f32 %v403, %v1170
        %v1172 = vpop.f32.mrf.mxu0
        %v1173 = vadd.f32 %v399, %v1172
        %v1174 = vpop.f32.mrf.mxu0
        %v1175 = vadd.f32 %v403, %v1174
        %1176 = vdwg.mxu0
        %1177 = vmatprep.subr.bf16.mxu0 %v887
        %1178 = vmatpush1.bf16.msra.mxu0 %v886
        %1179 = vmatprep.subr.bf16.mxu0 %v883
        %1180 = vmatpush1.bf16.msra.mxu0 %v882
        %1181 = vmatprep.subr.bf16.mxu0 %v879
        %1182 = vmatpush1.bf16.msra.mxu0 %v878
        %1183 = vmatprep.subr.bf16.mxu0 %v875
        %1184 = vmatpush1.bf16.msra.mxu0 %v874
        %1185 = vmatprep.subr.bf16.mxu0 %v871
        %1186 = vmatpush1.bf16.msra.mxu0 %v870
        %1187 = vmatprep.subr.bf16.mxu0 %v867
        %1188 = vmatpush1.bf16.msra.mxu0 %v866
        %1189 = vmatprep.subr.bf16.mxu0 %v863
        %1190 = vmatpush1.bf16.msra.mxu0 %v862
        %1191 = vmatprep.subr.bf16.mxu0 %v859
        %1192 = vmatpush1.bf16.msra.mxu0 %v858
        %1193 = vmatprep.subr.bf16.mxu0 %v919
        %1194 = vmatpush2.bf16.msra.mxu0 %v918
        %1195 = vmatprep.subr.bf16.mxu0 %v915
        %1196 = vmatpush2.bf16.msra.mxu0 %v914
        %1197 = vmatprep.subr.bf16.mxu0 %v911
        %1198 = vmatpush2.bf16.msra.mxu0 %v910
        %1199 = vmatprep.subr.bf16.mxu0 %v907
        %1200 = vmatpush2.bf16.msra.mxu0 %v906
        %1201 = vmatprep.subr.bf16.mxu0 %v903
        %1202 = vmatpush2.bf16.msra.mxu0 %v902
        %1203 = vmatprep.subr.bf16.mxu0 %v899
        %1204 = vmatpush2.bf16.msra.mxu0 %v898
        %1205 = vmatprep.subr.bf16.mxu0 %v895
        %1206 = vmatpush2.bf16.msra.mxu0 %v894
        %1207 = vmatprep.subr.bf16.mxu0 %v891
        %1208 = vmatpush2.bf16.msra.mxu0 %v890
        %1209 = vmatprep.mubr.bf16.mxu0 %v257
        %1210 = vmatmul.mubr.bf16.gmra.mxu0 %v256
        %v1211 = vpop.f32.mrf.mxu0
        %v1212 = vadd.f32 %v1169, %v1211
        %v1213 = vpop.f32.mrf.mxu0
        %v1214 = vadd.f32 %v1171, %v1213
        %v1215 = vpop.f32.mrf.mxu0
        %v1216 = vadd.f32 %v1173, %v1215
        %v1217 = vpop.f32.mrf.mxu0
        %v1218 = vadd.f32 %v1175, %v1217
        %1219 = vdwg.mxu0
        %1220 = vst [vmem:[%s230] sm:$0xff] %v1126
        %1221 = vst [vmem:[%s230 + $0x8] sm:$0xff] %v1128
        %1222 = vst [vmem:[%s230 + $0x10] sm:$0xff] %v1212
        %1223 = vst [vmem:[%s230 + $0x18] sm:$0xff] %v1214
        %1224 = vst [vmem:[%s230 + $0x20] sm:$0xff] %v1130
        %1225 = vst [vmem:[%s230 + $0x28] sm:$0xff] %v1132
        %1226 = vst [vmem:[%s230 + $0x30] sm:$0xff] %v1216
        %1227 = vst [vmem:[%s230 + $0x38] sm:$0xff] %v1218
        %s1228 = sand.u32 %s117, 1
        %s1229 = sand.u32 %s117, 1
        %s1230 = smul.addr %s1229, 64
        %s1231 = scalar_lea.vmem [#allocation4], %s1230
        // Predicated region
        $region37: #{encoder_forward.8} parent=31 // pred_check
          %p1232 = pneg %p127
        $region38: #{encoder_forward.8} parent=31 // pred_check_branch
          %1234 = sbr.rel (%p1232) target = $region40
        $region39: #{encoder_forward.8} parent=31 // pred_region
          %s1235 = smul.u32 2, %s21
          %s1236 = smul.u32 4, %s22
          %s1237 = smul.addr %s1235, 12
          %s1238 = sadd.s32 %s1236, %s1237
          %s1239 = smul.addr %s1238, 8
          %s1240 = scalar_lea.vmem %s3, %s1239
          // Predicated region
          $region41: #{encoder_forward.8} parent=39 // pred_check
            _
          $region42: #{encoder_forward.8} parent=39 // pred_check_branch
            %1242 = sbr.rel (0) target = $region44
          $region43: #{encoder_forward.8} parent=39 // pred_region
            // Predicated region
            $region45: #{encoder_forward.8} parent=43 // pred_check
              _
            $region46: #{encoder_forward.8} parent=43 // pred_check_branch
              %1244 = sbr.rel (0) target = $region48
            $region47: #{encoder_forward.8} parent=43 // pred_region
              loop: start=0, step=1, limit=1
              $region49: #{encoder_forward.8} parent=47 // loop_pre_header
                _
              $region50: #{encoder_forward.8} parent=47 // loop_header
                %s1246 = sphi 0, %s1250
                %p1247 = scmp.ge.s32.totalorder %s1246, 1
                %s1251 = sphi %s1231, %s1231
                %s1252 = sphi %s1240, %s1240
              $region51: #{encoder_forward.8} parent=47 // loop_header_branch
                %1249 = sbr.rel (%p1247) target = $region55
              $region52: #{encoder_forward.8} parent=47 // loop_body
                %v1253 = vld [vmem:[%s1251] sm:$0xff]
                %1254 = vst [vmem:[%s1252] sm:$0xff] %v1253
                %v1255 = vld [vmem:[%s1251 + $0x8] sm:$0xff]
                %1256 = vst [vmem:[%s1252 + $0x8] sm:$0xff] %v1255
                %v1257 = vld [vmem:[%s1251 + $0x10] sm:$0xff]
                %1258 = vst [vmem:[%s1252 + $0x10] sm:$0xff] %v1257
                %v1259 = vld [vmem:[%s1251 + $0x18] sm:$0xff]
                %1260 = vst [vmem:[%s1252 + $0x18] sm:$0xff] %v1259
                %v1261 = vld [vmem:[%s1251 + $0x20] sm:$0xff]
                %1262 = vst [vmem:[%s1252 + $0x60] sm:$0xff] %v1261
                %v1263 = vld [vmem:[%s1251 + $0x28] sm:$0xff]
                %1264 = vst [vmem:[%s1252 + $0x68] sm:$0xff] %v1263
                %v1265 = vld [vmem:[%s1251 + $0x30] sm:$0xff]
                %1266 = vst [vmem:[%s1252 + $0x70] sm:$0xff] %v1265
                %v1267 = vld [vmem:[%s1251 + $0x38] sm:$0xff]
                %1268 = vst [vmem:[%s1252 + $0x78] sm:$0xff] %v1267
              $region53: #{encoder_forward.8} parent=47 // loop_footer
                %s1250 = sadd.s32 1, %s1246
              $region54: #{encoder_forward.8} parent=47 // loop_footer_branch
                %1245 = sbr.rel target = $region50
              $region55: #{encoder_forward.8} parent=47 // loop_exit
                _
            $region48: #{encoder_forward.8} parent=43 // pred_fallthru
              _
            // Predicated region
            $region56: #{encoder_forward.8} parent=43 // pred_check
              _
            $region57: #{encoder_forward.8} parent=43 // pred_check_branch
              %1270 = sbr.rel target = $region59
            $region58: #{encoder_forward.8} parent=43 // pred_region
              _
            $region59: #{encoder_forward.8} parent=43 // pred_fallthru
              _
          $region44: #{encoder_forward.8} parent=39 // pred_fallthru
            _
          %1271 = vnop
        $region40: #{encoder_forward.8} parent=31 // pred_fallthru
          _
      $region32: #{encoder_forward.8} parent=5 // pred_fallthru
        _
      %p1272 = scmp.le.s32.totalorder 2, %s12
      // Predicated region
      $region60: #{encoder_forward.8} parent=5 // pred_check
        %p1273 = pneg %p1272
      $region61: #{encoder_forward.8} parent=5 // pred_check_branch
        %1275 = sbr.rel (%p1273) target = $region63
      $region62: #{encoder_forward.8} parent=5 // pred_region
        %s1276 = ssub.s32 %s12, 2
        // Predicated region
        $region64: #{encoder_forward.8} parent=62 // pred_check
          %p1277 = pneg %p133
        $region65: #{encoder_forward.8} parent=62 // pred_check_branch
          %1279 = sbr.rel (%p1277) target = $region67
        $region66: #{encoder_forward.8} parent=62 // pred_region
          %s1280 = sand.u32 %s118, 1
          %s1281 = sand.u32 %s118, 1
          %s1282 = smul.addr %s1281, 64
          %s1283 = scalar_lea.vmem [#allocation4], %s1282
        $region67: #{encoder_forward.8} parent=62 // pred_fallthru
          _
      $region63: #{encoder_forward.8} parent=5 // pred_fallthru
        _
    $region6: #{encoder_forward.8} parent=1 // loop_footer
      %s16 = sadd.s32 1, %s12
    $region7: #{encoder_forward.8} parent=1 // loop_footer_branch
      %11 = sbr.rel target = $region3
    $region8: #{encoder_forward.8} parent=1 // loop_exit
      _
    %1284 = vsyncpa [#allocation3], 1
    %s1285 = scalar_lea.sflag [#allocation3], 1
    %1286 = vsyncpa %s1285, 1

// kernel: encoder_forward.9
$region0: #{encoder_forward.9}
  #allocation0 [shape = 'u32[]', space=smem, size = 0x4, offset = 0x4, fixed_abs, tag = 'smem constant byte address 0x4 - core index']
  #allocation1 [shape = 'u32[144,128]{1,0:T(1,128)}', space=vmem, size = 0x12000, scoped, tag = 'internal scratch']
  %s0 = inlined_call_operand.vmem [shape: f32[2,8,8,64], index: 0, kind: input, shape index: {}]
  %s1 = inlined_call_operand.vmem [shape: f32[2,8,8,64], index: 1, kind: input, shape index: {}]
  %s2 = inlined_call_operand.vmem [shape: f32[2,8,8,64], index: 2, kind: input, shape index: {}]
  %s3 = inlined_call_operand.vmem [shape: f32[2,8,8,64], index: 3, kind: output, shape index: {0}]
  %s4 = inlined_call_operand.hbm [shape: f32[2,8,8,8], index: 4, kind: output, shape index: {1}]
  %5 = xla_tuple %s3, %s4
  %s6 = sld [smem:[#allocation0]]
  $region53: #{encoder_forward.9} parent=0
    _
  %s8 = ssub.s32 1, %s6
  %s9 = scalar_select 0, %s8, %s6
  $region1: #{encoder_forward.9} parent=0
    #allocation2 [shape = 'u8[65536]{0}', space=vmem, size = 0x10000, scoped, tag = 'output window, operand 1']
    #allocation3 [shape = 's32[2]{0}', space=sflag, size = 0x8, scoped, tag = 'scoped memory for encoder_forward.9']
    %10 = vsyncpa [#allocation3], 0
    %s11 = scalar_lea.sflag [#allocation3], 1
    %12 = vsyncpa %s11, 0
    loop: start=0, step=1, limit=4
    $region2: #{encoder_forward.9} parent=1 // loop_pre_header
      _
    $region3: #{encoder_forward.9} parent=1 // loop_header
      %s14 = sphi 0, %s18
      %p15 = scmp.ge.s32.totalorder %s14, 4
      %s24 = sphi 0, %s26
      %s27 = sphi 0, %s24
      %s28 = sphi 0, %s27
      %s44 = sphi 0, %s28
      %s50 = sphi 0, %s52
      %s53 = sphi 0, %s50
      %s54 = sphi 0, %s53
      %s70 = sphi 0, %s54
      %s76 = sphi 0, %s78
      %s79 = sphi 0, %s76
      %s80 = sphi 0, %s79
      %s96 = sphi 0, %s80
      %s102 = sphi 0, %s104
      %s105 = sphi 0, %s102
      %s106 = sphi 0, %s105
      %s122 = sphi 0, %s106
      %s128 = sphi 0, %s130
      %s131 = sphi 0, %s128
      %s132 = sphi 0, %s131
      %s148 = sphi 0, %s132
    $region4: #{encoder_forward.9} parent=1 // loop_header_branch
      %17 = sbr.rel (%p15) target = $region8
    $region5: #{encoder_forward.9} parent=1 // loop_body
      %s19 = ssub.s32 %s14, 1
      %s20 = ssub.s32 %s14, 2
      %s21 = sadd.s32 %s14, 1
      %s22 = ssub.s32 %s14, %s21
      %p23 = scmp.eq.s32.totalorder %s22, 0
      %s25 = sadd.s32 %s24, 1
      %s26 = scalar_select %p23, %s24, %s25
      %p29 = pneg %p23
      %p30 = scmp.eq.s32.totalorder %s14, 1
      %p31 = por %p29, %p30
      %p32 = scmp.ne.s32.totalorder %s24, %s27
      %p33 = scmp.eq.s32.totalorder %s14, 0
      %p34 = por %p32, %p33
      %p35 = scmp.ne.s32.totalorder %s24, %s27
      %p36 = scmp.eq.s32.totalorder %s19, 1
      %p37 = por %p35, %p36
      %p38 = scmp.ne.s32.totalorder %s27, %s28
      %p39 = scmp.eq.s32.totalorder %s19, 0
      %p40 = por %p38, %p39
      %p41 = scmp.ne.s32.totalorder %s27, %s28
      %p42 = scmp.eq.s32.totalorder %s20, 1
      %p43 = por %p41, %p42
      %p45 = scmp.ne.s32.totalorder %s28, %s44
      %p46 = scmp.eq.s32.totalorder %s20, 0
      %p47 = por %p45, %p46
      %s48 = ssub.s32 %s14, %s21
      %p49 = scmp.eq.s32.totalorder %s48, 0
      %s51 = sadd.s32 %s50, 1
      %s52 = scalar_select %p49, %s50, %s51
      %p55 = pneg %p49
      %p56 = scmp.eq.s32.totalorder %s14, 1
      %p57 = por %p55, %p56
      %p58 = scmp.ne.s32.totalorder %s50, %s53
      %p59 = scmp.eq.s32.totalorder %s14, 0
      %p60 = por %p58, %p59
      %p61 = scmp.ne.s32.totalorder %s50, %s53
      %p62 = scmp.eq.s32.totalorder %s19, 1
      %p63 = por %p61, %p62
      %p64 = scmp.ne.s32.totalorder %s53, %s54
      %p65 = scmp.eq.s32.totalorder %s19, 0
      %p66 = por %p64, %p65
      %p67 = scmp.ne.s32.totalorder %s53, %s54
      %p68 = scmp.eq.s32.totalorder %s20, 1
      %p69 = por %p67, %p68
      %p71 = scmp.ne.s32.totalorder %s54, %s70
      %p72 = scmp.eq.s32.totalorder %s20, 0
      %p73 = por %p71, %p72
      %s74 = ssub.s32 %s14, %s21
      %p75 = scmp.eq.s32.totalorder %s74, 0
      %s77 = sadd.s32 %s76, 1
      %s78 = scalar_select %p75, %s76, %s77
      %p81 = pneg %p75
      %p82 = scmp.eq.s32.totalorder %s14, 1
      %p83 = por %p81, %p82
      %p84 = scmp.ne.s32.totalorder %s76, %s79
      %p85 = scmp.eq.s32.totalorder %s14, 0
      %p86 = por %p84, %p85
      %p87 = scmp.ne.s32.totalorder %s76, %s79
      %p88 = scmp.eq.s32.totalorder %s19, 1
      %p89 = por %p87, %p88
      %p90 = scmp.ne.s32.totalorder %s79, %s80
      %p91 = scmp.eq.s32.totalorder %s19, 0
      %p92 = por %p90, %p91
      %p93 = scmp.ne.s32.totalorder %s79, %s80
      %p94 = scmp.eq.s32.totalorder %s20, 1
      %p95 = por %p93, %p94
      %p97 = scmp.ne.s32.totalorder %s80, %s96
      %p98 = scmp.eq.s32.totalorder %s20, 0
      %p99 = por %p97, %p98
      %s100 = ssub.s32 %s14, %s21
      %p101 = scmp.eq.s32.totalorder %s100, 0
      %s103 = sadd.s32 %s102, 1
      %s104 = scalar_select %p101, %s102, %s103
      %p107 = pneg %p101
      %p108 = scmp.eq.s32.totalorder %s14, 1
      %p109 = por %p107, %p108
      %p110 = scmp.ne.s32.totalorder %s102, %s105
      %p111 = scmp.eq.s32.totalorder %s14, 0
      %p112 = por %p110, %p111
      %p113 = scmp.ne.s32.totalorder %s102, %s105
      %p114 = scmp.eq.s32.totalorder %s19, 1
      %p115 = por %p113, %p114
      %p116 = scmp.ne.s32.totalorder %s105, %s106
      %p117 = scmp.eq.s32.totalorder %s19, 0
      %p118 = por %p116, %p117
      %p119 = scmp.ne.s32.totalorder %s105, %s106
      %p120 = scmp.eq.s32.totalorder %s20, 1
      %p121 = por %p119, %p120
      %p123 = scmp.ne.s32.totalorder %s106, %s122
      %p124 = scmp.eq.s32.totalorder %s20, 0
      %p125 = por %p123, %p124
      %s126 = ssub.s32 %s14, %s21
      %p127 = scmp.eq.s32.totalorder %s126, 0
      %s129 = sadd.s32 %s128, 1
      %s130 = scalar_select %p127, %s128, %s129
      %p133 = pneg %p127
      %p134 = scmp.eq.s32.totalorder %s14, 1
      %p135 = por %p133, %p134
      %p136 = scmp.ne.s32.totalorder %s128, %s131
      %p137 = scmp.eq.s32.totalorder %s14, 0
      %p138 = por %p136, %p137
      %p139 = scmp.ne.s32.totalorder %s128, %s131
      %p140 = scmp.eq.s32.totalorder %s19, 1
      %p141 = por %p139, %p140
      %p142 = scmp.ne.s32.totalorder %s131, %s132
      %p143 = scmp.eq.s32.totalorder %s19, 0
      %p144 = por %p142, %p143
      %p145 = scmp.ne.s32.totalorder %s131, %s132
      %p146 = scmp.eq.s32.totalorder %s20, 1
      %p147 = por %p145, %p146
      %p149 = scmp.ne.s32.totalorder %s132, %s148
      %p150 = scmp.eq.s32.totalorder %s20, 0
      %p151 = por %p149, %p150
      %p152 = scmp.le.s32.totalorder 1, %s14
      %p153 = scmp.lt.s32.totalorder %s14, 3
      %p154 = pnand %p152, %p153
      %p155 = pneg %p154
      // Predicated region
      $region9: #{encoder_forward.9} parent=5 // pred_check
        _
      $region10: #{encoder_forward.9} parent=5 // pred_check_branch
        %157 = sbr.rel (%p154) target = $region12
      $region11: #{encoder_forward.9} parent=5 // pred_region
        %s158 = ssub.s32 %s14, 1
      $region12: #{encoder_forward.9} parent=5 // pred_fallthru
        _
      %p159 = scmp.lt.s32.totalorder %s14, 2
      // Predicated region
      $region13: #{encoder_forward.9} parent=5 // pred_check
        %p160 = pneg %p159
      $region14: #{encoder_forward.9} parent=5 // pred_check_branch
        %162 = sbr.rel (%p160) target = $region16
      $region15: #{encoder_forward.9} parent=5 // pred_region
        // Predicated region
        $region17: #{encoder_forward.9} parent=15 // pred_check
          %p163 = pneg %p34
        $region18: #{encoder_forward.9} parent=15 // pred_check_branch
          %165 = sbr.rel (%p163) target = $region20
        $region19: #{encoder_forward.9} parent=15 // pred_region
          %p166 = scmp.lt.s32.totalorder %s14, 1
          %s167 = scalar_select %p166, %s14, 1
          %s168 = smul.addr %s167, 8
          %s169 = smul.addr %s168, 8
          %s170 = scalar_lea.vmem %s0, %s169
        $region20: #{encoder_forward.9} parent=15 // pred_fallthru
          _
        // Predicated region
        $region21: #{encoder_forward.9} parent=15 // pred_check
          %p171 = pneg %p60
        $region22: #{encoder_forward.9} parent=15 // pred_check_branch
          %173 = sbr.rel (%p171) target = $region24
        $region23: #{encoder_forward.9} parent=15 // pred_region
          %p174 = scmp.lt.s32.totalorder %s14, 1
          %s175 = scalar_select %p174, %s14, 1
          %s176 = smul.addr %s175, 8
          %s177 = smul.addr %s176, 8
          %s178 = scalar_lea.vmem %s1, %s177
        $region24: #{encoder_forward.9} parent=15 // pred_fallthru
          _
        // Predicated region
        $region25: #{encoder_forward.9} parent=15 // pred_check
          %p179 = pneg %p86
        $region26: #{encoder_forward.9} parent=15 // pred_check_branch
          %181 = sbr.rel (%p179) target = $region28
        $region27: #{encoder_forward.9} parent=15 // pred_region
          %p182 = scmp.lt.s32.totalorder %s14, 1
          %s183 = scalar_select %p182, %s14, 1
          %s184 = smul.addr %s183, 8
          %s185 = smul.addr %s184, 8
          %s186 = scalar_lea.vmem %s2, %s185
        $region28: #{encoder_forward.9} parent=15 // pred_fallthru
          _
      $region16: #{encoder_forward.9} parent=5 // pred_fallthru
        _
      %p187 = scmp.le.s32.totalorder 1, %s14
      %p188 = scmp.lt.s32.totalorder %s14, 3
      %p189 = pnand %p187, %p188
      %p190 = pneg %p189
      // Predicated region
      $region29: #{encoder_forward.9} parent=5 // pred_check
        _
      $region30: #{encoder_forward.9} parent=5 // pred_check_branch
        %192 = sbr.rel (%p189) target = $region32
      $region31: #{encoder_forward.9} parent=5 // pred_region
        %s193 = ssub.s32 %s14, 1
        %p194 = scmp.lt.s32.totalorder %s19, 1
        %s195 = scalar_select %p194, %s19, 1
        %s196 = smul.addr %s195, 8
        %s197 = smul.addr %s196, 8
        %s198 = scalar_lea.vmem %s0, %s197
        %p199 = pneg %p40
        %p200 = pneg %p37
        %p201 = scmp.lt.s32.totalorder %s19, 1
        %s202 = scalar_select %p201, %s19, 1
        %s203 = smul.addr %s202, 8
        %s204 = smul.addr %s203, 8
        %s205 = scalar_lea.vmem %s1, %s204
        %p206 = pneg %p66
        %p207 = pneg %p63
        %p208 = scmp.lt.s32.totalorder %s19, 1
        %s209 = scalar_select %p208, %s19, 1
        %s210 = smul.addr %s209, 8
        %s211 = smul.addr %s210, 8
        %s212 = scalar_lea.vmem %s2, %s211
        %p213 = pneg %p92
        %p214 = pneg %p89
        %p215 = pneg %p118
        %p216 = pneg %p115
        %p217 = scmp.lt.s32.totalorder %s19, 1
        %s218 = scalar_select %p217, %s19, 1
        %s219 = smul.addr %s218, 8
        %s220 = smul.addr %s219, 8
        %s221 = scalar_lea.vmem %s3, %s220
        %p222 = pneg %p144
        %p223 = pneg %p141
        %s224 = sand.u32 %s131, 1
        %s225 = scalar_lea.sflag [#allocation3], %s224
        %s226 = sand.u32 %s131, 1
        %s227 = smul.addr %s226, 64
        %s228 = scalar_lea.vmem [#allocation2], %s227
        %p229 = scmp.lt.s32.totalorder %s19, 1
        %s230 = scalar_select %p229, %s19, 1
        %s231 = smul.addr %s230, 8
        %s232 = smul.addr %s231, 8
        %s233 = scalar_lea.vmem %s0, %s232
        %p234 = scmp.lt.s32.totalorder %s19, 1
        %s235 = scalar_select %p234, %s19, 1
        %s236 = smul.addr %s235, 8
        %s237 = smul.addr %s236, 8
        %s238 = scalar_lea.vmem %s1, %s237
        %p239 = scmp.lt.s32.totalorder %s19, 1
        %s240 = scalar_select %p239, %s19, 1
        %s241 = smul.addr %s240, 8
        %s242 = smul.addr %s241, 8
        %s243 = scalar_lea.vmem %s2, %s242
        %p244 = scmp.lt.s32.totalorder %s19, 1
        %s245 = scalar_select %p244, %s19, 1
        %s246 = smul.addr %s245, 8
        %s247 = smul.addr %s246, 8
        %s248 = scalar_lea.vmem %s3, %s247
        %v249 = vld [vmem:[%s233] sm:$0xff]
        %v250 = vld [vmem:[%s233 + $0x8] sm:$0xff]
        %v251 = vld [vmem:[%s233 + $0x10] sm:$0xff]
        %v252 = vld [vmem:[%s233 + $0x18] sm:$0xff]
        %v253 = vld [vmem:[%s233 + $0x20] sm:$0xff]
        %v254 = vld [vmem:[%s233 + $0x28] sm:$0xff]
        %v255 = vld [vmem:[%s233 + $0x30] sm:$0xff]
        %v256 = vld [vmem:[%s233 + $0x38] sm:$0xff]
        %v257 = vld [vmem:[%s238] sm:$0xff]
        %v258 = vld [vmem:[%s238 + $0x8] sm:$0xff]
        %v259 = vld [vmem:[%s238 + $0x10] sm:$0xff]
        %v260 = vld [vmem:[%s238 + $0x18] sm:$0xff]
        %v261 = vld [vmem:[%s238 + $0x20] sm:$0xff]
        %v262 = vld [vmem:[%s238 + $0x28] sm:$0xff]
        %v263 = vld [vmem:[%s238 + $0x30] sm:$0xff]
        %v264 = vld [vmem:[%s238 + $0x38] sm:$0xff]
        %v265 = vld [vmem:[%s243] sm:$0xff]
        %v266 = vld [vmem:[%s243 + $0x8] sm:$0xff]
        %v267 = vld [vmem:[%s243 + $0x10] sm:$0xff]
        %v268 = vld [vmem:[%s243 + $0x18] sm:$0xff]
        %v269 = vld [vmem:[%s243 + $0x20] sm:$0xff]
        %v270 = vld [vmem:[%s243 + $0x28] sm:$0xff]
        %v271 = vld [vmem:[%s243 + $0x30] sm:$0xff]
        %v272 = vld [vmem:[%s243 + $0x38] sm:$0xff]
        %vm273 = vcmask 523264
        %v275 = vsel %vm273, %v249, 0
        %v278 = vsel %vm273, %v257, 0
        %280 = vmatprep.subr.mxu0 0.0
        %281 = vmatpush1.xpose.msra.mxu0 0.0
        %282 = vmatprep.subr.mxu0 0.0
        %283 = vmatpush1.xpose.msra.mxu0 0.0
        %284 = vmatprep.subr.mxu0 0.0
        %285 = vmatpush1.xpose.msra.mxu0 0.0
        %286 = vmatprep.subr.mxu0 0.0
        %287 = vmatpush1.xpose.msra.mxu0 0.0
        %288 = vmatprep.subr.mxu0 0.0
        %289 = vmatpush1.xpose.msra.mxu0 0.0
        %290 = vmatprep.subr.mxu0 0.0
        %291 = vmatpush1.xpose.msra.mxu0 0.0
        %292 = vmatprep.subr.mxu0 0.0
        %293 = vmatpush1.xpose.msra.mxu0 0.0
        %294 = vmatprep.subr.mxu0 0.0
        %295 = vmatpush1.xpose.msra.mxu0 0.0
        %296 = vmatprep.subr.mxu0 0.0
        %297 = vmatpush1.xpose.msra.mxu0 0.0
        %298 = vmatprep.subr.mxu0 0.0
        %299 = vmatpush1.xpose.msra.mxu0 0.0
        %300 = vmatprep.subr.mxu0 0.0
        %301 = vmatpush1.xpose.msra.mxu0 0.0
        %302 = vmatprep.subr.mxu0 0.0
        %303 = vmatpush1.xpose.msra.mxu0 0.0
        %304 = vmatprep.subr.mxu0 0.0
        %305 = vmatpush1.xpose.msra.mxu0 0.0
        %306 = vmatprep.subr.mxu0 0.0
        %307 = vmatpush1.xpose.msra.mxu0 0.0
        %308 = vmatprep.subr.mxu0 0.0
        %309 = vmatpush1.xpose.msra.mxu0 0.0
        %310 = vmatprep.subr.mxu0 0.0
        %311 = vmatpush1.xpose.msra.mxu0 %v278
        %312 = vmatprep.subr.mxu0 0.0
        %313 = vmatpush2.xpose.msra.mxu0 0.0
        %314 = vmatprep.subr.mxu0 0.0
        %315 = vmatpush2.xpose.msra.mxu0 0.0
        %316 = vmatprep.subr.mxu0 0.0
        %317 = vmatpush2.xpose.msra.mxu0 0.0
        %318 = vmatprep.subr.mxu0 0.0
        %319 = vmatpush2.xpose.msra.mxu0 0.0
        %320 = vmatprep.subr.mxu0 0.0
        %321 = vmatpush2.xpose.msra.mxu0 0.0
        %322 = vmatprep.subr.mxu0 0.0
        %323 = vmatpush2.xpose.msra.mxu0 0.0
        %324 = vmatprep.subr.mxu0 0.0
        %325 = vmatpush2.xpose.msra.mxu0 0.0
        %326 = vmatprep.subr.mxu0 0.0
        %327 = vmatpush2.xpose.msra.mxu0 0.0
        %328 = vmatprep.subr.mxu0 0.0
        %329 = vmatpush2.xpose.msra.mxu0 0.0
        %330 = vmatprep.subr.mxu0 0.0
        %331 = vmatpush2.xpose.msra.mxu0 0.0
        %332 = vmatprep.subr.mxu0 0.0
        %333 = vmatpush2.xpose.msra.mxu0 0.0
        %334 = vmatprep.subr.mxu0 0.0
        %335 = vmatpush2.xpose.msra.mxu0 0.0
        %336 = vmatprep.subr.mxu0 0.0
        %337 = vmatpush2.xpose.msra.mxu0 0.0
        %338 = vmatprep.subr.mxu0 0.0
        %339 = vmatpush2.xpose.msra.mxu0 0.0
        %340 = vmatprep.subr.mxu0 0.0
        %341 = vmatpush2.xpose.msra.mxu0 0.0
        %342 = vmatprep.subr.mxu0 0.0
        %343 = vmatpush2.xpose.msra.mxu0 0.0
        %344 = vmatprep.mubr.f32.mxu0 0.0
        %345 = vmatmul.mubr.f32.gmra.mxu0 %v275
        %v346 = vpop.f32.mrf.mxu0
        %v347 = vadd.f32 0.0, %v346
        %v348 = vpop.f32.mrf.mxu0
        %349 = vdwg.mxu0
        %v351 = vsel %vm273, %v250, 0
        %v354 = vsel %vm273, %v258, 0
        %356 = vmatprep.subr.mxu0 0.0
        %357 = vmatpush1.xpose.msra.mxu0 0.0
        %358 = vmatprep.subr.mxu0 0.0
        %359 = vmatpush1.xpose.msra.mxu0 0.0
        %360 = vmatprep.subr.mxu0 0.0
        %361 = vmatpush1.xpose.msra.mxu0 0.0
        %362 = vmatprep.subr.mxu0 0.0
        %363 = vmatpush1.xpose.msra.mxu0 0.0
        %364 = vmatprep.subr.mxu0 0.0
        %365 = vmatpush1.xpose.msra.mxu0 0.0
        %366 = vmatprep.subr.mxu0 0.0
        %367 = vmatpush1.xpose.msra.mxu0 0.0
        %368 = vmatprep.subr.mxu0 0.0
        %369 = vmatpush1.xpose.msra.mxu0 0.0
        %370 = vmatprep.subr.mxu0 0.0
        %371 = vmatpush1.xpose.msra.mxu0 0.0
        %372 = vmatprep.subr.mxu0 0.0
        %373 = vmatpush1.xpose.msra.mxu0 0.0
        %374 = vmatprep.subr.mxu0 0.0
        %375 = vmatpush1.xpose.msra.mxu0 0.0
        %376 = vmatprep.subr.mxu0 0.0
        %377 = vmatpush1.xpose.msra.mxu0 0.0
        %378 = vmatprep.subr.mxu0 0.0
        %379 = vmatpush1.xpose.msra.mxu0 0.0
        %380 = vmatprep.subr.mxu0 0.0
        %381 = vmatpush1.xpose.msra.mxu0 0.0
        %382 = vmatprep.subr.mxu0 0.0
        %383 = vmatpush1.xpose.msra.mxu0 0.0
        %384 = vmatprep.subr.mxu0 0.0
        %385 = vmatpush1.xpose.msra.mxu0 0.0
        %386 = vmatprep.subr.mxu0 0.0
        %387 = vmatpush1.xpose.msra.mxu0 %v354
        %388 = vmatprep.subr.mxu0 0.0
        %389 = vmatpush2.xpose.msra.mxu0 0.0
        %390 = vmatprep.subr.mxu0 0.0
        %391 = vmatpush2.xpose.msra.mxu0 0.0
        %392 = vmatprep.subr.mxu0 0.0
        %393 = vmatpush2.xpose.msra.mxu0 0.0
        %394 = vmatprep.subr.mxu0 0.0
        %395 = vmatpush2.xpose.msra.mxu0 0.0
        %396 = vmatprep.subr.mxu0 0.0
        %397 = vmatpush2.xpose.msra.mxu0 0.0
        %398 = vmatprep.subr.mxu0 0.0
        %399 = vmatpush2.xpose.msra.mxu0 0.0
        %400 = vmatprep.subr.mxu0 0.0
        %401 = vmatpush2.xpose.msra.mxu0 0.0
        %402 = vmatprep.subr.mxu0 0.0
        %403 = vmatpush2.xpose.msra.mxu0 0.0
        %404 = vmatprep.subr.mxu0 0.0
        %405 = vmatpush2.xpose.msra.mxu0 0.0
        %406 = vmatprep.subr.mxu0 0.0
        %407 = vmatpush2.xpose.msra.mxu0 0.0
        %408 = vmatprep.subr.mxu0 0.0
        %409 = vmatpush2.xpose.msra.mxu0 0.0
        %410 = vmatprep.subr.mxu0 0.0
        %411 = vmatpush2.xpose.msra.mxu0 0.0
        %412 = vmatprep.subr.mxu0 0.0
        %413 = vmatpush2.xpose.msra.mxu0 0.0
        %414 = vmatprep.subr.mxu0 0.0
        %415 = vmatpush2.xpose.msra.mxu0 0.0
        %416 = vmatprep.subr.mxu0 0.0
        %417 = vmatpush2.xpose.msra.mxu0 0.0
        %418 = vmatprep.subr.mxu0 0.0
        %419 = vmatpush2.xpose.msra.mxu0 0.0
        %420 = vmatprep.mubr.f32.mxu0 0.0
        %421 = vmatmul.mubr.f32.gmra.mxu0 %v351
        %v422 = vpop.f32.mrf.mxu0
        %v423 = vadd.f32 0.0, %v422
        %v424 = vpop.f32.mrf.mxu0
        %425 = vdwg.mxu0
        %v427 = vsel %vm273, %v251, 0
        %v430 = vsel %vm273, %v259, 0
        %432 = vmatprep.subr.mxu0 0.0
        %433 = vmatpush1.xpose.msra.mxu0 0.0
        %434 = vmatprep.subr.mxu0 0.0
        %435 = vmatpush1.xpose.msra.mxu0 0.0
        %436 = vmatprep.subr.mxu0 0.0
        %437 = vmatpush1.xpose.msra.mxu0 0.0
        %438 = vmatprep.subr.mxu0 0.0
        %439 = vmatpush1.xpose.msra.mxu0 0.0
        %440 = vmatprep.subr.mxu0 0.0
        %441 = vmatpush1.xpose.msra.mxu0 0.0
        %442 = vmatprep.subr.mxu0 0.0
        %443 = vmatpush1.xpose.msra.mxu0 0.0
        %444 = vmatprep.subr.mxu0 0.0
        %445 = vmatpush1.xpose.msra.mxu0 0.0
        %446 = vmatprep.subr.mxu0 0.0
        %447 = vmatpush1.xpose.msra.mxu0 0.0
        %448 = vmatprep.subr.mxu0 0.0
        %449 = vmatpush1.xpose.msra.mxu0 0.0
        %450 = vmatprep.subr.mxu0 0.0
        %451 = vmatpush1.xpose.msra.mxu0 0.0
        %452 = vmatprep.subr.mxu0 0.0
        %453 = vmatpush1.xpose.msra.mxu0 0.0
        %454 = vmatprep.subr.mxu0 0.0
        %455 = vmatpush1.xpose.msra.mxu0 0.0
        %456 = vmatprep.subr.mxu0 0.0
        %457 = vmatpush1.xpose.msra.mxu0 0.0
        %458 = vmatprep.subr.mxu0 0.0
        %459 = vmatpush1.xpose.msra.mxu0 0.0
        %460 = vmatprep.subr.mxu0 0.0
        %461 = vmatpush1.xpose.msra.mxu0 0.0
        %462 = vmatprep.subr.mxu0 0.0
        %463 = vmatpush1.xpose.msra.mxu0 %v430
        %464 = vmatprep.subr.mxu0 0.0
        %465 = vmatpush2.xpose.msra.mxu0 0.0
        %466 = vmatprep.subr.mxu0 0.0
        %467 = vmatpush2.xpose.msra.mxu0 0.0
        %468 = vmatprep.subr.mxu0 0.0
        %469 = vmatpush2.xpose.msra.mxu0 0.0
        %470 = vmatprep.subr.mxu0 0.0
        %471 = vmatpush2.xpose.msra.mxu0 0.0
        %472 = vmatprep.subr.mxu0 0.0
        %473 = vmatpush2.xpose.msra.mxu0 0.0
        %474 = vmatprep.subr.mxu0 0.0
        %475 = vmatpush2.xpose.msra.mxu0 0.0
        %476 = vmatprep.subr.mxu0 0.0
        %477 = vmatpush2.xpose.msra.mxu0 0.0
        %478 = vmatprep.subr.mxu0 0.0
        %479 = vmatpush2.xpose.msra.mxu0 0.0
        %480 = vmatprep.subr.mxu0 0.0
        %481 = vmatpush2.xpose.msra.mxu0 0.0
        %482 = vmatprep.subr.mxu0 0.0
        %483 = vmatpush2.xpose.msra.mxu0 0.0
        %484 = vmatprep.subr.mxu0 0.0
        %485 = vmatpush2.xpose.msra.mxu0 0.0
        %486 = vmatprep.subr.mxu0 0.0
        %487 = vmatpush2.xpose.msra.mxu0 0.0
        %488 = vmatprep.subr.mxu0 0.0
        %489 = vmatpush2.xpose.msra.mxu0 0.0
        %490 = vmatprep.subr.mxu0 0.0
        %491 = vmatpush2.xpose.msra.mxu0 0.0
        %492 = vmatprep.subr.mxu0 0.0
        %493 = vmatpush2.xpose.msra.mxu0 0.0
        %494 = vmatprep.subr.mxu0 0.0
        %495 = vmatpush2.xpose.msra.mxu0 0.0
        %496 = vmatprep.mubr.f32.mxu0 0.0
        %497 = vmatmul.mubr.f32.gmra.mxu0 %v427
        %v498 = vpop.f32.mrf.mxu0
        %v499 = vadd.f32 0.0, %v498
        %v500 = vpop.f32.mrf.mxu0
        %501 = vdwg.mxu0
        %v503 = vsel %vm273, %v252, 0
        %v506 = vsel %vm273, %v260, 0
        %508 = vmatprep.subr.mxu0 0.0
        %509 = vmatpush1.xpose.msra.mxu0 0.0
        %510 = vmatprep.subr.mxu0 0.0
        %511 = vmatpush1.xpose.msra.mxu0 0.0
        %512 = vmatprep.subr.mxu0 0.0
        %513 = vmatpush1.xpose.msra.mxu0 0.0
        %514 = vmatprep.subr.mxu0 0.0
        %515 = vmatpush1.xpose.msra.mxu0 0.0
        %516 = vmatprep.subr.mxu0 0.0
        %517 = vmatpush1.xpose.msra.mxu0 0.0
        %518 = vmatprep.subr.mxu0 0.0
        %519 = vmatpush1.xpose.msra.mxu0 0.0
        %520 = vmatprep.subr.mxu0 0.0
        %521 = vmatpush1.xpose.msra.mxu0 0.0
        %522 = vmatprep.subr.mxu0 0.0
        %523 = vmatpush1.xpose.msra.mxu0 0.0
        %524 = vmatprep.subr.mxu0 0.0
        %525 = vmatpush1.xpose.msra.mxu0 0.0
        %526 = vmatprep.subr.mxu0 0.0
        %527 = vmatpush1.xpose.msra.mxu0 0.0
        %528 = vmatprep.subr.mxu0 0.0
        %529 = vmatpush1.xpose.msra.mxu0 0.0
        %530 = vmatprep.subr.mxu0 0.0
        %531 = vmatpush1.xpose.msra.mxu0 0.0
        %532 = vmatprep.subr.mxu0 0.0
        %533 = vmatpush1.xpose.msra.mxu0 0.0
        %534 = vmatprep.subr.mxu0 0.0
        %535 = vmatpush1.xpose.msra.mxu0 0.0
        %536 = vmatprep.subr.mxu0 0.0
        %537 = vmatpush1.xpose.msra.mxu0 0.0
        %538 = vmatprep.subr.mxu0 0.0
        %539 = vmatpush1.xpose.msra.mxu0 %v506
        %540 = vmatprep.subr.mxu0 0.0
        %541 = vmatpush2.xpose.msra.mxu0 0.0
        %542 = vmatprep.subr.mxu0 0.0
        %543 = vmatpush2.xpose.msra.mxu0 0.0
        %544 = vmatprep.subr.mxu0 0.0
        %545 = vmatpush2.xpose.msra.mxu0 0.0
        %546 = vmatprep.subr.mxu0 0.0
        %547 = vmatpush2.xpose.msra.mxu0 0.0
        %548 = vmatprep.subr.mxu0 0.0
        %549 = vmatpush2.xpose.msra.mxu0 0.0
        %550 = vmatprep.subr.mxu0 0.0
        %551 = vmatpush2.xpose.msra.mxu0 0.0
        %552 = vmatprep.subr.mxu0 0.0
        %553 = vmatpush2.xpose.msra.mxu0 0.0
        %554 = vmatprep.subr.mxu0 0.0
        %555 = vmatpush2.xpose.msra.mxu0 0.0
        %556 = vmatprep.subr.mxu0 0.0
        %557 = vmatpush2.xpose.msra.mxu0 0.0
        %558 = vmatprep.subr.mxu0 0.0
        %559 = vmatpush2.xpose.msra.mxu0 0.0
        %560 = vmatprep.subr.mxu0 0.0
        %561 = vmatpush2.xpose.msra.mxu0 0.0
        %562 = vmatprep.subr.mxu0 0.0
        %563 = vmatpush2.xpose.msra.mxu0 0.0
        %564 = vmatprep.subr.mxu0 0.0
        %565 = vmatpush2.xpose.msra.mxu0 0.0
        %566 = vmatprep.subr.mxu0 0.0
        %567 = vmatpush2.xpose.msra.mxu0 0.0
        %568 = vmatprep.subr.mxu0 0.0
        %569 = vmatpush2.xpose.msra.mxu0 0.0
        %570 = vmatprep.subr.mxu0 0.0
        %571 = vmatpush2.xpose.msra.mxu0 0.0
        %572 = vmatprep.mubr.f32.mxu0 0.0
        %573 = vmatmul.mubr.f32.gmra.mxu0 %v503
        %v574 = vpop.f32.mrf.mxu0
        %v575 = vadd.f32 0.0, %v574
        %v576 = vpop.f32.mrf.mxu0
        %577 = vdwg.mxu0
        %v579 = vsel %vm273, %v253, 0
        %v582 = vsel %vm273, %v261, 0
        %584 = vmatprep.subr.mxu0 0.0
        %585 = vmatpush1.xpose.msra.mxu0 0.0
        %586 = vmatprep.subr.mxu0 0.0
        %587 = vmatpush1.xpose.msra.mxu0 0.0
        %588 = vmatprep.subr.mxu0 0.0
        %589 = vmatpush1.xpose.msra.mxu0 0.0
        %590 = vmatprep.subr.mxu0 0.0
        %591 = vmatpush1.xpose.msra.mxu0 0.0
        %592 = vmatprep.subr.mxu0 0.0
        %593 = vmatpush1.xpose.msra.mxu0 0.0
        %594 = vmatprep.subr.mxu0 0.0
        %595 = vmatpush1.xpose.msra.mxu0 0.0
        %596 = vmatprep.subr.mxu0 0.0
        %597 = vmatpush1.xpose.msra.mxu0 0.0
        %598 = vmatprep.subr.mxu0 0.0
        %599 = vmatpush1.xpose.msra.mxu0 0.0
        %600 = vmatprep.subr.mxu0 0.0
        %601 = vmatpush1.xpose.msra.mxu0 0.0
        %602 = vmatprep.subr.mxu0 0.0
        %603 = vmatpush1.xpose.msra.mxu0 0.0
        %604 = vmatprep.subr.mxu0 0.0
        %605 = vmatpush1.xpose.msra.mxu0 0.0
        %606 = vmatprep.subr.mxu0 0.0
        %607 = vmatpush1.xpose.msra.mxu0 0.0
        %608 = vmatprep.subr.mxu0 0.0
        %609 = vmatpush1.xpose.msra.mxu0 0.0
        %610 = vmatprep.subr.mxu0 0.0
        %611 = vmatpush1.xpose.msra.mxu0 0.0
        %612 = vmatprep.subr.mxu0 0.0
        %613 = vmatpush1.xpose.msra.mxu0 0.0
        %614 = vmatprep.subr.mxu0 0.0
        %615 = vmatpush1.xpose.msra.mxu0 %v582
        %616 = vmatprep.subr.mxu0 0.0
        %617 = vmatpush2.xpose.msra.mxu0 0.0
        %618 = vmatprep.subr.mxu0 0.0
        %619 = vmatpush2.xpose.msra.mxu0 0.0
        %620 = vmatprep.subr.mxu0 0.0
        %621 = vmatpush2.xpose.msra.mxu0 0.0
        %622 = vmatprep.subr.mxu0 0.0
        %623 = vmatpush2.xpose.msra.mxu0 0.0
        %624 = vmatprep.subr.mxu0 0.0
        %625 = vmatpush2.xpose.msra.mxu0 0.0
        %626 = vmatprep.subr.mxu0 0.0
        %627 = vmatpush2.xpose.msra.mxu0 0.0
        %628 = vmatprep.subr.mxu0 0.0
        %629 = vmatpush2.xpose.msra.mxu0 0.0
        %630 = vmatprep.subr.mxu0 0.0
        %631 = vmatpush2.xpose.msra.mxu0 0.0
        %632 = vmatprep.subr.mxu0 0.0
        %633 = vmatpush2.xpose.msra.mxu0 0.0
        %634 = vmatprep.subr.mxu0 0.0
        %635 = vmatpush2.xpose.msra.mxu0 0.0
        %636 = vmatprep.subr.mxu0 0.0
        %637 = vmatpush2.xpose.msra.mxu0 0.0
        %638 = vmatprep.subr.mxu0 0.0
        %639 = vmatpush2.xpose.msra.mxu0 0.0
        %640 = vmatprep.subr.mxu0 0.0
        %641 = vmatpush2.xpose.msra.mxu0 0.0
        %642 = vmatprep.subr.mxu0 0.0
        %643 = vmatpush2.xpose.msra.mxu0 0.0
        %644 = vmatprep.subr.mxu0 0.0
        %645 = vmatpush2.xpose.msra.mxu0 0.0
        %646 = vmatprep.subr.mxu0 0.0
        %647 = vmatpush2.xpose.msra.mxu0 0.0
        %648 = vmatprep.mubr.f32.mxu0 0.0
        %649 = vmatmul.mubr.f32.gmra.mxu0 %v579
        %v650 = vpop.f32.mrf.mxu0
        %v651 = vadd.f32 0.0, %v650
        %v652 = vpop.f32.mrf.mxu0
        %653 = vdwg.mxu0
        %v655 = vsel %vm273, %v254, 0
        %v658 = vsel %vm273, %v262, 0
        %660 = vmatprep.subr.mxu0 0.0
        %661 = vmatpush1.xpose.msra.mxu0 0.0
        %662 = vmatprep.subr.mxu0 0.0
        %663 = vmatpush1.xpose.msra.mxu0 0.0
        %664 = vmatprep.subr.mxu0 0.0
        %665 = vmatpush1.xpose.msra.mxu0 0.0
        %666 = vmatprep.subr.mxu0 0.0
        %667 = vmatpush1.xpose.msra.mxu0 0.0
        %668 = vmatprep.subr.mxu0 0.0
        %669 = vmatpush1.xpose.msra.mxu0 0.0
        %670 = vmatprep.subr.mxu0 0.0
        %671 = vmatpush1.xpose.msra.mxu0 0.0
        %672 = vmatprep.subr.mxu0 0.0
        %673 = vmatpush1.xpose.msra.mxu0 0.0
        %674 = vmatprep.subr.mxu0 0.0
        %675 = vmatpush1.xpose.msra.mxu0 0.0
        %676 = vmatprep.subr.mxu0 0.0
        %677 = vmatpush1.xpose.msra.mxu0 0.0
        %678 = vmatprep.subr.mxu0 0.0
        %679 = vmatpush1.xpose.msra.mxu0 0.0
        %680 = vmatprep.subr.mxu0 0.0
        %681 = vmatpush1.xpose.msra.mxu0 0.0
        %682 = vmatprep.subr.mxu0 0.0
        %683 = vmatpush1.xpose.msra.mxu0 0.0
        %684 = vmatprep.subr.mxu0 0.0
        %685 = vmatpush1.xpose.msra.mxu0 0.0
        %686 = vmatprep.subr.mxu0 0.0
        %687 = vmatpush1.xpose.msra.mxu0 0.0
        %688 = vmatprep.subr.mxu0 0.0
        %689 = vmatpush1.xpose.msra.mxu0 0.0
        %690 = vmatprep.subr.mxu0 0.0
        %691 = vmatpush1.xpose.msra.mxu0 %v658
        %692 = vmatprep.subr.mxu0 0.0
        %693 = vmatpush2.xpose.msra.mxu0 0.0
        %694 = vmatprep.subr.mxu0 0.0
        %695 = vmatpush2.xpose.msra.mxu0 0.0
        %696 = vmatprep.subr.mxu0 0.0
        %697 = vmatpush2.xpose.msra.mxu0 0.0
        %698 = vmatprep.subr.mxu0 0.0
        %699 = vmatpush2.xpose.msra.mxu0 0.0
        %700 = vmatprep.subr.mxu0 0.0
        %701 = vmatpush2.xpose.msra.mxu0 0.0
        %702 = vmatprep.subr.mxu0 0.0
        %703 = vmatpush2.xpose.msra.mxu0 0.0
        %704 = vmatprep.subr.mxu0 0.0
        %705 = vmatpush2.xpose.msra.mxu0 0.0
        %706 = vmatprep.subr.mxu0 0.0
        %707 = vmatpush2.xpose.msra.mxu0 0.0
        %708 = vmatprep.subr.mxu0 0.0
        %709 = vmatpush2.xpose.msra.mxu0 0.0
        %710 = vmatprep.subr.mxu0 0.0
        %711 = vmatpush2.xpose.msra.mxu0 0.0
        %712 = vmatprep.subr.mxu0 0.0
        %713 = vmatpush2.xpose.msra.mxu0 0.0
        %714 = vmatprep.subr.mxu0 0.0
        %715 = vmatpush2.xpose.msra.mxu0 0.0
        %716 = vmatprep.subr.mxu0 0.0
        %717 = vmatpush2.xpose.msra.mxu0 0.0
        %718 = vmatprep.subr.mxu0 0.0
        %719 = vmatpush2.xpose.msra.mxu0 0.0
        %720 = vmatprep.subr.mxu0 0.0
        %721 = vmatpush2.xpose.msra.mxu0 0.0
        %722 = vmatprep.subr.mxu0 0.0
        %723 = vmatpush2.xpose.msra.mxu0 0.0
        %724 = vmatprep.mubr.f32.mxu0 0.0
        %725 = vmatmul.mubr.f32.gmra.mxu0 %v655
        %v726 = vpop.f32.mrf.mxu0
        %v727 = vadd.f32 0.0, %v726
        %v728 = vpop.f32.mrf.mxu0
        %729 = vdwg.mxu0
        %v731 = vsel %vm273, %v255, 0
        %v734 = vsel %vm273, %v263, 0
        %736 = vmatprep.subr.mxu0 0.0
        %737 = vmatpush1.xpose.msra.mxu0 0.0
        %738 = vmatprep.subr.mxu0 0.0
        %739 = vmatpush1.xpose.msra.mxu0 0.0
        %740 = vmatprep.subr.mxu0 0.0
        %741 = vmatpush1.xpose.msra.mxu0 0.0
        %742 = vmatprep.subr.mxu0 0.0
        %743 = vmatpush1.xpose.msra.mxu0 0.0
        %744 = vmatprep.subr.mxu0 0.0
        %745 = vmatpush1.xpose.msra.mxu0 0.0
        %746 = vmatprep.subr.mxu0 0.0
        %747 = vmatpush1.xpose.msra.mxu0 0.0
        %748 = vmatprep.subr.mxu0 0.0
        %749 = vmatpush1.xpose.msra.mxu0 0.0
        %750 = vmatprep.subr.mxu0 0.0
        %751 = vmatpush1.xpose.msra.mxu0 0.0
        %752 = vmatprep.subr.mxu0 0.0
        %753 = vmatpush1.xpose.msra.mxu0 0.0
        %754 = vmatprep.subr.mxu0 0.0
        %755 = vmatpush1.xpose.msra.mxu0 0.0
        %756 = vmatprep.subr.mxu0 0.0
        %757 = vmatpush1.xpose.msra.mxu0 0.0
        %758 = vmatprep.subr.mxu0 0.0
        %759 = vmatpush1.xpose.msra.mxu0 0.0
        %760 = vmatprep.subr.mxu0 0.0
        %761 = vmatpush1.xpose.msra.mxu0 0.0
        %762 = vmatprep.subr.mxu0 0.0
        %763 = vmatpush1.xpose.msra.mxu0 0.0
        %764 = vmatprep.subr.mxu0 0.0
        %765 = vmatpush1.xpose.msra.mxu0 0.0
        %766 = vmatprep.subr.mxu0 0.0
        %767 = vmatpush1.xpose.msra.mxu0 %v734
        %768 = vmatprep.subr.mxu0 0.0
        %769 = vmatpush2.xpose.msra.mxu0 0.0
        %770 = vmatprep.subr.mxu0 0.0
        %771 = vmatpush2.xpose.msra.mxu0 0.0
        %772 = vmatprep.subr.mxu0 0.0
        %773 = vmatpush2.xpose.msra.mxu0 0.0
        %774 = vmatprep.subr.mxu0 0.0
        %775 = vmatpush2.xpose.msra.mxu0 0.0
        %776 = vmatprep.subr.mxu0 0.0
        %777 = vmatpush2.xpose.msra.mxu0 0.0
        %778 = vmatprep.subr.mxu0 0.0
        %779 = vmatpush2.xpose.msra.mxu0 0.0
        %780 = vmatprep.subr.mxu0 0.0
        %781 = vmatpush2.xpose.msra.mxu0 0.0
        %782 = vmatprep.subr.mxu0 0.0
        %783 = vmatpush2.xpose.msra.mxu0 0.0
        %784 = vmatprep.subr.mxu0 0.0
        %785 = vmatpush2.xpose.msra.mxu0 0.0
        %786 = vmatprep.subr.mxu0 0.0
        %787 = vmatpush2.xpose.msra.mxu0 0.0
        %788 = vmatprep.subr.mxu0 0.0
        %789 = vmatpush2.xpose.msra.mxu0 0.0
        %790 = vmatprep.subr.mxu0 0.0
        %791 = vmatpush2.xpose.msra.mxu0 0.0
        %792 = vmatprep.subr.mxu0 0.0
        %793 = vmatpush2.xpose.msra.mxu0 0.0
        %794 = vmatprep.subr.mxu0 0.0
        %795 = vmatpush2.xpose.msra.mxu0 0.0
        %796 = vmatprep.subr.mxu0 0.0
        %797 = vmatpush2.xpose.msra.mxu0 0.0
        %798 = vmatprep.subr.mxu0 0.0
        %799 = vmatpush2.xpose.msra.mxu0 0.0
        %800 = vmatprep.mubr.f32.mxu0 0.0
        %801 = vmatmul.mubr.f32.gmra.mxu0 %v731
        %v802 = vpop.f32.mrf.mxu0
        %v803 = vadd.f32 0.0, %v802
        %v804 = vpop.f32.mrf.mxu0
        %805 = vdwg.mxu0
        %v807 = vsel %vm273, %v256, 0
        %v810 = vsel %vm273, %v264, 0
        %812 = vmatprep.subr.mxu0 0.0
        %813 = vmatpush1.xpose.msra.mxu0 0.0
        %814 = vmatprep.subr.mxu0 0.0
        %815 = vmatpush1.xpose.msra.mxu0 0.0
        %816 = vmatprep.subr.mxu0 0.0
        %817 = vmatpush1.xpose.msra.mxu0 0.0
        %818 = vmatprep.subr.mxu0 0.0
        %819 = vmatpush1.xpose.msra.mxu0 0.0
        %820 = vmatprep.subr.mxu0 0.0
        %821 = vmatpush1.xpose.msra.mxu0 0.0
        %822 = vmatprep.subr.mxu0 0.0
        %823 = vmatpush1.xpose.msra.mxu0 0.0
        %824 = vmatprep.subr.mxu0 0.0
        %825 = vmatpush1.xpose.msra.mxu0 0.0
        %826 = vmatprep.subr.mxu0 0.0
        %827 = vmatpush1.xpose.msra.mxu0 0.0
        %828 = vmatprep.subr.mxu0 0.0
        %829 = vmatpush1.xpose.msra.mxu0 0.0
        %830 = vmatprep.subr.mxu0 0.0
        %831 = vmatpush1.xpose.msra.mxu0 0.0
        %832 = vmatprep.subr.mxu0 0.0
        %833 = vmatpush1.xpose.msra.mxu0 0.0
        %834 = vmatprep.subr.mxu0 0.0
        %835 = vmatpush1.xpose.msra.mxu0 0.0
        %836 = vmatprep.subr.mxu0 0.0
        %837 = vmatpush1.xpose.msra.mxu0 0.0
        %838 = vmatprep.subr.mxu0 0.0
        %839 = vmatpush1.xpose.msra.mxu0 0.0
        %840 = vmatprep.subr.mxu0 0.0
        %841 = vmatpush1.xpose.msra.mxu0 0.0
        %842 = vmatprep.subr.mxu0 0.0
        %843 = vmatpush1.xpose.msra.mxu0 %v810
        %844 = vmatprep.subr.mxu0 0.0
        %845 = vmatpush2.xpose.msra.mxu0 0.0
        %846 = vmatprep.subr.mxu0 0.0
        %847 = vmatpush2.xpose.msra.mxu0 0.0
        %848 = vmatprep.subr.mxu0 0.0
        %849 = vmatpush2.xpose.msra.mxu0 0.0
        %850 = vmatprep.subr.mxu0 0.0
        %851 = vmatpush2.xpose.msra.mxu0 0.0
        %852 = vmatprep.subr.mxu0 0.0
        %853 = vmatpush2.xpose.msra.mxu0 0.0
        %854 = vmatprep.subr.mxu0 0.0
        %855 = vmatpush2.xpose.msra.mxu0 0.0
        %856 = vmatprep.subr.mxu0 0.0
        %857 = vmatpush2.xpose.msra.mxu0 0.0
        %858 = vmatprep.subr.mxu0 0.0
        %859 = vmatpush2.xpose.msra.mxu0 0.0
        %860 = vmatprep.subr.mxu0 0.0
        %861 = vmatpush2.xpose.msra.mxu0 0.0
        %862 = vmatprep.subr.mxu0 0.0
        %863 = vmatpush2.xpose.msra.mxu0 0.0
        %864 = vmatprep.subr.mxu0 0.0
        %865 = vmatpush2.xpose.msra.mxu0 0.0
        %866 = vmatprep.subr.mxu0 0.0
        %867 = vmatpush2.xpose.msra.mxu0 0.0
        %868 = vmatprep.subr.mxu0 0.0
        %869 = vmatpush2.xpose.msra.mxu0 0.0
        %870 = vmatprep.subr.mxu0 0.0
        %871 = vmatpush2.xpose.msra.mxu0 0.0
        %872 = vmatprep.subr.mxu0 0.0
        %873 = vmatpush2.xpose.msra.mxu0 0.0
        %874 = vmatprep.subr.mxu0 0.0
        %875 = vmatpush2.xpose.msra.mxu0 0.0
        %876 = vmatprep.mubr.f32.mxu0 0.0
        %877 = vmatmul.mubr.f32.gmra.mxu0 %v807
        %v878 = vpop.f32.mrf.mxu0
        %v879 = vadd.f32 0.0, %v878
        %v880 = vpop.f32.mrf.mxu0
        %881 = vdwg.mxu0
        %v882 = vmul.f32 %v347, 0.125
        %v883 = vmul.f32 %v423, 0.125
        %v884 = vmul.f32 %v499, 0.125
        %v885 = vmul.f32 %v575, 0.125
        %v886 = vmul.f32 %v651, 0.125
        %v887 = vmul.f32 %v727, 0.125
        %v888 = vmul.f32 %v803, 0.125
        %v889 = vmul.f32 %v879, 0.125
        %vm890 = vcmask 64512
        %v891 = vsel %vm890, %v882, -inf
        %892 = vmax.xlane.f32.xlu0 %v891
        %v893 = vpop.xlane.xlu0 %892
        %v894 = vsel %vm890, %v883, -inf
        %895 = vmax.xlane.f32.xlu0 %v894
        %v896 = vpop.xlane.xlu0 %895
        %v897 = vsel %vm890, %v884, -inf
        %898 = vmax.xlane.f32.xlu0 %v897
        %v899 = vpop.xlane.xlu0 %898
        %v900 = vsel %vm890, %v885, -inf
        %901 = vmax.xlane.f32.xlu0 %v900
        %v902 = vpop.xlane.xlu0 %901
        %v903 = vsel %vm890, %v886, -inf
        %904 = vmax.xlane.f32.xlu0 %v903
        %v905 = vpop.xlane.xlu0 %904
        %v906 = vsel %vm890, %v887, -inf
        %907 = vmax.xlane.f32.xlu0 %v906
        %v908 = vpop.xlane.xlu0 %907
        %v909 = vsel %vm890, %v888, -inf
        %910 = vmax.xlane.f32.xlu0 %v909
        %v911 = vpop.xlane.xlu0 %910
        %v912 = vsel %vm890, %v889, -inf
        %913 = vmax.xlane.f32.xlu0 %v912
        %v914 = vpop.xlane.xlu0 %913
        %v915 = vsub.f32 %v882, %v893
        %v916 = vsub.f32 %v883, %v896
        %v917 = vsub.f32 %v884, %v899
        %v918 = vsub.f32 %v885, %v902
        %v919 = vsub.f32 %v886, %v905
        %v920 = vsub.f32 %v887, %v908
        %v921 = vsub.f32 %v888, %v911
        %v922 = vsub.f32 %v889, %v914
        %v923 = vmul.f32 %v915, 1.442695
        %v924 = vpow.pop %v923
        %v925 = vmul.f32 %v916, 1.442695
        %v926 = vpow.pop %v925
        %v927 = vmul.f32 %v917, 1.442695
        %v928 = vpow.pop %v927
        %v929 = vmul.f32 %v918, 1.442695
        %v930 = vpow.pop %v929
        %v931 = vmul.f32 %v919, 1.442695
        %v932 = vpow.pop %v931
        %v933 = vmul.f32 %v920, 1.442695
        %v934 = vpow.pop %v933
        %v935 = vmul.f32 %v921, 1.442695
        %v936 = vpow.pop %v935
        %v937 = vmul.f32 %v922, 1.442695
        %v938 = vpow.pop %v937
        %v939 = vsel %vm890, %v924, 0.0
        %940 = vadd.xlane.f32.xlu0 %v939
        %v941 = vpop.xlane.xlu0 %940
        %v942 = vsel %vm890, %v926, 0.0
        %943 = vadd.xlane.f32.xlu0 %v942
        %v944 = vpop.xlane.xlu0 %943
        %v945 = vsel %vm890, %v928, 0.0
        %946 = vadd.xlane.f32.xlu0 %v945
        %v947 = vpop.xlane.xlu0 %946
        %v948 = vsel %vm890, %v930, 0.0
        %949 = vadd.xlane.f32.xlu0 %v948
        %v950 = vpop.xlane.xlu0 %949
        %v951 = vsel %vm890, %v932, 0.0
        %952 = vadd.xlane.f32.xlu0 %v951
        %v953 = vpop.xlane.xlu0 %952
        %v954 = vsel %vm890, %v934, 0.0
        %955 = vadd.xlane.f32.xlu0 %v954
        %v956 = vpop.xlane.xlu0 %955
        %v957 = vsel %vm890, %v936, 0.0
        %958 = vadd.xlane.f32.xlu0 %v957
        %v959 = vpop.xlane.xlu0 %958
        %v960 = vsel %vm890, %v938, 0.0
        %961 = vadd.xlane.f32.xlu0 %v960
        %v962 = vpop.xlane.xlu0 %961
        %v963 = vrcp.pop %v941
        %v964 = vmul.f32 %v924, %v963
        %v965 = vrcp.pop %v944
        %v966 = vmul.f32 %v926, %v965
        %v967 = vrcp.pop %v947
        %v968 = vmul.f32 %v928, %v967
        %v969 = vrcp.pop %v950
        %v970 = vmul.f32 %v930, %v969
        %v971 = vrcp.pop %v953
        %v972 = vmul.f32 %v932, %v971
        %v973 = vrcp.pop %v956
        %v974 = vmul.f32 %v934, %v973
        %v975 = vrcp.pop %v959
        %v976 = vmul.f32 %v936, %v975
        %v977 = vrcp.pop %v962
        %v978 = vmul.f32 %v938, %v977
        %v980 = vsel %vm890, %v964, 0
        %982 = vmatprep.subr.mxu0 0.0
        %983 = vmatpush1.msra.mxu0 0.0
        %984 = vmatprep.subr.mxu0 0.0
        %985 = vmatpush1.msra.mxu0 0.0
        %986 = vmatprep.subr.mxu0 0.0
        %987 = vmatpush1.msra.mxu0 0.0
        %988 = vmatprep.subr.mxu0 0.0
        %989 = vmatpush1.msra.mxu0 0.0
        %990 = vmatprep.subr.mxu0 0.0
        %991 = vmatpush1.msra.mxu0 0.0
        %992 = vmatprep.subr.mxu0 0.0
        %993 = vmatpush1.msra.mxu0 0.0
        %994 = vmatprep.subr.mxu0 0.0
        %995 = vmatpush1.msra.mxu0 0.0
        %996 = vmatprep.subr.mxu0 0.0
        %997 = vmatpush1.msra.mxu0 0.0
        %998 = vmatprep.subr.mxu0 0.0
        %999 = vmatpush1.msra.mxu0 0.0
        %1000 = vmatprep.subr.mxu0 0.0
        %1001 = vmatpush1.msra.mxu0 0.0
        %1002 = vmatprep.subr.mxu0 0.0
        %1003 = vmatpush1.msra.mxu0 0.0
        %1004 = vmatprep.subr.mxu0 0.0
        %1005 = vmatpush1.msra.mxu0 0.0
        %1006 = vmatprep.subr.mxu0 0.0
        %1007 = vmatpush1.msra.mxu0 0.0
        %1008 = vmatprep.subr.mxu0 0.0
        %1009 = vmatpush1.msra.mxu0 0.0
        %1010 = vmatprep.subr.mxu0 0.0
        %1011 = vmatpush1.msra.mxu0 0.0
        %1012 = vmatprep.subr.mxu0 0.0
        %1013 = vmatpush1.msra.mxu0 %v265
        %1014 = vmatprep.subr.mxu0 0.0
        %1015 = vmatpush2.msra.mxu0 0.0
        %1016 = vmatprep.subr.mxu0 0.0
        %1017 = vmatpush2.msra.mxu0 0.0
        %1018 = vmatprep.subr.mxu0 0.0
        %1019 = vmatpush2.msra.mxu0 0.0
        %1020 = vmatprep.subr.mxu0 0.0
        %1021 = vmatpush2.msra.mxu0 0.0
        %1022 = vmatprep.subr.mxu0 0.0
        %1023 = vmatpush2.msra.mxu0 0.0
        %1024 = vmatprep.subr.mxu0 0.0
        %1025 = vmatpush2.msra.mxu0 0.0
        %1026 = vmatprep.subr.mxu0 0.0
        %1027 = vmatpush2.msra.mxu0 0.0
        %1028 = vmatprep.subr.mxu0 0.0
        %1029 = vmatpush2.msra.mxu0 0.0
        %1030 = vmatprep.subr.mxu0 0.0
        %1031 = vmatpush2.msra.mxu0 0.0
        %1032 = vmatprep.subr.mxu0 0.0
        %1033 = vmatpush2.msra.mxu0 0.0
        %1034 = vmatprep.subr.mxu0 0.0
        %1035 = vmatpush2.msra.mxu0 0.0
        %1036 = vmatprep.subr.mxu0 0.0
        %1037 = vmatpush2.msra.mxu0 0.0
        %1038 = vmatprep.subr.mxu0 0.0
        %1039 = vmatpush2.msra.mxu0 0.0
        %1040 = vmatprep.subr.mxu0 0.0
        %1041 = vmatpush2.msra.mxu0 0.0
        %1042 = vmatprep.subr.mxu0 0.0
        %1043 = vmatpush2.msra.mxu0 0.0
        %1044 = vmatprep.subr.mxu0 0.0
        %1045 = vmatpush2.msra.mxu0 0.0
        %1046 = vmatprep.mubr.f32.mxu0 0.0
        %1047 = vmatmul.mubr.f32.gmra.mxu0 %v980
        %v1048 = vpop.f32.mrf.mxu0
        %v1049 = vadd.f32 0.0, %v1048
        %v1050 = vpop.f32.mrf.mxu0
        %1051 = vdwg.mxu0
        %v1053 = vsel %vm890, %v966, 0
        %1055 = vmatprep.subr.mxu0 0.0
        %1056 = vmatpush1.msra.mxu0 0.0
        %1057 = vmatprep.subr.mxu0 0.0
        %1058 = vmatpush1.msra.mxu0 0.0
        %1059 = vmatprep.subr.mxu0 0.0
        %1060 = vmatpush1.msra.mxu0 0.0
        %1061 = vmatprep.subr.mxu0 0.0
        %1062 = vmatpush1.msra.mxu0 0.0
        %1063 = vmatprep.subr.mxu0 0.0
        %1064 = vmatpush1.msra.mxu0 0.0
        %1065 = vmatprep.subr.mxu0 0.0
        %1066 = vmatpush1.msra.mxu0 0.0
        %1067 = vmatprep.subr.mxu0 0.0
        %1068 = vmatpush1.msra.mxu0 0.0
        %1069 = vmatprep.subr.mxu0 0.0
        %1070 = vmatpush1.msra.mxu0 0.0
        %1071 = vmatprep.subr.mxu0 0.0
        %1072 = vmatpush1.msra.mxu0 0.0
        %1073 = vmatprep.subr.mxu0 0.0
        %1074 = vmatpush1.msra.mxu0 0.0
        %1075 = vmatprep.subr.mxu0 0.0
        %1076 = vmatpush1.msra.mxu0 0.0
        %1077 = vmatprep.subr.mxu0 0.0
        %1078 = vmatpush1.msra.mxu0 0.0
        %1079 = vmatprep.subr.mxu0 0.0
        %1080 = vmatpush1.msra.mxu0 0.0
        %1081 = vmatprep.subr.mxu0 0.0
        %1082 = vmatpush1.msra.mxu0 0.0
        %1083 = vmatprep.subr.mxu0 0.0
        %1084 = vmatpush1.msra.mxu0 0.0
        %1085 = vmatprep.subr.mxu0 0.0
        %1086 = vmatpush1.msra.mxu0 %v266
        %1087 = vmatprep.subr.mxu0 0.0
        %1088 = vmatpush2.msra.mxu0 0.0
        %1089 = vmatprep.subr.mxu0 0.0
        %1090 = vmatpush2.msra.mxu0 0.0
        %1091 = vmatprep.subr.mxu0 0.0
        %1092 = vmatpush2.msra.mxu0 0.0
        %1093 = vmatprep.subr.mxu0 0.0
        %1094 = vmatpush2.msra.mxu0 0.0
        %1095 = vmatprep.subr.mxu0 0.0
        %1096 = vmatpush2.msra.mxu0 0.0
        %1097 = vmatprep.subr.mxu0 0.0
        %1098 = vmatpush2.msra.mxu0 0.0
        %1099 = vmatprep.subr.mxu0 0.0
        %1100 = vmatpush2.msra.mxu0 0.0
        %1101 = vmatprep.subr.mxu0 0.0
        %1102 = vmatpush2.msra.mxu0 0.0
        %1103 = vmatprep.subr.mxu0 0.0
        %1104 = vmatpush2.msra.mxu0 0.0
        %1105 = vmatprep.subr.mxu0 0.0
        %1106 = vmatpush2.msra.mxu0 0.0
        %1107 = vmatprep.subr.mxu0 0.0
        %1108 = vmatpush2.msra.mxu0 0.0
        %1109 = vmatprep.subr.mxu0 0.0
        %1110 = vmatpush2.msra.mxu0 0.0
        %1111 = vmatprep.subr.mxu0 0.0
        %1112 = vmatpush2.msra.mxu0 0.0
        %1113 = vmatprep.subr.mxu0 0.0
        %1114 = vmatpush2.msra.mxu0 0.0
        %1115 = vmatprep.subr.mxu0 0.0
        %1116 = vmatpush2.msra.mxu0 0.0
        %1117 = vmatprep.subr.mxu0 0.0
        %1118 = vmatpush2.msra.mxu0 0.0
        %1119 = vmatprep.mubr.f32.mxu0 0.0
        %1120 = vmatmul.mubr.f32.gmra.mxu0 %v1053
        %v1121 = vpop.f32.mrf.mxu0
        %v1122 = vadd.f32 0.0, %v1121
        %v1123 = vpop.f32.mrf.mxu0
        %1124 = vdwg.mxu0
        %v1126 = vsel %vm890, %v968, 0
        %1128 = vmatprep.subr.mxu0 0.0
        %1129 = vmatpush1.msra.mxu0 0.0
        %1130 = vmatprep.subr.mxu0 0.0
        %1131 = vmatpush1.msra.mxu0 0.0
        %1132 = vmatprep.subr.mxu0 0.0
        %1133 = vmatpush1.msra.mxu0 0.0
        %1134 = vmatprep.subr.mxu0 0.0
        %1135 = vmatpush1.msra.mxu0 0.0
        %1136 = vmatprep.subr.mxu0 0.0
        %1137 = vmatpush1.msra.mxu0 0.0
        %1138 = vmatprep.subr.mxu0 0.0
        %1139 = vmatpush1.msra.mxu0 0.0
        %1140 = vmatprep.subr.mxu0 0.0
        %1141 = vmatpush1.msra.mxu0 0.0
        %1142 = vmatprep.subr.mxu0 0.0
        %1143 = vmatpush1.msra.mxu0 0.0
        %1144 = vmatprep.subr.mxu0 0.0
        %1145 = vmatpush1.msra.mxu0 0.0
        %1146 = vmatprep.subr.mxu0 0.0
        %1147 = vmatpush1.msra.mxu0 0.0
        %1148 = vmatprep.subr.mxu0 0.0
        %1149 = vmatpush1.msra.mxu0 0.0
        %1150 = vmatprep.subr.mxu0 0.0
        %1151 = vmatpush1.msra.mxu0 0.0
        %1152 = vmatprep.subr.mxu0 0.0
        %1153 = vmatpush1.msra.mxu0 0.0
        %1154 = vmatprep.subr.mxu0 0.0
        %1155 = vmatpush1.msra.mxu0 0.0
        %1156 = vmatprep.subr.mxu0 0.0
        %1157 = vmatpush1.msra.mxu0 0.0
        %1158 = vmatprep.subr.mxu0 0.0
        %1159 = vmatpush1.msra.mxu0 %v267
        %1160 = vmatprep.subr.mxu0 0.0
        %1161 = vmatpush2.msra.mxu0 0.0
        %1162 = vmatprep.subr.mxu0 0.0
        %1163 = vmatpush2.msra.mxu0 0.0
        %1164 = vmatprep.subr.mxu0 0.0
        %1165 = vmatpush2.msra.mxu0 0.0
        %1166 = vmatprep.subr.mxu0 0.0
        %1167 = vmatpush2.msra.mxu0 0.0
        %1168 = vmatprep.subr.mxu0 0.0
        %1169 = vmatpush2.msra.mxu0 0.0
        %1170 = vmatprep.subr.mxu0 0.0
        %1171 = vmatpush2.msra.mxu0 0.0
        %1172 = vmatprep.subr.mxu0 0.0
        %1173 = vmatpush2.msra.mxu0 0.0
        %1174 = vmatprep.subr.mxu0 0.0
        %1175 = vmatpush2.msra.mxu0 0.0
        %1176 = vmatprep.subr.mxu0 0.0
        %1177 = vmatpush2.msra.mxu0 0.0
        %1178 = vmatprep.subr.mxu0 0.0
        %1179 = vmatpush2.msra.mxu0 0.0
        %1180 = vmatprep.subr.mxu0 0.0
        %1181 = vmatpush2.msra.mxu0 0.0
        %1182 = vmatprep.subr.mxu0 0.0
        %1183 = vmatpush2.msra.mxu0 0.0
        %1184 = vmatprep.subr.mxu0 0.0
        %1185 = vmatpush2.msra.mxu0 0.0
        %1186 = vmatprep.subr.mxu0 0.0
        %1187 = vmatpush2.msra.mxu0 0.0
        %1188 = vmatprep.subr.mxu0 0.0
        %1189 = vmatpush2.msra.mxu0 0.0
        %1190 = vmatprep.subr.mxu0 0.0
        %1191 = vmatpush2.msra.mxu0 0.0
        %1192 = vmatprep.mubr.f32.mxu0 0.0
        %1193 = vmatmul.mubr.f32.gmra.mxu0 %v1126
        %v1194 = vpop.f32.mrf.mxu0
        %v1195 = vadd.f32 0.0, %v1194
        %v1196 = vpop.f32.mrf.mxu0
        %1197 = vdwg.mxu0
        %v1199 = vsel %vm890, %v970, 0
        %1201 = vmatprep.subr.mxu0 0.0
        %1202 = vmatpush1.msra.mxu0 0.0
        %1203 = vmatprep.subr.mxu0 0.0
        %1204 = vmatpush1.msra.mxu0 0.0
        %1205 = vmatprep.subr.mxu0 0.0
        %1206 = vmatpush1.msra.mxu0 0.0
        %1207 = vmatprep.subr.mxu0 0.0
        %1208 = vmatpush1.msra.mxu0 0.0
        %1209 = vmatprep.subr.mxu0 0.0
        %1210 = vmatpush1.msra.mxu0 0.0
        %1211 = vmatprep.subr.mxu0 0.0
        %1212 = vmatpush1.msra.mxu0 0.0
        %1213 = vmatprep.subr.mxu0 0.0
        %1214 = vmatpush1.msra.mxu0 0.0
        %1215 = vmatprep.subr.mxu0 0.0
        %1216 = vmatpush1.msra.mxu0 0.0
        %1217 = vmatprep.subr.mxu0 0.0
        %1218 = vmatpush1.msra.mxu0 0.0
        %1219 = vmatprep.subr.mxu0 0.0
        %1220 = vmatpush1.msra.mxu0 0.0
        %1221 = vmatprep.subr.mxu0 0.0
        %1222 = vmatpush1.msra.mxu0 0.0
        %1223 = vmatprep.subr.mxu0 0.0
        %1224 = vmatpush1.msra.mxu0 0.0
        %1225 = vmatprep.subr.mxu0 0.0
        %1226 = vmatpush1.msra.mxu0 0.0
        %1227 = vmatprep.subr.mxu0 0.0
        %1228 = vmatpush1.msra.mxu0 0.0
        %1229 = vmatprep.subr.mxu0 0.0
        %1230 = vmatpush1.msra.mxu0 0.0
        %1231 = vmatprep.subr.mxu0 0.0
        %1232 = vmatpush1.msra.mxu0 %v268
        %1233 = vmatprep.subr.mxu0 0.0
        %1234 = vmatpush2.msra.mxu0 0.0
        %1235 = vmatprep.subr.mxu0 0.0
        %1236 = vmatpush2.msra.mxu0 0.0
        %1237 = vmatprep.subr.mxu0 0.0
        %1238 = vmatpush2.msra.mxu0 0.0
        %1239 = vmatprep.subr.mxu0 0.0
        %1240 = vmatpush2.msra.mxu0 0.0
        %1241 = vmatprep.subr.mxu0 0.0
        %1242 = vmatpush2.msra.mxu0 0.0
        %1243 = vmatprep.subr.mxu0 0.0
        %1244 = vmatpush2.msra.mxu0 0.0
        %1245 = vmatprep.subr.mxu0 0.0
        %1246 = vmatpush2.msra.mxu0 0.0
        %1247 = vmatprep.subr.mxu0 0.0
        %1248 = vmatpush2.msra.mxu0 0.0
        %1249 = vmatprep.subr.mxu0 0.0
        %1250 = vmatpush2.msra.mxu0 0.0
        %1251 = vmatprep.subr.mxu0 0.0
        %1252 = vmatpush2.msra.mxu0 0.0
        %1253 = vmatprep.subr.mxu0 0.0
        %1254 = vmatpush2.msra.mxu0 0.0
        %1255 = vmatprep.subr.mxu0 0.0
        %1256 = vmatpush2.msra.mxu0 0.0
        %1257 = vmatprep.subr.mxu0 0.0
        %1258 = vmatpush2.msra.mxu0 0.0
        %1259 = vmatprep.subr.mxu0 0.0
        %1260 = vmatpush2.msra.mxu0 0.0
        %1261 = vmatprep.subr.mxu0 0.0
        %1262 = vmatpush2.msra.mxu0 0.0
        %1263 = vmatprep.subr.mxu0 0.0
        %1264 = vmatpush2.msra.mxu0 0.0
        %1265 = vmatprep.mubr.f32.mxu0 0.0
        %1266 = vmatmul.mubr.f32.gmra.mxu0 %v1199
        %v1267 = vpop.f32.mrf.mxu0
        %v1268 = vadd.f32 0.0, %v1267
        %v1269 = vpop.f32.mrf.mxu0
        %1270 = vdwg.mxu0
        %v1272 = vsel %vm890, %v972, 0
        %1274 = vmatprep.subr.mxu0 0.0
        %1275 = vmatpush1.msra.mxu0 0.0
        %1276 = vmatprep.subr.mxu0 0.0
        %1277 = vmatpush1.msra.mxu0 0.0
        %1278 = vmatprep.subr.mxu0 0.0
        %1279 = vmatpush1.msra.mxu0 0.0
        %1280 = vmatprep.subr.mxu0 0.0
        %1281 = vmatpush1.msra.mxu0 0.0
        %1282 = vmatprep.subr.mxu0 0.0
        %1283 = vmatpush1.msra.mxu0 0.0
        %1284 = vmatprep.subr.mxu0 0.0
        %1285 = vmatpush1.msra.mxu0 0.0
        %1286 = vmatprep.subr.mxu0 0.0
        %1287 = vmatpush1.msra.mxu0 0.0
        %1288 = vmatprep.subr.mxu0 0.0
        %1289 = vmatpush1.msra.mxu0 0.0
        %1290 = vmatprep.subr.mxu0 0.0
        %1291 = vmatpush1.msra.mxu0 0.0
        %1292 = vmatprep.subr.mxu0 0.0
        %1293 = vmatpush1.msra.mxu0 0.0
        %1294 = vmatprep.subr.mxu0 0.0
        %1295 = vmatpush1.msra.mxu0 0.0
        %1296 = vmatprep.subr.mxu0 0.0
        %1297 = vmatpush1.msra.mxu0 0.0
        %1298 = vmatprep.subr.mxu0 0.0
        %1299 = vmatpush1.msra.mxu0 0.0
        %1300 = vmatprep.subr.mxu0 0.0
        %1301 = vmatpush1.msra.mxu0 0.0
        %1302 = vmatprep.subr.mxu0 0.0
        %1303 = vmatpush1.msra.mxu0 0.0
        %1304 = vmatprep.subr.mxu0 0.0
        %1305 = vmatpush1.msra.mxu0 %v269
        %1306 = vmatprep.subr.mxu0 0.0
        %1307 = vmatpush2.msra.mxu0 0.0
        %1308 = vmatprep.subr.mxu0 0.0
        %1309 = vmatpush2.msra.mxu0 0.0
        %1310 = vmatprep.subr.mxu0 0.0
        %1311 = vmatpush2.msra.mxu0 0.0
        %1312 = vmatprep.subr.mxu0 0.0
        %1313 = vmatpush2.msra.mxu0 0.0
        %1314 = vmatprep.subr.mxu0 0.0
        %1315 = vmatpush2.msra.mxu0 0.0
        %1316 = vmatprep.subr.mxu0 0.0
        %1317 = vmatpush2.msra.mxu0 0.0
        %1318 = vmatprep.subr.mxu0 0.0
        %1319 = vmatpush2.msra.mxu0 0.0
        %1320 = vmatprep.subr.mxu0 0.0
        %1321 = vmatpush2.msra.mxu0 0.0
        %1322 = vmatprep.subr.mxu0 0.0
        %1323 = vmatpush2.msra.mxu0 0.0
        %1324 = vmatprep.subr.mxu0 0.0
        %1325 = vmatpush2.msra.mxu0 0.0
        %1326 = vmatprep.subr.mxu0 0.0
        %1327 = vmatpush2.msra.mxu0 0.0
        %1328 = vmatprep.subr.mxu0 0.0
        %1329 = vmatpush2.msra.mxu0 0.0
        %1330 = vmatprep.subr.mxu0 0.0
        %1331 = vmatpush2.msra.mxu0 0.0
        %1332 = vmatprep.subr.mxu0 0.0
        %1333 = vmatpush2.msra.mxu0 0.0
        %1334 = vmatprep.subr.mxu0 0.0
        %1335 = vmatpush2.msra.mxu0 0.0
        %1336 = vmatprep.subr.mxu0 0.0
        %1337 = vmatpush2.msra.mxu0 0.0
        %1338 = vmatprep.mubr.f32.mxu0 0.0
        %1339 = vmatmul.mubr.f32.gmra.mxu0 %v1272
        %v1340 = vpop.f32.mrf.mxu0
        %v1341 = vadd.f32 0.0, %v1340
        %v1342 = vpop.f32.mrf.mxu0
        %1343 = vdwg.mxu0
        %v1345 = vsel %vm890, %v974, 0
        %1347 = vmatprep.subr.mxu0 0.0
        %1348 = vmatpush1.msra.mxu0 0.0
        %1349 = vmatprep.subr.mxu0 0.0
        %1350 = vmatpush1.msra.mxu0 0.0
        %1351 = vmatprep.subr.mxu0 0.0
        %1352 = vmatpush1.msra.mxu0 0.0
        %1353 = vmatprep.subr.mxu0 0.0
        %1354 = vmatpush1.msra.mxu0 0.0
        %1355 = vmatprep.subr.mxu0 0.0
        %1356 = vmatpush1.msra.mxu0 0.0
        %1357 = vmatprep.subr.mxu0 0.0
        %1358 = vmatpush1.msra.mxu0 0.0
        %1359 = vmatprep.subr.mxu0 0.0
        %1360 = vmatpush1.msra.mxu0 0.0
        %1361 = vmatprep.subr.mxu0 0.0
        %1362 = vmatpush1.msra.mxu0 0.0
        %1363 = vmatprep.subr.mxu0 0.0
        %1364 = vmatpush1.msra.mxu0 0.0
        %1365 = vmatprep.subr.mxu0 0.0
        %1366 = vmatpush1.msra.mxu0 0.0
        %1367 = vmatprep.subr.mxu0 0.0
        %1368 = vmatpush1.msra.mxu0 0.0
        %1369 = vmatprep.subr.mxu0 0.0
        %1370 = vmatpush1.msra.mxu0 0.0
        %1371 = vmatprep.subr.mxu0 0.0
        %1372 = vmatpush1.msra.mxu0 0.0
        %1373 = vmatprep.subr.mxu0 0.0
        %1374 = vmatpush1.msra.mxu0 0.0
        %1375 = vmatprep.subr.mxu0 0.0
        %1376 = vmatpush1.msra.mxu0 0.0
        %1377 = vmatprep.subr.mxu0 0.0
        %1378 = vmatpush1.msra.mxu0 %v270
        %1379 = vmatprep.subr.mxu0 0.0
        %1380 = vmatpush2.msra.mxu0 0.0
        %1381 = vmatprep.subr.mxu0 0.0
        %1382 = vmatpush2.msra.mxu0 0.0
        %1383 = vmatprep.subr.mxu0 0.0
        %1384 = vmatpush2.msra.mxu0 0.0
        %1385 = vmatprep.subr.mxu0 0.0
        %1386 = vmatpush2.msra.mxu0 0.0
        %1387 = vmatprep.subr.mxu0 0.0
        %1388 = vmatpush2.msra.mxu0 0.0
        %1389 = vmatprep.subr.mxu0 0.0
        %1390 = vmatpush2.msra.mxu0 0.0
        %1391 = vmatprep.subr.mxu0 0.0
        %1392 = vmatpush2.msra.mxu0 0.0
        %1393 = vmatprep.subr.mxu0 0.0
        %1394 = vmatpush2.msra.mxu0 0.0
        %1395 = vmatprep.subr.mxu0 0.0
        %1396 = vmatpush2.msra.mxu0 0.0
        %1397 = vmatprep.subr.mxu0 0.0
        %1398 = vmatpush2.msra.mxu0 0.0
        %1399 = vmatprep.subr.mxu0 0.0
        %1400 = vmatpush2.msra.mxu0 0.0
        %1401 = vmatprep.subr.mxu0 0.0
        %1402 = vmatpush2.msra.mxu0 0.0
        %1403 = vmatprep.subr.mxu0 0.0
        %1404 = vmatpush2.msra.mxu0 0.0
        %1405 = vmatprep.subr.mxu0 0.0
        %1406 = vmatpush2.msra.mxu0 0.0
        %1407 = vmatprep.subr.mxu0 0.0
        %1408 = vmatpush2.msra.mxu0 0.0
        %1409 = vmatprep.subr.mxu0 0.0
        %1410 = vmatpush2.msra.mxu0 0.0
        %1411 = vmatprep.mubr.f32.mxu0 0.0
        %1412 = vmatmul.mubr.f32.gmra.mxu0 %v1345
        %v1413 = vpop.f32.mrf.mxu0
        %v1414 = vadd.f32 0.0, %v1413
        %v1415 = vpop.f32.mrf.mxu0
        %1416 = vdwg.mxu0
        %v1418 = vsel %vm890, %v976, 0
        %1420 = vmatprep.subr.mxu0 0.0
        %1421 = vmatpush1.msra.mxu0 0.0
        %1422 = vmatprep.subr.mxu0 0.0
        %1423 = vmatpush1.msra.mxu0 0.0
        %1424 = vmatprep.subr.mxu0 0.0
        %1425 = vmatpush1.msra.mxu0 0.0
        %1426 = vmatprep.subr.mxu0 0.0
        %1427 = vmatpush1.msra.mxu0 0.0
        %1428 = vmatprep.subr.mxu0 0.0
        %1429 = vmatpush1.msra.mxu0 0.0
        %1430 = vmatprep.subr.mxu0 0.0
        %1431 = vmatpush1.msra.mxu0 0.0
        %1432 = vmatprep.subr.mxu0 0.0
        %1433 = vmatpush1.msra.mxu0 0.0
        %1434 = vmatprep.subr.mxu0 0.0
        %1435 = vmatpush1.msra.mxu0 0.0
        %1436 = vmatprep.subr.mxu0 0.0
        %1437 = vmatpush1.msra.mxu0 0.0
        %1438 = vmatprep.subr.mxu0 0.0
        %1439 = vmatpush1.msra.mxu0 0.0
        %1440 = vmatprep.subr.mxu0 0.0
        %1441 = vmatpush1.msra.mxu0 0.0
        %1442 = vmatprep.subr.mxu0 0.0
        %1443 = vmatpush1.msra.mxu0 0.0
        %1444 = vmatprep.subr.mxu0 0.0
        %1445 = vmatpush1.msra.mxu0 0.0
        %1446 = vmatprep.subr.mxu0 0.0
        %1447 = vmatpush1.msra.mxu0 0.0
        %1448 = vmatprep.subr.mxu0 0.0
        %1449 = vmatpush1.msra.mxu0 0.0
        %1450 = vmatprep.subr.mxu0 0.0
        %1451 = vmatpush1.msra.mxu0 %v271
        %1452 = vmatprep.subr.mxu0 0.0
        %1453 = vmatpush2.msra.mxu0 0.0
        %1454 = vmatprep.subr.mxu0 0.0
        %1455 = vmatpush2.msra.mxu0 0.0
        %1456 = vmatprep.subr.mxu0 0.0
        %1457 = vmatpush2.msra.mxu0 0.0
        %1458 = vmatprep.subr.mxu0 0.0
        %1459 = vmatpush2.msra.mxu0 0.0
        %1460 = vmatprep.subr.mxu0 0.0
        %1461 = vmatpush2.msra.mxu0 0.0
        %1462 = vmatprep.subr.mxu0 0.0
        %1463 = vmatpush2.msra.mxu0 0.0
        %1464 = vmatprep.subr.mxu0 0.0
        %1465 = vmatpush2.msra.mxu0 0.0
        %1466 = vmatprep.subr.mxu0 0.0
        %1467 = vmatpush2.msra.mxu0 0.0
        %1468 = vmatprep.subr.mxu0 0.0
        %1469 = vmatpush2.msra.mxu0 0.0
        %1470 = vmatprep.subr.mxu0 0.0
        %1471 = vmatpush2.msra.mxu0 0.0
        %1472 = vmatprep.subr.mxu0 0.0
        %1473 = vmatpush2.msra.mxu0 0.0
        %1474 = vmatprep.subr.mxu0 0.0
        %1475 = vmatpush2.msra.mxu0 0.0
        %1476 = vmatprep.subr.mxu0 0.0
        %1477 = vmatpush2.msra.mxu0 0.0
        %1478 = vmatprep.subr.mxu0 0.0
        %1479 = vmatpush2.msra.mxu0 0.0
        %1480 = vmatprep.subr.mxu0 0.0
        %1481 = vmatpush2.msra.mxu0 0.0
        %1482 = vmatprep.subr.mxu0 0.0
        %1483 = vmatpush2.msra.mxu0 0.0
        %1484 = vmatprep.mubr.f32.mxu0 0.0
        %1485 = vmatmul.mubr.f32.gmra.mxu0 %v1418
        %v1486 = vpop.f32.mrf.mxu0
        %v1487 = vadd.f32 0.0, %v1486
        %v1488 = vpop.f32.mrf.mxu0
        %1489 = vdwg.mxu0
        %v1491 = vsel %vm890, %v978, 0
        %1493 = vmatprep.subr.mxu0 0.0
        %1494 = vmatpush1.msra.mxu0 0.0
        %1495 = vmatprep.subr.mxu0 0.0
        %1496 = vmatpush1.msra.mxu0 0.0
        %1497 = vmatprep.subr.mxu0 0.0
        %1498 = vmatpush1.msra.mxu0 0.0
        %1499 = vmatprep.subr.mxu0 0.0
        %1500 = vmatpush1.msra.mxu0 0.0
        %1501 = vmatprep.subr.mxu0 0.0
        %1502 = vmatpush1.msra.mxu0 0.0
        %1503 = vmatprep.subr.mxu0 0.0
        %1504 = vmatpush1.msra.mxu0 0.0
        %1505 = vmatprep.subr.mxu0 0.0
        %1506 = vmatpush1.msra.mxu0 0.0
        %1507 = vmatprep.subr.mxu0 0.0
        %1508 = vmatpush1.msra.mxu0 0.0
        %1509 = vmatprep.subr.mxu0 0.0
        %1510 = vmatpush1.msra.mxu0 0.0
        %1511 = vmatprep.subr.mxu0 0.0
        %1512 = vmatpush1.msra.mxu0 0.0
        %1513 = vmatprep.subr.mxu0 0.0
        %1514 = vmatpush1.msra.mxu0 0.0
        %1515 = vmatprep.subr.mxu0 0.0
        %1516 = vmatpush1.msra.mxu0 0.0
        %1517 = vmatprep.subr.mxu0 0.0
        %1518 = vmatpush1.msra.mxu0 0.0
        %1519 = vmatprep.subr.mxu0 0.0
        %1520 = vmatpush1.msra.mxu0 0.0
        %1521 = vmatprep.subr.mxu0 0.0
        %1522 = vmatpush1.msra.mxu0 0.0
        %1523 = vmatprep.subr.mxu0 0.0
        %1524 = vmatpush1.msra.mxu0 %v272
        %1525 = vmatprep.subr.mxu0 0.0
        %1526 = vmatpush2.msra.mxu0 0.0
        %1527 = vmatprep.subr.mxu0 0.0
        %1528 = vmatpush2.msra.mxu0 0.0
        %1529 = vmatprep.subr.mxu0 0.0
        %1530 = vmatpush2.msra.mxu0 0.0
        %1531 = vmatprep.subr.mxu0 0.0
        %1532 = vmatpush2.msra.mxu0 0.0
        %1533 = vmatprep.subr.mxu0 0.0
        %1534 = vmatpush2.msra.mxu0 0.0
        %1535 = vmatprep.subr.mxu0 0.0
        %1536 = vmatpush2.msra.mxu0 0.0
        %1537 = vmatprep.subr.mxu0 0.0
        %1538 = vmatpush2.msra.mxu0 0.0
        %1539 = vmatprep.subr.mxu0 0.0
        %1540 = vmatpush2.msra.mxu0 0.0
        %1541 = vmatprep.subr.mxu0 0.0
        %1542 = vmatpush2.msra.mxu0 0.0
        %1543 = vmatprep.subr.mxu0 0.0
        %1544 = vmatpush2.msra.mxu0 0.0
        %1545 = vmatprep.subr.mxu0 0.0
        %1546 = vmatpush2.msra.mxu0 0.0
        %1547 = vmatprep.subr.mxu0 0.0
        %1548 = vmatpush2.msra.mxu0 0.0
        %1549 = vmatprep.subr.mxu0 0.0
        %1550 = vmatpush2.msra.mxu0 0.0
        %1551 = vmatprep.subr.mxu0 0.0
        %1552 = vmatpush2.msra.mxu0 0.0
        %1553 = vmatprep.subr.mxu0 0.0
        %1554 = vmatpush2.msra.mxu0 0.0
        %1555 = vmatprep.subr.mxu0 0.0
        %1556 = vmatpush2.msra.mxu0 0.0
        %1557 = vmatprep.mubr.f32.mxu0 0.0
        %1558 = vmatmul.mubr.f32.gmra.mxu0 %v1491
        %v1559 = vpop.f32.mrf.mxu0
        %v1560 = vadd.f32 0.0, %v1559
        %v1561 = vpop.f32.mrf.mxu0
        %1562 = vdwg.mxu0
        %1563 = vst.msk [vmem:[%s228] sm:$0xff] %vm890, %v964
        %1564 = vst.msk [vmem:[%s228 + $0x8] sm:$0xff] %vm890, %v966
        %1565 = vst.msk [vmem:[%s228 + $0x10] sm:$0xff] %vm890, %v968
        %1566 = vst.msk [vmem:[%s228 + $0x18] sm:$0xff] %vm890, %v970
        %1567 = vst.msk [vmem:[%s228 + $0x20] sm:$0xff] %vm890, %v972
        %1568 = vst.msk [vmem:[%s228 + $0x28] sm:$0xff] %vm890, %v974
        %1569 = vst.msk [vmem:[%s228 + $0x30] sm:$0xff] %vm890, %v976
        %1570 = vst.msk [vmem:[%s228 + $0x38] sm:$0xff] %vm890, %v978
        %1571 = vst.msk [vmem:[%s248] sm:$0xff] %vm273, %v1049
        %1572 = vst.msk [vmem:[%s248 + $0x8] sm:$0xff] %vm273, %v1122
        %1573 = vst.msk [vmem:[%s248 + $0x10] sm:$0xff] %vm273, %v1195
        %1574 = vst.msk [vmem:[%s248 + $0x18] sm:$0xff] %vm273, %v1268
        %1575 = vst.msk [vmem:[%s248 + $0x20] sm:$0xff] %vm273, %v1341
        %1576 = vst.msk [vmem:[%s248 + $0x28] sm:$0xff] %vm273, %v1414
        %1577 = vst.msk [vmem:[%s248 + $0x30] sm:$0xff] %vm273, %v1487
        %1578 = vst.msk [vmem:[%s248 + $0x38] sm:$0xff] %vm273, %v1560
        %p1579 = scmp.lt.s32.totalorder %s19, 1
        %s1580 = scalar_select %p1579, %s19, 1
        %s1581 = smul.addr %s1580, 8
        %s1582 = smul.addr %s1581, 8
        %s1583 = scalar_lea.vmem %s3, %s1582
        %s1584 = sand.u32 %s131, 1
        %s1585 = scalar_lea.sflag [#allocation3], %s1584
        %s1586 = sand.u32 %s131, 1
        %s1587 = smul.addr %s1586, 64
        %s1588 = scalar_lea.vmem [#allocation2], %s1587
        // Predicated region
        $region33: #{encoder_forward.9} parent=31 // pred_check
          %p1589 = pneg %p115
        $region34: #{encoder_forward.9} parent=31 // pred_check_branch
          %1591 = sbr.rel (%p1589) target = $region36
        $region35: #{encoder_forward.9} parent=31 // pred_region
          _
        $region36: #{encoder_forward.9} parent=31 // pred_fallthru
          _
        // Predicated region
        $region37: #{encoder_forward.9} parent=31 // pred_check
          %p1592 = pneg %p141
        $region38: #{encoder_forward.9} parent=31 // pred_check_branch
          %1594 = sbr.rel (%p1592) target = $region40
        $region39: #{encoder_forward.9} parent=31 // pred_region
          %s1596 = ssub.s32 1024, 1024
          %1597 = vsyncadd %s1585, %s1596
          %s1598 = smul.addr %s19, 8
          %s1599 = smul.addr %s1598, 128
          %s1600 = scalar_lea.hbm %s4, %s1599
          %s1601 = sshll.u32 %s1588, 4
          %s1602 = int_to_ptr.vmem [resolvable:$true] %s1601
          %1607 = dma.vmem_to_hbm [thread:$0]  %s1602, 1024, %s1600, %s1585, 128, 128, 8
        $region40: #{encoder_forward.9} parent=31 // pred_fallthru
          _
      $region32: #{encoder_forward.9} parent=5 // pred_fallthru
        _
      %p1608 = scmp.le.s32.totalorder 2, %s14
      // Predicated region
      $region41: #{encoder_forward.9} parent=5 // pred_check
        %p1609 = pneg %p1608
      $region42: #{encoder_forward.9} parent=5 // pred_check_branch
        %1611 = sbr.rel (%p1609) target = $region44
      $region43: #{encoder_forward.9} parent=5 // pred_region
        %s1612 = ssub.s32 %s14, 2
        // Predicated region
        $region45: #{encoder_forward.9} parent=43 // pred_check
          %p1613 = pneg %p121
        $region46: #{encoder_forward.9} parent=43 // pred_check_branch
          %1615 = sbr.rel (%p1613) target = $region48
        $region47: #{encoder_forward.9} parent=43 // pred_region
          %p1616 = scmp.lt.s32.totalorder %s20, 1
          %s1617 = scalar_select %p1616, %s20, 1
          %s1618 = smul.addr %s1617, 8
          %s1619 = smul.addr %s1618, 8
          %s1620 = scalar_lea.vmem %s3, %s1619
        $region48: #{encoder_forward.9} parent=43 // pred_fallthru
          _
        // Predicated region
        $region49: #{encoder_forward.9} parent=43 // pred_check
          %p1621 = pneg %p147
        $region50: #{encoder_forward.9} parent=43 // pred_check_branch
          %1623 = sbr.rel (%p1621) target = $region52
        $region51: #{encoder_forward.9} parent=43 // pred_region
          %s1624 = sand.u32 %s132, 1
          %s1625 = scalar_lea.sflag [#allocation3], %s1624
          %s1626 = sand.u32 %s132, 1
          %s1627 = smul.addr %s1626, 64
          %s1628 = scalar_lea.vmem [#allocation2], %s1627
          %1629 = dma.done %s1625, 1024
        $region52: #{encoder_forward.9} parent=43 // pred_fallthru
          _
      $region44: #{encoder_forward.9} parent=5 // pred_fallthru
        _
    $region6: #{encoder_forward.9} parent=1 // loop_footer
      %s18 = sadd.s32 1, %s14
    $region7: #{encoder_forward.9} parent=1 // loop_footer_branch
      %13 = sbr.rel target = $region3
    $region8: #{encoder_forward.9} parent=1 // loop_exit
      _
    %1630 = vsyncpa [#allocation3], 1
    %s1631 = scalar_lea.sflag [#allocation3], 1
    %1632 = vsyncpa %s1631, 1

// kernel: encoder_forward.11
$region0: #{encoder_forward.11}
  #allocation0 [shape = 'u32[]', space=smem, size = 0x4, offset = 0x4, fixed_abs, tag = 'smem constant byte address 0x4 - core index']
  #allocation1 [shape = 'u32[144,128]{1,0:T(1,128)}', space=vmem, size = 0x12000, scoped, tag = 'internal scratch']
  %s0 = inlined_call_operand.vmem [shape: f32[16,512], index: 0, kind: input, shape index: {}]
  %s1 = inlined_call_operand.vmem [shape: bf16[512,1536], index: 1, kind: input, shape index: {}]
  %s2 = inlined_call_operand.vmem [shape: f32[1,1536], index: 2, kind: input, shape index: {}]
  %s3 = inlined_call_operand.vmem [shape: f32[16,1536], index: 3, kind: output, shape index: {}]
  %s4 = sld [smem:[#allocation0]]
  $region87: #{encoder_forward.11} parent=0
    _
  %s6 = ssub.s32 1, %s4
  %s7 = scalar_select 0, %s6, %s4
  $region1: #{encoder_forward.11} parent=0
    #allocation2 [shape = 'u8[1048576]{0}', space=vmem, size = 0x100000, scoped, tag = 'input window, operand 1']
    #allocation3 [shape = 'u8[65536]{0}', space=vmem, size = 0x10000, scoped, tag = 'output window, operand 0']
    loop: start=0, step=1, limit=5
    $region2: #{encoder_forward.11} parent=1 // loop_pre_header
      _
    $region3: #{encoder_forward.11} parent=1 // loop_header
      %s9 = sphi 0, %s13
      %p10 = scmp.ge.s32.totalorder %s9, 5
      %s16 = sphi 0, %s28
      %s17 = sphi 0, %s24
      %s18 = sphi 0, %s16
      %s19 = sphi 0, %s17
      %s20 = sphi 0, %s18
      %s21 = sphi 0, %s19
      %s31 = sphi 0, %s33
      %s34 = sphi 0, %s31
      %s35 = sphi 0, %s34
      %s51 = sphi 0, %s35
      %s57 = sphi 0, %s59
      %s60 = sphi 0, %s57
      %s61 = sphi 0, %s60
      %s77 = sphi 0, %s61
      %s83 = sphi 0, %s85
      %s86 = sphi 0, %s83
      %s87 = sphi 0, %s86
      %s103 = sphi 0, %s87
      %s111 = sphi 0, %s113
      %s114 = sphi 0, %s111
      %s115 = sphi 0, %s114
      %s131 = sphi 0, %s115
    $region4: #{encoder_forward.11} parent=1 // loop_header_branch
      %12 = sbr.rel (%p10) target = $region8
    $region5: #{encoder_forward.11} parent=1 // loop_body
      %s14 = ssub.s32 %s9, 1
      %s15 = ssub.s32 %s9, 2
      %s22 = sadd.s32 1, %s17
      %p23 = scmp.ge.s32.totalorder %s22, 3
      %s24 = scalar_select %p23, 0, %s22
      %s25 = sadd.s32 1, %s16
      %s26 = scalar_select %p23, %s25, %s16
      %p27 = scmp.ge.s32.totalorder %s26, 1
      %s28 = scalar_select %p27, 0, %s26
      %s29 = ssub.s32 %s16, %s28
      %p30 = scmp.eq.s32.totalorder %s29, 0
      %s32 = sadd.s32 %s31, 1
      %s33 = scalar_select %p30, %s31, %s32
      %p36 = pneg %p30
      %p37 = scmp.eq.s32.totalorder %s9, 2
      %p38 = por %p36, %p37
      %p39 = scmp.ne.s32.totalorder %s31, %s34
      %p40 = scmp.eq.s32.totalorder %s9, 0
      %p41 = por %p39, %p40
      %p42 = scmp.ne.s32.totalorder %s31, %s34
      %p43 = scmp.eq.s32.totalorder %s14, 2
      %p44 = por %p42, %p43
      %p45 = scmp.ne.s32.totalorder %s34, %s35
      %p46 = scmp.eq.s32.totalorder %s14, 0
      %p47 = por %p45, %p46
      %p48 = scmp.ne.s32.totalorder %s34, %s35
      %p49 = scmp.eq.s32.totalorder %s15, 2
      %p50 = por %p48, %p49
      %p52 = scmp.ne.s32.totalorder %s35, %s51
      %p53 = scmp.eq.s32.totalorder %s15, 0
      %p54 = por %p52, %p53
      %s55 = ssub.s32 %s17, %s24
      %p56 = scmp.eq.s32.totalorder %s55, 0
      %s58 = sadd.s32 %s57, 1
      %s59 = scalar_select %p56, %s57, %s58
      %p62 = pneg %p56
      %p63 = scmp.eq.s32.totalorder %s9, 2
      %p64 = por %p62, %p63
      %p65 = scmp.ne.s32.totalorder %s57, %s60
      %p66 = scmp.eq.s32.totalorder %s9, 0
      %p67 = por %p65, %p66
      %p68 = scmp.ne.s32.totalorder %s57, %s60
      %p69 = scmp.eq.s32.totalorder %s14, 2
      %p70 = por %p68, %p69
      %p71 = scmp.ne.s32.totalorder %s60, %s61
      %p72 = scmp.eq.s32.totalorder %s14, 0
      %p73 = por %p71, %p72
      %p74 = scmp.ne.s32.totalorder %s60, %s61
      %p75 = scmp.eq.s32.totalorder %s15, 2
      %p76 = por %p74, %p75
      %p78 = scmp.ne.s32.totalorder %s61, %s77
      %p79 = scmp.eq.s32.totalorder %s15, 0
      %p80 = por %p78, %p79
      %s81 = ssub.s32 %s17, %s24
      %p82 = scmp.eq.s32.totalorder %s81, 0
      %s84 = sadd.s32 %s83, 1
      %s85 = scalar_select %p82, %s83, %s84
      %p88 = pneg %p82
      %p89 = scmp.eq.s32.totalorder %s9, 2
      %p90 = por %p88, %p89
      %p91 = scmp.ne.s32.totalorder %s83, %s86
      %p92 = scmp.eq.s32.totalorder %s9, 0
      %p93 = por %p91, %p92
      %p94 = scmp.ne.s32.totalorder %s83, %s86
      %p95 = scmp.eq.s32.totalorder %s14, 2
      %p96 = por %p94, %p95
      %p97 = scmp.ne.s32.totalorder %s86, %s87
      %p98 = scmp.eq.s32.totalorder %s14, 0
      %p99 = por %p97, %p98
      %p100 = scmp.ne.s32.totalorder %s86, %s87
      %p101 = scmp.eq.s32.totalorder %s15, 2
      %p102 = por %p100, %p101
      %p104 = scmp.ne.s32.totalorder %s87, %s103
      %p105 = scmp.eq.s32.totalorder %s15, 0
      %p106 = por %p104, %p105
      %s107 = ssub.s32 %s16, %s28
      %s108 = ssub.s32 %s17, %s24
      %s109 = sor.u32 %s107, %s108
      %p110 = scmp.eq.s32.totalorder %s109, 0
      %s112 = sadd.s32 %s111, 1
      %s113 = scalar_select %p110, %s111, %s112
      %p116 = pneg %p110
      %p117 = scmp.eq.s32.totalorder %s9, 2
      %p118 = por %p116, %p117
      %p119 = scmp.ne.s32.totalorder %s111, %s114
      %p120 = scmp.eq.s32.totalorder %s9, 0
      %p121 = por %p119, %p120
      %p122 = scmp.ne.s32.totalorder %s111, %s114
      %p123 = scmp.eq.s32.totalorder %s14, 2
      %p124 = por %p122, %p123
      %p125 = scmp.ne.s32.totalorder %s114, %s115
      %p126 = scmp.eq.s32.totalorder %s14, 0
      %p127 = por %p125, %p126
      %p128 = scmp.ne.s32.totalorder %s114, %s115
      %p129 = scmp.eq.s32.totalorder %s15, 2
      %p130 = por %p128, %p129
      %p132 = scmp.ne.s32.totalorder %s115, %s131
      %p133 = scmp.eq.s32.totalorder %s15, 0
      %p134 = por %p132, %p133
      %p135 = scmp.le.s32.totalorder 1, %s9
      %p136 = scmp.lt.s32.totalorder %s9, 4
      %p137 = pnand %p135, %p136
      %p138 = pneg %p137
      // Predicated region
      $region9: #{encoder_forward.11} parent=5 // pred_check
        _
      $region10: #{encoder_forward.11} parent=5 // pred_check_branch
        %140 = sbr.rel (%p137) target = $region12
      $region11: #{encoder_forward.11} parent=5 // pred_region
        %s141 = ssub.s32 %s9, 1
        // Predicated region
        $region13: #{encoder_forward.11} parent=11 // pred_check
          %p142 = pneg %p47
        $region14: #{encoder_forward.11} parent=11 // pred_check_branch
          %144 = sbr.rel (%p142) target = $region16
        $region15: #{encoder_forward.11} parent=11 // pred_region
          %s145 = smul.u32 2, %s18
          %p146 = scmp.lt.s32.totalorder %s145, 1
          %s147 = scalar_select %p146, %s145, 1
          %s148 = smul.addr %s147, 4
          %s149 = smul.addr %s148, 8
          %s150 = scalar_lea.vmem %s0, %s149
          %s151 = smul.u32 2, %s18
        $region16: #{encoder_forward.11} parent=11 // pred_fallthru
          _
      $region12: #{encoder_forward.11} parent=5 // pred_fallthru
        _
      %p152 = scmp.lt.s32.totalorder %s9, 3
      // Predicated region
      $region17: #{encoder_forward.11} parent=5 // pred_check
        %p153 = pneg %p152
      $region18: #{encoder_forward.11} parent=5 // pred_check_branch
        %155 = sbr.rel (%p153) target = $region20
      $region19: #{encoder_forward.11} parent=5 // pred_region
        // Predicated region
        $region21: #{encoder_forward.11} parent=19 // pred_check
          %p156 = pneg %p67
        $region22: #{encoder_forward.11} parent=19 // pred_check_branch
          %158 = sbr.rel (%p156) target = $region24
        $region23: #{encoder_forward.11} parent=19 // pred_region
          %s159 = sand.u32 %s57, 1
          %s160 = sand.u32 %s57, 1
          %s161 = smul.addr %s160, 1024
          %s162 = scalar_lea.vmem [#allocation2], %s161
          %s163 = smul.u32 4, %s17
          %s164 = smul.addr %s163, 4
          %s165 = scalar_lea.vmem %s1, %s164
          // Predicated region
          $region25: #{encoder_forward.11} parent=23 // pred_check
            _
          $region26: #{encoder_forward.11} parent=23 // pred_check_branch
            %167 = sbr.rel (0) target = $region28
          $region27: #{encoder_forward.11} parent=23 // pred_region
            // Predicated region
            $region29: #{encoder_forward.11} parent=27 // pred_check
              _
            $region30: #{encoder_forward.11} parent=27 // pred_check_branch
              %169 = sbr.rel (0) target = $region32
            $region31: #{encoder_forward.11} parent=27 // pred_region
              loop: start=0, step=1, limit=1
              $region33: #{encoder_forward.11} parent=31 // loop_pre_header
                _
              $region34: #{encoder_forward.11} parent=31 // loop_header
                %s171 = sphi 0, %s175
                %p172 = scmp.ge.s32.totalorder %s171, 1
                %s176 = sphi %s165, %s165
                %s177 = sphi %s162, %s162
              $region35: #{encoder_forward.11} parent=31 // loop_header_branch
                %174 = sbr.rel (%p172) target = $region39
              $region36: #{encoder_forward.11} parent=31 // loop_body
                %v178 = vld [vmem:[%s176] sm:$0xff]
                %179 = vst [vmem:[%s177] sm:$0xff] %v178
                %v180 = vld [vmem:[%s176 + $0x8] sm:$0xff]
                %181 = vst [vmem:[%s177 + $0x8] sm:$0xff] %v180
                %v182 = vld [vmem:[%s176 + $0x30] sm:$0xff]
                %183 = vst [vmem:[%s177 + $0x10] sm:$0xff] %v182
                %v184 = vld [vmem:[%s176 + $0x38] sm:$0xff]
                %185 = vst [vmem:[%s177 + $0x18] sm:$0xff] %v184
                %v186 = vld [vmem:[%s176 + $0x60] sm:$0xff]
                %187 = vst [vmem:[%s177 + $0x20] sm:$0xff] %v186
                %v188 = vld [vmem:[%s176 + $0x68] sm:$0xff]
                %189 = vst [vmem:[%s177 + $0x28] sm:$0xff] %v188
                %v190 = vld [vmem:[%s176 + $0x90] sm:$0xff]
                %191 = vst [vmem:[%s177 + $0x30] sm:$0xff] %v190
                %v192 = vld [vmem:[%s176 + $0x98] sm:$0xff]
                %193 = vst [vmem:[%s177 + $0x38] sm:$0xff] %v192
                %v194 = vld [vmem:[%s176 + $0xc0] sm:$0xff]
                %195 = vst [vmem:[%s177 + $0x40] sm:$0xff] %v194
                %v196 = vld [vmem:[%s176 + $0xc8] sm:$0xff]
                %197 = vst [vmem:[%s177 + $0x48] sm:$0xff] %v196
                %v198 = vld [vmem:[%s176 + $0xf0] sm:$0xff]
                %199 = vst [vmem:[%s177 + $0x50] sm:$0xff] %v198
                %v200 = vld [vmem:[%s176 + $0xf8] sm:$0xff]
                %201 = vst [vmem:[%s177 + $0x58] sm:$0xff] %v200
                %v202 = vld [vmem:[%s176 + $0x120] sm:$0xff]
                %203 = vst [vmem:[%s177 + $0x60] sm:$0xff] %v202
                %v204 = vld [vmem:[%s176 + $0x128] sm:$0xff]
                %205 = vst [vmem:[%s177 + $0x68] sm:$0xff] %v204
                %v206 = vld [vmem:[%s176 + $0x150] sm:$0xff]
                %207 = vst [vmem:[%s177 + $0x70] sm:$0xff] %v206
                %v208 = vld [vmem:[%s176 + $0x158] sm:$0xff]
                %209 = vst [vmem:[%s177 + $0x78] sm:$0xff] %v208
                %v210 = vld [vmem:[%s176 + $0x180] sm:$0xff]
                %211 = vst [vmem:[%s177 + $0x80] sm:$0xff] %v210
                %v212 = vld [vmem:[%s176 + $0x188] sm:$0xff]
                %213 = vst [vmem:[%s177 + $0x88] sm:$0xff] %v212
                %v214 = vld [vmem:[%s176 + $0x1b0] sm:$0xff]
                %215 = vst [vmem:[%s177 + $0x90] sm:$0xff] %v214
                %v216 = vld [vmem:[%s176 + $0x1b8] sm:$0xff]
                %217 = vst [vmem:[%s177 + $0x98] sm:$0xff] %v216
                %v218 = vld [vmem:[%s176 + $0x1e0] sm:$0xff]
                %219 = vst [vmem:[%s177 + $0xa0] sm:$0xff] %v218
                %v220 = vld [vmem:[%s176 + $0x1e8] sm:$0xff]
                %221 = vst [vmem:[%s177 + $0xa8] sm:$0xff] %v220
                %v222 = vld [vmem:[%s176 + $0x210] sm:$0xff]
                %223 = vst [vmem:[%s177 + $0xb0] sm:$0xff] %v222
                %v224 = vld [vmem:[%s176 + $0x218] sm:$0xff]
                %225 = vst [vmem:[%s177 + $0xb8] sm:$0xff] %v224
                %v226 = vld [vmem:[%s176 + $0x240] sm:$0xff]
                %227 = vst [vmem:[%s177 + $0xc0] sm:$0xff] %v226
                %v228 = vld [vmem:[%s176 + $0x248] sm:$0xff]
                %229 = vst [vmem:[%s177 + $0xc8] sm:$0xff] %v228
                %v230 = vld [vmem:[%s176 + $0x270] sm:$0xff]
                %231 = vst [vmem:[%s177 + $0xd0] sm:$0xff] %v230
                %v232 = vld [vmem:[%s176 + $0x278] sm:$0xff]
                %233 = vst [vmem:[%s177 + $0xd8] sm:$0xff] %v232
                %v234 = vld [vmem:[%s176 + $0x2a0] sm:$0xff]
                %235 = vst [vmem:[%s177 + $0xe0] sm:$0xff] %v234
                %v236 = vld [vmem:[%s176 + $0x2a8] sm:$0xff]
                %237 = vst [vmem:[%s177 + $0xe8] sm:$0xff] %v236
                %v238 = vld [vmem:[%s176 + $0x2d0] sm:$0xff]
                %239 = vst [vmem:[%s177 + $0xf0] sm:$0xff] %v238
                %v240 = vld [vmem:[%s176 + $0x2d8] sm:$0xff]
                %241 = vst [vmem:[%s177 + $0xf8] sm:$0xff] %v240
                %v242 = vld [vmem:[%s176 + $0x300] sm:$0xff]
                %243 = vst [vmem:[%s177 + $0x100] sm:$0xff] %v242
                %v244 = vld [vmem:[%s176 + $0x308] sm:$0xff]
                %245 = vst [vmem:[%s177 + $0x108] sm:$0xff] %v244
                %v246 = vld [vmem:[%s176 + $0x330] sm:$0xff]
                %247 = vst [vmem:[%s177 + $0x110] sm:$0xff] %v246
                %v248 = vld [vmem:[%s176 + $0x338] sm:$0xff]
                %249 = vst [vmem:[%s177 + $0x118] sm:$0xff] %v248
                %v250 = vld [vmem:[%s176 + $0x360] sm:$0xff]
                %251 = vst [vmem:[%s177 + $0x120] sm:$0xff] %v250
                %v252 = vld [vmem:[%s176 + $0x368] sm:$0xff]
                %253 = vst [vmem:[%s177 + $0x128] sm:$0xff] %v252
                %v254 = vld [vmem:[%s176 + $0x390] sm:$0xff]
                %255 = vst [vmem:[%s177 + $0x130] sm:$0xff] %v254
                %v256 = vld [vmem:[%s176 + $0x398] sm:$0xff]
                %257 = vst [vmem:[%s177 + $0x138] sm:$0xff] %v256
                %v258 = vld [vmem:[%s176 + $0x3c0] sm:$0xff]
                %259 = vst [vmem:[%s177 + $0x140] sm:$0xff] %v258
                %v260 = vld [vmem:[%s176 + $0x3c8] sm:$0xff]
                %261 = vst [vmem:[%s177 + $0x148] sm:$0xff] %v260
                %v262 = vld [vmem:[%s176 + $0x3f0] sm:$0xff]
                %263 = vst [vmem:[%s177 + $0x150] sm:$0xff] %v262
                %v264 = vld [vmem:[%s176 + $0x3f8] sm:$0xff]
                %265 = vst [vmem:[%s177 + $0x158] sm:$0xff] %v264
                %v266 = vld [vmem:[%s176 + $0x420] sm:$0xff]
                %267 = vst [vmem:[%s177 + $0x160] sm:$0xff] %v266
                %v268 = vld [vmem:[%s176 + $0x428] sm:$0xff]
                %269 = vst [vmem:[%s177 + $0x168] sm:$0xff] %v268
                %v270 = vld [vmem:[%s176 + $0x450] sm:$0xff]
                %271 = vst [vmem:[%s177 + $0x170] sm:$0xff] %v270
                %v272 = vld [vmem:[%s176 + $0x458] sm:$0xff]
                %273 = vst [vmem:[%s177 + $0x178] sm:$0xff] %v272
                %v274 = vld [vmem:[%s176 + $0x480] sm:$0xff]
                %275 = vst [vmem:[%s177 + $0x180] sm:$0xff] %v274
                %v276 = vld [vmem:[%s176 + $0x488] sm:$0xff]
                %277 = vst [vmem:[%s177 + $0x188] sm:$0xff] %v276
                %v278 = vld [vmem:[%s176 + $0x4b0] sm:$0xff]
                %279 = vst [vmem:[%s177 + $0x190] sm:$0xff] %v278
                %v280 = vld [vmem:[%s176 + $0x4b8] sm:$0xff]
                %281 = vst [vmem:[%s177 + $0x198] sm:$0xff] %v280
                %v282 = vld [vmem:[%s176 + $0x4e0] sm:$0xff]
                %283 = vst [vmem:[%s177 + $0x1a0] sm:$0xff] %v282
                %v284 = vld [vmem:[%s176 + $0x4e8] sm:$0xff]
                %285 = vst [vmem:[%s177 + $0x1a8] sm:$0xff] %v284
                %v286 = vld [vmem:[%s176 + $0x510] sm:$0xff]
                %287 = vst [vmem:[%s177 + $0x1b0] sm:$0xff] %v286
                %v288 = vld [vmem:[%s176 + $0x518] sm:$0xff]
                %289 = vst [vmem:[%s177 + $0x1b8] sm:$0xff] %v288
                %v290 = vld [vmem:[%s176 + $0x540] sm:$0xff]
                %291 = vst [vmem:[%s177 + $0x1c0] sm:$0xff] %v290
                %v292 = vld [vmem:[%s176 + $0x548] sm:$0xff]
                %293 = vst [vmem:[%s177 + $0x1c8] sm:$0xff] %v292
                %v294 = vld [vmem:[%s176 + $0x570] sm:$0xff]
                %295 = vst [vmem:[%s177 + $0x1d0] sm:$0xff] %v294
                %v296 = vld [vmem:[%s176 + $0x578] sm:$0xff]
                %297 = vst [vmem:[%s177 + $0x1d8] sm:$0xff] %v296
                %v298 = vld [vmem:[%s176 + $0x5a0] sm:$0xff]
                %299 = vst [vmem:[%s177 + $0x1e0] sm:$0xff] %v298
                %v300 = vld [vmem:[%s176 + $0x5a8] sm:$0xff]
                %301 = vst [vmem:[%s177 + $0x1e8] sm:$0xff] %v300
                %v302 = vld [vmem:[%s176 + $0x5d0] sm:$0xff]
                %303 = vst [vmem:[%s177 + $0x1f0] sm:$0xff] %v302
                %v304 = vld [vmem:[%s176 + $0x5d8] sm:$0xff]
                %305 = vst [vmem:[%s177 + $0x1f8] sm:$0xff] %v304
                %v306 = vld [vmem:[%s176 + $0x600] sm:$0xff]
                %307 = vst [vmem:[%s177 + $0x200] sm:$0xff] %v306
                %v308 = vld [vmem:[%s176 + $0x608] sm:$0xff]
                %309 = vst [vmem:[%s177 + $0x208] sm:$0xff] %v308
                %v310 = vld [vmem:[%s176 + $0x630] sm:$0xff]
                %311 = vst [vmem:[%s177 + $0x210] sm:$0xff] %v310
                %v312 = vld [vmem:[%s176 + $0x638] sm:$0xff]
                %313 = vst [vmem:[%s177 + $0x218] sm:$0xff] %v312
                %v314 = vld [vmem:[%s176 + $0x660] sm:$0xff]
                %315 = vst [vmem:[%s177 + $0x220] sm:$0xff] %v314
                %v316 = vld [vmem:[%s176 + $0x668] sm:$0xff]
                %317 = vst [vmem:[%s177 + $0x228] sm:$0xff] %v316
                %v318 = vld [vmem:[%s176 + $0x690] sm:$0xff]
                %319 = vst [vmem:[%s177 + $0x230] sm:$0xff] %v318
                %v320 = vld [vmem:[%s176 + $0x698] sm:$0xff]
                %321 = vst [vmem:[%s177 + $0x238] sm:$0xff] %v320
                %v322 = vld [vmem:[%s176 + $0x6c0] sm:$0xff]
                %323 = vst [vmem:[%s177 + $0x240] sm:$0xff] %v322
                %v324 = vld [vmem:[%s176 + $0x6c8] sm:$0xff]
                %325 = vst [vmem:[%s177 + $0x248] sm:$0xff] %v324
                %v326 = vld [vmem:[%s176 + $0x6f0] sm:$0xff]
                %327 = vst [vmem:[%s177 + $0x250] sm:$0xff] %v326
                %v328 = vld [vmem:[%s176 + $0x6f8] sm:$0xff]
                %329 = vst [vmem:[%s177 + $0x258] sm:$0xff] %v328
                %v330 = vld [vmem:[%s176 + $0x720] sm:$0xff]
                %331 = vst [vmem:[%s177 + $0x260] sm:$0xff] %v330
                %v332 = vld [vmem:[%s176 + $0x728] sm:$0xff]
                %333 = vst [vmem:[%s177 + $0x268] sm:$0xff] %v332
                %v334 = vld [vmem:[%s176 + $0x750] sm:$0xff]
                %335 = vst [vmem:[%s177 + $0x270] sm:$0xff] %v334
                %v336 = vld [vmem:[%s176 + $0x758] sm:$0xff]
                %337 = vst [vmem:[%s177 + $0x278] sm:$0xff] %v336
                %v338 = vld [vmem:[%s176 + $0x780] sm:$0xff]
                %339 = vst [vmem:[%s177 + $0x280] sm:$0xff] %v338
                %v340 = vld [vmem:[%s176 + $0x788] sm:$0xff]
                %341 = vst [vmem:[%s177 + $0x288] sm:$0xff] %v340
                %v342 = vld [vmem:[%s176 + $0x7b0] sm:$0xff]
                %343 = vst [vmem:[%s177 + $0x290] sm:$0xff] %v342
                %v344 = vld [vmem:[%s176 + $0x7b8] sm:$0xff]
                %345 = vst [vmem:[%s177 + $0x298] sm:$0xff] %v344
                %v346 = vld [vmem:[%s176 + $0x7e0] sm:$0xff]
                %347 = vst [vmem:[%s177 + $0x2a0] sm:$0xff] %v346
                %v348 = vld [vmem:[%s176 + $0x7e8] sm:$0xff]
                %349 = vst [vmem:[%s177 + $0x2a8] sm:$0xff] %v348
                %v350 = vld [vmem:[%s176 + $0x810] sm:$0xff]
                %351 = vst [vmem:[%s177 + $0x2b0] sm:$0xff] %v350
                %v352 = vld [vmem:[%s176 + $0x818] sm:$0xff]
                %353 = vst [vmem:[%s177 + $0x2b8] sm:$0xff] %v352
                %v354 = vld [vmem:[%s176 + $0x840] sm:$0xff]
                %355 = vst [vmem:[%s177 + $0x2c0] sm:$0xff] %v354
                %v356 = vld [vmem:[%s176 + $0x848] sm:$0xff]
                %357 = vst [vmem:[%s177 + $0x2c8] sm:$0xff] %v356
                %v358 = vld [vmem:[%s176 + $0x870] sm:$0xff]
                %359 = vst [vmem:[%s177 + $0x2d0] sm:$0xff] %v358
                %v360 = vld [vmem:[%s176 + $0x878] sm:$0xff]
                %361 = vst [vmem:[%s177 + $0x2d8] sm:$0xff] %v360
                %v362 = vld [vmem:[%s176 + $0x8a0] sm:$0xff]
                %363 = vst [vmem:[%s177 + $0x2e0] sm:$0xff] %v362
                %v364 = vld [vmem:[%s176 + $0x8a8] sm:$0xff]
                %365 = vst [vmem:[%s177 + $0x2e8] sm:$0xff] %v364
                %v366 = vld [vmem:[%s176 + $0x8d0] sm:$0xff]
                %367 = vst [vmem:[%s177 + $0x2f0] sm:$0xff] %v366
                %v368 = vld [vmem:[%s176 + $0x8d8] sm:$0xff]
                %369 = vst [vmem:[%s177 + $0x2f8] sm:$0xff] %v368
                %v370 = vld [vmem:[%s176 + $0x900] sm:$0xff]
                %371 = vst [vmem:[%s177 + $0x300] sm:$0xff] %v370
                %v372 = vld [vmem:[%s176 + $0x908] sm:$0xff]
                %373 = vst [vmem:[%s177 + $0x308] sm:$0xff] %v372
                %v374 = vld [vmem:[%s176 + $0x930] sm:$0xff]
                %375 = vst [vmem:[%s177 + $0x310] sm:$0xff] %v374
                %v376 = vld [vmem:[%s176 + $0x938] sm:$0xff]
                %377 = vst [vmem:[%s177 + $0x318] sm:$0xff] %v376
                %v378 = vld [vmem:[%s176 + $0x960] sm:$0xff]
                %379 = vst [vmem:[%s177 + $0x320] sm:$0xff] %v378
                %v380 = vld [vmem:[%s176 + $0x968] sm:$0xff]
                %381 = vst [vmem:[%s177 + $0x328] sm:$0xff] %v380
                %v382 = vld [vmem:[%s176 + $0x990] sm:$0xff]
                %383 = vst [vmem:[%s177 + $0x330] sm:$0xff] %v382
                %v384 = vld [vmem:[%s176 + $0x998] sm:$0xff]
                %385 = vst [vmem:[%s177 + $0x338] sm:$0xff] %v384
                %v386 = vld [vmem:[%s176 + $0x9c0] sm:$0xff]
                %387 = vst [vmem:[%s177 + $0x340] sm:$0xff] %v386
                %v388 = vld [vmem:[%s176 + $0x9c8] sm:$0xff]
                %389 = vst [vmem:[%s177 + $0x348] sm:$0xff] %v388
                %v390 = vld [vmem:[%s176 + $0x9f0] sm:$0xff]
                %391 = vst [vmem:[%s177 + $0x350] sm:$0xff] %v390
                %v392 = vld [vmem:[%s176 + $0x9f8] sm:$0xff]
                %393 = vst [vmem:[%s177 + $0x358] sm:$0xff] %v392
                %v394 = vld [vmem:[%s176 + $0xa20] sm:$0xff]
                %395 = vst [vmem:[%s177 + $0x360] sm:$0xff] %v394
                %v396 = vld [vmem:[%s176 + $0xa28] sm:$0xff]
                %397 = vst [vmem:[%s177 + $0x368] sm:$0xff] %v396
                %v398 = vld [vmem:[%s176 + $0xa50] sm:$0xff]
                %399 = vst [vmem:[%s177 + $0x370] sm:$0xff] %v398
                %v400 = vld [vmem:[%s176 + $0xa58] sm:$0xff]
                %401 = vst [vmem:[%s177 + $0x378] sm:$0xff] %v400
                %v402 = vld [vmem:[%s176 + $0xa80] sm:$0xff]
                %403 = vst [vmem:[%s177 + $0x380] sm:$0xff] %v402
                %v404 = vld [vmem:[%s176 + $0xa88] sm:$0xff]
                %405 = vst [vmem:[%s177 + $0x388] sm:$0xff] %v404
                %v406 = vld [vmem:[%s176 + $0xab0] sm:$0xff]
                %407 = vst [vmem:[%s177 + $0x390] sm:$0xff] %v406
                %v408 = vld [vmem:[%s176 + $0xab8] sm:$0xff]
                %409 = vst [vmem:[%s177 + $0x398] sm:$0xff] %v408
                %v410 = vld [vmem:[%s176 + $0xae0] sm:$0xff]
                %411 = vst [vmem:[%s177 + $0x3a0] sm:$0xff] %v410
                %v412 = vld [vmem:[%s176 + $0xae8] sm:$0xff]
                %413 = vst [vmem:[%s177 + $0x3a8] sm:$0xff] %v412
                %v414 = vld [vmem:[%s176 + $0xb10] sm:$0xff]
                %415 = vst [vmem:[%s177 + $0x3b0] sm:$0xff] %v414
                %v416 = vld [vmem:[%s176 + $0xb18] sm:$0xff]
                %417 = vst [vmem:[%s177 + $0x3b8] sm:$0xff] %v416
                %v418 = vld [vmem:[%s176 + $0xb40] sm:$0xff]
                %419 = vst [vmem:[%s177 + $0x3c0] sm:$0xff] %v418
                %v420 = vld [vmem:[%s176 + $0xb48] sm:$0xff]
                %421 = vst [vmem:[%s177 + $0x3c8] sm:$0xff] %v420
                %v422 = vld [vmem:[%s176 + $0xb70] sm:$0xff]
                %423 = vst [vmem:[%s177 + $0x3d0] sm:$0xff] %v422
                %v424 = vld [vmem:[%s176 + $0xb78] sm:$0xff]
                %425 = vst [vmem:[%s177 + $0x3d8] sm:$0xff] %v424
                %v426 = vld [vmem:[%s176 + $0xba0] sm:$0xff]
                %427 = vst [vmem:[%s177 + $0x3e0] sm:$0xff] %v426
                %v428 = vld [vmem:[%s176 + $0xba8] sm:$0xff]
                %429 = vst [vmem:[%s177 + $0x3e8] sm:$0xff] %v428
                %v430 = vld [vmem:[%s176 + $0xbd0] sm:$0xff]
                %431 = vst [vmem:[%s177 + $0x3f0] sm:$0xff] %v430
                %v432 = vld [vmem:[%s176 + $0xbd8] sm:$0xff]
                %433 = vst [vmem:[%s177 + $0x3f8] sm:$0xff] %v432
              $region37: #{encoder_forward.11} parent=31 // loop_footer
                %s175 = sadd.s32 1, %s171
              $region38: #{encoder_forward.11} parent=31 // loop_footer_branch
                %170 = sbr.rel target = $region34
              $region39: #{encoder_forward.11} parent=31 // loop_exit
                _
            $region32: #{encoder_forward.11} parent=27 // pred_fallthru
              _
            // Predicated region
            $region40: #{encoder_forward.11} parent=27 // pred_check
              _
            $region41: #{encoder_forward.11} parent=27 // pred_check_branch
              %435 = sbr.rel target = $region43
            $region42: #{encoder_forward.11} parent=27 // pred_region
              _
            $region43: #{encoder_forward.11} parent=27 // pred_fallthru
              _
          $region28: #{encoder_forward.11} parent=23 // pred_fallthru
            _
          %436 = vnop
        $region24: #{encoder_forward.11} parent=19 // pred_fallthru
          _
        // Predicated region
        $region44: #{encoder_forward.11} parent=19 // pred_check
          %p437 = pneg %p93
        $region45: #{encoder_forward.11} parent=19 // pred_check_branch
          %439 = sbr.rel (%p437) target = $region47
        $region46: #{encoder_forward.11} parent=19 // pred_region
          %s440 = smul.u32 4, %s17
          %p441 = scmp.lt.s32.totalorder %s440, 11
          %s442 = scalar_select %p441, %s440, 11
          %s443 = scalar_lea.vmem %s2, %s442
          %s444 = smul.u32 4, %s17
        $region47: #{encoder_forward.11} parent=19 // pred_fallthru
          _
      $region20: #{encoder_forward.11} parent=5 // pred_fallthru
        _
      %p445 = scmp.le.s32.totalorder 1, %s9
      %p446 = scmp.lt.s32.totalorder %s9, 4
      %p447 = pnand %p445, %p446
      %p448 = pneg %p447
      // Predicated region
      $region48: #{encoder_forward.11} parent=5 // pred_check
        _
      $region49: #{encoder_forward.11} parent=5 // pred_check_branch
        %450 = sbr.rel (%p447) target = $region51
      $region50: #{encoder_forward.11} parent=5 // pred_region
        %s451 = ssub.s32 %s9, 1
        %s452 = sand.u32 %s60, 1
        %s453 = sand.u32 %s60, 1
        %s454 = smul.addr %s453, 1024
        %s455 = scalar_lea.vmem [#allocation2], %s454
        // Predicated region
        $region52: #{encoder_forward.11} parent=50 // pred_check
          %p456 = pneg %p73
        $region53: #{encoder_forward.11} parent=50 // pred_check_branch
          %458 = sbr.rel (%p456) target = $region55
        $region54: #{encoder_forward.11} parent=50 // pred_region
          _
        $region55: #{encoder_forward.11} parent=50 // pred_fallthru
          _
        %s459 = smul.u32 2, %s18
        %p460 = scmp.lt.s32.totalorder %s459, 1
        %s461 = scalar_select %p460, %s459, 1
        %s462 = smul.addr %s461, 4
        %s463 = smul.addr %s462, 8
        %s464 = scalar_lea.vmem %s0, %s463
        %p465 = pneg %p47
        %p466 = pneg %p44
        %s467 = sand.u32 %s60, 1
        %s468 = sand.u32 %s60, 1
        %s469 = smul.addr %s468, 1024
        %s470 = scalar_lea.vmem [#allocation2], %s469
        %p471 = pneg %p73
        %p472 = pneg %p70
        %s473 = smul.u32 4, %s19
        %p474 = scmp.lt.s32.totalorder %s473, 11
        %s475 = scalar_select %p474, %s473, 11
        %s476 = scalar_lea.vmem %s2, %s475
        %p477 = pneg %p99
        %p478 = pneg %p96
        %p479 = pneg %p127
        %p480 = pneg %p124
        %s481 = sand.u32 %s114, 1
        %s482 = sand.u32 %s114, 1
        %s483 = smul.addr %s482, 64
        %s484 = scalar_lea.vmem [#allocation3], %s483
        %s485 = smul.u32 2, %s18
        %p486 = scmp.lt.s32.totalorder %s485, 1
        %s487 = scalar_select %p486, %s485, 1
        %s488 = smul.addr %s487, 4
        %s489 = smul.addr %s488, 8
        %s490 = scalar_lea.vmem %s0, %s489
        %s491 = smul.u32 2, %s18
        %s492 = smul.u32 4, %s19
        %s493 = smul.u32 4, %s19
        %p494 = scmp.lt.s32.totalorder %s493, 11
        %s495 = scalar_select %p494, %s493, 11
        %s496 = scalar_lea.vmem %s2, %s495
        %s497 = smul.u32 4, %s19
        %s498 = smul.u32 2, %s18
        %s499 = smul.u32 4, %s19
        %v500 = vld [vmem:[%s490] sm:$0xff]
        %v501 = vld [vmem:[%s490 + $0x8] sm:$0xff]
        %v502 = vld [vmem:[%s490 + $0x10] sm:$0xff]
        %v503 = vld [vmem:[%s490 + $0x18] sm:$0xff]
        %v504 = vld [vmem:[%s490 + $0x20] sm:$0xff]
        %v505 = vld [vmem:[%s490 + $0x28] sm:$0xff]
        %v506 = vld [vmem:[%s490 + $0x30] sm:$0xff]
        %v507 = vld [vmem:[%s490 + $0x38] sm:$0xff]
        %v508 = vpack.c.bf16 %v504, %v500
        %v509 = vpack.c.bf16 %v505, %v501
        %v510 = vpack.c.bf16 %v506, %v502
        %v511 = vpack.c.bf16 %v507, %v503
        %v512 = vld [vmem:[%s455] sm:$0xff]
        %v513 = vld [vmem:[%s455 + $0x8] sm:$0xff]
        %v514 = vld [vmem:[%s455 + $0x10] sm:$0xff]
        %v515 = vld [vmem:[%s455 + $0x18] sm:$0xff]
        %v516 = vld [vmem:[%s455 + $0x20] sm:$0xff]
        %v517 = vld [vmem:[%s455 + $0x28] sm:$0xff]
        %v518 = vld [vmem:[%s455 + $0x30] sm:$0xff]
        %v519 = vld [vmem:[%s455 + $0x38] sm:$0xff]
        %v520 = vld [vmem:[%s455 + $0x40] sm:$0xff]
        %v521 = vld [vmem:[%s455 + $0x48] sm:$0xff]
        %v522 = vld [vmem:[%s455 + $0x50] sm:$0xff]
        %v523 = vld [vmem:[%s455 + $0x58] sm:$0xff]
        %v524 = vld [vmem:[%s455 + $0x60] sm:$0xff]
        %v525 = vld [vmem:[%s455 + $0x68] sm:$0xff]
        %v526 = vld [vmem:[%s455 + $0x70] sm:$0xff]
        %v527 = vld [vmem:[%s455 + $0x78] sm:$0xff]
        %v528 = vld [vmem:[%s455 + $0x80] sm:$0xff]
        %v529 = vld [vmem:[%s455 + $0x88] sm:$0xff]
        %v530 = vld [vmem:[%s455 + $0x90] sm:$0xff]
        %v531 = vld [vmem:[%s455 + $0x98] sm:$0xff]
        %v532 = vld [vmem:[%s455 + $0xa0] sm:$0xff]
        %v533 = vld [vmem:[%s455 + $0xa8] sm:$0xff]
        %v534 = vld [vmem:[%s455 + $0xb0] sm:$0xff]
        %v535 = vld [vmem:[%s455 + $0xb8] sm:$0xff]
        %v536 = vld [vmem:[%s455 + $0xc0] sm:$0xff]
        %v537 = vld [vmem:[%s455 + $0xc8] sm:$0xff]
        %v538 = vld [vmem:[%s455 + $0xd0] sm:$0xff]
        %v539 = vld [vmem:[%s455 + $0xd8] sm:$0xff]
        %v540 = vld [vmem:[%s455 + $0xe0] sm:$0xff]
        %v541 = vld [vmem:[%s455 + $0xe8] sm:$0xff]
        %v542 = vld [vmem:[%s455 + $0xf0] sm:$0xff]
        %v543 = vld [vmem:[%s455 + $0xf8] sm:$0xff]
        %v544 = vld [vmem:[%s455 + $0x100] sm:$0xff]
        %v545 = vld [vmem:[%s455 + $0x108] sm:$0xff]
        %v546 = vld [vmem:[%s455 + $0x110] sm:$0xff]
        %v547 = vld [vmem:[%s455 + $0x118] sm:$0xff]
        %v548 = vld [vmem:[%s455 + $0x120] sm:$0xff]
        %v549 = vld [vmem:[%s455 + $0x128] sm:$0xff]
        %v550 = vld [vmem:[%s455 + $0x130] sm:$0xff]
        %v551 = vld [vmem:[%s455 + $0x138] sm:$0xff]
        %v552 = vld [vmem:[%s455 + $0x140] sm:$0xff]
        %v553 = vld [vmem:[%s455 + $0x148] sm:$0xff]
        %v554 = vld [vmem:[%s455 + $0x150] sm:$0xff]
        %v555 = vld [vmem:[%s455 + $0x158] sm:$0xff]
        %v556 = vld [vmem:[%s455 + $0x160] sm:$0xff]
        %v557 = vld [vmem:[%s455 + $0x168] sm:$0xff]
        %v558 = vld [vmem:[%s455 + $0x170] sm:$0xff]
        %v559 = vld [vmem:[%s455 + $0x178] sm:$0xff]
        %v560 = vld [vmem:[%s455 + $0x180] sm:$0xff]
        %v561 = vld [vmem:[%s455 + $0x188] sm:$0xff]
        %v562 = vld [vmem:[%s455 + $0x190] sm:$0xff]
        %v563 = vld [vmem:[%s455 + $0x198] sm:$0xff]
        %v564 = vld [vmem:[%s455 + $0x1a0] sm:$0xff]
        %v565 = vld [vmem:[%s455 + $0x1a8] sm:$0xff]
        %v566 = vld [vmem:[%s455 + $0x1b0] sm:$0xff]
        %v567 = vld [vmem:[%s455 + $0x1b8] sm:$0xff]
        %v568 = vld [vmem:[%s455 + $0x1c0] sm:$0xff]
        %v569 = vld [vmem:[%s455 + $0x1c8] sm:$0xff]
        %v570 = vld [vmem:[%s455 + $0x1d0] sm:$0xff]
        %v571 = vld [vmem:[%s455 + $0x1d8] sm:$0xff]
        %v572 = vld [vmem:[%s455 + $0x1e0] sm:$0xff]
        %v573 = vld [vmem:[%s455 + $0x1e8] sm:$0xff]
        %v574 = vld [vmem:[%s455 + $0x1f0] sm:$0xff]
        %v575 = vld [vmem:[%s455 + $0x1f8] sm:$0xff]
        %v576 = vld [vmem:[%s455 + $0x200] sm:$0xff]
        %v577 = vld [vmem:[%s455 + $0x208] sm:$0xff]
        %v578 = vld [vmem:[%s455 + $0x210] sm:$0xff]
        %v579 = vld [vmem:[%s455 + $0x218] sm:$0xff]
        %v580 = vld [vmem:[%s455 + $0x220] sm:$0xff]
        %v581 = vld [vmem:[%s455 + $0x228] sm:$0xff]
        %v582 = vld [vmem:[%s455 + $0x230] sm:$0xff]
        %v583 = vld [vmem:[%s455 + $0x238] sm:$0xff]
        %v584 = vld [vmem:[%s455 + $0x240] sm:$0xff]
        %v585 = vld [vmem:[%s455 + $0x248] sm:$0xff]
        %v586 = vld [vmem:[%s455 + $0x250] sm:$0xff]
        %v587 = vld [vmem:[%s455 + $0x258] sm:$0xff]
        %v588 = vld [vmem:[%s455 + $0x260] sm:$0xff]
        %v589 = vld [vmem:[%s455 + $0x268] sm:$0xff]
        %v590 = vld [vmem:[%s455 + $0x270] sm:$0xff]
        %v591 = vld [vmem:[%s455 + $0x278] sm:$0xff]
        %v592 = vld [vmem:[%s455 + $0x280] sm:$0xff]
        %v593 = vld [vmem:[%s455 + $0x288] sm:$0xff]
        %v594 = vld [vmem:[%s455 + $0x290] sm:$0xff]
        %v595 = vld [vmem:[%s455 + $0x298] sm:$0xff]
        %v596 = vld [vmem:[%s455 + $0x2a0] sm:$0xff]
        %v597 = vld [vmem:[%s455 + $0x2a8] sm:$0xff]
        %v598 = vld [vmem:[%s455 + $0x2b0] sm:$0xff]
        %v599 = vld [vmem:[%s455 + $0x2b8] sm:$0xff]
        %v600 = vld [vmem:[%s455 + $0x2c0] sm:$0xff]
        %v601 = vld [vmem:[%s455 + $0x2c8] sm:$0xff]
        %v602 = vld [vmem:[%s455 + $0x2d0] sm:$0xff]
        %v603 = vld [vmem:[%s455 + $0x2d8] sm:$0xff]
        %v604 = vld [vmem:[%s455 + $0x2e0] sm:$0xff]
        %v605 = vld [vmem:[%s455 + $0x2e8] sm:$0xff]
        %v606 = vld [vmem:[%s455 + $0x2f0] sm:$0xff]
        %v607 = vld [vmem:[%s455 + $0x2f8] sm:$0xff]
        %v608 = vld [vmem:[%s455 + $0x300] sm:$0xff]
        %v609 = vld [vmem:[%s455 + $0x308] sm:$0xff]
        %v610 = vld [vmem:[%s455 + $0x310] sm:$0xff]
        %v611 = vld [vmem:[%s455 + $0x318] sm:$0xff]
        %v612 = vld [vmem:[%s455 + $0x320] sm:$0xff]
        %v613 = vld [vmem:[%s455 + $0x328] sm:$0xff]
        %v614 = vld [vmem:[%s455 + $0x330] sm:$0xff]
        %v615 = vld [vmem:[%s455 + $0x338] sm:$0xff]
        %v616 = vld [vmem:[%s455 + $0x340] sm:$0xff]
        %v617 = vld [vmem:[%s455 + $0x348] sm:$0xff]
        %v618 = vld [vmem:[%s455 + $0x350] sm:$0xff]
        %v619 = vld [vmem:[%s455 + $0x358] sm:$0xff]
        %v620 = vld [vmem:[%s455 + $0x360] sm:$0xff]
        %v621 = vld [vmem:[%s455 + $0x368] sm:$0xff]
        %v622 = vld [vmem:[%s455 + $0x370] sm:$0xff]
        %v623 = vld [vmem:[%s455 + $0x378] sm:$0xff]
        %v624 = vld [vmem:[%s455 + $0x380] sm:$0xff]
        %v625 = vld [vmem:[%s455 + $0x388] sm:$0xff]
        %v626 = vld [vmem:[%s455 + $0x390] sm:$0xff]
        %v627 = vld [vmem:[%s455 + $0x398] sm:$0xff]
        %v628 = vld [vmem:[%s455 + $0x3a0] sm:$0xff]
        %v629 = vld [vmem:[%s455 + $0x3a8] sm:$0xff]
        %v630 = vld [vmem:[%s455 + $0x3b0] sm:$0xff]
        %v631 = vld [vmem:[%s455 + $0x3b8] sm:$0xff]
        %v632 = vld [vmem:[%s455 + $0x3c0] sm:$0xff]
        %v633 = vld [vmem:[%s455 + $0x3c8] sm:$0xff]
        %v634 = vld [vmem:[%s455 + $0x3d0] sm:$0xff]
        %v635 = vld [vmem:[%s455 + $0x3d8] sm:$0xff]
        %v636 = vld [vmem:[%s455 + $0x3e0] sm:$0xff]
        %v637 = vld [vmem:[%s455 + $0x3e8] sm:$0xff]
        %v638 = vld [vmem:[%s455 + $0x3f0] sm:$0xff]
        %v639 = vld [vmem:[%s455 + $0x3f8] sm:$0xff]
        %v640 = vld [vmem:[%s496] sm:$0xf]
        %v642 = vlaneseq
        %v643 = vshrl.u32 %v642, 7
        %v644 = vsub.s32 0, %v643
        %v645 = vrot.slane %v640, %v644
        %v646 = vlaneseq
        %v647 = vshrl.u32 %v646, 7
        %v648 = vsub.s32 1, %v647
        %v649 = vrot.slane %v640, %v648
        %v650 = vlaneseq
        %v651 = vshrl.u32 %v650, 7
        %v652 = vsub.s32 2, %v651
        %v653 = vrot.slane %v640, %v652
        %v654 = vlaneseq
        %v655 = vshrl.u32 %v654, 7
        %v656 = vsub.s32 3, %v655
        %v657 = vrot.slane %v640, %v656
        %v790 = vunpack.c.l.b16 %v512
        %v791 = vunpack.c.h.b16 %v512
        %v792 = vunpack.c.l.b16 %v513
        %v793 = vunpack.c.h.b16 %v513
        %v794 = vunpack.c.l.b16 %v514
        %v795 = vunpack.c.h.b16 %v514
        %v796 = vunpack.c.l.b16 %v515
        %v797 = vunpack.c.h.b16 %v515
        %v798 = vunpack.c.l.b16 %v516
        %v799 = vunpack.c.h.b16 %v516
        %v800 = vunpack.c.l.b16 %v517
        %v801 = vunpack.c.h.b16 %v517
        %v802 = vunpack.c.l.b16 %v518
        %v803 = vunpack.c.h.b16 %v518
        %v804 = vunpack.c.l.b16 %v519
        %v805 = vunpack.c.h.b16 %v519
        %v806 = vunpack.c.l.b16 %v520
        %v807 = vunpack.c.h.b16 %v520
        %v808 = vunpack.c.l.b16 %v521
        %v809 = vunpack.c.h.b16 %v521
        %v810 = vunpack.c.l.b16 %v522
        %v811 = vunpack.c.h.b16 %v522
        %v812 = vunpack.c.l.b16 %v523
        %v813 = vunpack.c.h.b16 %v523
        %v814 = vunpack.c.l.b16 %v524
        %v815 = vunpack.c.h.b16 %v524
        %v816 = vunpack.c.l.b16 %v525
        %v817 = vunpack.c.h.b16 %v525
        %v818 = vunpack.c.l.b16 %v526
        %v819 = vunpack.c.h.b16 %v526
        %v820 = vunpack.c.l.b16 %v527
        %v821 = vunpack.c.h.b16 %v527
        %v822 = vunpack.c.l.b16 %v528
        %v823 = vunpack.c.h.b16 %v528
        %v824 = vunpack.c.l.b16 %v529
        %v825 = vunpack.c.h.b16 %v529
        %v826 = vunpack.c.l.b16 %v530
        %v827 = vunpack.c.h.b16 %v530
        %v828 = vunpack.c.l.b16 %v531
        %v829 = vunpack.c.h.b16 %v531
        %v830 = vunpack.c.l.b16 %v532
        %v831 = vunpack.c.h.b16 %v532
        %v832 = vunpack.c.l.b16 %v533
        %v833 = vunpack.c.h.b16 %v533
        %v834 = vunpack.c.l.b16 %v534
        %v835 = vunpack.c.h.b16 %v534
        %v836 = vunpack.c.l.b16 %v535
        %v837 = vunpack.c.h.b16 %v535
        %v838 = vunpack.c.l.b16 %v536
        %v839 = vunpack.c.h.b16 %v536
        %v840 = vunpack.c.l.b16 %v537
        %v841 = vunpack.c.h.b16 %v537
        %v842 = vunpack.c.l.b16 %v538
        %v843 = vunpack.c.h.b16 %v538
        %v844 = vunpack.c.l.b16 %v539
        %v845 = vunpack.c.h.b16 %v539
        %v846 = vunpack.c.l.b16 %v540
        %v847 = vunpack.c.h.b16 %v540
        %v848 = vunpack.c.l.b16 %v541
        %v849 = vunpack.c.h.b16 %v541
        %v850 = vunpack.c.l.b16 %v542
        %v851 = vunpack.c.h.b16 %v542
        %v852 = vunpack.c.l.b16 %v543
        %v853 = vunpack.c.h.b16 %v543
        %v854 = vunpack.c.l.b16 %v544
        %v855 = vunpack.c.h.b16 %v544
        %v856 = vunpack.c.l.b16 %v545
        %v857 = vunpack.c.h.b16 %v545
        %v858 = vunpack.c.l.b16 %v546
        %v859 = vunpack.c.h.b16 %v546
        %v860 = vunpack.c.l.b16 %v547
        %v861 = vunpack.c.h.b16 %v547
        %v862 = vunpack.c.l.b16 %v548
        %v863 = vunpack.c.h.b16 %v548
        %v864 = vunpack.c.l.b16 %v549
        %v865 = vunpack.c.h.b16 %v549
        %v866 = vunpack.c.l.b16 %v550
        %v867 = vunpack.c.h.b16 %v550
        %v868 = vunpack.c.l.b16 %v551
        %v869 = vunpack.c.h.b16 %v551
        %v870 = vunpack.c.l.b16 %v552
        %v871 = vunpack.c.h.b16 %v552
        %v872 = vunpack.c.l.b16 %v553
        %v873 = vunpack.c.h.b16 %v553
        %v874 = vunpack.c.l.b16 %v554
        %v875 = vunpack.c.h.b16 %v554
        %v876 = vunpack.c.l.b16 %v555
        %v877 = vunpack.c.h.b16 %v555
        %v878 = vunpack.c.l.b16 %v556
        %v879 = vunpack.c.h.b16 %v556
        %v880 = vunpack.c.l.b16 %v557
        %v881 = vunpack.c.h.b16 %v557
        %v882 = vunpack.c.l.b16 %v558
        %v883 = vunpack.c.h.b16 %v558
        %v884 = vunpack.c.l.b16 %v559
        %v885 = vunpack.c.h.b16 %v559
        %v886 = vunpack.c.l.b16 %v560
        %v887 = vunpack.c.h.b16 %v560
        %v888 = vunpack.c.l.b16 %v561
        %v889 = vunpack.c.h.b16 %v561
        %v890 = vunpack.c.l.b16 %v562
        %v891 = vunpack.c.h.b16 %v562
        %v892 = vunpack.c.l.b16 %v563
        %v893 = vunpack.c.h.b16 %v563
        %v894 = vunpack.c.l.b16 %v564
        %v895 = vunpack.c.h.b16 %v564
        %v896 = vunpack.c.l.b16 %v565
        %v897 = vunpack.c.h.b16 %v565
        %v898 = vunpack.c.l.b16 %v566
        %v899 = vunpack.c.h.b16 %v566
        %v900 = vunpack.c.l.b16 %v567
        %v901 = vunpack.c.h.b16 %v567
        %v902 = vunpack.c.l.b16 %v568
        %v903 = vunpack.c.h.b16 %v568
        %v904 = vunpack.c.l.b16 %v569
        %v905 = vunpack.c.h.b16 %v569
        %v906 = vunpack.c.l.b16 %v570
        %v907 = vunpack.c.h.b16 %v570
        %v908 = vunpack.c.l.b16 %v571
        %v909 = vunpack.c.h.b16 %v571
        %v910 = vunpack.c.l.b16 %v572
        %v911 = vunpack.c.h.b16 %v572
        %v912 = vunpack.c.l.b16 %v573
        %v913 = vunpack.c.h.b16 %v573
        %v914 = vunpack.c.l.b16 %v574
        %v915 = vunpack.c.h.b16 %v574
        %v916 = vunpack.c.l.b16 %v575
        %v917 = vunpack.c.h.b16 %v575
        %v918 = vunpack.c.l.b16 %v576
        %v919 = vunpack.c.h.b16 %v576
        %v920 = vunpack.c.l.b16 %v577
        %v921 = vunpack.c.h.b16 %v577
        %v922 = vunpack.c.l.b16 %v578
        %v923 = vunpack.c.h.b16 %v578
        %v924 = vunpack.c.l.b16 %v579
        %v925 = vunpack.c.h.b16 %v579
        %v926 = vunpack.c.l.b16 %v580
        %v927 = vunpack.c.h.b16 %v580
        %v928 = vunpack.c.l.b16 %v581
        %v929 = vunpack.c.h.b16 %v581
        %v930 = vunpack.c.l.b16 %v582
        %v931 = vunpack.c.h.b16 %v582
        %v932 = vunpack.c.l.b16 %v583
        %v933 = vunpack.c.h.b16 %v583
        %v934 = vunpack.c.l.b16 %v584
        %v935 = vunpack.c.h.b16 %v584
        %v936 = vunpack.c.l.b16 %v585
        %v937 = vunpack.c.h.b16 %v585
        %v938 = vunpack.c.l.b16 %v586
        %v939 = vunpack.c.h.b16 %v586
        %v940 = vunpack.c.l.b16 %v587
        %v941 = vunpack.c.h.b16 %v587
        %v942 = vunpack.c.l.b16 %v588
        %v943 = vunpack.c.h.b16 %v588
        %v944 = vunpack.c.l.b16 %v589
        %v945 = vunpack.c.h.b16 %v589
        %v946 = vunpack.c.l.b16 %v590
        %v947 = vunpack.c.h.b16 %v590
        %v948 = vunpack.c.l.b16 %v591
        %v949 = vunpack.c.h.b16 %v591
        %v950 = vunpack.c.l.b16 %v592
        %v951 = vunpack.c.h.b16 %v592
        %v952 = vunpack.c.l.b16 %v593
        %v953 = vunpack.c.h.b16 %v593
        %v954 = vunpack.c.l.b16 %v594
        %v955 = vunpack.c.h.b16 %v594
        %v956 = vunpack.c.l.b16 %v595
        %v957 = vunpack.c.h.b16 %v595
        %v958 = vunpack.c.l.b16 %v596
        %v959 = vunpack.c.h.b16 %v596
        %v960 = vunpack.c.l.b16 %v597
        %v961 = vunpack.c.h.b16 %v597
        %v962 = vunpack.c.l.b16 %v598
        %v963 = vunpack.c.h.b16 %v598
        %v964 = vunpack.c.l.b16 %v599
        %v965 = vunpack.c.h.b16 %v599
        %v966 = vunpack.c.l.b16 %v600
        %v967 = vunpack.c.h.b16 %v600
        %v968 = vunpack.c.l.b16 %v601
        %v969 = vunpack.c.h.b16 %v601
        %v970 = vunpack.c.l.b16 %v602
        %v971 = vunpack.c.h.b16 %v602
        %v972 = vunpack.c.l.b16 %v603
        %v973 = vunpack.c.h.b16 %v603
        %v974 = vunpack.c.l.b16 %v604
        %v975 = vunpack.c.h.b16 %v604
        %v976 = vunpack.c.l.b16 %v605
        %v977 = vunpack.c.h.b16 %v605
        %v978 = vunpack.c.l.b16 %v606
        %v979 = vunpack.c.h.b16 %v606
        %v980 = vunpack.c.l.b16 %v607
        %v981 = vunpack.c.h.b16 %v607
        %v982 = vunpack.c.l.b16 %v608
        %v983 = vunpack.c.h.b16 %v608
        %v984 = vunpack.c.l.b16 %v609
        %v985 = vunpack.c.h.b16 %v609
        %v986 = vunpack.c.l.b16 %v610
        %v987 = vunpack.c.h.b16 %v610
        %v988 = vunpack.c.l.b16 %v611
        %v989 = vunpack.c.h.b16 %v611
        %v990 = vunpack.c.l.b16 %v612
        %v991 = vunpack.c.h.b16 %v612
        %v992 = vunpack.c.l.b16 %v613
        %v993 = vunpack.c.h.b16 %v613
        %v994 = vunpack.c.l.b16 %v614
        %v995 = vunpack.c.h.b16 %v614
        %v996 = vunpack.c.l.b16 %v615
        %v997 = vunpack.c.h.b16 %v615
        %v998 = vunpack.c.l.b16 %v616
        %v999 = vunpack.c.h.b16 %v616
        %v1000 = vunpack.c.l.b16 %v617
        %v1001 = vunpack.c.h.b16 %v617
        %v1002 = vunpack.c.l.b16 %v618
        %v1003 = vunpack.c.h.b16 %v618
        %v1004 = vunpack.c.l.b16 %v619
        %v1005 = vunpack.c.h.b16 %v619
        %v1006 = vunpack.c.l.b16 %v620
        %v1007 = vunpack.c.h.b16 %v620
        %v1008 = vunpack.c.l.b16 %v621
        %v1009 = vunpack.c.h.b16 %v621
        %v1010 = vunpack.c.l.b16 %v622
        %v1011 = vunpack.c.h.b16 %v622
        %v1012 = vunpack.c.l.b16 %v623
        %v1013 = vunpack.c.h.b16 %v623
        %v1014 = vunpack.c.l.b16 %v624
        %v1015 = vunpack.c.h.b16 %v624
        %v1016 = vunpack.c.l.b16 %v625
        %v1017 = vunpack.c.h.b16 %v625
        %v1018 = vunpack.c.l.b16 %v626
        %v1019 = vunpack.c.h.b16 %v626
        %v1020 = vunpack.c.l.b16 %v627
        %v1021 = vunpack.c.h.b16 %v627
        %v1022 = vunpack.c.l.b16 %v628
        %v1023 = vunpack.c.h.b16 %v628
        %v1024 = vunpack.c.l.b16 %v629
        %v1025 = vunpack.c.h.b16 %v629
        %v1026 = vunpack.c.l.b16 %v630
        %v1027 = vunpack.c.h.b16 %v630
        %v1028 = vunpack.c.l.b16 %v631
        %v1029 = vunpack.c.h.b16 %v631
        %v1030 = vunpack.c.l.b16 %v632
        %v1031 = vunpack.c.h.b16 %v632
        %v1032 = vunpack.c.l.b16 %v633
        %v1033 = vunpack.c.h.b16 %v633
        %v1034 = vunpack.c.l.b16 %v634
        %v1035 = vunpack.c.h.b16 %v634
        %v1036 = vunpack.c.l.b16 %v635
        %v1037 = vunpack.c.h.b16 %v635
        %v1038 = vunpack.c.l.b16 %v636
        %v1039 = vunpack.c.h.b16 %v636
        %v1040 = vunpack.c.l.b16 %v637
        %v1041 = vunpack.c.h.b16 %v637
        %v1042 = vunpack.c.l.b16 %v638
        %v1043 = vunpack.c.h.b16 %v638
        %v1044 = vunpack.c.l.b16 %v639
        %v1045 = vunpack.c.h.b16 %v639
        %v1046 = vpack.c.b16 %v794, %v790
        %v1047 = vpack.c.b16 %v795, %v791
        %v1048 = vpack.c.b16 %v796, %v792
        %v1049 = vpack.c.b16 %v797, %v793
        %v1050 = vpack.c.b16 %v802, %v798
        %v1051 = vpack.c.b16 %v803, %v799
        %v1052 = vpack.c.b16 %v804, %v800
        %v1053 = vpack.c.b16 %v805, %v801
        %v1054 = vpack.c.b16 %v810, %v806
        %v1055 = vpack.c.b16 %v811, %v807
        %v1056 = vpack.c.b16 %v812, %v808
        %v1057 = vpack.c.b16 %v813, %v809
        %v1058 = vpack.c.b16 %v818, %v814
        %v1059 = vpack.c.b16 %v819, %v815
        %v1060 = vpack.c.b16 %v820, %v816
        %v1061 = vpack.c.b16 %v821, %v817
        %v1062 = vpack.c.b16 %v826, %v822
        %v1063 = vpack.c.b16 %v827, %v823
        %v1064 = vpack.c.b16 %v828, %v824
        %v1065 = vpack.c.b16 %v829, %v825
        %v1066 = vpack.c.b16 %v834, %v830
        %v1067 = vpack.c.b16 %v835, %v831
        %v1068 = vpack.c.b16 %v836, %v832
        %v1069 = vpack.c.b16 %v837, %v833
        %v1070 = vpack.c.b16 %v842, %v838
        %v1071 = vpack.c.b16 %v843, %v839
        %v1072 = vpack.c.b16 %v844, %v840
        %v1073 = vpack.c.b16 %v845, %v841
        %v1074 = vpack.c.b16 %v850, %v846
        %v1075 = vpack.c.b16 %v851, %v847
        %v1076 = vpack.c.b16 %v852, %v848
        %v1077 = vpack.c.b16 %v853, %v849
        %v1078 = vpack.c.b16 %v858, %v854
        %v1079 = vpack.c.b16 %v859, %v855
        %v1080 = vpack.c.b16 %v860, %v856
        %v1081 = vpack.c.b16 %v861, %v857
        %v1082 = vpack.c.b16 %v866, %v862
        %v1083 = vpack.c.b16 %v867, %v863
        %v1084 = vpack.c.b16 %v868, %v864
        %v1085 = vpack.c.b16 %v869, %v865
        %v1086 = vpack.c.b16 %v874, %v870
        %v1087 = vpack.c.b16 %v875, %v871
        %v1088 = vpack.c.b16 %v876, %v872
        %v1089 = vpack.c.b16 %v877, %v873
        %v1090 = vpack.c.b16 %v882, %v878
        %v1091 = vpack.c.b16 %v883, %v879
        %v1092 = vpack.c.b16 %v884, %v880
        %v1093 = vpack.c.b16 %v885, %v881
        %v1094 = vpack.c.b16 %v890, %v886
        %v1095 = vpack.c.b16 %v891, %v887
        %v1096 = vpack.c.b16 %v892, %v888
        %v1097 = vpack.c.b16 %v893, %v889
        %v1098 = vpack.c.b16 %v898, %v894
        %v1099 = vpack.c.b16 %v899, %v895
        %v1100 = vpack.c.b16 %v900, %v896
        %v1101 = vpack.c.b16 %v901, %v897
        %v1102 = vpack.c.b16 %v906, %v902
        %v1103 = vpack.c.b16 %v907, %v903
        %v1104 = vpack.c.b16 %v908, %v904
        %v1105 = vpack.c.b16 %v909, %v905
        %v1106 = vpack.c.b16 %v914, %v910
        %v1107 = vpack.c.b16 %v915, %v911
        %v1108 = vpack.c.b16 %v916, %v912
        %v1109 = vpack.c.b16 %v917, %v913
        %v1110 = vpack.c.b16 %v922, %v918
        %v1111 = vpack.c.b16 %v923, %v919
        %v1112 = vpack.c.b16 %v924, %v920
        %v1113 = vpack.c.b16 %v925, %v921
        %v1114 = vpack.c.b16 %v930, %v926
        %v1115 = vpack.c.b16 %v931, %v927
        %v1116 = vpack.c.b16 %v932, %v928
        %v1117 = vpack.c.b16 %v933, %v929
        %v1118 = vpack.c.b16 %v938, %v934
        %v1119 = vpack.c.b16 %v939, %v935
        %v1120 = vpack.c.b16 %v940, %v936
        %v1121 = vpack.c.b16 %v941, %v937
        %v1122 = vpack.c.b16 %v946, %v942
        %v1123 = vpack.c.b16 %v947, %v943
        %v1124 = vpack.c.b16 %v948, %v944
        %v1125 = vpack.c.b16 %v949, %v945
        %v1126 = vpack.c.b16 %v954, %v950
        %v1127 = vpack.c.b16 %v955, %v951
        %v1128 = vpack.c.b16 %v956, %v952
        %v1129 = vpack.c.b16 %v957, %v953
        %v1130 = vpack.c.b16 %v962, %v958
        %v1131 = vpack.c.b16 %v963, %v959
        %v1132 = vpack.c.b16 %v964, %v960
        %v1133 = vpack.c.b16 %v965, %v961
        %v1134 = vpack.c.b16 %v970, %v966
        %v1135 = vpack.c.b16 %v971, %v967
        %v1136 = vpack.c.b16 %v972, %v968
        %v1137 = vpack.c.b16 %v973, %v969
        %v1138 = vpack.c.b16 %v978, %v974
        %v1139 = vpack.c.b16 %v979, %v975
        %v1140 = vpack.c.b16 %v980, %v976
        %v1141 = vpack.c.b16 %v981, %v977
        %v1142 = vpack.c.b16 %v986, %v982
        %v1143 = vpack.c.b16 %v987, %v983
        %v1144 = vpack.c.b16 %v988, %v984
        %v1145 = vpack.c.b16 %v989, %v985
        %v1146 = vpack.c.b16 %v994, %v990
        %v1147 = vpack.c.b16 %v995, %v991
        %v1148 = vpack.c.b16 %v996, %v992
        %v1149 = vpack.c.b16 %v997, %v993
        %v1150 = vpack.c.b16 %v1002, %v998
        %v1151 = vpack.c.b16 %v1003, %v999
        %v1152 = vpack.c.b16 %v1004, %v1000
        %v1153 = vpack.c.b16 %v1005, %v1001
        %v1154 = vpack.c.b16 %v1010, %v1006
        %v1155 = vpack.c.b16 %v1011, %v1007
        %v1156 = vpack.c.b16 %v1012, %v1008
        %v1157 = vpack.c.b16 %v1013, %v1009
        %v1158 = vpack.c.b16 %v1018, %v1014
        %v1159 = vpack.c.b16 %v1019, %v1015
        %v1160 = vpack.c.b16 %v1020, %v1016
        %v1161 = vpack.c.b16 %v1021, %v1017
        %v1162 = vpack.c.b16 %v1026, %v1022
        %v1163 = vpack.c.b16 %v1027, %v1023
        %v1164 = vpack.c.b16 %v1028, %v1024
        %v1165 = vpack.c.b16 %v1029, %v1025
        %v1166 = vpack.c.b16 %v1034, %v1030
        %v1167 = vpack.c.b16 %v1035, %v1031
        %v1168 = vpack.c.b16 %v1036, %v1032
        %v1169 = vpack.c.b16 %v1037, %v1033
        %v1170 = vpack.c.b16 %v1042, %v1038
        %v1171 = vpack.c.b16 %v1043, %v1039
        %v1172 = vpack.c.b16 %v1044, %v1040
        %v1173 = vpack.c.b16 %v1045, %v1041
        %1302 = vmatprep.subr.bf16.mxu0 %v1075
        %1303 = vmatpush1.bf16.msra.mxu0 %v1074
        %1304 = vmatprep.subr.bf16.mxu0 %v1071
        %1305 = vmatpush1.bf16.msra.mxu0 %v1070
        %1306 = vmatprep.subr.bf16.mxu0 %v1067
        %1307 = vmatpush1.bf16.msra.mxu0 %v1066
        %1308 = vmatprep.subr.bf16.mxu0 %v1063
        %1309 = vmatpush1.bf16.msra.mxu0 %v1062
        %1310 = vmatprep.subr.bf16.mxu0 %v1059
        %1311 = vmatpush1.bf16.msra.mxu0 %v1058
        %1312 = vmatprep.subr.bf16.mxu0 %v1055
        %1313 = vmatpush1.bf16.msra.mxu0 %v1054
        %1314 = vmatprep.subr.bf16.mxu0 %v1051
        %1315 = vmatpush1.bf16.msra.mxu0 %v1050
        %1316 = vmatprep.subr.bf16.mxu0 %v1047
        %1317 = vmatpush1.bf16.msra.mxu0 %v1046
        %1318 = vmatprep.subr.bf16.mxu0 %v1107
        %1319 = vmatpush2.bf16.msra.mxu0 %v1106
        %1320 = vmatprep.subr.bf16.mxu0 %v1103
        %1321 = vmatpush2.bf16.msra.mxu0 %v1102
        %1322 = vmatprep.subr.bf16.mxu0 %v1099
        %1323 = vmatpush2.bf16.msra.mxu0 %v1098
        %1324 = vmatprep.subr.bf16.mxu0 %v1095
        %1325 = vmatpush2.bf16.msra.mxu0 %v1094
        %1326 = vmatprep.subr.bf16.mxu0 %v1091
        %1327 = vmatpush2.bf16.msra.mxu0 %v1090
        %1328 = vmatprep.subr.bf16.mxu0 %v1087
        %1329 = vmatpush2.bf16.msra.mxu0 %v1086
        %1330 = vmatprep.subr.bf16.mxu0 %v1083
        %1331 = vmatpush2.bf16.msra.mxu0 %v1082
        %1332 = vmatprep.subr.bf16.mxu0 %v1079
        %1333 = vmatpush2.bf16.msra.mxu0 %v1078
        %1334 = vmatprep.mubr.bf16.mxu0 %v509
        %1335 = vmatmul.mubr.bf16.gmra.mxu0 %v508
        %v1336 = vpop.f32.mrf.mxu0
        %v1337 = vadd.f32 %v645, %v1336
        %v1338 = vpop.f32.mrf.mxu0
        %v1339 = vadd.f32 %v649, %v1338
        %v1340 = vpop.f32.mrf.mxu0
        %v1341 = vadd.f32 %v645, %v1340
        %v1342 = vpop.f32.mrf.mxu0
        %v1343 = vadd.f32 %v649, %v1342
        %1344 = vdwg.mxu0
        %1345 = vmatprep.subr.bf16.mxu0 %v1139
        %1346 = vmatpush1.bf16.msra.mxu0 %v1138
        %1347 = vmatprep.subr.bf16.mxu0 %v1135
        %1348 = vmatpush1.bf16.msra.mxu0 %v1134
        %1349 = vmatprep.subr.bf16.mxu0 %v1131
        %1350 = vmatpush1.bf16.msra.mxu0 %v1130
        %1351 = vmatprep.subr.bf16.mxu0 %v1127
        %1352 = vmatpush1.bf16.msra.mxu0 %v1126
        %1353 = vmatprep.subr.bf16.mxu0 %v1123
        %1354 = vmatpush1.bf16.msra.mxu0 %v1122
        %1355 = vmatprep.subr.bf16.mxu0 %v1119
        %1356 = vmatpush1.bf16.msra.mxu0 %v1118
        %1357 = vmatprep.subr.bf16.mxu0 %v1115
        %1358 = vmatpush1.bf16.msra.mxu0 %v1114
        %1359 = vmatprep.subr.bf16.mxu0 %v1111
        %1360 = vmatpush1.bf16.msra.mxu0 %v1110
        %1361 = vmatprep.subr.bf16.mxu0 %v1171
        %1362 = vmatpush2.bf16.msra.mxu0 %v1170
        %1363 = vmatprep.subr.bf16.mxu0 %v1167
        %1364 = vmatpush2.bf16.msra.mxu0 %v1166
        %1365 = vmatprep.subr.bf16.mxu0 %v1163
        %1366 = vmatpush2.bf16.msra.mxu0 %v1162
        %1367 = vmatprep.subr.bf16.mxu0 %v1159
        %1368 = vmatpush2.bf16.msra.mxu0 %v1158
        %1369 = vmatprep.subr.bf16.mxu0 %v1155
        %1370 = vmatpush2.bf16.msra.mxu0 %v1154
        %1371 = vmatprep.subr.bf16.mxu0 %v1151
        %1372 = vmatpush2.bf16.msra.mxu0 %v1150
        %1373 = vmatprep.subr.bf16.mxu0 %v1147
        %1374 = vmatpush2.bf16.msra.mxu0 %v1146
        %1375 = vmatprep.subr.bf16.mxu0 %v1143
        %1376 = vmatpush2.bf16.msra.mxu0 %v1142
        %1377 = vmatprep.mubr.bf16.mxu0 %v511
        %1378 = vmatmul.mubr.bf16.gmra.mxu0 %v510
        %v1379 = vpop.f32.mrf.mxu0
        %v1380 = vadd.f32 %v1337, %v1379
        %v1381 = vpop.f32.mrf.mxu0
        %v1382 = vadd.f32 %v1339, %v1381
        %v1383 = vpop.f32.mrf.mxu0
        %v1384 = vadd.f32 %v1341, %v1383
        %v1385 = vpop.f32.mrf.mxu0
        %v1386 = vadd.f32 %v1343, %v1385
        %1387 = vdwg.mxu0
        %1388 = vmatprep.subr.bf16.mxu0 %v1077
        %1389 = vmatpush1.bf16.msra.mxu0 %v1076
        %1390 = vmatprep.subr.bf16.mxu0 %v1073
        %1391 = vmatpush1.bf16.msra.mxu0 %v1072
        %1392 = vmatprep.subr.bf16.mxu0 %v1069
        %1393 = vmatpush1.bf16.msra.mxu0 %v1068
        %1394 = vmatprep.subr.bf16.mxu0 %v1065
        %1395 = vmatpush1.bf16.msra.mxu0 %v1064
        %1396 = vmatprep.subr.bf16.mxu0 %v1061
        %1397 = vmatpush1.bf16.msra.mxu0 %v1060
        %1398 = vmatprep.subr.bf16.mxu0 %v1057
        %1399 = vmatpush1.bf16.msra.mxu0 %v1056
        %1400 = vmatprep.subr.bf16.mxu0 %v1053
        %1401 = vmatpush1.bf16.msra.mxu0 %v1052
        %1402 = vmatprep.subr.bf16.mxu0 %v1049
        %1403 = vmatpush1.bf16.msra.mxu0 %v1048
        %1404 = vmatprep.subr.bf16.mxu0 %v1109
        %1405 = vmatpush2.bf16.msra.mxu0 %v1108
        %1406 = vmatprep.subr.bf16.mxu0 %v1105
        %1407 = vmatpush2.bf16.msra.mxu0 %v1104
        %1408 = vmatprep.subr.bf16.mxu0 %v1101
        %1409 = vmatpush2.bf16.msra.mxu0 %v1100
        %1410 = vmatprep.subr.bf16.mxu0 %v1097
        %1411 = vmatpush2.bf16.msra.mxu0 %v1096
        %1412 = vmatprep.subr.bf16.mxu0 %v1093
        %1413 = vmatpush2.bf16.msra.mxu0 %v1092
        %1414 = vmatprep.subr.bf16.mxu0 %v1089
        %1415 = vmatpush2.bf16.msra.mxu0 %v1088
        %1416 = vmatprep.subr.bf16.mxu0 %v1085
        %1417 = vmatpush2.bf16.msra.mxu0 %v1084
        %1418 = vmatprep.subr.bf16.mxu0 %v1081
        %1419 = vmatpush2.bf16.msra.mxu0 %v1080
        %1420 = vmatprep.mubr.bf16.mxu0 %v509
        %1421 = vmatmul.mubr.bf16.gmra.mxu0 %v508
        %v1422 = vpop.f32.mrf.mxu0
        %v1423 = vadd.f32 %v653, %v1422
        %v1424 = vpop.f32.mrf.mxu0
        %v1425 = vadd.f32 %v657, %v1424
        %v1426 = vpop.f32.mrf.mxu0
        %v1427 = vadd.f32 %v653, %v1426
        %v1428 = vpop.f32.mrf.mxu0
        %v1429 = vadd.f32 %v657, %v1428
        %1430 = vdwg.mxu0
        %1431 = vmatprep.subr.bf16.mxu0 %v1141
        %1432 = vmatpush1.bf16.msra.mxu0 %v1140
        %1433 = vmatprep.subr.bf16.mxu0 %v1137
        %1434 = vmatpush1.bf16.msra.mxu0 %v1136
        %1435 = vmatprep.subr.bf16.mxu0 %v1133
        %1436 = vmatpush1.bf16.msra.mxu0 %v1132
        %1437 = vmatprep.subr.bf16.mxu0 %v1129
        %1438 = vmatpush1.bf16.msra.mxu0 %v1128
        %1439 = vmatprep.subr.bf16.mxu0 %v1125
        %1440 = vmatpush1.bf16.msra.mxu0 %v1124
        %1441 = vmatprep.subr.bf16.mxu0 %v1121
        %1442 = vmatpush1.bf16.msra.mxu0 %v1120
        %1443 = vmatprep.subr.bf16.mxu0 %v1117
        %1444 = vmatpush1.bf16.msra.mxu0 %v1116
        %1445 = vmatprep.subr.bf16.mxu0 %v1113
        %1446 = vmatpush1.bf16.msra.mxu0 %v1112
        %1447 = vmatprep.subr.bf16.mxu0 %v1173
        %1448 = vmatpush2.bf16.msra.mxu0 %v1172
        %1449 = vmatprep.subr.bf16.mxu0 %v1169
        %1450 = vmatpush2.bf16.msra.mxu0 %v1168
        %1451 = vmatprep.subr.bf16.mxu0 %v1165
        %1452 = vmatpush2.bf16.msra.mxu0 %v1164
        %1453 = vmatprep.subr.bf16.mxu0 %v1161
        %1454 = vmatpush2.bf16.msra.mxu0 %v1160
        %1455 = vmatprep.subr.bf16.mxu0 %v1157
        %1456 = vmatpush2.bf16.msra.mxu0 %v1156
        %1457 = vmatprep.subr.bf16.mxu0 %v1153
        %1458 = vmatpush2.bf16.msra.mxu0 %v1152
        %1459 = vmatprep.subr.bf16.mxu0 %v1149
        %1460 = vmatpush2.bf16.msra.mxu0 %v1148
        %1461 = vmatprep.subr.bf16.mxu0 %v1145
        %1462 = vmatpush2.bf16.msra.mxu0 %v1144
        %1463 = vmatprep.mubr.bf16.mxu0 %v511
        %1464 = vmatmul.mubr.bf16.gmra.mxu0 %v510
        %v1465 = vpop.f32.mrf.mxu0
        %v1466 = vadd.f32 %v1423, %v1465
        %v1467 = vpop.f32.mrf.mxu0
        %v1468 = vadd.f32 %v1425, %v1467
        %v1469 = vpop.f32.mrf.mxu0
        %v1470 = vadd.f32 %v1427, %v1469
        %v1471 = vpop.f32.mrf.mxu0
        %v1472 = vadd.f32 %v1429, %v1471
        %1473 = vdwg.mxu0
        %1474 = vst [vmem:[%s484] sm:$0xff] %v1380
        %1475 = vst [vmem:[%s484 + $0x8] sm:$0xff] %v1382
        %1476 = vst [vmem:[%s484 + $0x10] sm:$0xff] %v1466
        %1477 = vst [vmem:[%s484 + $0x18] sm:$0xff] %v1468
        %1478 = vst [vmem:[%s484 + $0x20] sm:$0xff] %v1384
        %1479 = vst [vmem:[%s484 + $0x28] sm:$0xff] %v1386
        %1480 = vst [vmem:[%s484 + $0x30] sm:$0xff] %v1470
        %1481 = vst [vmem:[%s484 + $0x38] sm:$0xff] %v1472
        %s1482 = sand.u32 %s114, 1
        %s1483 = sand.u32 %s114, 1
        %s1484 = smul.addr %s1483, 64
        %s1485 = scalar_lea.vmem [#allocation3], %s1484
        // Predicated region
        $region56: #{encoder_forward.11} parent=50 // pred_check
          %p1486 = pneg %p124
        $region57: #{encoder_forward.11} parent=50 // pred_check_branch
          %1488 = sbr.rel (%p1486) target = $region59
        $region58: #{encoder_forward.11} parent=50 // pred_region
          %s1489 = smul.u32 2, %s18
          %s1490 = smul.u32 4, %s19
          %s1491 = smul.addr %s1489, 12
          %s1492 = sadd.s32 %s1490, %s1491
          %s1493 = smul.addr %s1492, 8
          %s1494 = scalar_lea.vmem %s3, %s1493
          // Predicated region
          $region60: #{encoder_forward.11} parent=58 // pred_check
            _
          $region61: #{encoder_forward.11} parent=58 // pred_check_branch
            %1496 = sbr.rel (0) target = $region63
          $region62: #{encoder_forward.11} parent=58 // pred_region
            // Predicated region
            $region64: #{encoder_forward.11} parent=62 // pred_check
              _
            $region65: #{encoder_forward.11} parent=62 // pred_check_branch
              %1498 = sbr.rel (0) target = $region67
            $region66: #{encoder_forward.11} parent=62 // pred_region
              loop: start=0, step=1, limit=1
              $region68: #{encoder_forward.11} parent=66 // loop_pre_header
                _
              $region69: #{encoder_forward.11} parent=66 // loop_header
                %s1500 = sphi 0, %s1504
                %p1501 = scmp.ge.s32.totalorder %s1500, 1
                %s1505 = sphi %s1485, %s1485
                %s1506 = sphi %s1494, %s1494
              $region70: #{encoder_forward.11} parent=66 // loop_header_branch
                %1503 = sbr.rel (%p1501) target = $region74
              $region71: #{encoder_forward.11} parent=66 // loop_body
                %v1507 = vld [vmem:[%s1505] sm:$0xff]
                %1508 = vst [vmem:[%s1506] sm:$0xff] %v1507
                %v1509 = vld [vmem:[%s1505 + $0x8] sm:$0xff]
                %1510 = vst [vmem:[%s1506 + $0x8] sm:$0xff] %v1509
                %v1511 = vld [vmem:[%s1505 + $0x10] sm:$0xff]
                %1512 = vst [vmem:[%s1506 + $0x10] sm:$0xff] %v1511
                %v1513 = vld [vmem:[%s1505 + $0x18] sm:$0xff]
                %1514 = vst [vmem:[%s1506 + $0x18] sm:$0xff] %v1513
                %v1515 = vld [vmem:[%s1505 + $0x20] sm:$0xff]
                %1516 = vst [vmem:[%s1506 + $0x60] sm:$0xff] %v1515
                %v1517 = vld [vmem:[%s1505 + $0x28] sm:$0xff]
                %1518 = vst [vmem:[%s1506 + $0x68] sm:$0xff] %v1517
                %v1519 = vld [vmem:[%s1505 + $0x30] sm:$0xff]
                %1520 = vst [vmem:[%s1506 + $0x70] sm:$0xff] %v1519
                %v1521 = vld [vmem:[%s1505 + $0x38] sm:$0xff]
                %1522 = vst [vmem:[%s1506 + $0x78] sm:$0xff] %v1521
              $region72: #{encoder_forward.11} parent=66 // loop_footer
                %s1504 = sadd.s32 1, %s1500
              $region73: #{encoder_forward.11} parent=66 // loop_footer_branch
                %1499 = sbr.rel target = $region69
              $region74: #{encoder_forward.11} parent=66 // loop_exit
                _
            $region67: #{encoder_forward.11} parent=62 // pred_fallthru
              _
            // Predicated region
            $region75: #{encoder_forward.11} parent=62 // pred_check
              _
            $region76: #{encoder_forward.11} parent=62 // pred_check_branch
              %1524 = sbr.rel target = $region78
            $region77: #{encoder_forward.11} parent=62 // pred_region
              _
            $region78: #{encoder_forward.11} parent=62 // pred_fallthru
              _
          $region63: #{encoder_forward.11} parent=58 // pred_fallthru
            _
          %1525 = vnop
        $region59: #{encoder_forward.11} parent=50 // pred_fallthru
          _
      $region51: #{encoder_forward.11} parent=5 // pred_fallthru
        _
      %p1526 = scmp.le.s32.totalorder 2, %s9
      // Predicated region
      $region79: #{encoder_forward.11} parent=5 // pred_check
        %p1527 = pneg %p1526
      $region80: #{encoder_forward.11} parent=5 // pred_check_branch
        %1529 = sbr.rel (%p1527) target = $region82
      $region81: #{encoder_forward.11} parent=5 // pred_region
        %s1530 = ssub.s32 %s9, 2
        // Predicated region
        $region83: #{encoder_forward.11} parent=81 // pred_check
          %p1531 = pneg %p130
        $region84: #{encoder_forward.11} parent=81 // pred_check_branch
          %1533 = sbr.rel (%p1531) target = $region86
        $region85: #{encoder_forward.11} parent=81 // pred_region
          %s1534 = sand.u32 %s115, 1
          %s1535 = sand.u32 %s115, 1
          %s1536 = smul.addr %s1535, 64
          %s1537 = scalar_lea.vmem [#allocation3], %s1536
        $region86: #{encoder_forward.11} parent=81 // pred_fallthru
          _
      $region82: #{encoder_forward.11} parent=5 // pred_fallthru
        _
    $region6: #{encoder_forward.11} parent=1 // loop_footer
      %s13 = sadd.s32 1, %s9
    $region7: #{encoder_forward.11} parent=1 // loop_footer_branch
      %8 = sbr.rel target = $region3
    $region8: #{encoder_forward.11} parent=1 // loop_exit
      _

// kernel: encoder_forward.10
$region0: #{encoder_forward.10}
  #allocation0 [shape = 'u32[]', space=smem, size = 0x4, offset = 0x4, fixed_abs, tag = 'smem constant byte address 0x4 - core index']
  #allocation1 [shape = 'u32[144,128]{1,0:T(1,128)}', space=vmem, size = 0x12000, scoped, tag = 'internal scratch']
  %s0 = inlined_call_operand.vmem [shape: f32[16,512], index: 0, kind: input, shape index: {}]
  %s1 = inlined_call_operand.vmem [shape: bf16[512,512], index: 1, kind: input, shape index: {}]
  %s2 = inlined_call_operand.vmem [shape: f32[1,512], index: 2, kind: input, shape index: {}]
  %s3 = inlined_call_operand.vmem [shape: f32[16,512], index: 3, kind: input, shape index: {}]
  %s4 = inlined_call_operand.vmem [shape: f32[1,512], index: 4, kind: input, shape index: {}]
  %s5 = inlined_call_operand.vmem [shape: f32[1,512], index: 5, kind: input, shape index: {}]
  %s6 = inlined_call_operand.vmem [shape: f32[16,512], index: 6, kind: output, shape index: {}]
  %s7 = sld [smem:[#allocation0]]
  $region34: #{encoder_forward.10} parent=0
    _
  %s9 = ssub.s32 1, %s7
  %s10 = scalar_select 0, %s9, %s7
  // Predicated region
  $region2: #{encoder_forward.10} parent=0 // pred_check
    _
  $region3: #{encoder_forward.10} parent=0 // pred_check_branch
    %12 = sbr.rel (0) target = $region5
  $region4: #{encoder_forward.10} parent=0 // pred_region
    _
  $region5: #{encoder_forward.10} parent=0 // pred_fallthru
    _
  // Predicated region
  $region6: #{encoder_forward.10} parent=0 // pred_check
    _
  $region7: #{encoder_forward.10} parent=0 // pred_check_branch
    %14 = sbr.rel (0) target = $region9
  $region8: #{encoder_forward.10} parent=0 // pred_region
    _
  $region9: #{encoder_forward.10} parent=0 // pred_fallthru
    _
  // Predicated region
  $region10: #{encoder_forward.10} parent=0 // pred_check
    _
  $region11: #{encoder_forward.10} parent=0 // pred_check_branch
    %16 = sbr.rel (0) target = $region13
  $region12: #{encoder_forward.10} parent=0 // pred_region
    _
  $region13: #{encoder_forward.10} parent=0 // pred_fallthru
    _
  // Predicated region
  $region14: #{encoder_forward.10} parent=0 // pred_check
    _
  $region15: #{encoder_forward.10} parent=0 // pred_check_branch
    %18 = sbr.rel (0) target = $region17
  $region16: #{encoder_forward.10} parent=0 // pred_region
    _
  $region17: #{encoder_forward.10} parent=0 // pred_fallthru
    _
  // Predicated region
  $region18: #{encoder_forward.10} parent=0 // pred_check
    _
  $region19: #{encoder_forward.10} parent=0 // pred_check_branch
    %20 = sbr.rel (0) target = $region21
  $region20: #{encoder_forward.10} parent=0 // pred_region
    _
  $region21: #{encoder_forward.10} parent=0 // pred_fallthru
    _
  // Predicated region
  $region22: #{encoder_forward.10} parent=0 // pred_check
    _
  $region23: #{encoder_forward.10} parent=0 // pred_check_branch
    %22 = sbr.rel (0) target = $region25
  $region24: #{encoder_forward.10} parent=0 // pred_region
    _
  $region25: #{encoder_forward.10} parent=0 // pred_fallthru
    _
  %v23 = vld [vmem:[%s0] sm:$0xff]
  %v24 = vld [vmem:[%s0 + $0x8] sm:$0xff]
  %v25 = vld [vmem:[%s0 + $0x10] sm:$0xff]
  %v26 = vld [vmem:[%s0 + $0x18] sm:$0xff]
  %v27 = vld [vmem:[%s0 + $0x20] sm:$0xff]
  %v28 = vld [vmem:[%s0 + $0x28] sm:$0xff]
  %v29 = vld [vmem:[%s0 + $0x30] sm:$0xff]
  %v30 = vld [vmem:[%s0 + $0x38] sm:$0xff]
  %v31 = vpack.c.bf16 %v27, %v23
  %v32 = vpack.c.bf16 %v28, %v24
  %v33 = vpack.c.bf16 %v29, %v25
  %v34 = vpack.c.bf16 %v30, %v26
  %v35 = vld [vmem:[%s1] sm:$0xff]
  %v36 = vld [vmem:[%s1 + $0x8] sm:$0xff]
  %v37 = vld [vmem:[%s1 + $0x10] sm:$0xff]
  %v38 = vld [vmem:[%s1 + $0x18] sm:$0xff]
  %v39 = vld [vmem:[%s1 + $0x20] sm:$0xff]
  %v40 = vld [vmem:[%s1 + $0x28] sm:$0xff]
  %v41 = vld [vmem:[%s1 + $0x30] sm:$0xff]
  %v42 = vld [vmem:[%s1 + $0x38] sm:$0xff]
  %v43 = vld [vmem:[%s1 + $0x40] sm:$0xff]
  %v44 = vld [vmem:[%s1 + $0x48] sm:$0xff]
  %v45 = vld [vmem:[%s1 + $0x50] sm:$0xff]
  %v46 = vld [vmem:[%s1 + $0x58] sm:$0xff]
  %v47 = vld [vmem:[%s1 + $0x60] sm:$0xff]
  %v48 = vld [vmem:[%s1 + $0x68] sm:$0xff]
  %v49 = vld [vmem:[%s1 + $0x70] sm:$0xff]
  %v50 = vld [vmem:[%s1 + $0x78] sm:$0xff]
  %v51 = vld [vmem:[%s1 + $0x80] sm:$0xff]
  %v52 = vld [vmem:[%s1 + $0x88] sm:$0xff]
  %v53 = vld [vmem:[%s1 + $0x90] sm:$0xff]
  %v54 = vld [vmem:[%s1 + $0x98] sm:$0xff]
  %v55 = vld [vmem:[%s1 + $0xa0] sm:$0xff]
  %v56 = vld [vmem:[%s1 + $0xa8] sm:$0xff]
  %v57 = vld [vmem:[%s1 + $0xb0] sm:$0xff]
  %v58 = vld [vmem:[%s1 + $0xb8] sm:$0xff]
  %v59 = vld [vmem:[%s1 + $0xc0] sm:$0xff]
  %v60 = vld [vmem:[%s1 + $0xc8] sm:$0xff]
  %v61 = vld [vmem:[%s1 + $0xd0] sm:$0xff]
  %v62 = vld [vmem:[%s1 + $0xd8] sm:$0xff]
  %v63 = vld [vmem:[%s1 + $0xe0] sm:$0xff]
  %v64 = vld [vmem:[%s1 + $0xe8] sm:$0xff]
  %v65 = vld [vmem:[%s1 + $0xf0] sm:$0xff]
  %v66 = vld [vmem:[%s1 + $0xf8] sm:$0xff]
  %v67 = vld [vmem:[%s1 + $0x100] sm:$0xff]
  %v68 = vld [vmem:[%s1 + $0x108] sm:$0xff]
  %v69 = vld [vmem:[%s1 + $0x110] sm:$0xff]
  %v70 = vld [vmem:[%s1 + $0x118] sm:$0xff]
  %v71 = vld [vmem:[%s1 + $0x120] sm:$0xff]
  %v72 = vld [vmem:[%s1 + $0x128] sm:$0xff]
  %v73 = vld [vmem:[%s1 + $0x130] sm:$0xff]
  %v74 = vld [vmem:[%s1 + $0x138] sm:$0xff]
  %v75 = vld [vmem:[%s1 + $0x140] sm:$0xff]
  %v76 = vld [vmem:[%s1 + $0x148] sm:$0xff]
  %v77 = vld [vmem:[%s1 + $0x150] sm:$0xff]
  %v78 = vld [vmem:[%s1 + $0x158] sm:$0xff]
  %v79 = vld [vmem:[%s1 + $0x160] sm:$0xff]
  %v80 = vld [vmem:[%s1 + $0x168] sm:$0xff]
  %v81 = vld [vmem:[%s1 + $0x170] sm:$0xff]
  %v82 = vld [vmem:[%s1 + $0x178] sm:$0xff]
  %v83 = vld [vmem:[%s1 + $0x180] sm:$0xff]
  %v84 = vld [vmem:[%s1 + $0x188] sm:$0xff]
  %v85 = vld [vmem:[%s1 + $0x190] sm:$0xff]
  %v86 = vld [vmem:[%s1 + $0x198] sm:$0xff]
  %v87 = vld [vmem:[%s1 + $0x1a0] sm:$0xff]
  %v88 = vld [vmem:[%s1 + $0x1a8] sm:$0xff]
  %v89 = vld [vmem:[%s1 + $0x1b0] sm:$0xff]
  %v90 = vld [vmem:[%s1 + $0x1b8] sm:$0xff]
  %v91 = vld [vmem:[%s1 + $0x1c0] sm:$0xff]
  %v92 = vld [vmem:[%s1 + $0x1c8] sm:$0xff]
  %v93 = vld [vmem:[%s1 + $0x1d0] sm:$0xff]
  %v94 = vld [vmem:[%s1 + $0x1d8] sm:$0xff]
  %v95 = vld [vmem:[%s1 + $0x1e0] sm:$0xff]
  %v96 = vld [vmem:[%s1 + $0x1e8] sm:$0xff]
  %v97 = vld [vmem:[%s1 + $0x1f0] sm:$0xff]
  %v98 = vld [vmem:[%s1 + $0x1f8] sm:$0xff]
  %v99 = vld [vmem:[%s1 + $0x200] sm:$0xff]
  %v100 = vld [vmem:[%s1 + $0x208] sm:$0xff]
  %v101 = vld [vmem:[%s1 + $0x210] sm:$0xff]
  %v102 = vld [vmem:[%s1 + $0x218] sm:$0xff]
  %v103 = vld [vmem:[%s1 + $0x220] sm:$0xff]
  %v104 = vld [vmem:[%s1 + $0x228] sm:$0xff]
  %v105 = vld [vmem:[%s1 + $0x230] sm:$0xff]
  %v106 = vld [vmem:[%s1 + $0x238] sm:$0xff]
  %v107 = vld [vmem:[%s1 + $0x240] sm:$0xff]
  %v108 = vld [vmem:[%s1 + $0x248] sm:$0xff]
  %v109 = vld [vmem:[%s1 + $0x250] sm:$0xff]
  %v110 = vld [vmem:[%s1 + $0x258] sm:$0xff]
  %v111 = vld [vmem:[%s1 + $0x260] sm:$0xff]
  %v112 = vld [vmem:[%s1 + $0x268] sm:$0xff]
  %v113 = vld [vmem:[%s1 + $0x270] sm:$0xff]
  %v114 = vld [vmem:[%s1 + $0x278] sm:$0xff]
  %v115 = vld [vmem:[%s1 + $0x280] sm:$0xff]
  %v116 = vld [vmem:[%s1 + $0x288] sm:$0xff]
  %v117 = vld [vmem:[%s1 + $0x290] sm:$0xff]
  %v118 = vld [vmem:[%s1 + $0x298] sm:$0xff]
  %v119 = vld [vmem:[%s1 + $0x2a0] sm:$0xff]
  %v120 = vld [vmem:[%s1 + $0x2a8] sm:$0xff]
  %v121 = vld [vmem:[%s1 + $0x2b0] sm:$0xff]
  %v122 = vld [vmem:[%s1 + $0x2b8] sm:$0xff]
  %v123 = vld [vmem:[%s1 + $0x2c0] sm:$0xff]
  %v124 = vld [vmem:[%s1 + $0x2c8] sm:$0xff]
  %v125 = vld [vmem:[%s1 + $0x2d0] sm:$0xff]
  %v126 = vld [vmem:[%s1 + $0x2d8] sm:$0xff]
  %v127 = vld [vmem:[%s1 + $0x2e0] sm:$0xff]
  %v128 = vld [vmem:[%s1 + $0x2e8] sm:$0xff]
  %v129 = vld [vmem:[%s1 + $0x2f0] sm:$0xff]
  %v130 = vld [vmem:[%s1 + $0x2f8] sm:$0xff]
  %v131 = vld [vmem:[%s1 + $0x300] sm:$0xff]
  %v132 = vld [vmem:[%s1 + $0x308] sm:$0xff]
  %v133 = vld [vmem:[%s1 + $0x310] sm:$0xff]
  %v134 = vld [vmem:[%s1 + $0x318] sm:$0xff]
  %v135 = vld [vmem:[%s1 + $0x320] sm:$0xff]
  %v136 = vld [vmem:[%s1 + $0x328] sm:$0xff]
  %v137 = vld [vmem:[%s1 + $0x330] sm:$0xff]
  %v138 = vld [vmem:[%s1 + $0x338] sm:$0xff]
  %v139 = vld [vmem:[%s1 + $0x340] sm:$0xff]
  %v140 = vld [vmem:[%s1 + $0x348] sm:$0xff]
  %v141 = vld [vmem:[%s1 + $0x350] sm:$0xff]
  %v142 = vld [vmem:[%s1 + $0x358] sm:$0xff]
  %v143 = vld [vmem:[%s1 + $0x360] sm:$0xff]
  %v144 = vld [vmem:[%s1 + $0x368] sm:$0xff]
  %v145 = vld [vmem:[%s1 + $0x370] sm:$0xff]
  %v146 = vld [vmem:[%s1 + $0x378] sm:$0xff]
  %v147 = vld [vmem:[%s1 + $0x380] sm:$0xff]
  %v148 = vld [vmem:[%s1 + $0x388] sm:$0xff]
  %v149 = vld [vmem:[%s1 + $0x390] sm:$0xff]
  %v150 = vld [vmem:[%s1 + $0x398] sm:$0xff]
  %v151 = vld [vmem:[%s1 + $0x3a0] sm:$0xff]
  %v152 = vld [vmem:[%s1 + $0x3a8] sm:$0xff]
  %v153 = vld [vmem:[%s1 + $0x3b0] sm:$0xff]
  %v154 = vld [vmem:[%s1 + $0x3b8] sm:$0xff]
  %v155 = vld [vmem:[%s1 + $0x3c0] sm:$0xff]
  %v156 = vld [vmem:[%s1 + $0x3c8] sm:$0xff]
  %v157 = vld [vmem:[%s1 + $0x3d0] sm:$0xff]
  %v158 = vld [vmem:[%s1 + $0x3d8] sm:$0xff]
  %v159 = vld [vmem:[%s1 + $0x3e0] sm:$0xff]
  %v160 = vld [vmem:[%s1 + $0x3e8] sm:$0xff]
  %v161 = vld [vmem:[%s1 + $0x3f0] sm:$0xff]
  %v162 = vld [vmem:[%s1 + $0x3f8] sm:$0xff]
  %v163 = vld [vmem:[%s2] sm:$0xf]
  %v165 = vlaneseq
  %v166 = vshrl.u32 %v165, 7
  %v167 = vsub.s32 0, %v166
  %v168 = vrot.slane %v163, %v167
  %v169 = vlaneseq
  %v170 = vshrl.u32 %v169, 7
  %v171 = vsub.s32 1, %v170
  %v172 = vrot.slane %v163, %v171
  %v173 = vlaneseq
  %v174 = vshrl.u32 %v173, 7
  %v175 = vsub.s32 2, %v174
  %v176 = vrot.slane %v163, %v175
  %v177 = vlaneseq
  %v178 = vshrl.u32 %v177, 7
  %v179 = vsub.s32 3, %v178
  %v180 = vrot.slane %v163, %v179
  %v313 = vunpack.c.l.b16 %v35
  %v314 = vunpack.c.h.b16 %v35
  %v315 = vunpack.c.l.b16 %v36
  %v316 = vunpack.c.h.b16 %v36
  %v317 = vunpack.c.l.b16 %v37
  %v318 = vunpack.c.h.b16 %v37
  %v319 = vunpack.c.l.b16 %v38
  %v320 = vunpack.c.h.b16 %v38
  %v321 = vunpack.c.l.b16 %v39
  %v322 = vunpack.c.h.b16 %v39
  %v323 = vunpack.c.l.b16 %v40
  %v324 = vunpack.c.h.b16 %v40
  %v325 = vunpack.c.l.b16 %v41
  %v326 = vunpack.c.h.b16 %v41
  %v327 = vunpack.c.l.b16 %v42
  %v328 = vunpack.c.h.b16 %v42
  %v329 = vunpack.c.l.b16 %v43
  %v330 = vunpack.c.h.b16 %v43
  %v331 = vunpack.c.l.b16 %v44
  %v332 = vunpack.c.h.b16 %v44
  %v333 = vunpack.c.l.b16 %v45
  %v334 = vunpack.c.h.b16 %v45
  %v335 = vunpack.c.l.b16 %v46
  %v336 = vunpack.c.h.b16 %v46
  %v337 = vunpack.c.l.b16 %v47
  %v338 = vunpack.c.h.b16 %v47
  %v339 = vunpack.c.l.b16 %v48
  %v340 = vunpack.c.h.b16 %v48
  %v341 = vunpack.c.l.b16 %v49
  %v342 = vunpack.c.h.b16 %v49
  %v343 = vunpack.c.l.b16 %v50
  %v344 = vunpack.c.h.b16 %v50
  %v345 = vunpack.c.l.b16 %v51
  %v346 = vunpack.c.h.b16 %v51
  %v347 = vunpack.c.l.b16 %v52
  %v348 = vunpack.c.h.b16 %v52
  %v349 = vunpack.c.l.b16 %v53
  %v350 = vunpack.c.h.b16 %v53
  %v351 = vunpack.c.l.b16 %v54
  %v352 = vunpack.c.h.b16 %v54
  %v353 = vunpack.c.l.b16 %v55
  %v354 = vunpack.c.h.b16 %v55
  %v355 = vunpack.c.l.b16 %v56
  %v356 = vunpack.c.h.b16 %v56
  %v357 = vunpack.c.l.b16 %v57
  %v358 = vunpack.c.h.b16 %v57
  %v359 = vunpack.c.l.b16 %v58
  %v360 = vunpack.c.h.b16 %v58
  %v361 = vunpack.c.l.b16 %v59
  %v362 = vunpack.c.h.b16 %v59
  %v363 = vunpack.c.l.b16 %v60
  %v364 = vunpack.c.h.b16 %v60
  %v365 = vunpack.c.l.b16 %v61
  %v366 = vunpack.c.h.b16 %v61
  %v367 = vunpack.c.l.b16 %v62
  %v368 = vunpack.c.h.b16 %v62
  %v369 = vunpack.c.l.b16 %v63
  %v370 = vunpack.c.h.b16 %v63
  %v371 = vunpack.c.l.b16 %v64
  %v372 = vunpack.c.h.b16 %v64
  %v373 = vunpack.c.l.b16 %v65
  %v374 = vunpack.c.h.b16 %v65
  %v375 = vunpack.c.l.b16 %v66
  %v376 = vunpack.c.h.b16 %v66
  %v377 = vunpack.c.l.b16 %v67
  %v378 = vunpack.c.h.b16 %v67
  %v379 = vunpack.c.l.b16 %v68
  %v380 = vunpack.c.h.b16 %v68
  %v381 = vunpack.c.l.b16 %v69
  %v382 = vunpack.c.h.b16 %v69
  %v383 = vunpack.c.l.b16 %v70
  %v384 = vunpack.c.h.b16 %v70
  %v385 = vunpack.c.l.b16 %v71
  %v386 = vunpack.c.h.b16 %v71
  %v387 = vunpack.c.l.b16 %v72
  %v388 = vunpack.c.h.b16 %v72
  %v389 = vunpack.c.l.b16 %v73
  %v390 = vunpack.c.h.b16 %v73
  %v391 = vunpack.c.l.b16 %v74
  %v392 = vunpack.c.h.b16 %v74
  %v393 = vunpack.c.l.b16 %v75
  %v394 = vunpack.c.h.b16 %v75
  %v395 = vunpack.c.l.b16 %v76
  %v396 = vunpack.c.h.b16 %v76
  %v397 = vunpack.c.l.b16 %v77
  %v398 = vunpack.c.h.b16 %v77
  %v399 = vunpack.c.l.b16 %v78
  %v400 = vunpack.c.h.b16 %v78
  %v401 = vunpack.c.l.b16 %v79
  %v402 = vunpack.c.h.b16 %v79
  %v403 = vunpack.c.l.b16 %v80
  %v404 = vunpack.c.h.b16 %v80
  %v405 = vunpack.c.l.b16 %v81
  %v406 = vunpack.c.h.b16 %v81
  %v407 = vunpack.c.l.b16 %v82
  %v408 = vunpack.c.h.b16 %v82
  %v409 = vunpack.c.l.b16 %v83
  %v410 = vunpack.c.h.b16 %v83
  %v411 = vunpack.c.l.b16 %v84
  %v412 = vunpack.c.h.b16 %v84
  %v413 = vunpack.c.l.b16 %v85
  %v414 = vunpack.c.h.b16 %v85
  %v415 = vunpack.c.l.b16 %v86
  %v416 = vunpack.c.h.b16 %v86
  %v417 = vunpack.c.l.b16 %v87
  %v418 = vunpack.c.h.b16 %v87
  %v419 = vunpack.c.l.b16 %v88
  %v420 = vunpack.c.h.b16 %v88
  %v421 = vunpack.c.l.b16 %v89
  %v422 = vunpack.c.h.b16 %v89
  %v423 = vunpack.c.l.b16 %v90
  %v424 = vunpack.c.h.b16 %v90
  %v425 = vunpack.c.l.b16 %v91
  %v426 = vunpack.c.h.b16 %v91
  %v427 = vunpack.c.l.b16 %v92
  %v428 = vunpack.c.h.b16 %v92
  %v429 = vunpack.c.l.b16 %v93
  %v430 = vunpack.c.h.b16 %v93
  %v431 = vunpack.c.l.b16 %v94
  %v432 = vunpack.c.h.b16 %v94
  %v433 = vunpack.c.l.b16 %v95
  %v434 = vunpack.c.h.b16 %v95
  %v435 = vunpack.c.l.b16 %v96
  %v436 = vunpack.c.h.b16 %v96
  %v437 = vunpack.c.l.b16 %v97
  %v438 = vunpack.c.h.b16 %v97
  %v439 = vunpack.c.l.b16 %v98
  %v440 = vunpack.c.h.b16 %v98
  %v441 = vunpack.c.l.b16 %v99
  %v442 = vunpack.c.h.b16 %v99
  %v443 = vunpack.c.l.b16 %v100
  %v444 = vunpack.c.h.b16 %v100
  %v445 = vunpack.c.l.b16 %v101
  %v446 = vunpack.c.h.b16 %v101
  %v447 = vunpack.c.l.b16 %v102
  %v448 = vunpack.c.h.b16 %v102
  %v449 = vunpack.c.l.b16 %v103
  %v450 = vunpack.c.h.b16 %v103
  %v451 = vunpack.c.l.b16 %v104
  %v452 = vunpack.c.h.b16 %v104
  %v453 = vunpack.c.l.b16 %v105
  %v454 = vunpack.c.h.b16 %v105
  %v455 = vunpack.c.l.b16 %v106
  %v456 = vunpack.c.h.b16 %v106
  %v457 = vunpack.c.l.b16 %v107
  %v458 = vunpack.c.h.b16 %v107
  %v459 = vunpack.c.l.b16 %v108
  %v460 = vunpack.c.h.b16 %v108
  %v461 = vunpack.c.l.b16 %v109
  %v462 = vunpack.c.h.b16 %v109
  %v463 = vunpack.c.l.b16 %v110
  %v464 = vunpack.c.h.b16 %v110
  %v465 = vunpack.c.l.b16 %v111
  %v466 = vunpack.c.h.b16 %v111
  %v467 = vunpack.c.l.b16 %v112
  %v468 = vunpack.c.h.b16 %v112
  %v469 = vunpack.c.l.b16 %v113
  %v470 = vunpack.c.h.b16 %v113
  %v471 = vunpack.c.l.b16 %v114
  %v472 = vunpack.c.h.b16 %v114
  %v473 = vunpack.c.l.b16 %v115
  %v474 = vunpack.c.h.b16 %v115
  %v475 = vunpack.c.l.b16 %v116
  %v476 = vunpack.c.h.b16 %v116
  %v477 = vunpack.c.l.b16 %v117
  %v478 = vunpack.c.h.b16 %v117
  %v479 = vunpack.c.l.b16 %v118
  %v480 = vunpack.c.h.b16 %v118
  %v481 = vunpack.c.l.b16 %v119
  %v482 = vunpack.c.h.b16 %v119
  %v483 = vunpack.c.l.b16 %v120
  %v484 = vunpack.c.h.b16 %v120
  %v485 = vunpack.c.l.b16 %v121
  %v486 = vunpack.c.h.b16 %v121
  %v487 = vunpack.c.l.b16 %v122
  %v488 = vunpack.c.h.b16 %v122
  %v489 = vunpack.c.l.b16 %v123
  %v490 = vunpack.c.h.b16 %v123
  %v491 = vunpack.c.l.b16 %v124
  %v492 = vunpack.c.h.b16 %v124
  %v493 = vunpack.c.l.b16 %v125
  %v494 = vunpack.c.h.b16 %v125
  %v495 = vunpack.c.l.b16 %v126
  %v496 = vunpack.c.h.b16 %v126
  %v497 = vunpack.c.l.b16 %v127
  %v498 = vunpack.c.h.b16 %v127
  %v499 = vunpack.c.l.b16 %v128
  %v500 = vunpack.c.h.b16 %v128
  %v501 = vunpack.c.l.b16 %v129
  %v502 = vunpack.c.h.b16 %v129
  %v503 = vunpack.c.l.b16 %v130
  %v504 = vunpack.c.h.b16 %v130
  %v505 = vunpack.c.l.b16 %v131
  %v506 = vunpack.c.h.b16 %v131
  %v507 = vunpack.c.l.b16 %v132
  %v508 = vunpack.c.h.b16 %v132
  %v509 = vunpack.c.l.b16 %v133
  %v510 = vunpack.c.h.b16 %v133
  %v511 = vunpack.c.l.b16 %v134
  %v512 = vunpack.c.h.b16 %v134
  %v513 = vunpack.c.l.b16 %v135
  %v514 = vunpack.c.h.b16 %v135
  %v515 = vunpack.c.l.b16 %v136
  %v516 = vunpack.c.h.b16 %v136
  %v517 = vunpack.c.l.b16 %v137
  %v518 = vunpack.c.h.b16 %v137
  %v519 = vunpack.c.l.b16 %v138
  %v520 = vunpack.c.h.b16 %v138
  %v521 = vunpack.c.l.b16 %v139
  %v522 = vunpack.c.h.b16 %v139
  %v523 = vunpack.c.l.b16 %v140
  %v524 = vunpack.c.h.b16 %v140
  %v525 = vunpack.c.l.b16 %v141
  %v526 = vunpack.c.h.b16 %v141
  %v527 = vunpack.c.l.b16 %v142
  %v528 = vunpack.c.h.b16 %v142
  %v529 = vunpack.c.l.b16 %v143
  %v530 = vunpack.c.h.b16 %v143
  %v531 = vunpack.c.l.b16 %v144
  %v532 = vunpack.c.h.b16 %v144
  %v533 = vunpack.c.l.b16 %v145
  %v534 = vunpack.c.h.b16 %v145
  %v535 = vunpack.c.l.b16 %v146
  %v536 = vunpack.c.h.b16 %v146
  %v537 = vunpack.c.l.b16 %v147
  %v538 = vunpack.c.h.b16 %v147
  %v539 = vunpack.c.l.b16 %v148
  %v540 = vunpack.c.h.b16 %v148
  %v541 = vunpack.c.l.b16 %v149
  %v542 = vunpack.c.h.b16 %v149
  %v543 = vunpack.c.l.b16 %v150
  %v544 = vunpack.c.h.b16 %v150
  %v545 = vunpack.c.l.b16 %v151
  %v546 = vunpack.c.h.b16 %v151
  %v547 = vunpack.c.l.b16 %v152
  %v548 = vunpack.c.h.b16 %v152
  %v549 = vunpack.c.l.b16 %v153
  %v550 = vunpack.c.h.b16 %v153
  %v551 = vunpack.c.l.b16 %v154
  %v552 = vunpack.c.h.b16 %v154
  %v553 = vunpack.c.l.b16 %v155
  %v554 = vunpack.c.h.b16 %v155
  %v555 = vunpack.c.l.b16 %v156
  %v556 = vunpack.c.h.b16 %v156
  %v557 = vunpack.c.l.b16 %v157
  %v558 = vunpack.c.h.b16 %v157
  %v559 = vunpack.c.l.b16 %v158
  %v560 = vunpack.c.h.b16 %v158
  %v561 = vunpack.c.l.b16 %v159
  %v562 = vunpack.c.h.b16 %v159
  %v563 = vunpack.c.l.b16 %v160
  %v564 = vunpack.c.h.b16 %v160
  %v565 = vunpack.c.l.b16 %v161
  %v566 = vunpack.c.h.b16 %v161
  %v567 = vunpack.c.l.b16 %v162
  %v568 = vunpack.c.h.b16 %v162
  %v569 = vpack.c.b16 %v317, %v313
  %v570 = vpack.c.b16 %v318, %v314
  %v571 = vpack.c.b16 %v319, %v315
  %v572 = vpack.c.b16 %v320, %v316
  %v573 = vpack.c.b16 %v325, %v321
  %v574 = vpack.c.b16 %v326, %v322
  %v575 = vpack.c.b16 %v327, %v323
  %v576 = vpack.c.b16 %v328, %v324
  %v577 = vpack.c.b16 %v333, %v329
  %v578 = vpack.c.b16 %v334, %v330
  %v579 = vpack.c.b16 %v335, %v331
  %v580 = vpack.c.b16 %v336, %v332
  %v581 = vpack.c.b16 %v341, %v337
  %v582 = vpack.c.b16 %v342, %v338
  %v583 = vpack.c.b16 %v343, %v339
  %v584 = vpack.c.b16 %v344, %v340
  %v585 = vpack.c.b16 %v349, %v345
  %v586 = vpack.c.b16 %v350, %v346
  %v587 = vpack.c.b16 %v351, %v347
  %v588 = vpack.c.b16 %v352, %v348
  %v589 = vpack.c.b16 %v357, %v353
  %v590 = vpack.c.b16 %v358, %v354
  %v591 = vpack.c.b16 %v359, %v355
  %v592 = vpack.c.b16 %v360, %v356
  %v593 = vpack.c.b16 %v365, %v361
  %v594 = vpack.c.b16 %v366, %v362
  %v595 = vpack.c.b16 %v367, %v363
  %v596 = vpack.c.b16 %v368, %v364
  %v597 = vpack.c.b16 %v373, %v369
  %v598 = vpack.c.b16 %v374, %v370
  %v599 = vpack.c.b16 %v375, %v371
  %v600 = vpack.c.b16 %v376, %v372
  %v601 = vpack.c.b16 %v381, %v377
  %v602 = vpack.c.b16 %v382, %v378
  %v603 = vpack.c.b16 %v383, %v379
  %v604 = vpack.c.b16 %v384, %v380
  %v605 = vpack.c.b16 %v389, %v385
  %v606 = vpack.c.b16 %v390, %v386
  %v607 = vpack.c.b16 %v391, %v387
  %v608 = vpack.c.b16 %v392, %v388
  %v609 = vpack.c.b16 %v397, %v393
  %v610 = vpack.c.b16 %v398, %v394
  %v611 = vpack.c.b16 %v399, %v395
  %v612 = vpack.c.b16 %v400, %v396
  %v613 = vpack.c.b16 %v405, %v401
  %v614 = vpack.c.b16 %v406, %v402
  %v615 = vpack.c.b16 %v407, %v403
  %v616 = vpack.c.b16 %v408, %v404
  %v617 = vpack.c.b16 %v413, %v409
  %v618 = vpack.c.b16 %v414, %v410
  %v619 = vpack.c.b16 %v415, %v411
  %v620 = vpack.c.b16 %v416, %v412
  %v621 = vpack.c.b16 %v421, %v417
  %v622 = vpack.c.b16 %v422, %v418
  %v623 = vpack.c.b16 %v423, %v419
  %v624 = vpack.c.b16 %v424, %v420
  %v625 = vpack.c.b16 %v429, %v425
  %v626 = vpack.c.b16 %v430, %v426
  %v627 = vpack.c.b16 %v431, %v427
  %v628 = vpack.c.b16 %v432, %v428
  %v629 = vpack.c.b16 %v437, %v433
  %v630 = vpack.c.b16 %v438, %v434
  %v631 = vpack.c.b16 %v439, %v435
  %v632 = vpack.c.b16 %v440, %v436
  %v633 = vpack.c.b16 %v445, %v441
  %v634 = vpack.c.b16 %v446, %v442
  %v635 = vpack.c.b16 %v447, %v443
  %v636 = vpack.c.b16 %v448, %v444
  %v637 = vpack.c.b16 %v453, %v449
  %v638 = vpack.c.b16 %v454, %v450
  %v639 = vpack.c.b16 %v455, %v451
  %v640 = vpack.c.b16 %v456, %v452
  %v641 = vpack.c.b16 %v461, %v457
  %v642 = vpack.c.b16 %v462, %v458
  %v643 = vpack.c.b16 %v463, %v459
  %v644 = vpack.c.b16 %v464, %v460
  %v645 = vpack.c.b16 %v469, %v465
  %v646 = vpack.c.b16 %v470, %v466
  %v647 = vpack.c.b16 %v471, %v467
  %v648 = vpack.c.b16 %v472, %v468
  %v649 = vpack.c.b16 %v477, %v473
  %v650 = vpack.c.b16 %v478, %v474
  %v651 = vpack.c.b16 %v479, %v475
  %v652 = vpack.c.b16 %v480, %v476
  %v653 = vpack.c.b16 %v485, %v481
  %v654 = vpack.c.b16 %v486, %v482
  %v655 = vpack.c.b16 %v487, %v483
  %v656 = vpack.c.b16 %v488, %v484
  %v657 = vpack.c.b16 %v493, %v489
  %v658 = vpack.c.b16 %v494, %v490
  %v659 = vpack.c.b16 %v495, %v491
  %v660 = vpack.c.b16 %v496, %v492
  %v661 = vpack.c.b16 %v501, %v497
  %v662 = vpack.c.b16 %v502, %v498
  %v663 = vpack.c.b16 %v503, %v499
  %v664 = vpack.c.b16 %v504, %v500
  %v665 = vpack.c.b16 %v509, %v505
  %v666 = vpack.c.b16 %v510, %v506
  %v667 = vpack.c.b16 %v511, %v507
  %v668 = vpack.c.b16 %v512, %v508
  %v669 = vpack.c.b16 %v517, %v513
  %v670 = vpack.c.b16 %v518, %v514
  %v671 = vpack.c.b16 %v519, %v515
  %v672 = vpack.c.b16 %v520, %v516
  %v673 = vpack.c.b16 %v525, %v521
  %v674 = vpack.c.b16 %v526, %v522
  %v675 = vpack.c.b16 %v527, %v523
  %v676 = vpack.c.b16 %v528, %v524
  %v677 = vpack.c.b16 %v533, %v529
  %v678 = vpack.c.b16 %v534, %v530
  %v679 = vpack.c.b16 %v535, %v531
  %v680 = vpack.c.b16 %v536, %v532
  %v681 = vpack.c.b16 %v541, %v537
  %v682 = vpack.c.b16 %v542, %v538
  %v683 = vpack.c.b16 %v543, %v539
  %v684 = vpack.c.b16 %v544, %v540
  %v685 = vpack.c.b16 %v549, %v545
  %v686 = vpack.c.b16 %v550, %v546
  %v687 = vpack.c.b16 %v551, %v547
  %v688 = vpack.c.b16 %v552, %v548
  %v689 = vpack.c.b16 %v557, %v553
  %v690 = vpack.c.b16 %v558, %v554
  %v691 = vpack.c.b16 %v559, %v555
  %v692 = vpack.c.b16 %v560, %v556
  %v693 = vpack.c.b16 %v565, %v561
  %v694 = vpack.c.b16 %v566, %v562
  %v695 = vpack.c.b16 %v567, %v563
  %v696 = vpack.c.b16 %v568, %v564
  %825 = vmatprep.subr.bf16.mxu0 %v598
  %826 = vmatpush1.bf16.msra.mxu0 %v597
  %827 = vmatprep.subr.bf16.mxu0 %v594
  %828 = vmatpush1.bf16.msra.mxu0 %v593
  %829 = vmatprep.subr.bf16.mxu0 %v590
  %830 = vmatpush1.bf16.msra.mxu0 %v589
  %831 = vmatprep.subr.bf16.mxu0 %v586
  %832 = vmatpush1.bf16.msra.mxu0 %v585
  %833 = vmatprep.subr.bf16.mxu0 %v582
  %834 = vmatpush1.bf16.msra.mxu0 %v581
  %835 = vmatprep.subr.bf16.mxu0 %v578
  %836 = vmatpush1.bf16.msra.mxu0 %v577
  %837 = vmatprep.subr.bf16.mxu0 %v574
  %838 = vmatpush1.bf16.msra.mxu0 %v573
  %839 = vmatprep.subr.bf16.mxu0 %v570
  %840 = vmatpush1.bf16.msra.mxu0 %v569
  %841 = vmatprep.subr.bf16.mxu0 %v630
  %842 = vmatpush2.bf16.msra.mxu0 %v629
  %843 = vmatprep.subr.bf16.mxu0 %v626
  %844 = vmatpush2.bf16.msra.mxu0 %v625
  %845 = vmatprep.subr.bf16.mxu0 %v622
  %846 = vmatpush2.bf16.msra.mxu0 %v621
  %847 = vmatprep.subr.bf16.mxu0 %v618
  %848 = vmatpush2.bf16.msra.mxu0 %v617
  %849 = vmatprep.subr.bf16.mxu0 %v614
  %850 = vmatpush2.bf16.msra.mxu0 %v613
  %851 = vmatprep.subr.bf16.mxu0 %v610
  %852 = vmatpush2.bf16.msra.mxu0 %v609
  %853 = vmatprep.subr.bf16.mxu0 %v606
  %854 = vmatpush2.bf16.msra.mxu0 %v605
  %855 = vmatprep.subr.bf16.mxu0 %v602
  %856 = vmatpush2.bf16.msra.mxu0 %v601
  %857 = vmatprep.mubr.bf16.mxu0 %v32
  %858 = vmatmul.mubr.bf16.gmra.mxu0 %v31
  %v859 = vpop.f32.mrf.mxu0
  %v860 = vadd.f32 %v168, %v859
  %v861 = vpop.f32.mrf.mxu0
  %v862 = vadd.f32 %v172, %v861
  %v863 = vpop.f32.mrf.mxu0
  %v864 = vadd.f32 %v168, %v863
  %v865 = vpop.f32.mrf.mxu0
  %v866 = vadd.f32 %v172, %v865
  %867 = vdwg.mxu0
  %868 = vmatprep.subr.bf16.mxu0 %v662
  %869 = vmatpush1.bf16.msra.mxu0 %v661
  %870 = vmatprep.subr.bf16.mxu0 %v658
  %871 = vmatpush1.bf16.msra.mxu0 %v657
  %872 = vmatprep.subr.bf16.mxu0 %v654
  %873 = vmatpush1.bf16.msra.mxu0 %v653
  %874 = vmatprep.subr.bf16.mxu0 %v650
  %875 = vmatpush1.bf16.msra.mxu0 %v649
  %876 = vmatprep.subr.bf16.mxu0 %v646
  %877 = vmatpush1.bf16.msra.mxu0 %v645
  %878 = vmatprep.subr.bf16.mxu0 %v642
  %879 = vmatpush1.bf16.msra.mxu0 %v641
  %880 = vmatprep.subr.bf16.mxu0 %v638
  %881 = vmatpush1.bf16.msra.mxu0 %v637
  %882 = vmatprep.subr.bf16.mxu0 %v634
  %883 = vmatpush1.bf16.msra.mxu0 %v633
  %884 = vmatprep.subr.bf16.mxu0 %v694
  %885 = vmatpush2.bf16.msra.mxu0 %v693
  %886 = vmatprep.subr.bf16.mxu0 %v690
  %887 = vmatpush2.bf16.msra.mxu0 %v689
  %888 = vmatprep.subr.bf16.mxu0 %v686
  %889 = vmatpush2.bf16.msra.mxu0 %v685
  %890 = vmatprep.subr.bf16.mxu0 %v682
  %891 = vmatpush2.bf16.msra.mxu0 %v681
  %892 = vmatprep.subr.bf16.mxu0 %v678
  %893 = vmatpush2.bf16.msra.mxu0 %v677
  %894 = vmatprep.subr.bf16.mxu0 %v674
  %895 = vmatpush2.bf16.msra.mxu0 %v673
  %896 = vmatprep.subr.bf16.mxu0 %v670
  %897 = vmatpush2.bf16.msra.mxu0 %v669
  %898 = vmatprep.subr.bf16.mxu0 %v666
  %899 = vmatpush2.bf16.msra.mxu0 %v665
  %900 = vmatprep.mubr.bf16.mxu0 %v34
  %901 = vmatmul.mubr.bf16.gmra.mxu0 %v33
  %v902 = vpop.f32.mrf.mxu0
  %v903 = vadd.f32 %v860, %v902
  %v904 = vpop.f32.mrf.mxu0
  %v905 = vadd.f32 %v862, %v904
  %v906 = vpop.f32.mrf.mxu0
  %v907 = vadd.f32 %v864, %v906
  %v908 = vpop.f32.mrf.mxu0
  %v909 = vadd.f32 %v866, %v908
  %910 = vdwg.mxu0
  %911 = vmatprep.subr.bf16.mxu0 %v600
  %912 = vmatpush1.bf16.msra.mxu0 %v599
  %913 = vmatprep.subr.bf16.mxu0 %v596
  %914 = vmatpush1.bf16.msra.mxu0 %v595
  %915 = vmatprep.subr.bf16.mxu0 %v592
  %916 = vmatpush1.bf16.msra.mxu0 %v591
  %917 = vmatprep.subr.bf16.mxu0 %v588
  %918 = vmatpush1.bf16.msra.mxu0 %v587
  %919 = vmatprep.subr.bf16.mxu0 %v584
  %920 = vmatpush1.bf16.msra.mxu0 %v583
  %921 = vmatprep.subr.bf16.mxu0 %v580
  %922 = vmatpush1.bf16.msra.mxu0 %v579
  %923 = vmatprep.subr.bf16.mxu0 %v576
  %924 = vmatpush1.bf16.msra.mxu0 %v575
  %925 = vmatprep.subr.bf16.mxu0 %v572
  %926 = vmatpush1.bf16.msra.mxu0 %v571
  %927 = vmatprep.subr.bf16.mxu0 %v632
  %928 = vmatpush2.bf16.msra.mxu0 %v631
  %929 = vmatprep.subr.bf16.mxu0 %v628
  %930 = vmatpush2.bf16.msra.mxu0 %v627
  %931 = vmatprep.subr.bf16.mxu0 %v624
  %932 = vmatpush2.bf16.msra.mxu0 %v623
  %933 = vmatprep.subr.bf16.mxu0 %v620
  %934 = vmatpush2.bf16.msra.mxu0 %v619
  %935 = vmatprep.subr.bf16.mxu0 %v616
  %936 = vmatpush2.bf16.msra.mxu0 %v615
  %937 = vmatprep.subr.bf16.mxu0 %v612
  %938 = vmatpush2.bf16.msra.mxu0 %v611
  %939 = vmatprep.subr.bf16.mxu0 %v608
  %940 = vmatpush2.bf16.msra.mxu0 %v607
  %941 = vmatprep.subr.bf16.mxu0 %v604
  %942 = vmatpush2.bf16.msra.mxu0 %v603
  %943 = vmatprep.mubr.bf16.mxu0 %v32
  %944 = vmatmul.mubr.bf16.gmra.mxu0 %v31
  %v945 = vpop.f32.mrf.mxu0
  %v946 = vadd.f32 %v176, %v945
  %v947 = vpop.f32.mrf.mxu0
  %v948 = vadd.f32 %v180, %v947
  %v949 = vpop.f32.mrf.mxu0
  %v950 = vadd.f32 %v176, %v949
  %v951 = vpop.f32.mrf.mxu0
  %v952 = vadd.f32 %v180, %v951
  %953 = vdwg.mxu0
  %954 = vmatprep.subr.bf16.mxu0 %v664
  %955 = vmatpush1.bf16.msra.mxu0 %v663
  %956 = vmatprep.subr.bf16.mxu0 %v660
  %957 = vmatpush1.bf16.msra.mxu0 %v659
  %958 = vmatprep.subr.bf16.mxu0 %v656
  %959 = vmatpush1.bf16.msra.mxu0 %v655
  %960 = vmatprep.subr.bf16.mxu0 %v652
  %961 = vmatpush1.bf16.msra.mxu0 %v651
  %962 = vmatprep.subr.bf16.mxu0 %v648
  %963 = vmatpush1.bf16.msra.mxu0 %v647
  %964 = vmatprep.subr.bf16.mxu0 %v644
  %965 = vmatpush1.bf16.msra.mxu0 %v643
  %966 = vmatprep.subr.bf16.mxu0 %v640
  %967 = vmatpush1.bf16.msra.mxu0 %v639
  %968 = vmatprep.subr.bf16.mxu0 %v636
  %969 = vmatpush1.bf16.msra.mxu0 %v635
  %970 = vmatprep.subr.bf16.mxu0 %v696
  %971 = vmatpush2.bf16.msra.mxu0 %v695
  %972 = vmatprep.subr.bf16.mxu0 %v692
  %973 = vmatpush2.bf16.msra.mxu0 %v691
  %974 = vmatprep.subr.bf16.mxu0 %v688
  %975 = vmatpush2.bf16.msra.mxu0 %v687
  %976 = vmatprep.subr.bf16.mxu0 %v684
  %977 = vmatpush2.bf16.msra.mxu0 %v683
  %978 = vmatprep.subr.bf16.mxu0 %v680
  %979 = vmatpush2.bf16.msra.mxu0 %v679
  %980 = vmatprep.subr.bf16.mxu0 %v676
  %981 = vmatpush2.bf16.msra.mxu0 %v675
  %982 = vmatprep.subr.bf16.mxu0 %v672
  %983 = vmatpush2.bf16.msra.mxu0 %v671
  %984 = vmatprep.subr.bf16.mxu0 %v668
  %985 = vmatpush2.bf16.msra.mxu0 %v667
  %986 = vmatprep.mubr.bf16.mxu0 %v34
  %987 = vmatmul.mubr.bf16.gmra.mxu0 %v33
  %v988 = vpop.f32.mrf.mxu0
  %v989 = vadd.f32 %v946, %v988
  %v990 = vpop.f32.mrf.mxu0
  %v991 = vadd.f32 %v948, %v990
  %v992 = vpop.f32.mrf.mxu0
  %v993 = vadd.f32 %v950, %v992
  %v994 = vpop.f32.mrf.mxu0
  %v995 = vadd.f32 %v952, %v994
  %996 = vdwg.mxu0
  %v997 = vld [vmem:[%s3] sm:$0xff]
  %v998 = vld [vmem:[%s3 + $0x8] sm:$0xff]
  %v999 = vld [vmem:[%s3 + $0x10] sm:$0xff]
  %v1000 = vld [vmem:[%s3 + $0x18] sm:$0xff]
  %v1001 = vld [vmem:[%s3 + $0x20] sm:$0xff]
  %v1002 = vld [vmem:[%s3 + $0x28] sm:$0xff]
  %v1003 = vld [vmem:[%s3 + $0x30] sm:$0xff]
  %v1004 = vld [vmem:[%s3 + $0x38] sm:$0xff]
  %v1005 = vadd.f32 %v903, %v997
  %v1006 = vadd.f32 %v905, %v998
  %v1007 = vadd.f32 %v989, %v999
  %v1008 = vadd.f32 %v991, %v1000
  %v1009 = vadd.f32 %v907, %v1001
  %v1010 = vadd.f32 %v909, %v1002
  %v1011 = vadd.f32 %v993, %v1003
  %v1012 = vadd.f32 %v995, %v1004
  %v1013 = vadd.f32 %v1005, %v1006
  %v1014 = vadd.f32 %v1013, %v1007
  %v1015 = vadd.f32 %v1014, %v1008
  %1016 = vadd.xlane.f32.xlu0 %v1015
  %v1017 = vpop.xlane.xlu0 %1016
  %v1018 = vadd.f32 %v1009, %v1010
  %v1019 = vadd.f32 %v1018, %v1011
  %v1020 = vadd.f32 %v1019, %v1012
  %1021 = vadd.xlane.f32.xlu0 %v1020
  %v1022 = vpop.xlane.xlu0 %1021
  %v1023 = vrcp.pop 512.0
  %v1024 = vmul.f32 %v1017, %v1023
  %v1025 = vmul.f32 %v1022, %v1023
  %v1026 = vsub.f32 %v1005, %v1024
  %v1027 = vsub.f32 %v1006, %v1024
  %v1028 = vsub.f32 %v1007, %v1024
  %v1029 = vsub.f32 %v1008, %v1024
  %v1030 = vsub.f32 %v1009, %v1025
  %v1031 = vsub.f32 %v1010, %v1025
  %v1032 = vsub.f32 %v1011, %v1025
  %v1033 = vsub.f32 %v1012, %v1025
  %v1034 = vmul.f32 %v1026, %v1026
  %v1035 = vmul.f32 %v1027, %v1027
  %v1036 = vmul.f32 %v1028, %v1028
  %v1037 = vmul.f32 %v1029, %v1029
  %v1038 = vmul.f32 %v1030, %v1030
  %v1039 = vmul.f32 %v1031, %v1031
  %v1040 = vmul.f32 %v1032, %v1032
  %v1041 = vmul.f32 %v1033, %v1033
  %v1042 = vadd.f32 %v1034, %v1035
  %v1043 = vadd.f32 %v1042, %v1036
  %v1044 = vadd.f32 %v1043, %v1037
  %1045 = vadd.xlane.f32.xlu0 %v1044
  %v1046 = vpop.xlane.xlu0 %1045
  %v1047 = vadd.f32 %v1038, %v1039
  %v1048 = vadd.f32 %v1047, %v1040
  %v1049 = vadd.f32 %v1048, %v1041
  %1050 = vadd.xlane.f32.xlu0 %v1049
  %v1051 = vpop.xlane.xlu0 %1050
  %v1052 = vmul.f32 %v1046, %v1023
  %v1053 = vmul.f32 %v1051, %v1023
  %v1054 = vadd.f32 %v1052, 1e-05
  %v1055 = vadd.f32 %v1053, 1e-05
  %v1056 = vrsqrt.pop %v1054
  %v1057 = vrsqrt.pop %v1055
  %v1058 = vmul.f32 %v1026, %v1056
  %v1059 = vmul.f32 %v1027, %v1056
  %v1060 = vmul.f32 %v1028, %v1056
  %v1061 = vmul.f32 %v1029, %v1056
  %v1062 = vmul.f32 %v1030, %v1057
  %v1063 = vmul.f32 %v1031, %v1057
  %v1064 = vmul.f32 %v1032, %v1057
  %v1065 = vmul.f32 %v1033, %v1057
  %v1066 = vld [vmem:[%s4] sm:$0xf]
  %v1068 = vlaneseq
  %v1069 = vshrl.u32 %v1068, 7
  %v1070 = vsub.s32 0, %v1069
  %v1071 = vrot.slane %v1066, %v1070
  %v1072 = vlaneseq
  %v1073 = vshrl.u32 %v1072, 7
  %v1074 = vsub.s32 1, %v1073
  %v1075 = vrot.slane %v1066, %v1074
  %v1076 = vlaneseq
  %v1077 = vshrl.u32 %v1076, 7
  %v1078 = vsub.s32 2, %v1077
  %v1079 = vrot.slane %v1066, %v1078
  %v1080 = vlaneseq
  %v1081 = vshrl.u32 %v1080, 7
  %v1082 = vsub.s32 3, %v1081
  %v1083 = vrot.slane %v1066, %v1082
  %v1088 = vmul.f32 %v1058, %v1071
  %v1089 = vmul.f32 %v1059, %v1075
  %v1090 = vmul.f32 %v1060, %v1079
  %v1091 = vmul.f32 %v1061, %v1083
  %v1092 = vmul.f32 %v1062, %v1071
  %v1093 = vmul.f32 %v1063, %v1075
  %v1094 = vmul.f32 %v1064, %v1079
  %v1095 = vmul.f32 %v1065, %v1083
  %v1096 = vld [vmem:[%s5] sm:$0xf]
  %v1098 = vlaneseq
  %v1099 = vshrl.u32 %v1098, 7
  %v1100 = vsub.s32 0, %v1099
  %v1101 = vrot.slane %v1096, %v1100
  %v1102 = vlaneseq
  %v1103 = vshrl.u32 %v1102, 7
  %v1104 = vsub.s32 1, %v1103
  %v1105 = vrot.slane %v1096, %v1104
  %v1106 = vlaneseq
  %v1107 = vshrl.u32 %v1106, 7
  %v1108 = vsub.s32 2, %v1107
  %v1109 = vrot.slane %v1096, %v1108
  %v1110 = vlaneseq
  %v1111 = vshrl.u32 %v1110, 7
  %v1112 = vsub.s32 3, %v1111
  %v1113 = vrot.slane %v1096, %v1112
  %v1118 = vadd.f32 %v1088, %v1101
  %v1119 = vadd.f32 %v1089, %v1105
  %v1120 = vadd.f32 %v1090, %v1109
  %v1121 = vadd.f32 %v1091, %v1113
  %v1122 = vadd.f32 %v1092, %v1101
  %v1123 = vadd.f32 %v1093, %v1105
  %v1124 = vadd.f32 %v1094, %v1109
  %v1125 = vadd.f32 %v1095, %v1113
  %1126 = vst [vmem:[%s6] sm:$0xff] %v1118
  %1127 = vst [vmem:[%s6 + $0x8] sm:$0xff] %v1119
  %1128 = vst [vmem:[%s6 + $0x10] sm:$0xff] %v1120
  %1129 = vst [vmem:[%s6 + $0x18] sm:$0xff] %v1121
  %1130 = vst [vmem:[%s6 + $0x20] sm:$0xff] %v1122
  %1131 = vst [vmem:[%s6 + $0x28] sm:$0xff] %v1123
  %1132 = vst [vmem:[%s6 + $0x30] sm:$0xff] %v1124
  %1133 = vst [vmem:[%s6 + $0x38] sm:$0xff] %v1125
  // Predicated region
  $region26: #{encoder_forward.10} parent=0 // pred_check
    _
  $region27: #{encoder_forward.10} parent=0 // pred_check_branch
    %1135 = sbr.rel (0) target = $region29
  $region28: #{encoder_forward.10} parent=0 // pred_region
    _
  $region29: #{encoder_forward.10} parent=0 // pred_fallthru
    _
  // Predicated region
  $region30: #{encoder_forward.10} parent=0 // pred_check
    _
  $region31: #{encoder_forward.10} parent=0 // pred_check_branch
    %1137 = sbr.rel (0) target = $region33
  $region32: #{encoder_forward.10} parent=0 // pred_region
    _
  $region33: #{encoder_forward.10} parent=0 // pred_fallthru
    _

// kernel: encoder_forward.13
$region0: #{encoder_forward.13}
  #allocation0 [shape = 'u32[]', space=smem, size = 0x4, offset = 0x4, fixed_abs, tag = 'smem constant byte address 0x4 - core index']
  #allocation1 [shape = 'u32[144,128]{1,0:T(1,128)}', space=vmem, size = 0x12000, scoped, tag = 'internal scratch']
  %s0 = inlined_call_operand.vmem [shape: f32[16,512], index: 0, kind: input, shape index: {}]
  %s1 = inlined_call_operand.vmem [shape: bf16[512,512], index: 1, kind: input, shape index: {}]
  %s2 = inlined_call_operand.vmem [shape: f32[1,512], index: 2, kind: input, shape index: {}]
  %s3 = inlined_call_operand.vmem [shape: f32[16,512], index: 3, kind: input, shape index: {}]
  %s4 = inlined_call_operand.vmem [shape: f32[1,512], index: 4, kind: input, shape index: {}]
  %s5 = inlined_call_operand.vmem [shape: f32[1,512], index: 5, kind: input, shape index: {}]
  %s6 = inlined_call_operand.hbm [shape: f32[16,512], index: 6, kind: output, shape index: {}]
  %s7 = sld [smem:[#allocation0]]
  $region34: #{encoder_forward.13} parent=0
    _
  %s9 = ssub.s32 1, %s7
  %s10 = scalar_select 0, %s9, %s7
  $region1: #{encoder_forward.13} parent=0
    #allocation2 [shape = 'u8[32768]{0}', space=vmem, size = 0x8000, scoped, tag = 'output window, operand 0, single buffered']
    #allocation3 [shape = 's32[1]{0}', space=sflag, size = 0x4, scoped, tag = 'scoped memory for encoder_forward.13']
    %11 = vsyncpa [#allocation3], 0
    // Predicated region
    $region2: #{encoder_forward.13} parent=1 // pred_check
      _
    $region3: #{encoder_forward.13} parent=1 // pred_check_branch
      %13 = sbr.rel (0) target = $region5
    $region4: #{encoder_forward.13} parent=1 // pred_region
      _
    $region5: #{encoder_forward.13} parent=1 // pred_fallthru
      _
    // Predicated region
    $region6: #{encoder_forward.13} parent=1 // pred_check
      _
    $region7: #{encoder_forward.13} parent=1 // pred_check_branch
      %15 = sbr.rel (0) target = $region9
    $region8: #{encoder_forward.13} parent=1 // pred_region
      _
    $region9: #{encoder_forward.13} parent=1 // pred_fallthru
      _
    // Predicated region
    $region10: #{encoder_forward.13} parent=1 // pred_check
      _
    $region11: #{encoder_forward.13} parent=1 // pred_check_branch
      %17 = sbr.rel (0) target = $region13
    $region12: #{encoder_forward.13} parent=1 // pred_region
      _
    $region13: #{encoder_forward.13} parent=1 // pred_fallthru
      _
    // Predicated region
    $region14: #{encoder_forward.13} parent=1 // pred_check
      _
    $region15: #{encoder_forward.13} parent=1 // pred_check_branch
      %19 = sbr.rel (0) target = $region17
    $region16: #{encoder_forward.13} parent=1 // pred_region
      _
    $region17: #{encoder_forward.13} parent=1 // pred_fallthru
      _
    // Predicated region
    $region18: #{encoder_forward.13} parent=1 // pred_check
      _
    $region19: #{encoder_forward.13} parent=1 // pred_check_branch
      %21 = sbr.rel (0) target = $region21
    $region20: #{encoder_forward.13} parent=1 // pred_region
      _
    $region21: #{encoder_forward.13} parent=1 // pred_fallthru
      _
    // Predicated region
    $region22: #{encoder_forward.13} parent=1 // pred_check
      _
    $region23: #{encoder_forward.13} parent=1 // pred_check_branch
      %23 = sbr.rel (0) target = $region25
    $region24: #{encoder_forward.13} parent=1 // pred_region
      _
    $region25: #{encoder_forward.13} parent=1 // pred_fallthru
      _
    %v24 = vld [vmem:[%s0] sm:$0xff]
    %v25 = vld [vmem:[%s0 + $0x8] sm:$0xff]
    %v26 = vld [vmem:[%s0 + $0x10] sm:$0xff]
    %v27 = vld [vmem:[%s0 + $0x18] sm:$0xff]
    %v28 = vld [vmem:[%s0 + $0x20] sm:$0xff]
    %v29 = vld [vmem:[%s0 + $0x28] sm:$0xff]
    %v30 = vld [vmem:[%s0 + $0x30] sm:$0xff]
    %v31 = vld [vmem:[%s0 + $0x38] sm:$0xff]
    %v32 = vpack.c.bf16 %v28, %v24
    %v33 = vpack.c.bf16 %v29, %v25
    %v34 = vpack.c.bf16 %v30, %v26
    %v35 = vpack.c.bf16 %v31, %v27
    %v36 = vld [vmem:[%s1] sm:$0xff]
    %v37 = vld [vmem:[%s1 + $0x8] sm:$0xff]
    %v38 = vld [vmem:[%s1 + $0x10] sm:$0xff]
    %v39 = vld [vmem:[%s1 + $0x18] sm:$0xff]
    %v40 = vld [vmem:[%s1 + $0x20] sm:$0xff]
    %v41 = vld [vmem:[%s1 + $0x28] sm:$0xff]
    %v42 = vld [vmem:[%s1 + $0x30] sm:$0xff]
    %v43 = vld [vmem:[%s1 + $0x38] sm:$0xff]
    %v44 = vld [vmem:[%s1 + $0x40] sm:$0xff]
    %v45 = vld [vmem:[%s1 + $0x48] sm:$0xff]
    %v46 = vld [vmem:[%s1 + $0x50] sm:$0xff]
    %v47 = vld [vmem:[%s1 + $0x58] sm:$0xff]
    %v48 = vld [vmem:[%s1 + $0x60] sm:$0xff]
    %v49 = vld [vmem:[%s1 + $0x68] sm:$0xff]
    %v50 = vld [vmem:[%s1 + $0x70] sm:$0xff]
    %v51 = vld [vmem:[%s1 + $0x78] sm:$0xff]
    %v52 = vld [vmem:[%s1 + $0x80] sm:$0xff]
    %v53 = vld [vmem:[%s1 + $0x88] sm:$0xff]
    %v54 = vld [vmem:[%s1 + $0x90] sm:$0xff]
    %v55 = vld [vmem:[%s1 + $0x98] sm:$0xff]
    %v56 = vld [vmem:[%s1 + $0xa0] sm:$0xff]
    %v57 = vld [vmem:[%s1 + $0xa8] sm:$0xff]
    %v58 = vld [vmem:[%s1 + $0xb0] sm:$0xff]
    %v59 = vld [vmem:[%s1 + $0xb8] sm:$0xff]
    %v60 = vld [vmem:[%s1 + $0xc0] sm:$0xff]
    %v61 = vld [vmem:[%s1 + $0xc8] sm:$0xff]
    %v62 = vld [vmem:[%s1 + $0xd0] sm:$0xff]
    %v63 = vld [vmem:[%s1 + $0xd8] sm:$0xff]
    %v64 = vld [vmem:[%s1 + $0xe0] sm:$0xff]
    %v65 = vld [vmem:[%s1 + $0xe8] sm:$0xff]
    %v66 = vld [vmem:[%s1 + $0xf0] sm:$0xff]
    %v67 = vld [vmem:[%s1 + $0xf8] sm:$0xff]
    %v68 = vld [vmem:[%s1 + $0x100] sm:$0xff]
    %v69 = vld [vmem:[%s1 + $0x108] sm:$0xff]
    %v70 = vld [vmem:[%s1 + $0x110] sm:$0xff]
    %v71 = vld [vmem:[%s1 + $0x118] sm:$0xff]
    %v72 = vld [vmem:[%s1 + $0x120] sm:$0xff]
    %v73 = vld [vmem:[%s1 + $0x128] sm:$0xff]
    %v74 = vld [vmem:[%s1 + $0x130] sm:$0xff]
    %v75 = vld [vmem:[%s1 + $0x138] sm:$0xff]
    %v76 = vld [vmem:[%s1 + $0x140] sm:$0xff]
    %v77 = vld [vmem:[%s1 + $0x148] sm:$0xff]
    %v78 = vld [vmem:[%s1 + $0x150] sm:$0xff]
    %v79 = vld [vmem:[%s1 + $0x158] sm:$0xff]
    %v80 = vld [vmem:[%s1 + $0x160] sm:$0xff]
    %v81 = vld [vmem:[%s1 + $0x168] sm:$0xff]
    %v82 = vld [vmem:[%s1 + $0x170] sm:$0xff]
    %v83 = vld [vmem:[%s1 + $0x178] sm:$0xff]
    %v84 = vld [vmem:[%s1 + $0x180] sm:$0xff]
    %v85 = vld [vmem:[%s1 + $0x188] sm:$0xff]
    %v86 = vld [vmem:[%s1 + $0x190] sm:$0xff]
    %v87 = vld [vmem:[%s1 + $0x198] sm:$0xff]
    %v88 = vld [vmem:[%s1 + $0x1a0] sm:$0xff]
    %v89 = vld [vmem:[%s1 + $0x1a8] sm:$0xff]
    %v90 = vld [vmem:[%s1 + $0x1b0] sm:$0xff]
    %v91 = vld [vmem:[%s1 + $0x1b8] sm:$0xff]
    %v92 = vld [vmem:[%s1 + $0x1c0] sm:$0xff]
    %v93 = vld [vmem:[%s1 + $0x1c8] sm:$0xff]
    %v94 = vld [vmem:[%s1 + $0x1d0] sm:$0xff]
    %v95 = vld [vmem:[%s1 + $0x1d8] sm:$0xff]
    %v96 = vld [vmem:[%s1 + $0x1e0] sm:$0xff]
    %v97 = vld [vmem:[%s1 + $0x1e8] sm:$0xff]
    %v98 = vld [vmem:[%s1 + $0x1f0] sm:$0xff]
    %v99 = vld [vmem:[%s1 + $0x1f8] sm:$0xff]
    %v100 = vld [vmem:[%s1 + $0x200] sm:$0xff]
    %v101 = vld [vmem:[%s1 + $0x208] sm:$0xff]
    %v102 = vld [vmem:[%s1 + $0x210] sm:$0xff]
    %v103 = vld [vmem:[%s1 + $0x218] sm:$0xff]
    %v104 = vld [vmem:[%s1 + $0x220] sm:$0xff]
    %v105 = vld [vmem:[%s1 + $0x228] sm:$0xff]
    %v106 = vld [vmem:[%s1 + $0x230] sm:$0xff]
    %v107 = vld [vmem:[%s1 + $0x238] sm:$0xff]
    %v108 = vld [vmem:[%s1 + $0x240] sm:$0xff]
    %v109 = vld [vmem:[%s1 + $0x248] sm:$0xff]
    %v110 = vld [vmem:[%s1 + $0x250] sm:$0xff]
    %v111 = vld [vmem:[%s1 + $0x258] sm:$0xff]
    %v112 = vld [vmem:[%s1 + $0x260] sm:$0xff]
    %v113 = vld [vmem:[%s1 + $0x268] sm:$0xff]
    %v114 = vld [vmem:[%s1 + $0x270] sm:$0xff]
    %v115 = vld [vmem:[%s1 + $0x278] sm:$0xff]
    %v116 = vld [vmem:[%s1 + $0x280] sm:$0xff]
    %v117 = vld [vmem:[%s1 + $0x288] sm:$0xff]
    %v118 = vld [vmem:[%s1 + $0x290] sm:$0xff]
    %v119 = vld [vmem:[%s1 + $0x298] sm:$0xff]
    %v120 = vld [vmem:[%s1 + $0x2a0] sm:$0xff]
    %v121 = vld [vmem:[%s1 + $0x2a8] sm:$0xff]
    %v122 = vld [vmem:[%s1 + $0x2b0] sm:$0xff]
    %v123 = vld [vmem:[%s1 + $0x2b8] sm:$0xff]
    %v124 = vld [vmem:[%s1 + $0x2c0] sm:$0xff]
    %v125 = vld [vmem:[%s1 + $0x2c8] sm:$0xff]
    %v126 = vld [vmem:[%s1 + $0x2d0] sm:$0xff]
    %v127 = vld [vmem:[%s1 + $0x2d8] sm:$0xff]
    %v128 = vld [vmem:[%s1 + $0x2e0] sm:$0xff]
    %v129 = vld [vmem:[%s1 + $0x2e8] sm:$0xff]
    %v130 = vld [vmem:[%s1 + $0x2f0] sm:$0xff]
    %v131 = vld [vmem:[%s1 + $0x2f8] sm:$0xff]
    %v132 = vld [vmem:[%s1 + $0x300] sm:$0xff]
    %v133 = vld [vmem:[%s1 + $0x308] sm:$0xff]
    %v134 = vld [vmem:[%s1 + $0x310] sm:$0xff]
    %v135 = vld [vmem:[%s1 + $0x318] sm:$0xff]
    %v136 = vld [vmem:[%s1 + $0x320] sm:$0xff]
    %v137 = vld [vmem:[%s1 + $0x328] sm:$0xff]
    %v138 = vld [vmem:[%s1 + $0x330] sm:$0xff]
    %v139 = vld [vmem:[%s1 + $0x338] sm:$0xff]
    %v140 = vld [vmem:[%s1 + $0x340] sm:$0xff]
    %v141 = vld [vmem:[%s1 + $0x348] sm:$0xff]
    %v142 = vld [vmem:[%s1 + $0x350] sm:$0xff]
    %v143 = vld [vmem:[%s1 + $0x358] sm:$0xff]
    %v144 = vld [vmem:[%s1 + $0x360] sm:$0xff]
    %v145 = vld [vmem:[%s1 + $0x368] sm:$0xff]
    %v146 = vld [vmem:[%s1 + $0x370] sm:$0xff]
    %v147 = vld [vmem:[%s1 + $0x378] sm:$0xff]
    %v148 = vld [vmem:[%s1 + $0x380] sm:$0xff]
    %v149 = vld [vmem:[%s1 + $0x388] sm:$0xff]
    %v150 = vld [vmem:[%s1 + $0x390] sm:$0xff]
    %v151 = vld [vmem:[%s1 + $0x398] sm:$0xff]
    %v152 = vld [vmem:[%s1 + $0x3a0] sm:$0xff]
    %v153 = vld [vmem:[%s1 + $0x3a8] sm:$0xff]
    %v154 = vld [vmem:[%s1 + $0x3b0] sm:$0xff]
    %v155 = vld [vmem:[%s1 + $0x3b8] sm:$0xff]
    %v156 = vld [vmem:[%s1 + $0x3c0] sm:$0xff]
    %v157 = vld [vmem:[%s1 + $0x3c8] sm:$0xff]
    %v158 = vld [vmem:[%s1 + $0x3d0] sm:$0xff]
    %v159 = vld [vmem:[%s1 + $0x3d8] sm:$0xff]
    %v160 = vld [vmem:[%s1 + $0x3e0] sm:$0xff]
    %v161 = vld [vmem:[%s1 + $0x3e8] sm:$0xff]
    %v162 = vld [vmem:[%s1 + $0x3f0] sm:$0xff]
    %v163 = vld [vmem:[%s1 + $0x3f8] sm:$0xff]
    %v164 = vld [vmem:[%s2] sm:$0xf]
    %v166 = vlaneseq
    %v167 = vshrl.u32 %v166, 7
    %v168 = vsub.s32 0, %v167
    %v169 = vrot.slane %v164, %v168
    %v170 = vlaneseq
    %v171 = vshrl.u32 %v170, 7
    %v172 = vsub.s32 1, %v171
    %v173 = vrot.slane %v164, %v172
    %v174 = vlaneseq
    %v175 = vshrl.u32 %v174, 7
    %v176 = vsub.s32 2, %v175
    %v177 = vrot.slane %v164, %v176
    %v178 = vlaneseq
    %v179 = vshrl.u32 %v178, 7
    %v180 = vsub.s32 3, %v179
    %v181 = vrot.slane %v164, %v180
    %v314 = vunpack.c.l.b16 %v36
    %v315 = vunpack.c.h.b16 %v36
    %v316 = vunpack.c.l.b16 %v37
    %v317 = vunpack.c.h.b16 %v37
    %v318 = vunpack.c.l.b16 %v38
    %v319 = vunpack.c.h.b16 %v38
    %v320 = vunpack.c.l.b16 %v39
    %v321 = vunpack.c.h.b16 %v39
    %v322 = vunpack.c.l.b16 %v40
    %v323 = vunpack.c.h.b16 %v40
    %v324 = vunpack.c.l.b16 %v41
    %v325 = vunpack.c.h.b16 %v41
    %v326 = vunpack.c.l.b16 %v42
    %v327 = vunpack.c.h.b16 %v42
    %v328 = vunpack.c.l.b16 %v43
    %v329 = vunpack.c.h.b16 %v43
    %v330 = vunpack.c.l.b16 %v44
    %v331 = vunpack.c.h.b16 %v44
    %v332 = vunpack.c.l.b16 %v45
    %v333 = vunpack.c.h.b16 %v45
    %v334 = vunpack.c.l.b16 %v46
    %v335 = vunpack.c.h.b16 %v46
    %v336 = vunpack.c.l.b16 %v47
    %v337 = vunpack.c.h.b16 %v47
    %v338 = vunpack.c.l.b16 %v48
    %v339 = vunpack.c.h.b16 %v48
    %v340 = vunpack.c.l.b16 %v49
    %v341 = vunpack.c.h.b16 %v49
    %v342 = vunpack.c.l.b16 %v50
    %v343 = vunpack.c.h.b16 %v50
    %v344 = vunpack.c.l.b16 %v51
    %v345 = vunpack.c.h.b16 %v51
    %v346 = vunpack.c.l.b16 %v52
    %v347 = vunpack.c.h.b16 %v52
    %v348 = vunpack.c.l.b16 %v53
    %v349 = vunpack.c.h.b16 %v53
    %v350 = vunpack.c.l.b16 %v54
    %v351 = vunpack.c.h.b16 %v54
    %v352 = vunpack.c.l.b16 %v55
    %v353 = vunpack.c.h.b16 %v55
    %v354 = vunpack.c.l.b16 %v56
    %v355 = vunpack.c.h.b16 %v56
    %v356 = vunpack.c.l.b16 %v57
    %v357 = vunpack.c.h.b16 %v57
    %v358 = vunpack.c.l.b16 %v58
    %v359 = vunpack.c.h.b16 %v58
    %v360 = vunpack.c.l.b16 %v59
    %v361 = vunpack.c.h.b16 %v59
    %v362 = vunpack.c.l.b16 %v60
    %v363 = vunpack.c.h.b16 %v60
    %v364 = vunpack.c.l.b16 %v61
    %v365 = vunpack.c.h.b16 %v61
    %v366 = vunpack.c.l.b16 %v62
    %v367 = vunpack.c.h.b16 %v62
    %v368 = vunpack.c.l.b16 %v63
    %v369 = vunpack.c.h.b16 %v63
    %v370 = vunpack.c.l.b16 %v64
    %v371 = vunpack.c.h.b16 %v64
    %v372 = vunpack.c.l.b16 %v65
    %v373 = vunpack.c.h.b16 %v65
    %v374 = vunpack.c.l.b16 %v66
    %v375 = vunpack.c.h.b16 %v66
    %v376 = vunpack.c.l.b16 %v67
    %v377 = vunpack.c.h.b16 %v67
    %v378 = vunpack.c.l.b16 %v68
    %v379 = vunpack.c.h.b16 %v68
    %v380 = vunpack.c.l.b16 %v69
    %v381 = vunpack.c.h.b16 %v69
    %v382 = vunpack.c.l.b16 %v70
    %v383 = vunpack.c.h.b16 %v70
    %v384 = vunpack.c.l.b16 %v71
    %v385 = vunpack.c.h.b16 %v71
    %v386 = vunpack.c.l.b16 %v72
    %v387 = vunpack.c.h.b16 %v72
    %v388 = vunpack.c.l.b16 %v73
    %v389 = vunpack.c.h.b16 %v73
    %v390 = vunpack.c.l.b16 %v74
    %v391 = vunpack.c.h.b16 %v74
    %v392 = vunpack.c.l.b16 %v75
    %v393 = vunpack.c.h.b16 %v75
    %v394 = vunpack.c.l.b16 %v76
    %v395 = vunpack.c.h.b16 %v76
    %v396 = vunpack.c.l.b16 %v77
    %v397 = vunpack.c.h.b16 %v77
    %v398 = vunpack.c.l.b16 %v78
    %v399 = vunpack.c.h.b16 %v78
    %v400 = vunpack.c.l.b16 %v79
    %v401 = vunpack.c.h.b16 %v79
    %v402 = vunpack.c.l.b16 %v80
    %v403 = vunpack.c.h.b16 %v80
    %v404 = vunpack.c.l.b16 %v81
    %v405 = vunpack.c.h.b16 %v81
    %v406 = vunpack.c.l.b16 %v82
    %v407 = vunpack.c.h.b16 %v82
    %v408 = vunpack.c.l.b16 %v83
    %v409 = vunpack.c.h.b16 %v83
    %v410 = vunpack.c.l.b16 %v84
    %v411 = vunpack.c.h.b16 %v84
    %v412 = vunpack.c.l.b16 %v85
    %v413 = vunpack.c.h.b16 %v85
    %v414 = vunpack.c.l.b16 %v86
    %v415 = vunpack.c.h.b16 %v86
    %v416 = vunpack.c.l.b16 %v87
    %v417 = vunpack.c.h.b16 %v87
    %v418 = vunpack.c.l.b16 %v88
    %v419 = vunpack.c.h.b16 %v88
    %v420 = vunpack.c.l.b16 %v89
    %v421 = vunpack.c.h.b16 %v89
    %v422 = vunpack.c.l.b16 %v90
    %v423 = vunpack.c.h.b16 %v90
    %v424 = vunpack.c.l.b16 %v91
    %v425 = vunpack.c.h.b16 %v91
    %v426 = vunpack.c.l.b16 %v92
    %v427 = vunpack.c.h.b16 %v92
    %v428 = vunpack.c.l.b16 %v93
    %v429 = vunpack.c.h.b16 %v93
    %v430 = vunpack.c.l.b16 %v94
    %v431 = vunpack.c.h.b16 %v94
    %v432 = vunpack.c.l.b16 %v95
    %v433 = vunpack.c.h.b16 %v95
    %v434 = vunpack.c.l.b16 %v96
    %v435 = vunpack.c.h.b16 %v96
    %v436 = vunpack.c.l.b16 %v97
    %v437 = vunpack.c.h.b16 %v97
    %v438 = vunpack.c.l.b16 %v98
    %v439 = vunpack.c.h.b16 %v98
    %v440 = vunpack.c.l.b16 %v99
    %v441 = vunpack.c.h.b16 %v99
    %v442 = vunpack.c.l.b16 %v100
    %v443 = vunpack.c.h.b16 %v100
    %v444 = vunpack.c.l.b16 %v101
    %v445 = vunpack.c.h.b16 %v101
    %v446 = vunpack.c.l.b16 %v102
    %v447 = vunpack.c.h.b16 %v102
    %v448 = vunpack.c.l.b16 %v103
    %v449 = vunpack.c.h.b16 %v103
    %v450 = vunpack.c.l.b16 %v104
    %v451 = vunpack.c.h.b16 %v104
    %v452 = vunpack.c.l.b16 %v105
    %v453 = vunpack.c.h.b16 %v105
    %v454 = vunpack.c.l.b16 %v106
    %v455 = vunpack.c.h.b16 %v106
    %v456 = vunpack.c.l.b16 %v107
    %v457 = vunpack.c.h.b16 %v107
    %v458 = vunpack.c.l.b16 %v108
    %v459 = vunpack.c.h.b16 %v108
    %v460 = vunpack.c.l.b16 %v109
    %v461 = vunpack.c.h.b16 %v109
    %v462 = vunpack.c.l.b16 %v110
    %v463 = vunpack.c.h.b16 %v110
    %v464 = vunpack.c.l.b16 %v111
    %v465 = vunpack.c.h.b16 %v111
    %v466 = vunpack.c.l.b16 %v112
    %v467 = vunpack.c.h.b16 %v112
    %v468 = vunpack.c.l.b16 %v113
    %v469 = vunpack.c.h.b16 %v113
    %v470 = vunpack.c.l.b16 %v114
    %v471 = vunpack.c.h.b16 %v114
    %v472 = vunpack.c.l.b16 %v115
    %v473 = vunpack.c.h.b16 %v115
    %v474 = vunpack.c.l.b16 %v116
    %v475 = vunpack.c.h.b16 %v116
    %v476 = vunpack.c.l.b16 %v117
    %v477 = vunpack.c.h.b16 %v117
    %v478 = vunpack.c.l.b16 %v118
    %v479 = vunpack.c.h.b16 %v118
    %v480 = vunpack.c.l.b16 %v119
    %v481 = vunpack.c.h.b16 %v119
    %v482 = vunpack.c.l.b16 %v120
    %v483 = vunpack.c.h.b16 %v120
    %v484 = vunpack.c.l.b16 %v121
    %v485 = vunpack.c.h.b16 %v121
    %v486 = vunpack.c.l.b16 %v122
    %v487 = vunpack.c.h.b16 %v122
    %v488 = vunpack.c.l.b16 %v123
    %v489 = vunpack.c.h.b16 %v123
    %v490 = vunpack.c.l.b16 %v124
    %v491 = vunpack.c.h.b16 %v124
    %v492 = vunpack.c.l.b16 %v125
    %v493 = vunpack.c.h.b16 %v125
    %v494 = vunpack.c.l.b16 %v126
    %v495 = vunpack.c.h.b16 %v126
    %v496 = vunpack.c.l.b16 %v127
    %v497 = vunpack.c.h.b16 %v127
    %v498 = vunpack.c.l.b16 %v128
    %v499 = vunpack.c.h.b16 %v128
    %v500 = vunpack.c.l.b16 %v129
    %v501 = vunpack.c.h.b16 %v129
    %v502 = vunpack.c.l.b16 %v130
    %v503 = vunpack.c.h.b16 %v130
    %v504 = vunpack.c.l.b16 %v131
    %v505 = vunpack.c.h.b16 %v131
    %v506 = vunpack.c.l.b16 %v132
    %v507 = vunpack.c.h.b16 %v132
    %v508 = vunpack.c.l.b16 %v133
    %v509 = vunpack.c.h.b16 %v133
    %v510 = vunpack.c.l.b16 %v134
    %v511 = vunpack.c.h.b16 %v134
    %v512 = vunpack.c.l.b16 %v135
    %v513 = vunpack.c.h.b16 %v135
    %v514 = vunpack.c.l.b16 %v136
    %v515 = vunpack.c.h.b16 %v136
    %v516 = vunpack.c.l.b16 %v137
    %v517 = vunpack.c.h.b16 %v137
    %v518 = vunpack.c.l.b16 %v138
    %v519 = vunpack.c.h.b16 %v138
    %v520 = vunpack.c.l.b16 %v139
    %v521 = vunpack.c.h.b16 %v139
    %v522 = vunpack.c.l.b16 %v140
    %v523 = vunpack.c.h.b16 %v140
    %v524 = vunpack.c.l.b16 %v141
    %v525 = vunpack.c.h.b16 %v141
    %v526 = vunpack.c.l.b16 %v142
    %v527 = vunpack.c.h.b16 %v142
    %v528 = vunpack.c.l.b16 %v143
    %v529 = vunpack.c.h.b16 %v143
    %v530 = vunpack.c.l.b16 %v144
    %v531 = vunpack.c.h.b16 %v144
    %v532 = vunpack.c.l.b16 %v145
    %v533 = vunpack.c.h.b16 %v145
    %v534 = vunpack.c.l.b16 %v146
    %v535 = vunpack.c.h.b16 %v146
    %v536 = vunpack.c.l.b16 %v147
    %v537 = vunpack.c.h.b16 %v147
    %v538 = vunpack.c.l.b16 %v148
    %v539 = vunpack.c.h.b16 %v148
    %v540 = vunpack.c.l.b16 %v149
    %v541 = vunpack.c.h.b16 %v149
    %v542 = vunpack.c.l.b16 %v150
    %v543 = vunpack.c.h.b16 %v150
    %v544 = vunpack.c.l.b16 %v151
    %v545 = vunpack.c.h.b16 %v151
    %v546 = vunpack.c.l.b16 %v152
    %v547 = vunpack.c.h.b16 %v152
    %v548 = vunpack.c.l.b16 %v153
    %v549 = vunpack.c.h.b16 %v153
    %v550 = vunpack.c.l.b16 %v154
    %v551 = vunpack.c.h.b16 %v154
    %v552 = vunpack.c.l.b16 %v155
    %v553 = vunpack.c.h.b16 %v155
    %v554 = vunpack.c.l.b16 %v156
    %v555 = vunpack.c.h.b16 %v156
    %v556 = vunpack.c.l.b16 %v157
    %v557 = vunpack.c.h.b16 %v157
    %v558 = vunpack.c.l.b16 %v158
    %v559 = vunpack.c.h.b16 %v158
    %v560 = vunpack.c.l.b16 %v159
    %v561 = vunpack.c.h.b16 %v159
    %v562 = vunpack.c.l.b16 %v160
    %v563 = vunpack.c.h.b16 %v160
    %v564 = vunpack.c.l.b16 %v161
    %v565 = vunpack.c.h.b16 %v161
    %v566 = vunpack.c.l.b16 %v162
    %v567 = vunpack.c.h.b16 %v162
    %v568 = vunpack.c.l.b16 %v163
    %v569 = vunpack.c.h.b16 %v163
    %v570 = vpack.c.b16 %v318, %v314
    %v571 = vpack.c.b16 %v319, %v315
    %v572 = vpack.c.b16 %v320, %v316
    %v573 = vpack.c.b16 %v321, %v317
    %v574 = vpack.c.b16 %v326, %v322
    %v575 = vpack.c.b16 %v327, %v323
    %v576 = vpack.c.b16 %v328, %v324
    %v577 = vpack.c.b16 %v329, %v325
    %v578 = vpack.c.b16 %v334, %v330
    %v579 = vpack.c.b16 %v335, %v331
    %v580 = vpack.c.b16 %v336, %v332
    %v581 = vpack.c.b16 %v337, %v333
    %v582 = vpack.c.b16 %v342, %v338
    %v583 = vpack.c.b16 %v343, %v339
    %v584 = vpack.c.b16 %v344, %v340
    %v585 = vpack.c.b16 %v345, %v341
    %v586 = vpack.c.b16 %v350, %v346
    %v587 = vpack.c.b16 %v351, %v347
    %v588 = vpack.c.b16 %v352, %v348
    %v589 = vpack.c.b16 %v353, %v349
    %v590 = vpack.c.b16 %v358, %v354
    %v591 = vpack.c.b16 %v359, %v355
    %v592 = vpack.c.b16 %v360, %v356
    %v593 = vpack.c.b16 %v361, %v357
    %v594 = vpack.c.b16 %v366, %v362
    %v595 = vpack.c.b16 %v367, %v363
    %v596 = vpack.c.b16 %v368, %v364
    %v597 = vpack.c.b16 %v369, %v365
    %v598 = vpack.c.b16 %v374, %v370
    %v599 = vpack.c.b16 %v375, %v371
    %v600 = vpack.c.b16 %v376, %v372
    %v601 = vpack.c.b16 %v377, %v373
    %v602 = vpack.c.b16 %v382, %v378
    %v603 = vpack.c.b16 %v383, %v379
    %v604 = vpack.c.b16 %v384, %v380
    %v605 = vpack.c.b16 %v385, %v381
    %v606 = vpack.c.b16 %v390, %v386
    %v607 = vpack.c.b16 %v391, %v387
    %v608 = vpack.c.b16 %v392, %v388
    %v609 = vpack.c.b16 %v393, %v389
    %v610 = vpack.c.b16 %v398, %v394
    %v611 = vpack.c.b16 %v399, %v395
    %v612 = vpack.c.b16 %v400, %v396
    %v613 = vpack.c.b16 %v401, %v397
    %v614 = vpack.c.b16 %v406, %v402
    %v615 = vpack.c.b16 %v407, %v403
    %v616 = vpack.c.b16 %v408, %v404
    %v617 = vpack.c.b16 %v409, %v405
    %v618 = vpack.c.b16 %v414, %v410
    %v619 = vpack.c.b16 %v415, %v411
    %v620 = vpack.c.b16 %v416, %v412
    %v621 = vpack.c.b16 %v417, %v413
    %v622 = vpack.c.b16 %v422, %v418
    %v623 = vpack.c.b16 %v423, %v419
    %v624 = vpack.c.b16 %v424, %v420
    %v625 = vpack.c.b16 %v425, %v421
    %v626 = vpack.c.b16 %v430, %v426
    %v627 = vpack.c.b16 %v431, %v427
    %v628 = vpack.c.b16 %v432, %v428
    %v629 = vpack.c.b16 %v433, %v429
    %v630 = vpack.c.b16 %v438, %v434
    %v631 = vpack.c.b16 %v439, %v435
    %v632 = vpack.c.b16 %v440, %v436
    %v633 = vpack.c.b16 %v441, %v437
    %v634 = vpack.c.b16 %v446, %v442
    %v635 = vpack.c.b16 %v447, %v443
    %v636 = vpack.c.b16 %v448, %v444
    %v637 = vpack.c.b16 %v449, %v445
    %v638 = vpack.c.b16 %v454, %v450
    %v639 = vpack.c.b16 %v455, %v451
    %v640 = vpack.c.b16 %v456, %v452
    %v641 = vpack.c.b16 %v457, %v453
    %v642 = vpack.c.b16 %v462, %v458
    %v643 = vpack.c.b16 %v463, %v459
    %v644 = vpack.c.b16 %v464, %v460
    %v645 = vpack.c.b16 %v465, %v461
    %v646 = vpack.c.b16 %v470, %v466
    %v647 = vpack.c.b16 %v471, %v467
    %v648 = vpack.c.b16 %v472, %v468
    %v649 = vpack.c.b16 %v473, %v469
    %v650 = vpack.c.b16 %v478, %v474
    %v651 = vpack.c.b16 %v479, %v475
    %v652 = vpack.c.b16 %v480, %v476
    %v653 = vpack.c.b16 %v481, %v477
    %v654 = vpack.c.b16 %v486, %v482
    %v655 = vpack.c.b16 %v487, %v483
    %v656 = vpack.c.b16 %v488, %v484
    %v657 = vpack.c.b16 %v489, %v485
    %v658 = vpack.c.b16 %v494, %v490
    %v659 = vpack.c.b16 %v495, %v491
    %v660 = vpack.c.b16 %v496, %v492
    %v661 = vpack.c.b16 %v497, %v493
    %v662 = vpack.c.b16 %v502, %v498
    %v663 = vpack.c.b16 %v503, %v499
    %v664 = vpack.c.b16 %v504, %v500
    %v665 = vpack.c.b16 %v505, %v501
    %v666 = vpack.c.b16 %v510, %v506
    %v667 = vpack.c.b16 %v511, %v507
    %v668 = vpack.c.b16 %v512, %v508
    %v669 = vpack.c.b16 %v513, %v509
    %v670 = vpack.c.b16 %v518, %v514
    %v671 = vpack.c.b16 %v519, %v515
    %v672 = vpack.c.b16 %v520, %v516
    %v673 = vpack.c.b16 %v521, %v517
    %v674 = vpack.c.b16 %v526, %v522
    %v675 = vpack.c.b16 %v527, %v523
    %v676 = vpack.c.b16 %v528, %v524
    %v677 = vpack.c.b16 %v529, %v525
    %v678 = vpack.c.b16 %v534, %v530
    %v679 = vpack.c.b16 %v535, %v531
    %v680 = vpack.c.b16 %v536, %v532
    %v681 = vpack.c.b16 %v537, %v533
    %v682 = vpack.c.b16 %v542, %v538
    %v683 = vpack.c.b16 %v543, %v539
    %v684 = vpack.c.b16 %v544, %v540
    %v685 = vpack.c.b16 %v545, %v541
    %v686 = vpack.c.b16 %v550, %v546
    %v687 = vpack.c.b16 %v551, %v547
    %v688 = vpack.c.b16 %v552, %v548
    %v689 = vpack.c.b16 %v553, %v549
    %v690 = vpack.c.b16 %v558, %v554
    %v691 = vpack.c.b16 %v559, %v555
    %v692 = vpack.c.b16 %v560, %v556
    %v693 = vpack.c.b16 %v561, %v557
    %v694 = vpack.c.b16 %v566, %v562
    %v695 = vpack.c.b16 %v567, %v563
    %v696 = vpack.c.b16 %v568, %v564
    %v697 = vpack.c.b16 %v569, %v565
    %826 = vmatprep.subr.bf16.mxu0 %v599
    %827 = vmatpush1.bf16.msra.mxu0 %v598
    %828 = vmatprep.subr.bf16.mxu0 %v595
    %829 = vmatpush1.bf16.msra.mxu0 %v594
    %830 = vmatprep.subr.bf16.mxu0 %v591
    %831 = vmatpush1.bf16.msra.mxu0 %v590
    %832 = vmatprep.subr.bf16.mxu0 %v587
    %833 = vmatpush1.bf16.msra.mxu0 %v586
    %834 = vmatprep.subr.bf16.mxu0 %v583
    %835 = vmatpush1.bf16.msra.mxu0 %v582
    %836 = vmatprep.subr.bf16.mxu0 %v579
    %837 = vmatpush1.bf16.msra.mxu0 %v578
    %838 = vmatprep.subr.bf16.mxu0 %v575
    %839 = vmatpush1.bf16.msra.mxu0 %v574
    %840 = vmatprep.subr.bf16.mxu0 %v571
    %841 = vmatpush1.bf16.msra.mxu0 %v570
    %842 = vmatprep.subr.bf16.mxu0 %v631
    %843 = vmatpush2.bf16.msra.mxu0 %v630
    %844 = vmatprep.subr.bf16.mxu0 %v627
    %845 = vmatpush2.bf16.msra.mxu0 %v626
    %846 = vmatprep.subr.bf16.mxu0 %v623
    %847 = vmatpush2.bf16.msra.mxu0 %v622
    %848 = vmatprep.subr.bf16.mxu0 %v619
    %849 = vmatpush2.bf16.msra.mxu0 %v618
    %850 = vmatprep.subr.bf16.mxu0 %v615
    %851 = vmatpush2.bf16.msra.mxu0 %v614
    %852 = vmatprep.subr.bf16.mxu0 %v611
    %853 = vmatpush2.bf16.msra.mxu0 %v610
    %854 = vmatprep.subr.bf16.mxu0 %v607
    %855 = vmatpush2.bf16.msra.mxu0 %v606
    %856 = vmatprep.subr.bf16.mxu0 %v603
    %857 = vmatpush2.bf16.msra.mxu0 %v602
    %858 = vmatprep.mubr.bf16.mxu0 %v33
    %859 = vmatmul.mubr.bf16.gmra.mxu0 %v32
    %v860 = vpop.f32.mrf.mxu0
    %v861 = vadd.f32 %v169, %v860
    %v862 = vpop.f32.mrf.mxu0
    %v863 = vadd.f32 %v173, %v862
    %v864 = vpop.f32.mrf.mxu0
    %v865 = vadd.f32 %v169, %v864
    %v866 = vpop.f32.mrf.mxu0
    %v867 = vadd.f32 %v173, %v866
    %868 = vdwg.mxu0
    %869 = vmatprep.subr.bf16.mxu0 %v663
    %870 = vmatpush1.bf16.msra.mxu0 %v662
    %871 = vmatprep.subr.bf16.mxu0 %v659
    %872 = vmatpush1.bf16.msra.mxu0 %v658
    %873 = vmatprep.subr.bf16.mxu0 %v655
    %874 = vmatpush1.bf16.msra.mxu0 %v654
    %875 = vmatprep.subr.bf16.mxu0 %v651
    %876 = vmatpush1.bf16.msra.mxu0 %v650
    %877 = vmatprep.subr.bf16.mxu0 %v647
    %878 = vmatpush1.bf16.msra.mxu0 %v646
    %879 = vmatprep.subr.bf16.mxu0 %v643
    %880 = vmatpush1.bf16.msra.mxu0 %v642
    %881 = vmatprep.subr.bf16.mxu0 %v639
    %882 = vmatpush1.bf16.msra.mxu0 %v638
    %883 = vmatprep.subr.bf16.mxu0 %v635
    %884 = vmatpush1.bf16.msra.mxu0 %v634
    %885 = vmatprep.subr.bf16.mxu0 %v695
    %886 = vmatpush2.bf16.msra.mxu0 %v694
    %887 = vmatprep.subr.bf16.mxu0 %v691
    %888 = vmatpush2.bf16.msra.mxu0 %v690
    %889 = vmatprep.subr.bf16.mxu0 %v687
    %890 = vmatpush2.bf16.msra.mxu0 %v686
    %891 = vmatprep.subr.bf16.mxu0 %v683
    %892 = vmatpush2.bf16.msra.mxu0 %v682
    %893 = vmatprep.subr.bf16.mxu0 %v679
    %894 = vmatpush2.bf16.msra.mxu0 %v678
    %895 = vmatprep.subr.bf16.mxu0 %v675
    %896 = vmatpush2.bf16.msra.mxu0 %v674
    %897 = vmatprep.subr.bf16.mxu0 %v671
    %898 = vmatpush2.bf16.msra.mxu0 %v670
    %899 = vmatprep.subr.bf16.mxu0 %v667
    %900 = vmatpush2.bf16.msra.mxu0 %v666
    %901 = vmatprep.mubr.bf16.mxu0 %v35
    %902 = vmatmul.mubr.bf16.gmra.mxu0 %v34
    %v903 = vpop.f32.mrf.mxu0
    %v904 = vadd.f32 %v861, %v903
    %v905 = vpop.f32.mrf.mxu0
    %v906 = vadd.f32 %v863, %v905
    %v907 = vpop.f32.mrf.mxu0
    %v908 = vadd.f32 %v865, %v907
    %v909 = vpop.f32.mrf.mxu0
    %v910 = vadd.f32 %v867, %v909
    %911 = vdwg.mxu0
    %912 = vmatprep.subr.bf16.mxu0 %v601
    %913 = vmatpush1.bf16.msra.mxu0 %v600
    %914 = vmatprep.subr.bf16.mxu0 %v597
    %915 = vmatpush1.bf16.msra.mxu0 %v596
    %916 = vmatprep.subr.bf16.mxu0 %v593
    %917 = vmatpush1.bf16.msra.mxu0 %v592
    %918 = vmatprep.subr.bf16.mxu0 %v589
    %919 = vmatpush1.bf16.msra.mxu0 %v588
    %920 = vmatprep.subr.bf16.mxu0 %v585
    %921 = vmatpush1.bf16.msra.mxu0 %v584
    %922 = vmatprep.subr.bf16.mxu0 %v581
    %923 = vmatpush1.bf16.msra.mxu0 %v580
    %924 = vmatprep.subr.bf16.mxu0 %v577
    %925 = vmatpush1.bf16.msra.mxu0 %v576
    %926 = vmatprep.subr.bf16.mxu0 %v573
    %927 = vmatpush1.bf16.msra.mxu0 %v572
    %928 = vmatprep.subr.bf16.mxu0 %v633
    %929 = vmatpush2.bf16.msra.mxu0 %v632
    %930 = vmatprep.subr.bf16.mxu0 %v629
    %931 = vmatpush2.bf16.msra.mxu0 %v628
    %932 = vmatprep.subr.bf16.mxu0 %v625
    %933 = vmatpush2.bf16.msra.mxu0 %v624
    %934 = vmatprep.subr.bf16.mxu0 %v621
    %935 = vmatpush2.bf16.msra.mxu0 %v620
    %936 = vmatprep.subr.bf16.mxu0 %v617
    %937 = vmatpush2.bf16.msra.mxu0 %v616
    %938 = vmatprep.subr.bf16.mxu0 %v613
    %939 = vmatpush2.bf16.msra.mxu0 %v612
    %940 = vmatprep.subr.bf16.mxu0 %v609
    %941 = vmatpush2.bf16.msra.mxu0 %v608
    %942 = vmatprep.subr.bf16.mxu0 %v605
    %943 = vmatpush2.bf16.msra.mxu0 %v604
    %944 = vmatprep.mubr.bf16.mxu0 %v33
    %945 = vmatmul.mubr.bf16.gmra.mxu0 %v32
    %v946 = vpop.f32.mrf.mxu0
    %v947 = vadd.f32 %v177, %v946
    %v948 = vpop.f32.mrf.mxu0
    %v949 = vadd.f32 %v181, %v948
    %v950 = vpop.f32.mrf.mxu0
    %v951 = vadd.f32 %v177, %v950
    %v952 = vpop.f32.mrf.mxu0
    %v953 = vadd.f32 %v181, %v952
    %954 = vdwg.mxu0
    %955 = vmatprep.subr.bf16.mxu0 %v665
    %956 = vmatpush1.bf16.msra.mxu0 %v664
    %957 = vmatprep.subr.bf16.mxu0 %v661
    %958 = vmatpush1.bf16.msra.mxu0 %v660
    %959 = vmatprep.subr.bf16.mxu0 %v657
    %960 = vmatpush1.bf16.msra.mxu0 %v656
    %961 = vmatprep.subr.bf16.mxu0 %v653
    %962 = vmatpush1.bf16.msra.mxu0 %v652
    %963 = vmatprep.subr.bf16.mxu0 %v649
    %964 = vmatpush1.bf16.msra.mxu0 %v648
    %965 = vmatprep.subr.bf16.mxu0 %v645
    %966 = vmatpush1.bf16.msra.mxu0 %v644
    %967 = vmatprep.subr.bf16.mxu0 %v641
    %968 = vmatpush1.bf16.msra.mxu0 %v640
    %969 = vmatprep.subr.bf16.mxu0 %v637
    %970 = vmatpush1.bf16.msra.mxu0 %v636
    %971 = vmatprep.subr.bf16.mxu0 %v697
    %972 = vmatpush2.bf16.msra.mxu0 %v696
    %973 = vmatprep.subr.bf16.mxu0 %v693
    %974 = vmatpush2.bf16.msra.mxu0 %v692
    %975 = vmatprep.subr.bf16.mxu0 %v689
    %976 = vmatpush2.bf16.msra.mxu0 %v688
    %977 = vmatprep.subr.bf16.mxu0 %v685
    %978 = vmatpush2.bf16.msra.mxu0 %v684
    %979 = vmatprep.subr.bf16.mxu0 %v681
    %980 = vmatpush2.bf16.msra.mxu0 %v680
    %981 = vmatprep.subr.bf16.mxu0 %v677
    %982 = vmatpush2.bf16.msra.mxu0 %v676
    %983 = vmatprep.subr.bf16.mxu0 %v673
    %984 = vmatpush2.bf16.msra.mxu0 %v672
    %985 = vmatprep.subr.bf16.mxu0 %v669
    %986 = vmatpush2.bf16.msra.mxu0 %v668
    %987 = vmatprep.mubr.bf16.mxu0 %v35
    %988 = vmatmul.mubr.bf16.gmra.mxu0 %v34
    %v989 = vpop.f32.mrf.mxu0
    %v990 = vadd.f32 %v947, %v989
    %v991 = vpop.f32.mrf.mxu0
    %v992 = vadd.f32 %v949, %v991
    %v993 = vpop.f32.mrf.mxu0
    %v994 = vadd.f32 %v951, %v993
    %v995 = vpop.f32.mrf.mxu0
    %v996 = vadd.f32 %v953, %v995
    %997 = vdwg.mxu0
    %v998 = vld [vmem:[%s3] sm:$0xff]
    %v999 = vld [vmem:[%s3 + $0x8] sm:$0xff]
    %v1000 = vld [vmem:[%s3 + $0x10] sm:$0xff]
    %v1001 = vld [vmem:[%s3 + $0x18] sm:$0xff]
    %v1002 = vld [vmem:[%s3 + $0x20] sm:$0xff]
    %v1003 = vld [vmem:[%s3 + $0x28] sm:$0xff]
    %v1004 = vld [vmem:[%s3 + $0x30] sm:$0xff]
    %v1005 = vld [vmem:[%s3 + $0x38] sm:$0xff]
    %v1006 = vadd.f32 %v904, %v998
    %v1007 = vadd.f32 %v906, %v999
    %v1008 = vadd.f32 %v990, %v1000
    %v1009 = vadd.f32 %v992, %v1001
    %v1010 = vadd.f32 %v908, %v1002
    %v1011 = vadd.f32 %v910, %v1003
    %v1012 = vadd.f32 %v994, %v1004
    %v1013 = vadd.f32 %v996, %v1005
    %v1014 = vadd.f32 %v1006, %v1007
    %v1015 = vadd.f32 %v1014, %v1008
    %v1016 = vadd.f32 %v1015, %v1009
    %1017 = vadd.xlane.f32.xlu0 %v1016
    %v1018 = vpop.xlane.xlu0 %1017
    %v1019 = vadd.f32 %v1010, %v1011
    %v1020 = vadd.f32 %v1019, %v1012
    %v1021 = vadd.f32 %v1020, %v1013
    %1022 = vadd.xlane.f32.xlu0 %v1021
    %v1023 = vpop.xlane.xlu0 %1022
    %v1024 = vrcp.pop 512.0
    %v1025 = vmul.f32 %v1018, %v1024
    %v1026 = vmul.f32 %v1023, %v1024
    %v1027 = vsub.f32 %v1006, %v1025
    %v1028 = vsub.f32 %v1007, %v1025
    %v1029 = vsub.f32 %v1008, %v1025
    %v1030 = vsub.f32 %v1009, %v1025
    %v1031 = vsub.f32 %v1010, %v1026
    %v1032 = vsub.f32 %v1011, %v1026
    %v1033 = vsub.f32 %v1012, %v1026
    %v1034 = vsub.f32 %v1013, %v1026
    %v1035 = vmul.f32 %v1027, %v1027
    %v1036 = vmul.f32 %v1028, %v1028
    %v1037 = vmul.f32 %v1029, %v1029
    %v1038 = vmul.f32 %v1030, %v1030
    %v1039 = vmul.f32 %v1031, %v1031
    %v1040 = vmul.f32 %v1032, %v1032
    %v1041 = vmul.f32 %v1033, %v1033
    %v1042 = vmul.f32 %v1034, %v1034
    %v1043 = vadd.f32 %v1035, %v1036
    %v1044 = vadd.f32 %v1043, %v1037
    %v1045 = vadd.f32 %v1044, %v1038
    %1046 = vadd.xlane.f32.xlu0 %v1045
    %v1047 = vpop.xlane.xlu0 %1046
    %v1048 = vadd.f32 %v1039, %v1040
    %v1049 = vadd.f32 %v1048, %v1041
    %v1050 = vadd.f32 %v1049, %v1042
    %1051 = vadd.xlane.f32.xlu0 %v1050
    %v1052 = vpop.xlane.xlu0 %1051
    %v1053 = vmul.f32 %v1047, %v1024
    %v1054 = vmul.f32 %v1052, %v1024
    %v1055 = vadd.f32 %v1053, 1e-05
    %v1056 = vadd.f32 %v1054, 1e-05
    %v1057 = vrsqrt.pop %v1055
    %v1058 = vrsqrt.pop %v1056
    %v1059 = vmul.f32 %v1027, %v1057
    %v1060 = vmul.f32 %v1028, %v1057
    %v1061 = vmul.f32 %v1029, %v1057
    %v1062 = vmul.f32 %v1030, %v1057
    %v1063 = vmul.f32 %v1031, %v1058
    %v1064 = vmul.f32 %v1032, %v1058
    %v1065 = vmul.f32 %v1033, %v1058
    %v1066 = vmul.f32 %v1034, %v1058
    %v1067 = vld [vmem:[%s4] sm:$0xf]
    %v1069 = vlaneseq
    %v1070 = vshrl.u32 %v1069, 7
    %v1071 = vsub.s32 0, %v1070
    %v1072 = vrot.slane %v1067, %v1071
    %v1073 = vlaneseq
    %v1074 = vshrl.u32 %v1073, 7
    %v1075 = vsub.s32 1, %v1074
    %v1076 = vrot.slane %v1067, %v1075
    %v1077 = vlaneseq
    %v1078 = vshrl.u32 %v1077, 7
    %v1079 = vsub.s32 2, %v1078
    %v1080 = vrot.slane %v1067, %v1079
    %v1081 = vlaneseq
    %v1082 = vshrl.u32 %v1081, 7
    %v1083 = vsub.s32 3, %v1082
    %v1084 = vrot.slane %v1067, %v1083
    %v1089 = vmul.f32 %v1059, %v1072
    %v1090 = vmul.f32 %v1060, %v1076
    %v1091 = vmul.f32 %v1061, %v1080
    %v1092 = vmul.f32 %v1062, %v1084
    %v1093 = vmul.f32 %v1063, %v1072
    %v1094 = vmul.f32 %v1064, %v1076
    %v1095 = vmul.f32 %v1065, %v1080
    %v1096 = vmul.f32 %v1066, %v1084
    %v1097 = vld [vmem:[%s5] sm:$0xf]
    %v1099 = vlaneseq
    %v1100 = vshrl.u32 %v1099, 7
    %v1101 = vsub.s32 0, %v1100
    %v1102 = vrot.slane %v1097, %v1101
    %v1103 = vlaneseq
    %v1104 = vshrl.u32 %v1103, 7
    %v1105 = vsub.s32 1, %v1104
    %v1106 = vrot.slane %v1097, %v1105
    %v1107 = vlaneseq
    %v1108 = vshrl.u32 %v1107, 7
    %v1109 = vsub.s32 2, %v1108
    %v1110 = vrot.slane %v1097, %v1109
    %v1111 = vlaneseq
    %v1112 = vshrl.u32 %v1111, 7
    %v1113 = vsub.s32 3, %v1112
    %v1114 = vrot.slane %v1097, %v1113
    %v1119 = vadd.f32 %v1089, %v1102
    %v1120 = vadd.f32 %v1090, %v1106
    %v1121 = vadd.f32 %v1091, %v1110
    %v1122 = vadd.f32 %v1092, %v1114
    %v1123 = vadd.f32 %v1093, %v1102
    %v1124 = vadd.f32 %v1094, %v1106
    %v1125 = vadd.f32 %v1095, %v1110
    %v1126 = vadd.f32 %v1096, %v1114
    %1127 = vst [vmem:[#allocation2] sm:$0xff] %v1119
    %1128 = vst [vmem:[#allocation2 + $0x8] sm:$0xff] %v1120
    %1129 = vst [vmem:[#allocation2 + $0x10] sm:$0xff] %v1121
    %1130 = vst [vmem:[#allocation2 + $0x18] sm:$0xff] %v1122
    %1131 = vst [vmem:[#allocation2 + $0x20] sm:$0xff] %v1123
    %1132 = vst [vmem:[#allocation2 + $0x28] sm:$0xff] %v1124
    %1133 = vst [vmem:[#allocation2 + $0x30] sm:$0xff] %v1125
    %1134 = vst [vmem:[#allocation2 + $0x38] sm:$0xff] %v1126
    // Predicated region
    $region26: #{encoder_forward.13} parent=1 // pred_check
      _
    $region27: #{encoder_forward.13} parent=1 // pred_check_branch
      %1136 = sbr.rel (0) target = $region29
    $region28: #{encoder_forward.13} parent=1 // pred_region
      %s1138 = ssub.s32 1024, 1024
      %1139 = vsyncadd [#allocation3], %s1138
      %s1140 = sshll.u32 [#allocation2], 4
      %s1141 = int_to_ptr.vmem [resolvable:$true] %s1140
      %1146 = dma.vmem_to_hbm [thread:$0]  %s1141, 1024, %s6, [#allocation3], 512, 512, 32
    $region29: #{encoder_forward.13} parent=1 // pred_fallthru
      _
    // Predicated region
    $region30: #{encoder_forward.13} parent=1 // pred_check
      _
    $region31: #{encoder_forward.13} parent=1 // pred_check_branch
      %1148 = sbr.rel (0) target = $region33
    $region32: #{encoder_forward.13} parent=1 // pred_region
      %1149 = dma.done [#allocation3], 1024
    $region33: #{encoder_forward.13} parent=1 // pred_fallthru
      _
    %1150 = vsyncpa [#allocation3], 1

</llo_original>
